<compile_context>
chip_gen: v7x
topology: tpu7x:2x2x1
jax: 0.10.0
libtpu: 0.0.40
codegen_flags: <defaults>
</compile_context>

<pallas_src>
import numpy as np
import jax
import jax.numpy as jnp
from jax import lax
from jax.experimental import pallas as pl
from jax.experimental.pallas import tpu as pltpu


# ----------------------------------------------------------------------------
# Pallas kernel: one grid step = one batch tile of `block_b` elements.
# Layout: activations are [features (sublanes), block_b (lanes)].
# ----------------------------------------------------------------------------
def eca_kernel(x_ref, w1_ref, w2_ref, b2_ref, pmt_ref, ecab_ref, et_ref,
               bnh_ref, fcw_ref, fcb_ref, out_ref):
    x = x_ref[...]                                           # bf16 [128, Bt]; row 127 == 1

    # Conv2d(1->8, k=2, valid) + bias (folded into column 127) + Sigmoid.
    # bf16 MXU matmul, f32 accumulation, sigmoid in f32 (v5e-safe).
    y1 = jax.nn.sigmoid(
        jnp.dot(w1_ref[...], x, preferred_element_type=jnp.float32))   # [800, Bt] f32

    # Conv2d(8->16, k=3, valid); BN eval-scale pre-folded into the weights/bias.
    y2 = (jnp.dot(w2_ref[...], y1.astype(jnp.bfloat16),
                  preferred_element_type=jnp.float32)
          + b2_ref[...])                                     # [1024, Bt] f32 (scaled)

    # ECAAttention: GAP + Conv1d(1,1,k=3,pad=1) over channels + sigmoid, fused
    # into a [16,1024] reduce matmul (columns pre-divided by bn_scale so the
    # attention sees the unscaled y2) and a [1024,16] expand matmul.
    att = jax.nn.sigmoid(
        jnp.dot(pmt_ref[...], y2, preferred_element_type=jnp.float32)
        + ecab_ref[0])                                       # [16, Bt]
    y3 = y2 * jnp.dot(et_ref[...], att, preferred_element_type=jnp.float32)

    # BatchNorm2d (eval): scale already folded upstream, only the shift remains.
    z = jax.nn.sigmoid(y3 + bnh_ref[...])                    # [1024, Bt]

    # Flatten (rows already channel-major) + Dropout(eval=identity)
    # + Linear(1024->1) + Sigmoid.  fc weights live in row 0 of an [8, 1024]
    # slab so the output block stays (8,128)-aligned and lane-dense.
    logits = jnp.dot(fcw_ref[...], z, preferred_element_type=jnp.float32)
    out_ref[...] = jax.nn.sigmoid(logits + fcb_ref[0])       # [8, Bt], row 0 valid


def _round_up(a, m):
    return ((a + m - 1) // m) * m


def eca_forward(x, packed, *, block_b=512):
    """x: [B, 1, 11, 11] float32 (NCHW). Returns [B, 1] float32."""
    (w1d, w2d, b2c, pmt, ecab, et, bnh, fcw, fcb) = packed
    B = x.shape[0]
    block_b = min(_round_up(block_b, 128), _round_up(B, 128))
    # Prefer >= 2 grid tiles for moderate/large batches so the "parallel" axis
    # can be sharded across both v7x TensorCores (no effect on v5e/v6e).
    if B > 256 and _round_up(B, block_b) // block_b < 2:
        block_b = _round_up((B + 1) // 2, 128)
    n_tiles = _round_up(B, block_b) // block_b
    b_pad = n_tiles * block_b

    # [B, 1, 11, 11] -> bf16 [128, B_pad]: flat 11x11 spatial on sublanes, batch
    # on lanes; row 127 is the constant-1 row used for the conv1 bias fold.
    x_t = jnp.zeros((128, b_pad), jnp.bfloat16)
    x_t = x_t.at[:121, :B].set(x.reshape(B, 121).T.astype(jnp.bfloat16))
    x_t = x_t.at[127, :].set(1.0)

    smem = pl.BlockSpec(memory_space=pltpu.MemorySpace.SMEM)
    const2d = lambda shape: pl.BlockSpec(shape, lambda i: (0, 0))

    out = pl.pallas_call(
        eca_kernel,
        out_shape=jax.ShapeDtypeStruct((n_tiles * 8, block_b), jnp.float32),
        grid_spec=pltpu.PrefetchScalarGridSpec(
            num_scalar_prefetch=0,
            grid=(n_tiles,),
            in_specs=[
                pl.BlockSpec((128, block_b), lambda i: (0, i)),   # x batch tile (bf16)
                const2d((800, 128)),                              # conv1 dense (bf16, bias folded)
                const2d((1024, 800)),                             # conv2 dense (bf16, BN-scaled)
                const2d((1024, 1)),                               # conv2 bias (BN-scaled)
                const2d((16, 1024)),                              # ECA gap+conv1d (1/bn_scale)
                smem,                                             # ECA bias (1,)
                const2d((1024, 16)),                              # ECA expand
                const2d((1024, 1)),                               # BN shift
                const2d((8, 1024)),                               # fc weight slab
                smem,                                             # fc bias (1,)
            ],
            out_specs=pl.BlockSpec((8, block_b), lambda i: (i, 0)),
        ),
        compiler_params=pltpu.CompilerParams(
            dimension_semantics=("parallel",),
            vmem_limit_bytes=40 * 1024 * 1024),
    )(x_t, w1d, w2d, b2c, pmt, ecab, et, bnh, fcw, fcb)

    logits = out.reshape(n_tiles, 8, block_b)[:, 0, :].reshape(b_pad)
    return logits[:B].reshape(B, 1)


# ----------------------------------------------------------------------------
# Host-side parameter packing (numpy): expand the small convs into dense,
# lane/sublane-friendly matrices acting on flat feature slabs, with the conv1
# bias and BN eval-scale algebraically folded in.
# ----------------------------------------------------------------------------
def pack_params(w1, b1, w2, b2, eca_w, eca_b, bn_scale, bn_shift, fc_w, fc_b):
    w1 = np.asarray(w1, np.float32); b1 = np.asarray(b1, np.float32)
    w2 = np.asarray(w2, np.float32); b2 = np.asarray(b2, np.float32)
    eca_w = np.asarray(eca_w, np.float32); eca_b = np.asarray(eca_b, np.float32)
    bn_scale = np.asarray(bn_scale, np.float32)
    bn_shift = np.asarray(bn_shift, np.float32)
    fc_w = np.asarray(fc_w, np.float32); fc_b = np.asarray(fc_b, np.float32)

    # Conv1 (1->8, k=2) as a dense [800, 128] matrix on the flat 11x11 input.
    # Column 127 carries the bias (input row 127 is a constant 1.0).
    hh, ww = np.meshgrid(np.arange(10), np.arange(10), indexing="ij")
    p1 = (hh * 10 + ww).reshape(-1)                          # y1 flat (10-wide)
    w1d = np.zeros((800, 128), np.float32)
    for c in range(8):
        for di in range(2):
            for dj in range(2):
                q = ((hh + di) * 11 + (ww + dj)).reshape(-1)  # input flat (11-wide)
                w1d[c * 100 + p1, q] += w1[c, 0, di, dj]
    w1d[:, 127] = np.repeat(b1, 100)                          # conv1 bias fold

    # Conv2 (8->16, k=3) as a dense [1024, 800] matrix on y1 (8 ch x 10x10 flat);
    # output rows in torch Flatten order (c, h, w); BN eval-scale folded into
    # the rows (and into the bias).  Requires bn_scale != 0 (gamma != 0).
    bns_row = np.repeat(bn_scale, 64).astype(np.float32)      # [1024]
    hh2, ww2 = np.meshgrid(np.arange(8), np.arange(8), indexing="ij")
    p2 = (hh2 * 8 + ww2).reshape(-1)
    w2d = np.zeros((1024, 800), np.float32)
    for o in range(16):
        for c in range(8):
            for di in range(3):
                for dj in range(3):
                    q = (c * 100 + (hh2 + di) * 10 + (ww2 + dj)).reshape(-1)
                    w2d[o * 64 + p2, q] += w2[o, c, di, dj]
    w2d *= bns_row[:, None]
    b2c = (np.repeat(b2, 64) * bns_row).reshape(1024, 1)

    # ECAAttention: att[j] = sigmoid(sum_i M[i, j] * gap[i] + eca_b), gap = per-
    # channel mean; pmt[j, c*64+p] = M[c, j] / 64 fuses GAP with the conv1d.
    # Columns divided by bn_scale so the attention sees the *unscaled* y2.
    m = (eca_w[0] * np.eye(16, k=1) + eca_w[1] * np.eye(16)
         + eca_w[2] * np.eye(16, k=-1)).astype(np.float32)
    pmt = ((np.repeat(np.eye(16, dtype=np.float32), 64, axis=0) / 64.0) @ m).T
    pmt = pmt / bns_row[None, :]
    et = np.repeat(np.eye(16, dtype=np.float32), 64, axis=0)  # [1024, 16]

    bnh = np.repeat(bn_shift, 64).reshape(1024, 1)

    fcw = np.zeros((8, 1024), np.float32)
    fcw[0] = fc_w                                             # row 0 only

    f32 = lambda a: jnp.asarray(a, jnp.float32)
    bf16 = lambda a: jnp.asarray(a, jnp.bfloat16)
    return (bf16(w1d), bf16(w2d), f32(b2c), f32(pmt), f32(eca_b.reshape(1)),
            f32(et), f32(bnh), f32(fcw), f32(fc_b.reshape(1)))


# ----------------------------------------------------------------------------
# Pure-JAX reference mirroring the PyTorch forward (eval mode).
# ----------------------------------------------------------------------------
def reference_forward(x, w1, b1, w2, b2, eca_w, eca_b, bn_scale, bn_shift,
                      fc_w, fc_b):
    y1 = lax.conv_general_dilated(
        x, w1, (1, 1), 'VALID', dimension_numbers=('NCHW', 'OIHW', 'NCHW'),
        precision=lax.Precision.HIGHEST)
    y1 = jax.nn.sigmoid(y1 + b1[None, :, None, None])
    y2 = lax.conv_general_dilated(
        y1, w2, (1, 1), 'VALID', dimension_numbers=('NCHW', 'OIHW', 'NCHW'),
        precision=lax.Precision.HIGHEST)
    y2 = y2 + b2[None, :, None, None]                      # [B, 16, 8, 8]
    g = jnp.mean(y2, axis=(2, 3))                          # [B, 16]
    gp = jnp.pad(g, ((0, 0), (1, 1)))
    att = jax.nn.sigmoid(eca_w[0] * gp[:, :-2] + eca_w[1] * gp[:, 1:-1]
                         + eca_w[2] * gp[:, 2:] + eca_b[0])
    y3 = y2 * att[:, :, None, None]
    z = jax.nn.sigmoid(y3 * bn_scale[None, :, None, None]
                       + bn_shift[None, :, None, None])
    logit = z.reshape(x.shape[0], -1) @ fc_w + fc_b[0]
    return jax.nn.sigmoid(logit)[:, None]


if __name__ == "__main__":
    key = jax.random.PRNGKey(0)
    ks = jax.random.split(key, 14)

    # --- deterministic synthetic parameters (shapes from the module __init__) ---
    w1 = jax.random.normal(ks[0], (8, 1, 2, 2), jnp.float32) * 0.5     # Conv2d(1,8,2)
    b1 = jax.random.normal(ks[1], (8,), jnp.float32) * 0.1
    w2 = jax.random.normal(ks[2], (16, 8, 3, 3), jnp.float32) * 0.2    # Conv2d(8,16,3)
    b2 = jax.random.normal(ks[3], (16,), jnp.float32) * 0.1
    eca_w = jax.random.normal(ks[4], (3,), jnp.float32) * 0.5          # Conv1d(1,1,3)
    eca_b = jax.random.normal(ks[5], (1,), jnp.float32) * 0.1
    gamma = 1.0 + 0.1 * jax.random.normal(ks[6], (16,), jnp.float32)   # BatchNorm2d(16)
    beta = 0.1 * jax.random.normal(ks[7], (16,), jnp.float32)
    rmean = 0.1 * jax.random.normal(ks[8], (16,), jnp.float32)
    rvar = jnp.abs(jax.random.normal(ks[9], (16,), jnp.float32)) + 0.5
    fc_w = jax.random.normal(ks[10], (1024,), jnp.float32) * 0.03      # Linear(1024,1)
    fc_b = jax.random.normal(ks[11], (1,), jnp.float32) * 0.03

    # fold BN (eval mode) into per-channel scale/shift
    eps = 1e-5
    bn_scale = gamma / jnp.sqrt(rvar + eps)
    bn_shift = beta - rmean * bn_scale

    packed = pack_params(w1, b1, w2, b2, eca_w, eca_b, bn_scale, bn_shift,
                         fc_w, fc_b)

    # --- small check: batch = 2 (NCHW [2, 1, 11, 11]) ---
    x = jax.random.normal(ks[12], (2, 1, 11, 11), jnp.float32)
    out = jax.block_until_ready(eca_forward(x, packed))
    ref = jax.block_until_ready(
        reference_forward(x, w1, b1, w2, b2, eca_w, eca_b, bn_scale, bn_shift,
                          fc_w, fc_b))
    assert out.shape == (2, 1), f"bad output shape {out.shape}"
    diff = float(jnp.max(jnp.abs(out - ref)))
    assert diff < 5e-3, f"kernel/reference mismatch (B=2): max abs diff {diff}"

    # --- multi-tile check: batch = 260, block_b = 128 -> 3 grid steps + padding ---
    xb = jax.random.normal(ks[13], (260, 1, 11, 11), jnp.float32)
    outb = jax.block_until_ready(eca_forward(xb, packed, block_b=128))
    refb = jax.block_until_ready(
        reference_forward(xb, w1, b1, w2, b2, eca_w, eca_b, bn_scale, bn_shift,
                          fc_w, fc_b))
    assert outb.shape == (260, 1), f"bad output shape {outb.shape}"
    diffb = float(jnp.max(jnp.abs(outb - refb)))
    assert diffb < 5e-3, f"kernel/reference mismatch (B=260): max abs diff {diffb}"

    # --- default-tile check: batch = 300 exercises the >=2-tile heuristic ---
    xc = jax.random.normal(ks[13], (300, 1, 11, 11), jnp.float32)
    outc = jax.block_until_ready(eca_forward(xc, packed))
    refc = jax.block_until_ready(
        reference_forward(xc, w1, b1, w2, b2, eca_w, eca_b, bn_scale, bn_shift,
                          fc_w, fc_b))
    diffc = float(jnp.max(jnp.abs(outc - refc)))
    assert diffc < 5e-3, f"kernel/reference mismatch (B=300): max abs diff {diffc}"

    print("KERNEL_OK")
</pallas_src>

<mosaic_0001>
module attributes {stable_mosaic.version = 11 : i64} {
  func.func @eca_kernel(%arg0: i32, %arg1: memref<128x128xbf16, #tpu.memory_space<vmem>>, %arg2: memref<800x128xbf16, #tpu.memory_space<vmem>>, %arg3: memref<1024x800xbf16, #tpu.memory_space<vmem>>, %arg4: memref<1024x1xf32, #tpu.memory_space<vmem>>, %arg5: memref<16x1024xf32, #tpu.memory_space<vmem>>, %arg6: memref<1xf32, #tpu.memory_space<smem>>, %arg7: memref<1024x16xf32, #tpu.memory_space<vmem>>, %arg8: memref<1024x1xf32, #tpu.memory_space<vmem>>, %arg9: memref<8x1024xf32, #tpu.memory_space<vmem>>, %arg10: memref<1xf32, #tpu.memory_space<smem>>, %arg11: memref<8x128xf32, #tpu.memory_space<vmem>>) attributes {dimension_semantics = [#tpu.dimension_semantics<parallel>], iteration_bounds = array<i64: 1>, scalar_prefetch = 0 : i64, scratch_operands = 0 : i64, tpu.core_type = #tpu.core_type<tc>, window_params = [{transform_indices = @transform_0, window_bounds = array<i64: 128, 128>}, {pipeline_mode = #tpu.pipeline_mode<synchronous>, transform_indices = @transform_1, window_bounds = array<i64: 800, 128>}, {pipeline_mode = #tpu.pipeline_mode<synchronous>, transform_indices = @transform_2, window_bounds = array<i64: 1024, 800>}, {pipeline_mode = #tpu.pipeline_mode<synchronous>, transform_indices = @transform_3, window_bounds = array<i64: 1024, 1>}, {pipeline_mode = #tpu.pipeline_mode<synchronous>, transform_indices = @transform_4, window_bounds = array<i64: 16, 1024>}, {transform_indices = @transform_5, window_bounds = array<i64: 1>}, {pipeline_mode = #tpu.pipeline_mode<synchronous>, transform_indices = @transform_6, window_bounds = array<i64: 1024, 16>}, {pipeline_mode = #tpu.pipeline_mode<synchronous>, transform_indices = @transform_7, window_bounds = array<i64: 1024, 1>}, {pipeline_mode = #tpu.pipeline_mode<synchronous>, transform_indices = @transform_8, window_bounds = array<i64: 8, 1024>}, {transform_indices = @transform_9, window_bounds = array<i64: 1>}, {transform_indices = @transform_10, window_bounds = array<i64: 8, 128>}]} {
    %c0 = arith.constant 0 : index
    %c0_0 = arith.constant 0 : index
    %0 = vector.load %arg1[%c0, %c0_0] : memref<128x128xbf16, #tpu.memory_space<vmem>>, vector<128x128xbf16>
    %c0_1 = arith.constant 0 : index
    %c0_2 = arith.constant 0 : index
    %1 = vector.load %arg2[%c0_1, %c0_2] : memref<800x128xbf16, #tpu.memory_space<vmem>>, vector<800x128xbf16>
    %cst = arith.constant dense<0.000000e+00> : vector<800x128xf32>
    %2 = tpu.matmul %1, %0, %cst {dimension_numbers = #tpu.dot_dimension_numbers<[1], [0], [0], [1], [0, 0, 1, 1], [], []>} : vector<800x128xbf16>, vector<128x128xbf16>, vector<800x128xf32> -> vector<800x128xf32>
    %3 = arith.negf %2 : vector<800x128xf32>
    %4 = math.exp %3 : vector<800x128xf32>
    %cst_3 = arith.constant 1.000000e+00 : f32
    %5 = vector.broadcast %cst_3 : f32 to vector<800x128xf32>
    %6 = arith.addf %5, %4 : vector<800x128xf32>
    %7 = arith.divf %5, %6 : vector<800x128xf32>
    %c0_4 = arith.constant 0 : index
    %c0_5 = arith.constant 0 : index
    %8 = vector.load %arg3[%c0_4, %c0_5] : memref<1024x800xbf16, #tpu.memory_space<vmem>>, vector<1024x800xbf16>
    %9 = arith.truncf %7 : vector<800x128xf32> to vector<800x128xbf16>
    %cst_6 = arith.constant dense<0.000000e+00> : vector<1024x128xf32>
    %10 = tpu.matmul %8, %9, %cst_6 {dimension_numbers = #tpu.dot_dimension_numbers<[1], [0], [0], [1], [0, 0, 1, 1], [], []>} : vector<1024x800xbf16>, vector<800x128xbf16>, vector<1024x128xf32> -> vector<1024x128xf32>
    %c0_7 = arith.constant 0 : index
    %c0_8 = arith.constant 0 : index
    %11 = vector.load %arg4[%c0_7, %c0_8] : memref<1024x1xf32, #tpu.memory_space<vmem>>, vector<1024x1xf32>
    %12 = vector.broadcast %11 : vector<1024x1xf32> to vector<1024x128xf32>
    %13 = arith.addf %10, %12 : vector<1024x128xf32>
    %c0_9 = arith.constant 0 : index
    %c0_10 = arith.constant 0 : index
    %14 = vector.load %arg5[%c0_9, %c0_10] : memref<16x1024xf32, #tpu.memory_space<vmem>>, vector<16x1024xf32>
    %cst_11 = arith.constant dense<0.000000e+00> : vector<16x128xf32>
    %15 = tpu.matmul %14, %13, %cst_11 {dimension_numbers = #tpu.dot_dimension_numbers<[1], [0], [0], [1], [0, 0, 1, 1], [], []>} : vector<16x1024xf32>, vector<1024x128xf32>, vector<16x128xf32> -> vector<16x128xf32>
    %c0_12 = arith.constant 0 : index
    %16 = memref.load %arg6[%c0_12] : memref<1xf32, #tpu.memory_space<smem>>
    %17 = vector.broadcast %16 : f32 to vector<16x128xf32>
    %18 = arith.addf %15, %17 : vector<16x128xf32>
    %19 = arith.negf %18 : vector<16x128xf32>
    %20 = math.exp %19 : vector<16x128xf32>
    %cst_13 = arith.constant 1.000000e+00 : f32
    %21 = vector.broadcast %cst_13 : f32 to vector<16x128xf32>
    %22 = arith.addf %21, %20 : vector<16x128xf32>
    %23 = arith.divf %21, %22 : vector<16x128xf32>
    %c0_14 = arith.constant 0 : index
    %c0_15 = arith.constant 0 : index
    %24 = vector.load %arg7[%c0_14, %c0_15] : memref<1024x16xf32, #tpu.memory_space<vmem>>, vector<1024x16xf32>
    %cst_16 = arith.constant dense<0.000000e+00> : vector<1024x128xf32>
    %25 = tpu.matmul %24, %23, %cst_16 {dimension_numbers = #tpu.dot_dimension_numbers<[1], [0], [0], [1], [0, 0, 1, 1], [], []>} : vector<1024x16xf32>, vector<16x128xf32>, vector<1024x128xf32> -> vector<1024x128xf32>
    %26 = arith.mulf %13, %25 : vector<1024x128xf32>
    %c0_17 = arith.constant 0 : index
    %c0_18 = arith.constant 0 : index
    %27 = vector.load %arg8[%c0_17, %c0_18] : memref<1024x1xf32, #tpu.memory_space<vmem>>, vector<1024x1xf32>
    %28 = vector.broadcast %27 : vector<1024x1xf32> to vector<1024x128xf32>
    %29 = arith.addf %26, %28 : vector<1024x128xf32>
    %30 = arith.negf %29 : vector<1024x128xf32>
    %31 = math.exp %30 : vector<1024x128xf32>
    %cst_19 = arith.constant 1.000000e+00 : f32
    %32 = vector.broadcast %cst_19 : f32 to vector<1024x128xf32>
    %33 = arith.addf %32, %31 : vector<1024x128xf32>
    %34 = arith.divf %32, %33 : vector<1024x128xf32>
    %c0_20 = arith.constant 0 : index
    %c0_21 = arith.constant 0 : index
    %35 = vector.load %arg9[%c0_20, %c0_21] : memref<8x1024xf32, #tpu.memory_space<vmem>>, vector<8x1024xf32>
    %cst_22 = arith.constant dense<0.000000e+00> : vector<8x128xf32>
    %36 = tpu.matmul %35, %34, %cst_22 {dimension_numbers = #tpu.dot_dimension_numbers<[1], [0], [0], [1], [0, 0, 1, 1], [], []>} : vector<8x1024xf32>, vector<1024x128xf32>, vector<8x128xf32> -> vector<8x128xf32>
    %c0_23 = arith.constant 0 : index
    %37 = memref.load %arg10[%c0_23] : memref<1xf32, #tpu.memory_space<smem>>
    %38 = vector.broadcast %37 : f32 to vector<8x128xf32>
    %39 = arith.addf %36, %38 : vector<8x128xf32>
    %40 = arith.negf %39 : vector<8x128xf32>
    %41 = math.exp %40 : vector<8x128xf32>
    %cst_24 = arith.constant 1.000000e+00 : f32
    %42 = vector.broadcast %cst_24 : f32 to vector<8x128xf32>
    %43 = arith.addf %42, %41 : vector<8x128xf32>
    %44 = arith.divf %42, %43 : vector<8x128xf32>
    %c0_25 = arith.constant 0 : index
    %c0_26 = arith.constant 0 : index
    %45 = vector.load %arg11[%c0_25, %c0_26] : memref<8x128xf32, #tpu.memory_space<vmem>>, vector<8x128xf32>
    tpu.vector_store %arg11[%c0_25, %c0_26], %44 {strides = array<i32>} : memref<8x128xf32, #tpu.memory_space<vmem>>, vector<8x128xf32>,
    return
  }
  func.func @transform_0(%arg0: i32) -> (i32, i32) {
    %c0_i32 = arith.constant 0 : i32
    %c0_i32_0 = arith.constant 0 : i32
    return %c0_i32, %arg0 : i32, i32
  }
  func.func @transform_1(%arg0: i32) -> (i32, i32) {
    %c0_i32 = arith.constant 0 : i32
    %c0_i32_0 = arith.constant 0 : i32
    %c0_i32_1 = arith.constant 0 : i32
    return %c0_i32, %c0_i32_0 : i32, i32
  }
  func.func @transform_2(%arg0: i32) -> (i32, i32) {
    %c0_i32 = arith.constant 0 : i32
    %c0_i32_0 = arith.constant 0 : i32
    %c0_i32_1 = arith.constant 0 : i32
    return %c0_i32, %c0_i32_0 : i32, i32
  }
  func.func @transform_3(%arg0: i32) -> (i32, i32) {
    %c0_i32 = arith.constant 0 : i32
    %c0_i32_0 = arith.constant 0 : i32
    %c0_i32_1 = arith.constant 0 : i32
    return %c0_i32, %c0_i32_0 : i32, i32
  }
  func.func @transform_4(%arg0: i32) -> (i32, i32) {
    %c0_i32 = arith.constant 0 : i32
    %c0_i32_0 = arith.constant 0 : i32
    %c0_i32_1 = arith.constant 0 : i32
    return %c0_i32, %c0_i32_0 : i32, i32
  }
  func.func @transform_5(%arg0: i32) -> i32 {
    %c0_i32 = arith.constant 0 : i32
    %c0_i32_0 = arith.constant 0 : i32
    return %c0_i32 : i32
  }
  func.func @transform_6(%arg0: i32) -> (i32, i32) {
    %c0_i32 = arith.constant 0 : i32
    %c0_i32_0 = arith.constant 0 : i32
    %c0_i32_1 = arith.constant 0 : i32
    return %c0_i32, %c0_i32_0 : i32, i32
  }
  func.func @transform_7(%arg0: i32) -> (i32, i32) {
    %c0_i32 = arith.constant 0 : i32
    %c0_i32_0 = arith.constant 0 : i32
    %c0_i32_1 = arith.constant 0 : i32
    return %c0_i32, %c0_i32_0 : i32, i32
  }
  func.func @transform_8(%arg0: i32) -> (i32, i32) {
    %c0_i32 = arith.constant 0 : i32
    %c0_i32_0 = arith.constant 0 : i32
    %c0_i32_1 = arith.constant 0 : i32
    return %c0_i32, %c0_i32_0 : i32, i32
  }
  func.func @transform_9(%arg0: i32) -> i32 {
    %c0_i32 = arith.constant 0 : i32
    %c0_i32_0 = arith.constant 0 : i32
    return %c0_i32 : i32
  }
  func.func @transform_10(%arg0: i32) -> (i32, i32) {
    %c0_i32 = arith.constant 0 : i32
    %c0_i32_0 = arith.constant 0 : i32
    return %arg0, %c0_i32 : i32, i32
  }
}

</mosaic_0001>

<llo_original>
// kernel: tpu_custom_call.1
$region0: #{tpu_custom_call.1}
  #allocation0 [shape = 'u32[]', space=smem, size = 0x4, offset = 0x4, fixed_abs, tag = 'smem constant byte address 0x4 - core index']
  #allocation1 [shape = 'u32[144,128]{1,0:T(1,128)}', space=vmem, size = 0x12000, scoped, tag = 'internal scratch']
  #allocation2 [shape = 'f32[1]{0:T(128)S(6)}', space=smem, size = 0x200, scoped, tag = 'scoped memory for tpu_custom_call.1']
  #allocation3 [shape = 'f32[1]{0:T(128)S(6)}', space=smem, size = 0x200, scoped, tag = 'scoped memory for tpu_custom_call.1']
  %s0 = inlined_call_operand.vmem [shape: bf16[128,128], index: 0, kind: input, shape index: {}]
  %s1 = inlined_call_operand.vmem [shape: bf16[800,128], index: 1, kind: input, shape index: {}]
  %s2 = inlined_call_operand.vmem [shape: bf16[1024,800], index: 2, kind: input, shape index: {}]
  %s3 = inlined_call_operand.vmem [shape: f32[1024,1], index: 3, kind: input, shape index: {}]
  %s4 = inlined_call_operand.vmem [shape: f32[16,1024], index: 4, kind: input, shape index: {}]
  %s5 = inlined_call_operand.<no memory space> [shape: f32[1], index: 5, kind: input, shape index: {}]
  %s6 = inlined_call_operand.vmem [shape: f32[1024,16], index: 6, kind: input, shape index: {}]
  %s7 = inlined_call_operand.vmem [shape: f32[1024,1], index: 7, kind: input, shape index: {}]
  %s8 = inlined_call_operand.vmem [shape: f32[8,1024], index: 8, kind: input, shape index: {}]
  %s9 = inlined_call_operand.<no memory space> [shape: f32[1], index: 9, kind: input, shape index: {}]
  %s10 = inlined_call_operand.hbm [shape: f32[8,128], index: 10, kind: output, shape index: {}]
  %s11 = sld [smem:[#allocation0]]
  $region50: #{tpu_custom_call.1} parent=0
    _
  %s13 = ssub.s32 1, %s11
  %s14 = scalar_select 0, %s13, %s11
  %15 = sst [smem:[#allocation2]] %s5
  %16 = sst [smem:[#allocation3]] %s9
  $region1: #{tpu_custom_call.1} parent=0
    #allocation4 [shape = 'u8[4096]{0}', space=vmem, size = 0x1000, scoped, tag = 'output window, operand 0, single buffered']
    #allocation5 [shape = 's32[1]{0}', space=sflag, size = 0x4, scoped, tag = 'scoped memory for tpu_custom_call.1']
    %17 = vsyncpa [#allocation5], 0
    // Predicated region
    $region2: #{tpu_custom_call.1} parent=1 // pred_check
      _
    $region3: #{tpu_custom_call.1} parent=1 // pred_check_branch
      %19 = sbr.rel (0) target = $region5
    $region4: #{tpu_custom_call.1} parent=1 // pred_region
      _
    $region5: #{tpu_custom_call.1} parent=1 // pred_fallthru
      _
    // Predicated region
    $region6: #{tpu_custom_call.1} parent=1 // pred_check
      _
    $region7: #{tpu_custom_call.1} parent=1 // pred_check_branch
      %21 = sbr.rel (0) target = $region9
    $region8: #{tpu_custom_call.1} parent=1 // pred_region
      _
    $region9: #{tpu_custom_call.1} parent=1 // pred_fallthru
      _
    // Predicated region
    $region10: #{tpu_custom_call.1} parent=1 // pred_check
      _
    $region11: #{tpu_custom_call.1} parent=1 // pred_check_branch
      %23 = sbr.rel (0) target = $region13
    $region12: #{tpu_custom_call.1} parent=1 // pred_region
      _
    $region13: #{tpu_custom_call.1} parent=1 // pred_fallthru
      _
    // Predicated region
    $region14: #{tpu_custom_call.1} parent=1 // pred_check
      _
    $region15: #{tpu_custom_call.1} parent=1 // pred_check_branch
      %25 = sbr.rel (0) target = $region17
    $region16: #{tpu_custom_call.1} parent=1 // pred_region
      _
    $region17: #{tpu_custom_call.1} parent=1 // pred_fallthru
      _
    // Predicated region
    $region18: #{tpu_custom_call.1} parent=1 // pred_check
      _
    $region19: #{tpu_custom_call.1} parent=1 // pred_check_branch
      %27 = sbr.rel (0) target = $region21
    $region20: #{tpu_custom_call.1} parent=1 // pred_region
      _
    $region21: #{tpu_custom_call.1} parent=1 // pred_fallthru
      _
    // Predicated region
    $region22: #{tpu_custom_call.1} parent=1 // pred_check
      _
    $region23: #{tpu_custom_call.1} parent=1 // pred_check_branch
      %29 = sbr.rel (0) target = $region25
    $region24: #{tpu_custom_call.1} parent=1 // pred_region
      _
    $region25: #{tpu_custom_call.1} parent=1 // pred_fallthru
      _
    // Predicated region
    $region26: #{tpu_custom_call.1} parent=1 // pred_check
      _
    $region27: #{tpu_custom_call.1} parent=1 // pred_check_branch
      %31 = sbr.rel (0) target = $region29
    $region28: #{tpu_custom_call.1} parent=1 // pred_region
      _
    $region29: #{tpu_custom_call.1} parent=1 // pred_fallthru
      _
    // Predicated region
    $region30: #{tpu_custom_call.1} parent=1 // pred_check
      _
    $region31: #{tpu_custom_call.1} parent=1 // pred_check_branch
      %33 = sbr.rel (0) target = $region33
    $region32: #{tpu_custom_call.1} parent=1 // pred_region
      _
    $region33: #{tpu_custom_call.1} parent=1 // pred_fallthru
      _
    // Predicated region
    $region34: #{tpu_custom_call.1} parent=1 // pred_check
      _
    $region35: #{tpu_custom_call.1} parent=1 // pred_check_branch
      %35 = sbr.rel (0) target = $region37
    $region36: #{tpu_custom_call.1} parent=1 // pred_region
      _
    $region37: #{tpu_custom_call.1} parent=1 // pred_fallthru
      _
    // Predicated region
    $region38: #{tpu_custom_call.1} parent=1 // pred_check
      _
    $region39: #{tpu_custom_call.1} parent=1 // pred_check_branch
      %37 = sbr.rel (0) target = $region41
    $region40: #{tpu_custom_call.1} parent=1 // pred_region
      _
    $region41: #{tpu_custom_call.1} parent=1 // pred_fallthru
      _
    %v39 = vld [vmem:[%s0] sm:$0xf]
    %v40 = vld [vmem:[%s0 + $0x4] sm:$0xf]
    %v41 = vld [vmem:[%s0 + $0x8] sm:$0xf]
    %v42 = vld [vmem:[%s0 + $0xc] sm:$0xf]
    %v43 = vld [vmem:[%s0 + $0x10] sm:$0xf]
    %v44 = vld [vmem:[%s0 + $0x14] sm:$0xf]
    %v45 = vld [vmem:[%s0 + $0x18] sm:$0xf]
    %v46 = vld [vmem:[%s0 + $0x1c] sm:$0xf]
    %v47 = vld [vmem:[%s0 + $0x20] sm:$0xf]
    %v48 = vld [vmem:[%s0 + $0x24] sm:$0xf]
    %v49 = vld [vmem:[%s0 + $0x28] sm:$0xf]
    %v50 = vld [vmem:[%s0 + $0x2c] sm:$0xf]
    %v51 = vld [vmem:[%s0 + $0x30] sm:$0xf]
    %v52 = vld [vmem:[%s0 + $0x34] sm:$0xf]
    %v53 = vld [vmem:[%s0 + $0x38] sm:$0xf]
    %v54 = vld [vmem:[%s0 + $0x3c] sm:$0xf]
    %v55 = vld [vmem:[%s1] sm:$0xf]
    %v56 = vld [vmem:[%s1 + $0x4] sm:$0xf]
    %v57 = vld [vmem:[%s1 + $0x8] sm:$0xf]
    %v58 = vld [vmem:[%s1 + $0xc] sm:$0xf]
    %v59 = vld [vmem:[%s1 + $0x10] sm:$0xf]
    %v60 = vld [vmem:[%s1 + $0x14] sm:$0xf]
    %v61 = vld [vmem:[%s1 + $0x18] sm:$0xf]
    %v62 = vld [vmem:[%s1 + $0x1c] sm:$0xf]
    %v63 = vld [vmem:[%s1 + $0x20] sm:$0xf]
    %v64 = vld [vmem:[%s1 + $0x24] sm:$0xf]
    %v65 = vld [vmem:[%s1 + $0x28] sm:$0xf]
    %v66 = vld [vmem:[%s1 + $0x2c] sm:$0xf]
    %v67 = vld [vmem:[%s1 + $0x30] sm:$0xf]
    %v68 = vld [vmem:[%s1 + $0x34] sm:$0xf]
    %v69 = vld [vmem:[%s1 + $0x38] sm:$0xf]
    %v70 = vld [vmem:[%s1 + $0x3c] sm:$0xf]
    %v71 = vld [vmem:[%s1 + $0x40] sm:$0xf]
    %v72 = vld [vmem:[%s1 + $0x44] sm:$0xf]
    %v73 = vld [vmem:[%s1 + $0x48] sm:$0xf]
    %v74 = vld [vmem:[%s1 + $0x4c] sm:$0xf]
    %v75 = vld [vmem:[%s1 + $0x50] sm:$0xf]
    %v76 = vld [vmem:[%s1 + $0x54] sm:$0xf]
    %v77 = vld [vmem:[%s1 + $0x58] sm:$0xf]
    %v78 = vld [vmem:[%s1 + $0x5c] sm:$0xf]
    %v79 = vld [vmem:[%s1 + $0x60] sm:$0xf]
    %v80 = vld [vmem:[%s1 + $0x64] sm:$0xf]
    %v81 = vld [vmem:[%s1 + $0x68] sm:$0xf]
    %v82 = vld [vmem:[%s1 + $0x6c] sm:$0xf]
    %v83 = vld [vmem:[%s1 + $0x70] sm:$0xf]
    %v84 = vld [vmem:[%s1 + $0x74] sm:$0xf]
    %v85 = vld [vmem:[%s1 + $0x78] sm:$0xf]
    %v86 = vld [vmem:[%s1 + $0x7c] sm:$0xf]
    %v87 = vld [vmem:[%s1 + $0x80] sm:$0xf]
    %v88 = vld [vmem:[%s1 + $0x84] sm:$0xf]
    %v89 = vld [vmem:[%s1 + $0x88] sm:$0xf]
    %v90 = vld [vmem:[%s1 + $0x8c] sm:$0xf]
    %v91 = vld [vmem:[%s1 + $0x90] sm:$0xf]
    %v92 = vld [vmem:[%s1 + $0x94] sm:$0xf]
    %v93 = vld [vmem:[%s1 + $0x98] sm:$0xf]
    %v94 = vld [vmem:[%s1 + $0x9c] sm:$0xf]
    %v95 = vld [vmem:[%s1 + $0xa0] sm:$0xf]
    %v96 = vld [vmem:[%s1 + $0xa4] sm:$0xf]
    %v97 = vld [vmem:[%s1 + $0xa8] sm:$0xf]
    %v98 = vld [vmem:[%s1 + $0xac] sm:$0xf]
    %v99 = vld [vmem:[%s1 + $0xb0] sm:$0xf]
    %v100 = vld [vmem:[%s1 + $0xb4] sm:$0xf]
    %v101 = vld [vmem:[%s1 + $0xb8] sm:$0xf]
    %v102 = vld [vmem:[%s1 + $0xbc] sm:$0xf]
    %v103 = vld [vmem:[%s1 + $0xc0] sm:$0xf]
    %v104 = vld [vmem:[%s1 + $0xc4] sm:$0xf]
    %v105 = vld [vmem:[%s1 + $0xc8] sm:$0xf]
    %v106 = vld [vmem:[%s1 + $0xcc] sm:$0xf]
    %v107 = vld [vmem:[%s1 + $0xd0] sm:$0xf]
    %v108 = vld [vmem:[%s1 + $0xd4] sm:$0xf]
    %v109 = vld [vmem:[%s1 + $0xd8] sm:$0xf]
    %v110 = vld [vmem:[%s1 + $0xdc] sm:$0xf]
    %v111 = vld [vmem:[%s1 + $0xe0] sm:$0xf]
    %v112 = vld [vmem:[%s1 + $0xe4] sm:$0xf]
    %v113 = vld [vmem:[%s1 + $0xe8] sm:$0xf]
    %v114 = vld [vmem:[%s1 + $0xec] sm:$0xf]
    %v115 = vld [vmem:[%s1 + $0xf0] sm:$0xf]
    %v116 = vld [vmem:[%s1 + $0xf4] sm:$0xf]
    %v117 = vld [vmem:[%s1 + $0xf8] sm:$0xf]
    %v118 = vld [vmem:[%s1 + $0xfc] sm:$0xf]
    %v119 = vld [vmem:[%s1 + $0x100] sm:$0xf]
    %v120 = vld [vmem:[%s1 + $0x104] sm:$0xf]
    %v121 = vld [vmem:[%s1 + $0x108] sm:$0xf]
    %v122 = vld [vmem:[%s1 + $0x10c] sm:$0xf]
    %v123 = vld [vmem:[%s1 + $0x110] sm:$0xf]
    %v124 = vld [vmem:[%s1 + $0x114] sm:$0xf]
    %v125 = vld [vmem:[%s1 + $0x118] sm:$0xf]
    %v126 = vld [vmem:[%s1 + $0x11c] sm:$0xf]
    %v127 = vld [vmem:[%s1 + $0x120] sm:$0xf]
    %v128 = vld [vmem:[%s1 + $0x124] sm:$0xf]
    %v129 = vld [vmem:[%s1 + $0x128] sm:$0xf]
    %v130 = vld [vmem:[%s1 + $0x12c] sm:$0xf]
    %v131 = vld [vmem:[%s1 + $0x130] sm:$0xf]
    %v132 = vld [vmem:[%s1 + $0x134] sm:$0xf]
    %v133 = vld [vmem:[%s1 + $0x138] sm:$0xf]
    %v134 = vld [vmem:[%s1 + $0x13c] sm:$0xf]
    %v135 = vld [vmem:[%s1 + $0x140] sm:$0xf]
    %v136 = vld [vmem:[%s1 + $0x144] sm:$0xf]
    %v137 = vld [vmem:[%s1 + $0x148] sm:$0xf]
    %v138 = vld [vmem:[%s1 + $0x14c] sm:$0xf]
    %v139 = vld [vmem:[%s1 + $0x150] sm:$0xf]
    %v140 = vld [vmem:[%s1 + $0x154] sm:$0xf]
    %v141 = vld [vmem:[%s1 + $0x158] sm:$0xf]
    %v142 = vld [vmem:[%s1 + $0x15c] sm:$0xf]
    %v143 = vld [vmem:[%s1 + $0x160] sm:$0xf]
    %v144 = vld [vmem:[%s1 + $0x164] sm:$0xf]
    %v145 = vld [vmem:[%s1 + $0x168] sm:$0xf]
    %v146 = vld [vmem:[%s1 + $0x16c] sm:$0xf]
    %v147 = vld [vmem:[%s1 + $0x170] sm:$0xf]
    %v148 = vld [vmem:[%s1 + $0x174] sm:$0xf]
    %v149 = vld [vmem:[%s1 + $0x178] sm:$0xf]
    %v150 = vld [vmem:[%s1 + $0x17c] sm:$0xf]
    %v151 = vld [vmem:[%s1 + $0x180] sm:$0xf]
    %v152 = vld [vmem:[%s1 + $0x184] sm:$0xf]
    %v153 = vld [vmem:[%s1 + $0x188] sm:$0xf]
    %v154 = vld [vmem:[%s1 + $0x18c] sm:$0xf]
    %v255 = vunpack.c.l.b16 %v55
    %v256 = vunpack.c.l.b16 %v56
    %v257 = vunpack.c.l.b16 %v57
    %v258 = vunpack.c.l.b16 %v58
    %v259 = vunpack.c.l.b16 %v59
    %v260 = vunpack.c.l.b16 %v60
    %v261 = vunpack.c.l.b16 %v61
    %v262 = vunpack.c.l.b16 %v62
    %v263 = vunpack.c.l.b16 %v63
    %v264 = vunpack.c.l.b16 %v64
    %v265 = vunpack.c.l.b16 %v65
    %v266 = vunpack.c.l.b16 %v66
    %v267 = vunpack.c.l.b16 %v67
    %v268 = vunpack.c.l.b16 %v68
    %v269 = vunpack.c.l.b16 %v69
    %v270 = vunpack.c.l.b16 %v70
    %v271 = vunpack.c.l.b16 %v71
    %v272 = vunpack.c.l.b16 %v72
    %v273 = vunpack.c.l.b16 %v73
    %v274 = vunpack.c.l.b16 %v74
    %v275 = vunpack.c.l.b16 %v75
    %v276 = vunpack.c.l.b16 %v76
    %v277 = vunpack.c.l.b16 %v77
    %v278 = vunpack.c.l.b16 %v78
    %v279 = vunpack.c.l.b16 %v79
    %v280 = vunpack.c.l.b16 %v80
    %v281 = vunpack.c.l.b16 %v81
    %v282 = vunpack.c.l.b16 %v82
    %v283 = vunpack.c.l.b16 %v83
    %v284 = vunpack.c.l.b16 %v84
    %v285 = vunpack.c.l.b16 %v85
    %v286 = vunpack.c.l.b16 %v86
    %v287 = vunpack.c.l.b16 %v87
    %v288 = vunpack.c.l.b16 %v88
    %v289 = vunpack.c.l.b16 %v89
    %v290 = vunpack.c.l.b16 %v90
    %v291 = vunpack.c.l.b16 %v91
    %v292 = vunpack.c.l.b16 %v92
    %v293 = vunpack.c.l.b16 %v93
    %v294 = vunpack.c.l.b16 %v94
    %v295 = vunpack.c.l.b16 %v95
    %v296 = vunpack.c.l.b16 %v96
    %v297 = vunpack.c.l.b16 %v97
    %v298 = vunpack.c.l.b16 %v98
    %v299 = vunpack.c.l.b16 %v99
    %v300 = vunpack.c.l.b16 %v100
    %v301 = vunpack.c.l.b16 %v101
    %v302 = vunpack.c.l.b16 %v102
    %v303 = vunpack.c.l.b16 %v103
    %v304 = vunpack.c.l.b16 %v104
    %v305 = vunpack.c.l.b16 %v105
    %v306 = vunpack.c.l.b16 %v106
    %v307 = vunpack.c.l.b16 %v107
    %v308 = vunpack.c.l.b16 %v108
    %v309 = vunpack.c.l.b16 %v109
    %v310 = vunpack.c.l.b16 %v110
    %v311 = vunpack.c.l.b16 %v111
    %v312 = vunpack.c.l.b16 %v112
    %v313 = vunpack.c.l.b16 %v113
    %v314 = vunpack.c.l.b16 %v114
    %v315 = vunpack.c.l.b16 %v115
    %v316 = vunpack.c.l.b16 %v116
    %v317 = vunpack.c.l.b16 %v117
    %v318 = vunpack.c.l.b16 %v118
    %v319 = vunpack.c.l.b16 %v119
    %v320 = vunpack.c.l.b16 %v120
    %v321 = vunpack.c.l.b16 %v121
    %v322 = vunpack.c.l.b16 %v122
    %v323 = vunpack.c.l.b16 %v123
    %v324 = vunpack.c.l.b16 %v124
    %v325 = vunpack.c.l.b16 %v125
    %v326 = vunpack.c.l.b16 %v126
    %v327 = vunpack.c.l.b16 %v127
    %v328 = vunpack.c.l.b16 %v128
    %v329 = vunpack.c.l.b16 %v129
    %v330 = vunpack.c.l.b16 %v130
    %v331 = vunpack.c.l.b16 %v131
    %v332 = vunpack.c.l.b16 %v132
    %v333 = vunpack.c.l.b16 %v133
    %v334 = vunpack.c.l.b16 %v134
    %v335 = vunpack.c.l.b16 %v135
    %v336 = vunpack.c.l.b16 %v136
    %v337 = vunpack.c.l.b16 %v137
    %v338 = vunpack.c.l.b16 %v138
    %v339 = vunpack.c.l.b16 %v139
    %v340 = vunpack.c.l.b16 %v140
    %v341 = vunpack.c.l.b16 %v141
    %v342 = vunpack.c.l.b16 %v142
    %v343 = vunpack.c.l.b16 %v143
    %v344 = vunpack.c.l.b16 %v144
    %v345 = vunpack.c.l.b16 %v145
    %v346 = vunpack.c.l.b16 %v146
    %v347 = vunpack.c.l.b16 %v147
    %v348 = vunpack.c.l.b16 %v148
    %v349 = vunpack.c.l.b16 %v149
    %v350 = vunpack.c.l.b16 %v150
    %v351 = vunpack.c.l.b16 %v151
    %v352 = vunpack.c.l.b16 %v152
    %v353 = vunpack.c.l.b16 %v153
    %v354 = vunpack.c.l.b16 %v154
    %v355 = vpack.c.b16 %v256, %v255
    %v356 = vpack.c.b16 %v258, %v257
    %v357 = vpack.c.b16 %v260, %v259
    %v358 = vpack.c.b16 %v262, %v261
    %v359 = vpack.c.b16 %v264, %v263
    %v360 = vpack.c.b16 %v266, %v265
    %v361 = vpack.c.b16 %v268, %v267
    %v362 = vpack.c.b16 %v270, %v269
    %v363 = vpack.c.b16 %v272, %v271
    %v364 = vpack.c.b16 %v274, %v273
    %v365 = vpack.c.b16 %v276, %v275
    %v366 = vpack.c.b16 %v278, %v277
    %v367 = vpack.c.b16 %v280, %v279
    %v368 = vpack.c.b16 %v282, %v281
    %v369 = vpack.c.b16 %v284, %v283
    %v370 = vpack.c.b16 %v286, %v285
    %v371 = vpack.c.b16 %v288, %v287
    %v372 = vpack.c.b16 %v290, %v289
    %v373 = vpack.c.b16 %v292, %v291
    %v374 = vpack.c.b16 %v294, %v293
    %v375 = vpack.c.b16 %v296, %v295
    %v376 = vpack.c.b16 %v298, %v297
    %v377 = vpack.c.b16 %v300, %v299
    %v378 = vpack.c.b16 %v302, %v301
    %v379 = vpack.c.b16 %v304, %v303
    %v380 = vpack.c.b16 %v306, %v305
    %v381 = vpack.c.b16 %v308, %v307
    %v382 = vpack.c.b16 %v310, %v309
    %v383 = vpack.c.b16 %v312, %v311
    %v384 = vpack.c.b16 %v314, %v313
    %v385 = vpack.c.b16 %v316, %v315
    %v386 = vpack.c.b16 %v318, %v317
    %v387 = vpack.c.b16 %v320, %v319
    %v388 = vpack.c.b16 %v322, %v321
    %v389 = vpack.c.b16 %v324, %v323
    %v390 = vpack.c.b16 %v326, %v325
    %v391 = vpack.c.b16 %v328, %v327
    %v392 = vpack.c.b16 %v330, %v329
    %v393 = vpack.c.b16 %v332, %v331
    %v394 = vpack.c.b16 %v334, %v333
    %v395 = vpack.c.b16 %v336, %v335
    %v396 = vpack.c.b16 %v338, %v337
    %v397 = vpack.c.b16 %v340, %v339
    %v398 = vpack.c.b16 %v342, %v341
    %v399 = vpack.c.b16 %v344, %v343
    %v400 = vpack.c.b16 %v346, %v345
    %v401 = vpack.c.b16 %v348, %v347
    %v402 = vpack.c.b16 %v350, %v349
    %v403 = vpack.c.b16 %v352, %v351
    %v404 = vpack.c.b16 %v354, %v353
    %v471 = vunpack.c.l.b16 %v39
    %v472 = vunpack.c.l.b16 %v40
    %v473 = vunpack.c.l.b16 %v41
    %v474 = vunpack.c.l.b16 %v42
    %v475 = vunpack.c.l.b16 %v43
    %v476 = vunpack.c.l.b16 %v44
    %v477 = vunpack.c.l.b16 %v45
    %v478 = vunpack.c.l.b16 %v46
    %v479 = vunpack.c.l.b16 %v47
    %v480 = vunpack.c.l.b16 %v48
    %v481 = vunpack.c.l.b16 %v49
    %v482 = vunpack.c.l.b16 %v50
    %v483 = vunpack.c.l.b16 %v51
    %v484 = vunpack.c.l.b16 %v52
    %v485 = vunpack.c.l.b16 %v53
    %v486 = vunpack.c.l.b16 %v54
    %v487 = vpack.c.b16 %v472, %v471
    %v488 = vpack.c.b16 %v474, %v473
    %v489 = vpack.c.b16 %v476, %v475
    %v490 = vpack.c.b16 %v478, %v477
    %v491 = vpack.c.b16 %v480, %v479
    %v492 = vpack.c.b16 %v482, %v481
    %v493 = vpack.c.b16 %v484, %v483
    %v494 = vpack.c.b16 %v486, %v485
    %503 = vmatprep.subr.bf16.mxu0 0
    %504 = vmatpush1.bf16.msra.mxu0 %v487
    %505 = vmatprep.subr.bf16.mxu0 0
    %506 = vmatpush1.bf16.msra.mxu0 %v488
    %507 = vmatprep.subr.bf16.mxu0 0
    %508 = vmatpush1.bf16.msra.mxu0 %v489
    %509 = vmatprep.subr.bf16.mxu0 0
    %510 = vmatpush1.bf16.msra.mxu0 %v490
    %511 = vmatprep.subr.bf16.mxu0 0
    %512 = vmatpush1.bf16.msra.mxu0 %v491
    %513 = vmatprep.subr.bf16.mxu0 0
    %514 = vmatpush1.bf16.msra.mxu0 %v492
    %515 = vmatprep.subr.bf16.mxu0 0
    %516 = vmatpush1.bf16.msra.mxu0 %v493
    %517 = vmatprep.subr.bf16.mxu0 0
    %518 = vmatpush1.bf16.msra.mxu0 %v494
    %519 = vmatprep.subr.bf16.mxu0 0
    %520 = vmatpush1.bf16.msra.mxu0 0
    %521 = vmatprep.subr.bf16.mxu0 0
    %522 = vmatpush1.bf16.msra.mxu0 0
    %523 = vmatprep.subr.bf16.mxu0 0
    %524 = vmatpush1.bf16.msra.mxu0 0
    %525 = vmatprep.subr.bf16.mxu0 0
    %526 = vmatpush1.bf16.msra.mxu0 0
    %527 = vmatprep.subr.bf16.mxu0 0
    %528 = vmatpush1.bf16.msra.mxu0 0
    %529 = vmatprep.subr.bf16.mxu0 0
    %530 = vmatpush1.bf16.msra.mxu0 0
    %531 = vmatprep.subr.bf16.mxu0 0
    %532 = vmatpush1.bf16.msra.mxu0 0
    %533 = vmatprep.subr.bf16.mxu0 0
    %534 = vmatpush1.bf16.msra.mxu0 0
    %535 = vmatprep.mubr.bf16.mxu0 0
    %536 = vmatmul.mubr.bf16.gmra.mrb[0].mxu0 %v355
    %v537 = vpop.f32.mrb[0].mxu0
    %v538 = vadd.f32 0.0, %v537
    %v539 = vpop.f32.mrb[0].mxu0
    %v540 = vpop.f32.mrb[0].mxu0
    %v541 = vadd.f32 0.0, %v540
    %v542 = vpop.f32.mrb[0].mxu0
    %543 = vmatprep.mubr.bf16.mxu0 0
    %544 = vmatmul.mubr.bf16.gmra.mrb[0].mxu0 %v356
    %v545 = vpop.f32.mrb[0].mxu0
    %v546 = vadd.f32 0.0, %v545
    %v547 = vpop.f32.mrb[0].mxu0
    %v548 = vpop.f32.mrb[0].mxu0
    %v549 = vadd.f32 0.0, %v548
    %v550 = vpop.f32.mrb[0].mxu0
    %551 = vmatprep.mubr.bf16.mxu0 0
    %552 = vmatmul.mubr.bf16.gmra.mrb[0].mxu0 %v357
    %v553 = vpop.f32.mrb[0].mxu0
    %v554 = vadd.f32 0.0, %v553
    %v555 = vpop.f32.mrb[0].mxu0
    %v556 = vpop.f32.mrb[0].mxu0
    %v557 = vadd.f32 0.0, %v556
    %v558 = vpop.f32.mrb[0].mxu0
    %559 = vmatprep.mubr.bf16.mxu0 0
    %560 = vmatmul.mubr.bf16.gmra.mrb[0].mxu0 %v358
    %v561 = vpop.f32.mrb[0].mxu0
    %v562 = vadd.f32 0.0, %v561
    %v563 = vpop.f32.mrb[0].mxu0
    %v564 = vpop.f32.mrb[0].mxu0
    %v565 = vadd.f32 0.0, %v564
    %v566 = vpop.f32.mrb[0].mxu0
    %567 = vmatprep.mubr.bf16.mxu0 0
    %568 = vmatmul.mubr.bf16.gmra.mrb[0].mxu0 %v359
    %v569 = vpop.f32.mrb[0].mxu0
    %v570 = vadd.f32 0.0, %v569
    %v571 = vpop.f32.mrb[0].mxu0
    %v572 = vpop.f32.mrb[0].mxu0
    %v573 = vadd.f32 0.0, %v572
    %v574 = vpop.f32.mrb[0].mxu0
    %575 = vmatprep.mubr.bf16.mxu0 0
    %576 = vmatmul.mubr.bf16.gmra.mrb[0].mxu0 %v360
    %v577 = vpop.f32.mrb[0].mxu0
    %v578 = vadd.f32 0.0, %v577
    %v579 = vpop.f32.mrb[0].mxu0
    %v580 = vpop.f32.mrb[0].mxu0
    %v581 = vadd.f32 0.0, %v580
    %v582 = vpop.f32.mrb[0].mxu0
    %583 = vmatprep.mubr.bf16.mxu0 0
    %584 = vmatmul.mubr.bf16.gmra.mrb[0].mxu0 %v361
    %v585 = vpop.f32.mrb[0].mxu0
    %v586 = vadd.f32 0.0, %v585
    %v587 = vpop.f32.mrb[0].mxu0
    %v588 = vpop.f32.mrb[0].mxu0
    %v589 = vadd.f32 0.0, %v588
    %v590 = vpop.f32.mrb[0].mxu0
    %591 = vmatprep.mubr.bf16.mxu0 0
    %592 = vmatmul.mubr.bf16.gmra.mrb[0].mxu0 %v362
    %v593 = vpop.f32.mrb[0].mxu0
    %v594 = vadd.f32 0.0, %v593
    %v595 = vpop.f32.mrb[0].mxu0
    %v596 = vpop.f32.mrb[0].mxu0
    %v597 = vadd.f32 0.0, %v596
    %v598 = vpop.f32.mrb[0].mxu0
    %599 = vmatprep.mubr.bf16.mxu0 0
    %600 = vmatmul.mubr.bf16.gmra.mrb[0].mxu0 %v363
    %v601 = vpop.f32.mrb[0].mxu0
    %v602 = vadd.f32 0.0, %v601
    %v603 = vpop.f32.mrb[0].mxu0
    %v604 = vpop.f32.mrb[0].mxu0
    %v605 = vadd.f32 0.0, %v604
    %v606 = vpop.f32.mrb[0].mxu0
    %607 = vmatprep.mubr.bf16.mxu0 0
    %608 = vmatmul.mubr.bf16.gmra.mrb[0].mxu0 %v364
    %v609 = vpop.f32.mrb[0].mxu0
    %v610 = vadd.f32 0.0, %v609
    %v611 = vpop.f32.mrb[0].mxu0
    %v612 = vpop.f32.mrb[0].mxu0
    %v613 = vadd.f32 0.0, %v612
    %v614 = vpop.f32.mrb[0].mxu0
    %615 = vmatprep.mubr.bf16.mxu0 0
    %616 = vmatmul.mubr.bf16.gmra.mrb[0].mxu0 %v365
    %v617 = vpop.f32.mrb[0].mxu0
    %v618 = vadd.f32 0.0, %v617
    %v619 = vpop.f32.mrb[0].mxu0
    %v620 = vpop.f32.mrb[0].mxu0
    %v621 = vadd.f32 0.0, %v620
    %v622 = vpop.f32.mrb[0].mxu0
    %623 = vmatprep.mubr.bf16.mxu0 0
    %624 = vmatmul.mubr.bf16.gmra.mrb[0].mxu0 %v366
    %v625 = vpop.f32.mrb[0].mxu0
    %v626 = vadd.f32 0.0, %v625
    %v627 = vpop.f32.mrb[0].mxu0
    %v628 = vpop.f32.mrb[0].mxu0
    %v629 = vadd.f32 0.0, %v628
    %v630 = vpop.f32.mrb[0].mxu0
    %631 = vmatprep.mubr.bf16.mxu0 0
    %632 = vmatmul.mubr.bf16.gmra.mrb[0].mxu0 %v367
    %v633 = vpop.f32.mrb[0].mxu0
    %v634 = vadd.f32 0.0, %v633
    %v635 = vpop.f32.mrb[0].mxu0
    %v636 = vpop.f32.mrb[0].mxu0
    %v637 = vadd.f32 0.0, %v636
    %v638 = vpop.f32.mrb[0].mxu0
    %639 = vmatprep.mubr.bf16.mxu0 0
    %640 = vmatmul.mubr.bf16.gmra.mrb[0].mxu0 %v368
    %v641 = vpop.f32.mrb[0].mxu0
    %v642 = vadd.f32 0.0, %v641
    %v643 = vpop.f32.mrb[0].mxu0
    %v644 = vpop.f32.mrb[0].mxu0
    %v645 = vadd.f32 0.0, %v644
    %v646 = vpop.f32.mrb[0].mxu0
    %647 = vmatprep.mubr.bf16.mxu0 0
    %648 = vmatmul.mubr.bf16.gmra.mrb[0].mxu0 %v369
    %v649 = vpop.f32.mrb[0].mxu0
    %v650 = vadd.f32 0.0, %v649
    %v651 = vpop.f32.mrb[0].mxu0
    %v652 = vpop.f32.mrb[0].mxu0
    %v653 = vadd.f32 0.0, %v652
    %v654 = vpop.f32.mrb[0].mxu0
    %655 = vmatprep.mubr.bf16.mxu0 0
    %656 = vmatmul.mubr.bf16.gmra.mrb[0].mxu0 %v370
    %v657 = vpop.f32.mrb[0].mxu0
    %v658 = vadd.f32 0.0, %v657
    %v659 = vpop.f32.mrb[0].mxu0
    %v660 = vpop.f32.mrb[0].mxu0
    %v661 = vadd.f32 0.0, %v660
    %v662 = vpop.f32.mrb[0].mxu0
    %663 = vmatprep.mubr.bf16.mxu0 0
    %664 = vmatmul.mubr.bf16.gmra.mrb[0].mxu0 %v371
    %v665 = vpop.f32.mrb[0].mxu0
    %v666 = vadd.f32 0.0, %v665
    %v667 = vpop.f32.mrb[0].mxu0
    %v668 = vpop.f32.mrb[0].mxu0
    %v669 = vadd.f32 0.0, %v668
    %v670 = vpop.f32.mrb[0].mxu0
    %671 = vmatprep.mubr.bf16.mxu0 0
    %672 = vmatmul.mubr.bf16.gmra.mrb[0].mxu0 %v372
    %v673 = vpop.f32.mrb[0].mxu0
    %v674 = vadd.f32 0.0, %v673
    %v675 = vpop.f32.mrb[0].mxu0
    %v676 = vpop.f32.mrb[0].mxu0
    %v677 = vadd.f32 0.0, %v676
    %v678 = vpop.f32.mrb[0].mxu0
    %679 = vmatprep.mubr.bf16.mxu0 0
    %680 = vmatmul.mubr.bf16.gmra.mrb[0].mxu0 %v373
    %v681 = vpop.f32.mrb[0].mxu0
    %v682 = vadd.f32 0.0, %v681
    %v683 = vpop.f32.mrb[0].mxu0
    %v684 = vpop.f32.mrb[0].mxu0
    %v685 = vadd.f32 0.0, %v684
    %v686 = vpop.f32.mrb[0].mxu0
    %687 = vmatprep.mubr.bf16.mxu0 0
    %688 = vmatmul.mubr.bf16.gmra.mrb[0].mxu0 %v374
    %v689 = vpop.f32.mrb[0].mxu0
    %v690 = vadd.f32 0.0, %v689
    %v691 = vpop.f32.mrb[0].mxu0
    %v692 = vpop.f32.mrb[0].mxu0
    %v693 = vadd.f32 0.0, %v692
    %v694 = vpop.f32.mrb[0].mxu0
    %695 = vmatprep.mubr.bf16.mxu0 0
    %696 = vmatmul.mubr.bf16.gmra.mrb[0].mxu0 %v375
    %v697 = vpop.f32.mrb[0].mxu0
    %v698 = vadd.f32 0.0, %v697
    %v699 = vpop.f32.mrb[0].mxu0
    %v700 = vpop.f32.mrb[0].mxu0
    %v701 = vadd.f32 0.0, %v700
    %v702 = vpop.f32.mrb[0].mxu0
    %703 = vmatprep.mubr.bf16.mxu0 0
    %704 = vmatmul.mubr.bf16.gmra.mrb[0].mxu0 %v376
    %v705 = vpop.f32.mrb[0].mxu0
    %v706 = vadd.f32 0.0, %v705
    %v707 = vpop.f32.mrb[0].mxu0
    %v708 = vpop.f32.mrb[0].mxu0
    %v709 = vadd.f32 0.0, %v708
    %v710 = vpop.f32.mrb[0].mxu0
    %711 = vmatprep.mubr.bf16.mxu0 0
    %712 = vmatmul.mubr.bf16.gmra.mrb[0].mxu0 %v377
    %v713 = vpop.f32.mrb[0].mxu0
    %v714 = vadd.f32 0.0, %v713
    %v715 = vpop.f32.mrb[0].mxu0
    %v716 = vpop.f32.mrb[0].mxu0
    %v717 = vadd.f32 0.0, %v716
    %v718 = vpop.f32.mrb[0].mxu0
    %719 = vmatprep.mubr.bf16.mxu0 0
    %720 = vmatmul.mubr.bf16.gmra.mrb[0].mxu0 %v378
    %v721 = vpop.f32.mrb[0].mxu0
    %v722 = vadd.f32 0.0, %v721
    %v723 = vpop.f32.mrb[0].mxu0
    %v724 = vpop.f32.mrb[0].mxu0
    %v725 = vadd.f32 0.0, %v724
    %v726 = vpop.f32.mrb[0].mxu0
    %727 = vmatprep.mubr.bf16.mxu0 0
    %728 = vmatmul.mubr.bf16.gmra.mrb[0].mxu0 %v379
    %v729 = vpop.f32.mrb[0].mxu0
    %v730 = vadd.f32 0.0, %v729
    %v731 = vpop.f32.mrb[0].mxu0
    %v732 = vpop.f32.mrb[0].mxu0
    %v733 = vadd.f32 0.0, %v732
    %v734 = vpop.f32.mrb[0].mxu0
    %735 = vmatprep.mubr.bf16.mxu0 0
    %736 = vmatmul.mubr.bf16.gmra.mrb[0].mxu0 %v380
    %v737 = vpop.f32.mrb[0].mxu0
    %v738 = vadd.f32 0.0, %v737
    %v739 = vpop.f32.mrb[0].mxu0
    %v740 = vpop.f32.mrb[0].mxu0
    %v741 = vadd.f32 0.0, %v740
    %v742 = vpop.f32.mrb[0].mxu0
    %743 = vmatprep.mubr.bf16.mxu0 0
    %744 = vmatmul.mubr.bf16.gmra.mrb[0].mxu0 %v381
    %v745 = vpop.f32.mrb[0].mxu0
    %v746 = vadd.f32 0.0, %v745
    %v747 = vpop.f32.mrb[0].mxu0
    %v748 = vpop.f32.mrb[0].mxu0
    %v749 = vadd.f32 0.0, %v748
    %v750 = vpop.f32.mrb[0].mxu0
    %751 = vmatprep.mubr.bf16.mxu0 0
    %752 = vmatmul.mubr.bf16.gmra.mrb[0].mxu0 %v382
    %v753 = vpop.f32.mrb[0].mxu0
    %v754 = vadd.f32 0.0, %v753
    %v755 = vpop.f32.mrb[0].mxu0
    %v756 = vpop.f32.mrb[0].mxu0
    %v757 = vadd.f32 0.0, %v756
    %v758 = vpop.f32.mrb[0].mxu0
    %759 = vmatprep.mubr.bf16.mxu0 0
    %760 = vmatmul.mubr.bf16.gmra.mrb[0].mxu0 %v383
    %v761 = vpop.f32.mrb[0].mxu0
    %v762 = vadd.f32 0.0, %v761
    %v763 = vpop.f32.mrb[0].mxu0
    %v764 = vpop.f32.mrb[0].mxu0
    %v765 = vadd.f32 0.0, %v764
    %v766 = vpop.f32.mrb[0].mxu0
    %767 = vmatprep.mubr.bf16.mxu0 0
    %768 = vmatmul.mubr.bf16.gmra.mrb[0].mxu0 %v384
    %v769 = vpop.f32.mrb[0].mxu0
    %v770 = vadd.f32 0.0, %v769
    %v771 = vpop.f32.mrb[0].mxu0
    %v772 = vpop.f32.mrb[0].mxu0
    %v773 = vadd.f32 0.0, %v772
    %v774 = vpop.f32.mrb[0].mxu0
    %775 = vmatprep.mubr.bf16.mxu0 0
    %776 = vmatmul.mubr.bf16.gmra.mrb[0].mxu0 %v385
    %v777 = vpop.f32.mrb[0].mxu0
    %v778 = vadd.f32 0.0, %v777
    %v779 = vpop.f32.mrb[0].mxu0
    %v780 = vpop.f32.mrb[0].mxu0
    %v781 = vadd.f32 0.0, %v780
    %v782 = vpop.f32.mrb[0].mxu0
    %783 = vmatprep.mubr.bf16.mxu0 0
    %784 = vmatmul.mubr.bf16.gmra.mrb[0].mxu0 %v386
    %v785 = vpop.f32.mrb[0].mxu0
    %v786 = vadd.f32 0.0, %v785
    %v787 = vpop.f32.mrb[0].mxu0
    %v788 = vpop.f32.mrb[0].mxu0
    %v789 = vadd.f32 0.0, %v788
    %v790 = vpop.f32.mrb[0].mxu0
    %791 = vmatprep.mubr.bf16.mxu0 0
    %792 = vmatmul.mubr.bf16.gmra.mrb[0].mxu0 %v387
    %v793 = vpop.f32.mrb[0].mxu0
    %v794 = vadd.f32 0.0, %v793
    %v795 = vpop.f32.mrb[0].mxu0
    %v796 = vpop.f32.mrb[0].mxu0
    %v797 = vadd.f32 0.0, %v796
    %v798 = vpop.f32.mrb[0].mxu0
    %799 = vmatprep.mubr.bf16.mxu0 0
    %800 = vmatmul.mubr.bf16.gmra.mrb[0].mxu0 %v388
    %v801 = vpop.f32.mrb[0].mxu0
    %v802 = vadd.f32 0.0, %v801
    %v803 = vpop.f32.mrb[0].mxu0
    %v804 = vpop.f32.mrb[0].mxu0
    %v805 = vadd.f32 0.0, %v804
    %v806 = vpop.f32.mrb[0].mxu0
    %807 = vmatprep.mubr.bf16.mxu0 0
    %808 = vmatmul.mubr.bf16.gmra.mrb[0].mxu0 %v389
    %v809 = vpop.f32.mrb[0].mxu0
    %v810 = vadd.f32 0.0, %v809
    %v811 = vpop.f32.mrb[0].mxu0
    %v812 = vpop.f32.mrb[0].mxu0
    %v813 = vadd.f32 0.0, %v812
    %v814 = vpop.f32.mrb[0].mxu0
    %815 = vmatprep.mubr.bf16.mxu0 0
    %816 = vmatmul.mubr.bf16.gmra.mrb[0].mxu0 %v390
    %v817 = vpop.f32.mrb[0].mxu0
    %v818 = vadd.f32 0.0, %v817
    %v819 = vpop.f32.mrb[0].mxu0
    %v820 = vpop.f32.mrb[0].mxu0
    %v821 = vadd.f32 0.0, %v820
    %v822 = vpop.f32.mrb[0].mxu0
    %823 = vmatprep.mubr.bf16.mxu0 0
    %824 = vmatmul.mubr.bf16.gmra.mrb[0].mxu0 %v391
    %v825 = vpop.f32.mrb[0].mxu0
    %v826 = vadd.f32 0.0, %v825
    %v827 = vpop.f32.mrb[0].mxu0
    %v828 = vpop.f32.mrb[0].mxu0
    %v829 = vadd.f32 0.0, %v828
    %v830 = vpop.f32.mrb[0].mxu0
    %831 = vmatprep.mubr.bf16.mxu0 0
    %832 = vmatmul.mubr.bf16.gmra.mrb[0].mxu0 %v392
    %v833 = vpop.f32.mrb[0].mxu0
    %v834 = vadd.f32 0.0, %v833
    %v835 = vpop.f32.mrb[0].mxu0
    %v836 = vpop.f32.mrb[0].mxu0
    %v837 = vadd.f32 0.0, %v836
    %v838 = vpop.f32.mrb[0].mxu0
    %839 = vmatprep.mubr.bf16.mxu0 0
    %840 = vmatmul.mubr.bf16.gmra.mrb[0].mxu0 %v393
    %v841 = vpop.f32.mrb[0].mxu0
    %v842 = vadd.f32 0.0, %v841
    %v843 = vpop.f32.mrb[0].mxu0
    %v844 = vpop.f32.mrb[0].mxu0
    %v845 = vadd.f32 0.0, %v844
    %v846 = vpop.f32.mrb[0].mxu0
    %847 = vmatprep.mubr.bf16.mxu0 0
    %848 = vmatmul.mubr.bf16.gmra.mrb[0].mxu0 %v394
    %v849 = vpop.f32.mrb[0].mxu0
    %v850 = vadd.f32 0.0, %v849
    %v851 = vpop.f32.mrb[0].mxu0
    %v852 = vpop.f32.mrb[0].mxu0
    %v853 = vadd.f32 0.0, %v852
    %v854 = vpop.f32.mrb[0].mxu0
    %855 = vmatprep.mubr.bf16.mxu0 0
    %856 = vmatmul.mubr.bf16.gmra.mrb[0].mxu0 %v395
    %v857 = vpop.f32.mrb[0].mxu0
    %v858 = vadd.f32 0.0, %v857
    %v859 = vpop.f32.mrb[0].mxu0
    %v860 = vpop.f32.mrb[0].mxu0
    %v861 = vadd.f32 0.0, %v860
    %v862 = vpop.f32.mrb[0].mxu0
    %863 = vmatprep.mubr.bf16.mxu0 0
    %864 = vmatmul.mubr.bf16.gmra.mrb[0].mxu0 %v396
    %v865 = vpop.f32.mrb[0].mxu0
    %v866 = vadd.f32 0.0, %v865
    %v867 = vpop.f32.mrb[0].mxu0
    %v868 = vpop.f32.mrb[0].mxu0
    %v869 = vadd.f32 0.0, %v868
    %v870 = vpop.f32.mrb[0].mxu0
    %871 = vmatprep.mubr.bf16.mxu0 0
    %872 = vmatmul.mubr.bf16.gmra.mrb[0].mxu0 %v397
    %v873 = vpop.f32.mrb[0].mxu0
    %v874 = vadd.f32 0.0, %v873
    %v875 = vpop.f32.mrb[0].mxu0
    %v876 = vpop.f32.mrb[0].mxu0
    %v877 = vadd.f32 0.0, %v876
    %v878 = vpop.f32.mrb[0].mxu0
    %879 = vmatprep.mubr.bf16.mxu0 0
    %880 = vmatmul.mubr.bf16.gmra.mrb[0].mxu0 %v398
    %v881 = vpop.f32.mrb[0].mxu0
    %v882 = vadd.f32 0.0, %v881
    %v883 = vpop.f32.mrb[0].mxu0
    %v884 = vpop.f32.mrb[0].mxu0
    %v885 = vadd.f32 0.0, %v884
    %v886 = vpop.f32.mrb[0].mxu0
    %887 = vmatprep.mubr.bf16.mxu0 0
    %888 = vmatmul.mubr.bf16.gmra.mrb[0].mxu0 %v399
    %v889 = vpop.f32.mrb[0].mxu0
    %v890 = vadd.f32 0.0, %v889
    %v891 = vpop.f32.mrb[0].mxu0
    %v892 = vpop.f32.mrb[0].mxu0
    %v893 = vadd.f32 0.0, %v892
    %v894 = vpop.f32.mrb[0].mxu0
    %895 = vmatprep.mubr.bf16.mxu0 0
    %896 = vmatmul.mubr.bf16.gmra.mrb[0].mxu0 %v400
    %v897 = vpop.f32.mrb[0].mxu0
    %v898 = vadd.f32 0.0, %v897
    %v899 = vpop.f32.mrb[0].mxu0
    %v900 = vpop.f32.mrb[0].mxu0
    %v901 = vadd.f32 0.0, %v900
    %v902 = vpop.f32.mrb[0].mxu0
    %903 = vmatprep.mubr.bf16.mxu0 0
    %904 = vmatmul.mubr.bf16.gmra.mrb[0].mxu0 %v401
    %v905 = vpop.f32.mrb[0].mxu0
    %v906 = vadd.f32 0.0, %v905
    %v907 = vpop.f32.mrb[0].mxu0
    %v908 = vpop.f32.mrb[0].mxu0
    %v909 = vadd.f32 0.0, %v908
    %v910 = vpop.f32.mrb[0].mxu0
    %911 = vmatprep.mubr.bf16.mxu0 0
    %912 = vmatmul.mubr.bf16.gmra.mrb[0].mxu0 %v402
    %v913 = vpop.f32.mrb[0].mxu0
    %v914 = vadd.f32 0.0, %v913
    %v915 = vpop.f32.mrb[0].mxu0
    %v916 = vpop.f32.mrb[0].mxu0
    %v917 = vadd.f32 0.0, %v916
    %v918 = vpop.f32.mrb[0].mxu0
    %919 = vmatprep.mubr.bf16.mxu0 0
    %920 = vmatmul.mubr.bf16.gmra.mrb[0].mxu0 %v403
    %v921 = vpop.f32.mrb[0].mxu0
    %v922 = vadd.f32 0.0, %v921
    %v923 = vpop.f32.mrb[0].mxu0
    %v924 = vpop.f32.mrb[0].mxu0
    %v925 = vadd.f32 0.0, %v924
    %v926 = vpop.f32.mrb[0].mxu0
    %927 = vmatprep.mubr.bf16.mxu0 0
    %928 = vmatmul.mubr.bf16.gmra.mrb[0].mxu0 %v404
    %v929 = vpop.f32.mrb[0].mxu0
    %v930 = vadd.f32 0.0, %v929
    %v931 = vpop.f32.mrb[0].mxu0
    %v932 = vpop.f32.mrb[0].mxu0
    %v933 = vadd.f32 0.0, %v932
    %v934 = vpop.f32.mrb[0].mxu0
    %935 = vdwg.mxu0
    %v936 = vxor.u32 %v538, 2147483648
    %v937 = vxor.u32 %v541, 2147483648
    %v938 = vxor.u32 %v546, 2147483648
    %v939 = vxor.u32 %v549, 2147483648
    %v940 = vxor.u32 %v554, 2147483648
    %v941 = vxor.u32 %v557, 2147483648
    %v942 = vxor.u32 %v562, 2147483648
    %v943 = vxor.u32 %v565, 2147483648
    %v944 = vxor.u32 %v570, 2147483648
    %v945 = vxor.u32 %v573, 2147483648
    %v946 = vxor.u32 %v578, 2147483648
    %v947 = vxor.u32 %v581, 2147483648
    %v948 = vxor.u32 %v586, 2147483648
    %v949 = vxor.u32 %v589, 2147483648
    %v950 = vxor.u32 %v594, 2147483648
    %v951 = vxor.u32 %v597, 2147483648
    %v952 = vxor.u32 %v602, 2147483648
    %v953 = vxor.u32 %v605, 2147483648
    %v954 = vxor.u32 %v610, 2147483648
    %v955 = vxor.u32 %v613, 2147483648
    %v956 = vxor.u32 %v618, 2147483648
    %v957 = vxor.u32 %v621, 2147483648
    %v958 = vxor.u32 %v626, 2147483648
    %v959 = vxor.u32 %v629, 2147483648
    %v960 = vxor.u32 %v634, 2147483648
    %v961 = vxor.u32 %v637, 2147483648
    %v962 = vxor.u32 %v642, 2147483648
    %v963 = vxor.u32 %v645, 2147483648
    %v964 = vxor.u32 %v650, 2147483648
    %v965 = vxor.u32 %v653, 2147483648
    %v966 = vxor.u32 %v658, 2147483648
    %v967 = vxor.u32 %v661, 2147483648
    %v968 = vxor.u32 %v666, 2147483648
    %v969 = vxor.u32 %v669, 2147483648
    %v970 = vxor.u32 %v674, 2147483648
    %v971 = vxor.u32 %v677, 2147483648
    %v972 = vxor.u32 %v682, 2147483648
    %v973 = vxor.u32 %v685, 2147483648
    %v974 = vxor.u32 %v690, 2147483648
    %v975 = vxor.u32 %v693, 2147483648
    %v976 = vxor.u32 %v698, 2147483648
    %v977 = vxor.u32 %v701, 2147483648
    %v978 = vxor.u32 %v706, 2147483648
    %v979 = vxor.u32 %v709, 2147483648
    %v980 = vxor.u32 %v714, 2147483648
    %v981 = vxor.u32 %v717, 2147483648
    %v982 = vxor.u32 %v722, 2147483648
    %v983 = vxor.u32 %v725, 2147483648
    %v984 = vxor.u32 %v730, 2147483648
    %v985 = vxor.u32 %v733, 2147483648
    %v986 = vxor.u32 %v738, 2147483648
    %v987 = vxor.u32 %v741, 2147483648
    %v988 = vxor.u32 %v746, 2147483648
    %v989 = vxor.u32 %v749, 2147483648
    %v990 = vxor.u32 %v754, 2147483648
    %v991 = vxor.u32 %v757, 2147483648
    %v992 = vxor.u32 %v762, 2147483648
    %v993 = vxor.u32 %v765, 2147483648
    %v994 = vxor.u32 %v770, 2147483648
    %v995 = vxor.u32 %v773, 2147483648
    %v996 = vxor.u32 %v778, 2147483648
    %v997 = vxor.u32 %v781, 2147483648
    %v998 = vxor.u32 %v786, 2147483648
    %v999 = vxor.u32 %v789, 2147483648
    %v1000 = vxor.u32 %v794, 2147483648
    %v1001 = vxor.u32 %v797, 2147483648
    %v1002 = vxor.u32 %v802, 2147483648
    %v1003 = vxor.u32 %v805, 2147483648
    %v1004 = vxor.u32 %v810, 2147483648
    %v1005 = vxor.u32 %v813, 2147483648
    %v1006 = vxor.u32 %v818, 2147483648
    %v1007 = vxor.u32 %v821, 2147483648
    %v1008 = vxor.u32 %v826, 2147483648
    %v1009 = vxor.u32 %v829, 2147483648
    %v1010 = vxor.u32 %v834, 2147483648
    %v1011 = vxor.u32 %v837, 2147483648
    %v1012 = vxor.u32 %v842, 2147483648
    %v1013 = vxor.u32 %v845, 2147483648
    %v1014 = vxor.u32 %v850, 2147483648
    %v1015 = vxor.u32 %v853, 2147483648
    %v1016 = vxor.u32 %v858, 2147483648
    %v1017 = vxor.u32 %v861, 2147483648
    %v1018 = vxor.u32 %v866, 2147483648
    %v1019 = vxor.u32 %v869, 2147483648
    %v1020 = vxor.u32 %v874, 2147483648
    %v1021 = vxor.u32 %v877, 2147483648
    %v1022 = vxor.u32 %v882, 2147483648
    %v1023 = vxor.u32 %v885, 2147483648
    %v1024 = vxor.u32 %v890, 2147483648
    %v1025 = vxor.u32 %v893, 2147483648
    %v1026 = vxor.u32 %v898, 2147483648
    %v1027 = vxor.u32 %v901, 2147483648
    %v1028 = vxor.u32 %v906, 2147483648
    %v1029 = vxor.u32 %v909, 2147483648
    %v1030 = vxor.u32 %v914, 2147483648
    %v1031 = vxor.u32 %v917, 2147483648
    %v1032 = vxor.u32 %v922, 2147483648
    %v1033 = vxor.u32 %v925, 2147483648
    %v1034 = vxor.u32 %v930, 2147483648
    %v1035 = vxor.u32 %v933, 2147483648
    %v1036 = vmul.f32 %v936, 1.442695
    %v1037 = vpow.pop %v1036
    %v1038 = vmul.f32 %v937, 1.442695
    %v1039 = vpow.pop %v1038
    %v1040 = vmul.f32 %v938, 1.442695
    %v1041 = vpow.pop %v1040
    %v1042 = vmul.f32 %v939, 1.442695
    %v1043 = vpow.pop %v1042
    %v1044 = vmul.f32 %v940, 1.442695
    %v1045 = vpow.pop %v1044
    %v1046 = vmul.f32 %v941, 1.442695
    %v1047 = vpow.pop %v1046
    %v1048 = vmul.f32 %v942, 1.442695
    %v1049 = vpow.pop %v1048
    %v1050 = vmul.f32 %v943, 1.442695
    %v1051 = vpow.pop %v1050
    %v1052 = vmul.f32 %v944, 1.442695
    %v1053 = vpow.pop %v1052
    %v1054 = vmul.f32 %v945, 1.442695
    %v1055 = vpow.pop %v1054
    %v1056 = vmul.f32 %v946, 1.442695
    %v1057 = vpow.pop %v1056
    %v1058 = vmul.f32 %v947, 1.442695
    %v1059 = vpow.pop %v1058
    %v1060 = vmul.f32 %v948, 1.442695
    %v1061 = vpow.pop %v1060
    %v1062 = vmul.f32 %v949, 1.442695
    %v1063 = vpow.pop %v1062
    %v1064 = vmul.f32 %v950, 1.442695
    %v1065 = vpow.pop %v1064
    %v1066 = vmul.f32 %v951, 1.442695
    %v1067 = vpow.pop %v1066
    %v1068 = vmul.f32 %v952, 1.442695
    %v1069 = vpow.pop %v1068
    %v1070 = vmul.f32 %v953, 1.442695
    %v1071 = vpow.pop %v1070
    %v1072 = vmul.f32 %v954, 1.442695
    %v1073 = vpow.pop %v1072
    %v1074 = vmul.f32 %v955, 1.442695
    %v1075 = vpow.pop %v1074
    %v1076 = vmul.f32 %v956, 1.442695
    %v1077 = vpow.pop %v1076
    %v1078 = vmul.f32 %v957, 1.442695
    %v1079 = vpow.pop %v1078
    %v1080 = vmul.f32 %v958, 1.442695
    %v1081 = vpow.pop %v1080
    %v1082 = vmul.f32 %v959, 1.442695
    %v1083 = vpow.pop %v1082
    %v1084 = vmul.f32 %v960, 1.442695
    %v1085 = vpow.pop %v1084
    %v1086 = vmul.f32 %v961, 1.442695
    %v1087 = vpow.pop %v1086
    %v1088 = vmul.f32 %v962, 1.442695
    %v1089 = vpow.pop %v1088
    %v1090 = vmul.f32 %v963, 1.442695
    %v1091 = vpow.pop %v1090
    %v1092 = vmul.f32 %v964, 1.442695
    %v1093 = vpow.pop %v1092
    %v1094 = vmul.f32 %v965, 1.442695
    %v1095 = vpow.pop %v1094
    %v1096 = vmul.f32 %v966, 1.442695
    %v1097 = vpow.pop %v1096
    %v1098 = vmul.f32 %v967, 1.442695
    %v1099 = vpow.pop %v1098
    %v1100 = vmul.f32 %v968, 1.442695
    %v1101 = vpow.pop %v1100
    %v1102 = vmul.f32 %v969, 1.442695
    %v1103 = vpow.pop %v1102
    %v1104 = vmul.f32 %v970, 1.442695
    %v1105 = vpow.pop %v1104
    %v1106 = vmul.f32 %v971, 1.442695
    %v1107 = vpow.pop %v1106
    %v1108 = vmul.f32 %v972, 1.442695
    %v1109 = vpow.pop %v1108
    %v1110 = vmul.f32 %v973, 1.442695
    %v1111 = vpow.pop %v1110
    %v1112 = vmul.f32 %v974, 1.442695
    %v1113 = vpow.pop %v1112
    %v1114 = vmul.f32 %v975, 1.442695
    %v1115 = vpow.pop %v1114
    %v1116 = vmul.f32 %v976, 1.442695
    %v1117 = vpow.pop %v1116
    %v1118 = vmul.f32 %v977, 1.442695
    %v1119 = vpow.pop %v1118
    %v1120 = vmul.f32 %v978, 1.442695
    %v1121 = vpow.pop %v1120
    %v1122 = vmul.f32 %v979, 1.442695
    %v1123 = vpow.pop %v1122
    %v1124 = vmul.f32 %v980, 1.442695
    %v1125 = vpow.pop %v1124
    %v1126 = vmul.f32 %v981, 1.442695
    %v1127 = vpow.pop %v1126
    %v1128 = vmul.f32 %v982, 1.442695
    %v1129 = vpow.pop %v1128
    %v1130 = vmul.f32 %v983, 1.442695
    %v1131 = vpow.pop %v1130
    %v1132 = vmul.f32 %v984, 1.442695
    %v1133 = vpow.pop %v1132
    %v1134 = vmul.f32 %v985, 1.442695
    %v1135 = vpow.pop %v1134
    %v1136 = vmul.f32 %v986, 1.442695
    %v1137 = vpow.pop %v1136
    %v1138 = vmul.f32 %v987, 1.442695
    %v1139 = vpow.pop %v1138
    %v1140 = vmul.f32 %v988, 1.442695
    %v1141 = vpow.pop %v1140
    %v1142 = vmul.f32 %v989, 1.442695
    %v1143 = vpow.pop %v1142
    %v1144 = vmul.f32 %v990, 1.442695
    %v1145 = vpow.pop %v1144
    %v1146 = vmul.f32 %v991, 1.442695
    %v1147 = vpow.pop %v1146
    %v1148 = vmul.f32 %v992, 1.442695
    %v1149 = vpow.pop %v1148
    %v1150 = vmul.f32 %v993, 1.442695
    %v1151 = vpow.pop %v1150
    %v1152 = vmul.f32 %v994, 1.442695
    %v1153 = vpow.pop %v1152
    %v1154 = vmul.f32 %v995, 1.442695
    %v1155 = vpow.pop %v1154
    %v1156 = vmul.f32 %v996, 1.442695
    %v1157 = vpow.pop %v1156
    %v1158 = vmul.f32 %v997, 1.442695
    %v1159 = vpow.pop %v1158
    %v1160 = vmul.f32 %v998, 1.442695
    %v1161 = vpow.pop %v1160
    %v1162 = vmul.f32 %v999, 1.442695
    %v1163 = vpow.pop %v1162
    %v1164 = vmul.f32 %v1000, 1.442695
    %v1165 = vpow.pop %v1164
    %v1166 = vmul.f32 %v1001, 1.442695
    %v1167 = vpow.pop %v1166
    %v1168 = vmul.f32 %v1002, 1.442695
    %v1169 = vpow.pop %v1168
    %v1170 = vmul.f32 %v1003, 1.442695
    %v1171 = vpow.pop %v1170
    %v1172 = vmul.f32 %v1004, 1.442695
    %v1173 = vpow.pop %v1172
    %v1174 = vmul.f32 %v1005, 1.442695
    %v1175 = vpow.pop %v1174
    %v1176 = vmul.f32 %v1006, 1.442695
    %v1177 = vpow.pop %v1176
    %v1178 = vmul.f32 %v1007, 1.442695
    %v1179 = vpow.pop %v1178
    %v1180 = vmul.f32 %v1008, 1.442695
    %v1181 = vpow.pop %v1180
    %v1182 = vmul.f32 %v1009, 1.442695
    %v1183 = vpow.pop %v1182
    %v1184 = vmul.f32 %v1010, 1.442695
    %v1185 = vpow.pop %v1184
    %v1186 = vmul.f32 %v1011, 1.442695
    %v1187 = vpow.pop %v1186
    %v1188 = vmul.f32 %v1012, 1.442695
    %v1189 = vpow.pop %v1188
    %v1190 = vmul.f32 %v1013, 1.442695
    %v1191 = vpow.pop %v1190
    %v1192 = vmul.f32 %v1014, 1.442695
    %v1193 = vpow.pop %v1192
    %v1194 = vmul.f32 %v1015, 1.442695
    %v1195 = vpow.pop %v1194
    %v1196 = vmul.f32 %v1016, 1.442695
    %v1197 = vpow.pop %v1196
    %v1198 = vmul.f32 %v1017, 1.442695
    %v1199 = vpow.pop %v1198
    %v1200 = vmul.f32 %v1018, 1.442695
    %v1201 = vpow.pop %v1200
    %v1202 = vmul.f32 %v1019, 1.442695
    %v1203 = vpow.pop %v1202
    %v1204 = vmul.f32 %v1020, 1.442695
    %v1205 = vpow.pop %v1204
    %v1206 = vmul.f32 %v1021, 1.442695
    %v1207 = vpow.pop %v1206
    %v1208 = vmul.f32 %v1022, 1.442695
    %v1209 = vpow.pop %v1208
    %v1210 = vmul.f32 %v1023, 1.442695
    %v1211 = vpow.pop %v1210
    %v1212 = vmul.f32 %v1024, 1.442695
    %v1213 = vpow.pop %v1212
    %v1214 = vmul.f32 %v1025, 1.442695
    %v1215 = vpow.pop %v1214
    %v1216 = vmul.f32 %v1026, 1.442695
    %v1217 = vpow.pop %v1216
    %v1218 = vmul.f32 %v1027, 1.442695
    %v1219 = vpow.pop %v1218
    %v1220 = vmul.f32 %v1028, 1.442695
    %v1221 = vpow.pop %v1220
    %v1222 = vmul.f32 %v1029, 1.442695
    %v1223 = vpow.pop %v1222
    %v1224 = vmul.f32 %v1030, 1.442695
    %v1225 = vpow.pop %v1224
    %v1226 = vmul.f32 %v1031, 1.442695
    %v1227 = vpow.pop %v1226
    %v1228 = vmul.f32 %v1032, 1.442695
    %v1229 = vpow.pop %v1228
    %v1230 = vmul.f32 %v1033, 1.442695
    %v1231 = vpow.pop %v1230
    %v1232 = vmul.f32 %v1034, 1.442695
    %v1233 = vpow.pop %v1232
    %v1234 = vmul.f32 %v1035, 1.442695
    %v1235 = vpow.pop %v1234
    %v1236 = vadd.f32 %v1037, 1.0
    %v1237 = vadd.f32 %v1039, 1.0
    %v1238 = vadd.f32 %v1041, 1.0
    %v1239 = vadd.f32 %v1043, 1.0
    %v1240 = vadd.f32 %v1045, 1.0
    %v1241 = vadd.f32 %v1047, 1.0
    %v1242 = vadd.f32 %v1049, 1.0
    %v1243 = vadd.f32 %v1051, 1.0
    %v1244 = vadd.f32 %v1053, 1.0
    %v1245 = vadd.f32 %v1055, 1.0
    %v1246 = vadd.f32 %v1057, 1.0
    %v1247 = vadd.f32 %v1059, 1.0
    %v1248 = vadd.f32 %v1061, 1.0
    %v1249 = vadd.f32 %v1063, 1.0
    %v1250 = vadd.f32 %v1065, 1.0
    %v1251 = vadd.f32 %v1067, 1.0
    %v1252 = vadd.f32 %v1069, 1.0
    %v1253 = vadd.f32 %v1071, 1.0
    %v1254 = vadd.f32 %v1073, 1.0
    %v1255 = vadd.f32 %v1075, 1.0
    %v1256 = vadd.f32 %v1077, 1.0
    %v1257 = vadd.f32 %v1079, 1.0
    %v1258 = vadd.f32 %v1081, 1.0
    %v1259 = vadd.f32 %v1083, 1.0
    %v1260 = vadd.f32 %v1085, 1.0
    %v1261 = vadd.f32 %v1087, 1.0
    %v1262 = vadd.f32 %v1089, 1.0
    %v1263 = vadd.f32 %v1091, 1.0
    %v1264 = vadd.f32 %v1093, 1.0
    %v1265 = vadd.f32 %v1095, 1.0
    %v1266 = vadd.f32 %v1097, 1.0
    %v1267 = vadd.f32 %v1099, 1.0
    %v1268 = vadd.f32 %v1101, 1.0
    %v1269 = vadd.f32 %v1103, 1.0
    %v1270 = vadd.f32 %v1105, 1.0
    %v1271 = vadd.f32 %v1107, 1.0
    %v1272 = vadd.f32 %v1109, 1.0
    %v1273 = vadd.f32 %v1111, 1.0
    %v1274 = vadd.f32 %v1113, 1.0
    %v1275 = vadd.f32 %v1115, 1.0
    %v1276 = vadd.f32 %v1117, 1.0
    %v1277 = vadd.f32 %v1119, 1.0
    %v1278 = vadd.f32 %v1121, 1.0
    %v1279 = vadd.f32 %v1123, 1.0
    %v1280 = vadd.f32 %v1125, 1.0
    %v1281 = vadd.f32 %v1127, 1.0
    %v1282 = vadd.f32 %v1129, 1.0
    %v1283 = vadd.f32 %v1131, 1.0
    %v1284 = vadd.f32 %v1133, 1.0
    %v1285 = vadd.f32 %v1135, 1.0
    %v1286 = vadd.f32 %v1137, 1.0
    %v1287 = vadd.f32 %v1139, 1.0
    %v1288 = vadd.f32 %v1141, 1.0
    %v1289 = vadd.f32 %v1143, 1.0
    %v1290 = vadd.f32 %v1145, 1.0
    %v1291 = vadd.f32 %v1147, 1.0
    %v1292 = vadd.f32 %v1149, 1.0
    %v1293 = vadd.f32 %v1151, 1.0
    %v1294 = vadd.f32 %v1153, 1.0
    %v1295 = vadd.f32 %v1155, 1.0
    %v1296 = vadd.f32 %v1157, 1.0
    %v1297 = vadd.f32 %v1159, 1.0
    %v1298 = vadd.f32 %v1161, 1.0
    %v1299 = vadd.f32 %v1163, 1.0
    %v1300 = vadd.f32 %v1165, 1.0
    %v1301 = vadd.f32 %v1167, 1.0
    %v1302 = vadd.f32 %v1169, 1.0
    %v1303 = vadd.f32 %v1171, 1.0
    %v1304 = vadd.f32 %v1173, 1.0
    %v1305 = vadd.f32 %v1175, 1.0
    %v1306 = vadd.f32 %v1177, 1.0
    %v1307 = vadd.f32 %v1179, 1.0
    %v1308 = vadd.f32 %v1181, 1.0
    %v1309 = vadd.f32 %v1183, 1.0
    %v1310 = vadd.f32 %v1185, 1.0
    %v1311 = vadd.f32 %v1187, 1.0
    %v1312 = vadd.f32 %v1189, 1.0
    %v1313 = vadd.f32 %v1191, 1.0
    %v1314 = vadd.f32 %v1193, 1.0
    %v1315 = vadd.f32 %v1195, 1.0
    %v1316 = vadd.f32 %v1197, 1.0
    %v1317 = vadd.f32 %v1199, 1.0
    %v1318 = vadd.f32 %v1201, 1.0
    %v1319 = vadd.f32 %v1203, 1.0
    %v1320 = vadd.f32 %v1205, 1.0
    %v1321 = vadd.f32 %v1207, 1.0
    %v1322 = vadd.f32 %v1209, 1.0
    %v1323 = vadd.f32 %v1211, 1.0
    %v1324 = vadd.f32 %v1213, 1.0
    %v1325 = vadd.f32 %v1215, 1.0
    %v1326 = vadd.f32 %v1217, 1.0
    %v1327 = vadd.f32 %v1219, 1.0
    %v1328 = vadd.f32 %v1221, 1.0
    %v1329 = vadd.f32 %v1223, 1.0
    %v1330 = vadd.f32 %v1225, 1.0
    %v1331 = vadd.f32 %v1227, 1.0
    %v1332 = vadd.f32 %v1229, 1.0
    %v1333 = vadd.f32 %v1231, 1.0
    %v1334 = vadd.f32 %v1233, 1.0
    %v1335 = vadd.f32 %v1235, 1.0
    %v1336 = vrcp.pop %v1236
    %v1337 = vmul.f32 1.0, %v1336
    %v1338 = vrcp.pop %v1237
    %v1339 = vmul.f32 1.0, %v1338
    %v1340 = vrcp.pop %v1238
    %v1341 = vmul.f32 1.0, %v1340
    %v1342 = vrcp.pop %v1239
    %v1343 = vmul.f32 1.0, %v1342
    %v1344 = vrcp.pop %v1240
    %v1345 = vmul.f32 1.0, %v1344
    %v1346 = vrcp.pop %v1241
    %v1347 = vmul.f32 1.0, %v1346
    %v1348 = vrcp.pop %v1242
    %v1349 = vmul.f32 1.0, %v1348
    %v1350 = vrcp.pop %v1243
    %v1351 = vmul.f32 1.0, %v1350
    %v1352 = vrcp.pop %v1244
    %v1353 = vmul.f32 1.0, %v1352
    %v1354 = vrcp.pop %v1245
    %v1355 = vmul.f32 1.0, %v1354
    %v1356 = vrcp.pop %v1246
    %v1357 = vmul.f32 1.0, %v1356
    %v1358 = vrcp.pop %v1247
    %v1359 = vmul.f32 1.0, %v1358
    %v1360 = vrcp.pop %v1248
    %v1361 = vmul.f32 1.0, %v1360
    %v1362 = vrcp.pop %v1249
    %v1363 = vmul.f32 1.0, %v1362
    %v1364 = vrcp.pop %v1250
    %v1365 = vmul.f32 1.0, %v1364
    %v1366 = vrcp.pop %v1251
    %v1367 = vmul.f32 1.0, %v1366
    %v1368 = vrcp.pop %v1252
    %v1369 = vmul.f32 1.0, %v1368
    %v1370 = vrcp.pop %v1253
    %v1371 = vmul.f32 1.0, %v1370
    %v1372 = vrcp.pop %v1254
    %v1373 = vmul.f32 1.0, %v1372
    %v1374 = vrcp.pop %v1255
    %v1375 = vmul.f32 1.0, %v1374
    %v1376 = vrcp.pop %v1256
    %v1377 = vmul.f32 1.0, %v1376
    %v1378 = vrcp.pop %v1257
    %v1379 = vmul.f32 1.0, %v1378
    %v1380 = vrcp.pop %v1258
    %v1381 = vmul.f32 1.0, %v1380
    %v1382 = vrcp.pop %v1259
    %v1383 = vmul.f32 1.0, %v1382
    %v1384 = vrcp.pop %v1260
    %v1385 = vmul.f32 1.0, %v1384
    %v1386 = vrcp.pop %v1261
    %v1387 = vmul.f32 1.0, %v1386
    %v1388 = vrcp.pop %v1262
    %v1389 = vmul.f32 1.0, %v1388
    %v1390 = vrcp.pop %v1263
    %v1391 = vmul.f32 1.0, %v1390
    %v1392 = vrcp.pop %v1264
    %v1393 = vmul.f32 1.0, %v1392
    %v1394 = vrcp.pop %v1265
    %v1395 = vmul.f32 1.0, %v1394
    %v1396 = vrcp.pop %v1266
    %v1397 = vmul.f32 1.0, %v1396
    %v1398 = vrcp.pop %v1267
    %v1399 = vmul.f32 1.0, %v1398
    %v1400 = vrcp.pop %v1268
    %v1401 = vmul.f32 1.0, %v1400
    %v1402 = vrcp.pop %v1269
    %v1403 = vmul.f32 1.0, %v1402
    %v1404 = vrcp.pop %v1270
    %v1405 = vmul.f32 1.0, %v1404
    %v1406 = vrcp.pop %v1271
    %v1407 = vmul.f32 1.0, %v1406
    %v1408 = vrcp.pop %v1272
    %v1409 = vmul.f32 1.0, %v1408
    %v1410 = vrcp.pop %v1273
    %v1411 = vmul.f32 1.0, %v1410
    %v1412 = vrcp.pop %v1274
    %v1413 = vmul.f32 1.0, %v1412
    %v1414 = vrcp.pop %v1275
    %v1415 = vmul.f32 1.0, %v1414
    %v1416 = vrcp.pop %v1276
    %v1417 = vmul.f32 1.0, %v1416
    %v1418 = vrcp.pop %v1277
    %v1419 = vmul.f32 1.0, %v1418
    %v1420 = vrcp.pop %v1278
    %v1421 = vmul.f32 1.0, %v1420
    %v1422 = vrcp.pop %v1279
    %v1423 = vmul.f32 1.0, %v1422
    %v1424 = vrcp.pop %v1280
    %v1425 = vmul.f32 1.0, %v1424
    %v1426 = vrcp.pop %v1281
    %v1427 = vmul.f32 1.0, %v1426
    %v1428 = vrcp.pop %v1282
    %v1429 = vmul.f32 1.0, %v1428
    %v1430 = vrcp.pop %v1283
    %v1431 = vmul.f32 1.0, %v1430
    %v1432 = vrcp.pop %v1284
    %v1433 = vmul.f32 1.0, %v1432
    %v1434 = vrcp.pop %v1285
    %v1435 = vmul.f32 1.0, %v1434
    %v1436 = vrcp.pop %v1286
    %v1437 = vmul.f32 1.0, %v1436
    %v1438 = vrcp.pop %v1287
    %v1439 = vmul.f32 1.0, %v1438
    %v1440 = vrcp.pop %v1288
    %v1441 = vmul.f32 1.0, %v1440
    %v1442 = vrcp.pop %v1289
    %v1443 = vmul.f32 1.0, %v1442
    %v1444 = vrcp.pop %v1290
    %v1445 = vmul.f32 1.0, %v1444
    %v1446 = vrcp.pop %v1291
    %v1447 = vmul.f32 1.0, %v1446
    %v1448 = vrcp.pop %v1292
    %v1449 = vmul.f32 1.0, %v1448
    %v1450 = vrcp.pop %v1293
    %v1451 = vmul.f32 1.0, %v1450
    %v1452 = vrcp.pop %v1294
    %v1453 = vmul.f32 1.0, %v1452
    %v1454 = vrcp.pop %v1295
    %v1455 = vmul.f32 1.0, %v1454
    %v1456 = vrcp.pop %v1296
    %v1457 = vmul.f32 1.0, %v1456
    %v1458 = vrcp.pop %v1297
    %v1459 = vmul.f32 1.0, %v1458
    %v1460 = vrcp.pop %v1298
    %v1461 = vmul.f32 1.0, %v1460
    %v1462 = vrcp.pop %v1299
    %v1463 = vmul.f32 1.0, %v1462
    %v1464 = vrcp.pop %v1300
    %v1465 = vmul.f32 1.0, %v1464
    %v1466 = vrcp.pop %v1301
    %v1467 = vmul.f32 1.0, %v1466
    %v1468 = vrcp.pop %v1302
    %v1469 = vmul.f32 1.0, %v1468
    %v1470 = vrcp.pop %v1303
    %v1471 = vmul.f32 1.0, %v1470
    %v1472 = vrcp.pop %v1304
    %v1473 = vmul.f32 1.0, %v1472
    %v1474 = vrcp.pop %v1305
    %v1475 = vmul.f32 1.0, %v1474
    %v1476 = vrcp.pop %v1306
    %v1477 = vmul.f32 1.0, %v1476
    %v1478 = vrcp.pop %v1307
    %v1479 = vmul.f32 1.0, %v1478
    %v1480 = vrcp.pop %v1308
    %v1481 = vmul.f32 1.0, %v1480
    %v1482 = vrcp.pop %v1309
    %v1483 = vmul.f32 1.0, %v1482
    %v1484 = vrcp.pop %v1310
    %v1485 = vmul.f32 1.0, %v1484
    %v1486 = vrcp.pop %v1311
    %v1487 = vmul.f32 1.0, %v1486
    %v1488 = vrcp.pop %v1312
    %v1489 = vmul.f32 1.0, %v1488
    %v1490 = vrcp.pop %v1313
    %v1491 = vmul.f32 1.0, %v1490
    %v1492 = vrcp.pop %v1314
    %v1493 = vmul.f32 1.0, %v1492
    %v1494 = vrcp.pop %v1315
    %v1495 = vmul.f32 1.0, %v1494
    %v1496 = vrcp.pop %v1316
    %v1497 = vmul.f32 1.0, %v1496
    %v1498 = vrcp.pop %v1317
    %v1499 = vmul.f32 1.0, %v1498
    %v1500 = vrcp.pop %v1318
    %v1501 = vmul.f32 1.0, %v1500
    %v1502 = vrcp.pop %v1319
    %v1503 = vmul.f32 1.0, %v1502
    %v1504 = vrcp.pop %v1320
    %v1505 = vmul.f32 1.0, %v1504
    %v1506 = vrcp.pop %v1321
    %v1507 = vmul.f32 1.0, %v1506
    %v1508 = vrcp.pop %v1322
    %v1509 = vmul.f32 1.0, %v1508
    %v1510 = vrcp.pop %v1323
    %v1511 = vmul.f32 1.0, %v1510
    %v1512 = vrcp.pop %v1324
    %v1513 = vmul.f32 1.0, %v1512
    %v1514 = vrcp.pop %v1325
    %v1515 = vmul.f32 1.0, %v1514
    %v1516 = vrcp.pop %v1326
    %v1517 = vmul.f32 1.0, %v1516
    %v1518 = vrcp.pop %v1327
    %v1519 = vmul.f32 1.0, %v1518
    %v1520 = vrcp.pop %v1328
    %v1521 = vmul.f32 1.0, %v1520
    %v1522 = vrcp.pop %v1329
    %v1523 = vmul.f32 1.0, %v1522
    %v1524 = vrcp.pop %v1330
    %v1525 = vmul.f32 1.0, %v1524
    %v1526 = vrcp.pop %v1331
    %v1527 = vmul.f32 1.0, %v1526
    %v1528 = vrcp.pop %v1332
    %v1529 = vmul.f32 1.0, %v1528
    %v1530 = vrcp.pop %v1333
    %v1531 = vmul.f32 1.0, %v1530
    %v1532 = vrcp.pop %v1334
    %v1533 = vmul.f32 1.0, %v1532
    %v1534 = vrcp.pop %v1335
    %v1535 = vmul.f32 1.0, %v1534
    %v1536 = vld [vmem:[%s2] sm:$0xff]
    %v1537 = vld [vmem:[%s2 + $0x8] sm:$0xff]
    %v1538 = vld [vmem:[%s2 + $0x10] sm:$0xff]
    %v1539 = vld [vmem:[%s2 + $0x18] sm:$0xf]
    %v1540 = vld [vmem:[%s2 + $0x1c] sm:$0xff]
    %v1541 = vld [vmem:[%s2 + $0x24] sm:$0xff]
    %v1542 = vld [vmem:[%s2 + $0x2c] sm:$0xff]
    %v1543 = vld [vmem:[%s2 + $0x34] sm:$0xf]
    %v1544 = vld [vmem:[%s2 + $0x38] sm:$0xff]
    %v1545 = vld [vmem:[%s2 + $0x40] sm:$0xff]
    %v1546 = vld [vmem:[%s2 + $0x48] sm:$0xff]
    %v1547 = vld [vmem:[%s2 + $0x50] sm:$0xf]
    %v1548 = vld [vmem:[%s2 + $0x54] sm:$0xff]
    %v1549 = vld [vmem:[%s2 + $0x5c] sm:$0xff]
    %v1550 = vld [vmem:[%s2 + $0x64] sm:$0xff]
    %v1551 = vld [vmem:[%s2 + $0x6c] sm:$0xf]
    %v1552 = vld [vmem:[%s2 + $0x70] sm:$0xff]
    %v1553 = vld [vmem:[%s2 + $0x78] sm:$0xff]
    %v1554 = vld [vmem:[%s2 + $0x80] sm:$0xff]
    %v1555 = vld [vmem:[%s2 + $0x88] sm:$0xf]
    %v1556 = vld [vmem:[%s2 + $0x8c] sm:$0xff]
    %v1557 = vld [vmem:[%s2 + $0x94] sm:$0xff]
    %v1558 = vld [vmem:[%s2 + $0x9c] sm:$0xff]
    %v1559 = vld [vmem:[%s2 + $0xa4] sm:$0xf]
    %v1560 = vld [vmem:[%s2 + $0xa8] sm:$0xff]
    %v1561 = vld [vmem:[%s2 + $0xb0] sm:$0xff]
    %v1562 = vld [vmem:[%s2 + $0xb8] sm:$0xff]
    %v1563 = vld [vmem:[%s2 + $0xc0] sm:$0xf]
    %v1564 = vld [vmem:[%s2 + $0xc4] sm:$0xff]
    %v1565 = vld [vmem:[%s2 + $0xcc] sm:$0xff]
    %v1566 = vld [vmem:[%s2 + $0xd4] sm:$0xff]
    %v1567 = vld [vmem:[%s2 + $0xdc] sm:$0xf]
    %v1568 = vld [vmem:[%s2 + $0xe0] sm:$0xff]
    %v1569 = vld [vmem:[%s2 + $0xe8] sm:$0xff]
    %v1570 = vld [vmem:[%s2 + $0xf0] sm:$0xff]
    %v1571 = vld [vmem:[%s2 + $0xf8] sm:$0xf]
    %v1572 = vld [vmem:[%s2 + $0xfc] sm:$0xff]
    %v1573 = vld [vmem:[%s2 + $0x104] sm:$0xff]
    %v1574 = vld [vmem:[%s2 + $0x10c] sm:$0xff]
    %v1575 = vld [vmem:[%s2 + $0x114] sm:$0xf]
    %v1576 = vld [vmem:[%s2 + $0x118] sm:$0xff]
    %v1577 = vld [vmem:[%s2 + $0x120] sm:$0xff]
    %v1578 = vld [vmem:[%s2 + $0x128] sm:$0xff]
    %v1579 = vld [vmem:[%s2 + $0x130] sm:$0xf]
    %v1580 = vld [vmem:[%s2 + $0x134] sm:$0xff]
    %v1581 = vld [vmem:[%s2 + $0x13c] sm:$0xff]
    %v1582 = vld [vmem:[%s2 + $0x144] sm:$0xff]
    %v1583 = vld [vmem:[%s2 + $0x14c] sm:$0xf]
    %v1584 = vld [vmem:[%s2 + $0x150] sm:$0xff]
    %v1585 = vld [vmem:[%s2 + $0x158] sm:$0xff]
    %v1586 = vld [vmem:[%s2 + $0x160] sm:$0xff]
    %v1587 = vld [vmem:[%s2 + $0x168] sm:$0xf]
    %v1588 = vld [vmem:[%s2 + $0x16c] sm:$0xff]
    %v1589 = vld [vmem:[%s2 + $0x174] sm:$0xff]
    %v1590 = vld [vmem:[%s2 + $0x17c] sm:$0xff]
    %v1591 = vld [vmem:[%s2 + $0x184] sm:$0xf]
    %v1592 = vld [vmem:[%s2 + $0x188] sm:$0xff]
    %v1593 = vld [vmem:[%s2 + $0x190] sm:$0xff]
    %v1594 = vld [vmem:[%s2 + $0x198] sm:$0xff]
    %v1595 = vld [vmem:[%s2 + $0x1a0] sm:$0xf]
    %v1596 = vld [vmem:[%s2 + $0x1a4] sm:$0xff]
    %v1597 = vld [vmem:[%s2 + $0x1ac] sm:$0xff]
    %v1598 = vld [vmem:[%s2 + $0x1b4] sm:$0xff]
    %v1599 = vld [vmem:[%s2 + $0x1bc] sm:$0xf]
    %v1600 = vld [vmem:[%s2 + $0x1c0] sm:$0xff]
    %v1601 = vld [vmem:[%s2 + $0x1c8] sm:$0xff]
    %v1602 = vld [vmem:[%s2 + $0x1d0] sm:$0xff]
    %v1603 = vld [vmem:[%s2 + $0x1d8] sm:$0xf]
    %v1604 = vld [vmem:[%s2 + $0x1dc] sm:$0xff]
    %v1605 = vld [vmem:[%s2 + $0x1e4] sm:$0xff]
    %v1606 = vld [vmem:[%s2 + $0x1ec] sm:$0xff]
    %v1607 = vld [vmem:[%s2 + $0x1f4] sm:$0xf]
    %v1608 = vld [vmem:[%s2 + $0x1f8] sm:$0xff]
    %v1609 = vld [vmem:[%s2 + $0x200] sm:$0xff]
    %v1610 = vld [vmem:[%s2 + $0x208] sm:$0xff]
    %v1611 = vld [vmem:[%s2 + $0x210] sm:$0xf]
    %v1612 = vld [vmem:[%s2 + $0x214] sm:$0xff]
    %v1613 = vld [vmem:[%s2 + $0x21c] sm:$0xff]
    %v1614 = vld [vmem:[%s2 + $0x224] sm:$0xff]
    %v1615 = vld [vmem:[%s2 + $0x22c] sm:$0xf]
    %v1616 = vld [vmem:[%s2 + $0x230] sm:$0xff]
    %v1617 = vld [vmem:[%s2 + $0x238] sm:$0xff]
    %v1618 = vld [vmem:[%s2 + $0x240] sm:$0xff]
    %v1619 = vld [vmem:[%s2 + $0x248] sm:$0xf]
    %v1620 = vld [vmem:[%s2 + $0x24c] sm:$0xff]
    %v1621 = vld [vmem:[%s2 + $0x254] sm:$0xff]
    %v1622 = vld [vmem:[%s2 + $0x25c] sm:$0xff]
    %v1623 = vld [vmem:[%s2 + $0x264] sm:$0xf]
    %v1624 = vld [vmem:[%s2 + $0x268] sm:$0xff]
    %v1625 = vld [vmem:[%s2 + $0x270] sm:$0xff]
    %v1626 = vld [vmem:[%s2 + $0x278] sm:$0xff]
    %v1627 = vld [vmem:[%s2 + $0x280] sm:$0xf]
    %v1628 = vld [vmem:[%s2 + $0x284] sm:$0xff]
    %v1629 = vld [vmem:[%s2 + $0x28c] sm:$0xff]
    %v1630 = vld [vmem:[%s2 + $0x294] sm:$0xff]
    %v1631 = vld [vmem:[%s2 + $0x29c] sm:$0xf]
    %v1632 = vld [vmem:[%s2 + $0x2a0] sm:$0xff]
    %v1633 = vld [vmem:[%s2 + $0x2a8] sm:$0xff]
    %v1634 = vld [vmem:[%s2 + $0x2b0] sm:$0xff]
    %v1635 = vld [vmem:[%s2 + $0x2b8] sm:$0xf]
    %v1636 = vld [vmem:[%s2 + $0x2bc] sm:$0xff]
    %v1637 = vld [vmem:[%s2 + $0x2c4] sm:$0xff]
    %v1638 = vld [vmem:[%s2 + $0x2cc] sm:$0xff]
    %v1639 = vld [vmem:[%s2 + $0x2d4] sm:$0xf]
    %v1640 = vld [vmem:[%s2 + $0x2d8] sm:$0xff]
    %v1641 = vld [vmem:[%s2 + $0x2e0] sm:$0xff]
    %v1642 = vld [vmem:[%s2 + $0x2e8] sm:$0xff]
    %v1643 = vld [vmem:[%s2 + $0x2f0] sm:$0xf]
    %v1644 = vld [vmem:[%s2 + $0x2f4] sm:$0xff]
    %v1645 = vld [vmem:[%s2 + $0x2fc] sm:$0xff]
    %v1646 = vld [vmem:[%s2 + $0x304] sm:$0xff]
    %v1647 = vld [vmem:[%s2 + $0x30c] sm:$0xf]
    %v1648 = vld [vmem:[%s2 + $0x310] sm:$0xff]
    %v1649 = vld [vmem:[%s2 + $0x318] sm:$0xff]
    %v1650 = vld [vmem:[%s2 + $0x320] sm:$0xff]
    %v1651 = vld [vmem:[%s2 + $0x328] sm:$0xf]
    %v1652 = vld [vmem:[%s2 + $0x32c] sm:$0xff]
    %v1653 = vld [vmem:[%s2 + $0x334] sm:$0xff]
    %v1654 = vld [vmem:[%s2 + $0x33c] sm:$0xff]
    %v1655 = vld [vmem:[%s2 + $0x344] sm:$0xf]
    %v1656 = vld [vmem:[%s2 + $0x348] sm:$0xff]
    %v1657 = vld [vmem:[%s2 + $0x350] sm:$0xff]
    %v1658 = vld [vmem:[%s2 + $0x358] sm:$0xff]
    %v1659 = vld [vmem:[%s2 + $0x360] sm:$0xf]
    %v1660 = vld [vmem:[%s2 + $0x364] sm:$0xff]
    %v1661 = vld [vmem:[%s2 + $0x36c] sm:$0xff]
    %v1662 = vld [vmem:[%s2 + $0x374] sm:$0xff]
    %v1663 = vld [vmem:[%s2 + $0x37c] sm:$0xf]
    %v1664 = vld [vmem:[%s2 + $0x380] sm:$0xff]
    %v1665 = vld [vmem:[%s2 + $0x388] sm:$0xff]
    %v1666 = vld [vmem:[%s2 + $0x390] sm:$0xff]
    %v1667 = vld [vmem:[%s2 + $0x398] sm:$0xf]
    %v1668 = vld [vmem:[%s2 + $0x39c] sm:$0xff]
    %v1669 = vld [vmem:[%s2 + $0x3a4] sm:$0xff]
    %v1670 = vld [vmem:[%s2 + $0x3ac] sm:$0xff]
    %v1671 = vld [vmem:[%s2 + $0x3b4] sm:$0xf]
    %v1672 = vld [vmem:[%s2 + $0x3b8] sm:$0xff]
    %v1673 = vld [vmem:[%s2 + $0x3c0] sm:$0xff]
    %v1674 = vld [vmem:[%s2 + $0x3c8] sm:$0xff]
    %v1675 = vld [vmem:[%s2 + $0x3d0] sm:$0xf]
    %v1676 = vld [vmem:[%s2 + $0x3d4] sm:$0xff]
    %v1677 = vld [vmem:[%s2 + $0x3dc] sm:$0xff]
    %v1678 = vld [vmem:[%s2 + $0x3e4] sm:$0xff]
    %v1679 = vld [vmem:[%s2 + $0x3ec] sm:$0xf]
    %v1680 = vld [vmem:[%s2 + $0x3f0] sm:$0xff]
    %v1681 = vld [vmem:[%s2 + $0x3f8] sm:$0xff]
    %v1682 = vld [vmem:[%s2 + $0x400] sm:$0xff]
    %v1683 = vld [vmem:[%s2 + $0x408] sm:$0xf]
    %v1684 = vld [vmem:[%s2 + $0x40c] sm:$0xff]
    %v1685 = vld [vmem:[%s2 + $0x414] sm:$0xff]
    %v1686 = vld [vmem:[%s2 + $0x41c] sm:$0xff]
    %v1687 = vld [vmem:[%s2 + $0x424] sm:$0xf]
    %v1688 = vld [vmem:[%s2 + $0x428] sm:$0xff]
    %v1689 = vld [vmem:[%s2 + $0x430] sm:$0xff]
    %v1690 = vld [vmem:[%s2 + $0x438] sm:$0xff]
    %v1691 = vld [vmem:[%s2 + $0x440] sm:$0xf]
    %v1692 = vld [vmem:[%s2 + $0x444] sm:$0xff]
    %v1693 = vld [vmem:[%s2 + $0x44c] sm:$0xff]
    %v1694 = vld [vmem:[%s2 + $0x454] sm:$0xff]
    %v1695 = vld [vmem:[%s2 + $0x45c] sm:$0xf]
    %v1696 = vld [vmem:[%s2 + $0x460] sm:$0xff]
    %v1697 = vld [vmem:[%s2 + $0x468] sm:$0xff]
    %v1698 = vld [vmem:[%s2 + $0x470] sm:$0xff]
    %v1699 = vld [vmem:[%s2 + $0x478] sm:$0xf]
    %v1700 = vld [vmem:[%s2 + $0x47c] sm:$0xff]
    %v1701 = vld [vmem:[%s2 + $0x484] sm:$0xff]
    %v1702 = vld [vmem:[%s2 + $0x48c] sm:$0xff]
    %v1703 = vld [vmem:[%s2 + $0x494] sm:$0xf]
    %v1704 = vld [vmem:[%s2 + $0x498] sm:$0xff]
    %v1705 = vld [vmem:[%s2 + $0x4a0] sm:$0xff]
    %v1706 = vld [vmem:[%s2 + $0x4a8] sm:$0xff]
    %v1707 = vld [vmem:[%s2 + $0x4b0] sm:$0xf]
    %v1708 = vld [vmem:[%s2 + $0x4b4] sm:$0xff]
    %v1709 = vld [vmem:[%s2 + $0x4bc] sm:$0xff]
    %v1710 = vld [vmem:[%s2 + $0x4c4] sm:$0xff]
    %v1711 = vld [vmem:[%s2 + $0x4cc] sm:$0xf]
    %v1712 = vld [vmem:[%s2 + $0x4d0] sm:$0xff]
    %v1713 = vld [vmem:[%s2 + $0x4d8] sm:$0xff]
    %v1714 = vld [vmem:[%s2 + $0x4e0] sm:$0xff]
    %v1715 = vld [vmem:[%s2 + $0x4e8] sm:$0xf]
    %v1716 = vld [vmem:[%s2 + $0x4ec] sm:$0xff]
    %v1717 = vld [vmem:[%s2 + $0x4f4] sm:$0xff]
    %v1718 = vld [vmem:[%s2 + $0x4fc] sm:$0xff]
    %v1719 = vld [vmem:[%s2 + $0x504] sm:$0xf]
    %v1720 = vld [vmem:[%s2 + $0x508] sm:$0xff]
    %v1721 = vld [vmem:[%s2 + $0x510] sm:$0xff]
    %v1722 = vld [vmem:[%s2 + $0x518] sm:$0xff]
    %v1723 = vld [vmem:[%s2 + $0x520] sm:$0xf]
    %v1724 = vld [vmem:[%s2 + $0x524] sm:$0xff]
    %v1725 = vld [vmem:[%s2 + $0x52c] sm:$0xff]
    %v1726 = vld [vmem:[%s2 + $0x534] sm:$0xff]
    %v1727 = vld [vmem:[%s2 + $0x53c] sm:$0xf]
    %v1728 = vld [vmem:[%s2 + $0x540] sm:$0xff]
    %v1729 = vld [vmem:[%s2 + $0x548] sm:$0xff]
    %v1730 = vld [vmem:[%s2 + $0x550] sm:$0xff]
    %v1731 = vld [vmem:[%s2 + $0x558] sm:$0xf]
    %v1732 = vld [vmem:[%s2 + $0x55c] sm:$0xff]
    %v1733 = vld [vmem:[%s2 + $0x564] sm:$0xff]
    %v1734 = vld [vmem:[%s2 + $0x56c] sm:$0xff]
    %v1735 = vld [vmem:[%s2 + $0x574] sm:$0xf]
    %v1736 = vld [vmem:[%s2 + $0x578] sm:$0xff]
    %v1737 = vld [vmem:[%s2 + $0x580] sm:$0xff]
    %v1738 = vld [vmem:[%s2 + $0x588] sm:$0xff]
    %v1739 = vld [vmem:[%s2 + $0x590] sm:$0xf]
    %v1740 = vld [vmem:[%s2 + $0x594] sm:$0xff]
    %v1741 = vld [vmem:[%s2 + $0x59c] sm:$0xff]
    %v1742 = vld [vmem:[%s2 + $0x5a4] sm:$0xff]
    %v1743 = vld [vmem:[%s2 + $0x5ac] sm:$0xf]
    %v1744 = vld [vmem:[%s2 + $0x5b0] sm:$0xff]
    %v1745 = vld [vmem:[%s2 + $0x5b8] sm:$0xff]
    %v1746 = vld [vmem:[%s2 + $0x5c0] sm:$0xff]
    %v1747 = vld [vmem:[%s2 + $0x5c8] sm:$0xf]
    %v1748 = vld [vmem:[%s2 + $0x5cc] sm:$0xff]
    %v1749 = vld [vmem:[%s2 + $0x5d4] sm:$0xff]
    %v1750 = vld [vmem:[%s2 + $0x5dc] sm:$0xff]
    %v1751 = vld [vmem:[%s2 + $0x5e4] sm:$0xf]
    %v1752 = vld [vmem:[%s2 + $0x5e8] sm:$0xff]
    %v1753 = vld [vmem:[%s2 + $0x5f0] sm:$0xff]
    %v1754 = vld [vmem:[%s2 + $0x5f8] sm:$0xff]
    %v1755 = vld [vmem:[%s2 + $0x600] sm:$0xf]
    %v1756 = vld [vmem:[%s2 + $0x604] sm:$0xff]
    %v1757 = vld [vmem:[%s2 + $0x60c] sm:$0xff]
    %v1758 = vld [vmem:[%s2 + $0x614] sm:$0xff]
    %v1759 = vld [vmem:[%s2 + $0x61c] sm:$0xf]
    %v1760 = vld [vmem:[%s2 + $0x620] sm:$0xff]
    %v1761 = vld [vmem:[%s2 + $0x628] sm:$0xff]
    %v1762 = vld [vmem:[%s2 + $0x630] sm:$0xff]
    %v1763 = vld [vmem:[%s2 + $0x638] sm:$0xf]
    %v1764 = vld [vmem:[%s2 + $0x63c] sm:$0xff]
    %v1765 = vld [vmem:[%s2 + $0x644] sm:$0xff]
    %v1766 = vld [vmem:[%s2 + $0x64c] sm:$0xff]
    %v1767 = vld [vmem:[%s2 + $0x654] sm:$0xf]
    %v1768 = vld [vmem:[%s2 + $0x658] sm:$0xff]
    %v1769 = vld [vmem:[%s2 + $0x660] sm:$0xff]
    %v1770 = vld [vmem:[%s2 + $0x668] sm:$0xff]
    %v1771 = vld [vmem:[%s2 + $0x670] sm:$0xf]
    %v1772 = vld [vmem:[%s2 + $0x674] sm:$0xff]
    %v1773 = vld [vmem:[%s2 + $0x67c] sm:$0xff]
    %v1774 = vld [vmem:[%s2 + $0x684] sm:$0xff]
    %v1775 = vld [vmem:[%s2 + $0x68c] sm:$0xf]
    %v1776 = vld [vmem:[%s2 + $0x690] sm:$0xff]
    %v1777 = vld [vmem:[%s2 + $0x698] sm:$0xff]
    %v1778 = vld [vmem:[%s2 + $0x6a0] sm:$0xff]
    %v1779 = vld [vmem:[%s2 + $0x6a8] sm:$0xf]
    %v1780 = vld [vmem:[%s2 + $0x6ac] sm:$0xff]
    %v1781 = vld [vmem:[%s2 + $0x6b4] sm:$0xff]
    %v1782 = vld [vmem:[%s2 + $0x6bc] sm:$0xff]
    %v1783 = vld [vmem:[%s2 + $0x6c4] sm:$0xf]
    %v1784 = vld [vmem:[%s2 + $0x6c8] sm:$0xff]
    %v1785 = vld [vmem:[%s2 + $0x6d0] sm:$0xff]
    %v1786 = vld [vmem:[%s2 + $0x6d8] sm:$0xff]
    %v1787 = vld [vmem:[%s2 + $0x6e0] sm:$0xf]
    %v1788 = vld [vmem:[%s2 + $0x6e4] sm:$0xff]
    %v1789 = vld [vmem:[%s2 + $0x6ec] sm:$0xff]
    %v1790 = vld [vmem:[%s2 + $0x6f4] sm:$0xff]
    %v1791 = vld [vmem:[%s2 + $0x6fc] sm:$0xf]
    %v1792 = vld [vmem:[%s2 + $0x700] sm:$0xff]
    %v1793 = vld [vmem:[%s2 + $0x708] sm:$0xff]
    %v1794 = vld [vmem:[%s2 + $0x710] sm:$0xff]
    %v1795 = vld [vmem:[%s2 + $0x718] sm:$0xf]
    %v1796 = vld [vmem:[%s2 + $0x71c] sm:$0xff]
    %v1797 = vld [vmem:[%s2 + $0x724] sm:$0xff]
    %v1798 = vld [vmem:[%s2 + $0x72c] sm:$0xff]
    %v1799 = vld [vmem:[%s2 + $0x734] sm:$0xf]
    %v1800 = vld [vmem:[%s2 + $0x738] sm:$0xff]
    %v1801 = vld [vmem:[%s2 + $0x740] sm:$0xff]
    %v1802 = vld [vmem:[%s2 + $0x748] sm:$0xff]
    %v1803 = vld [vmem:[%s2 + $0x750] sm:$0xf]
    %v1804 = vld [vmem:[%s2 + $0x754] sm:$0xff]
    %v1805 = vld [vmem:[%s2 + $0x75c] sm:$0xff]
    %v1806 = vld [vmem:[%s2 + $0x764] sm:$0xff]
    %v1807 = vld [vmem:[%s2 + $0x76c] sm:$0xf]
    %v1808 = vld [vmem:[%s2 + $0x770] sm:$0xff]
    %v1809 = vld [vmem:[%s2 + $0x778] sm:$0xff]
    %v1810 = vld [vmem:[%s2 + $0x780] sm:$0xff]
    %v1811 = vld [vmem:[%s2 + $0x788] sm:$0xf]
    %v1812 = vld [vmem:[%s2 + $0x78c] sm:$0xff]
    %v1813 = vld [vmem:[%s2 + $0x794] sm:$0xff]
    %v1814 = vld [vmem:[%s2 + $0x79c] sm:$0xff]
    %v1815 = vld [vmem:[%s2 + $0x7a4] sm:$0xf]
    %v1816 = vld [vmem:[%s2 + $0x7a8] sm:$0xff]
    %v1817 = vld [vmem:[%s2 + $0x7b0] sm:$0xff]
    %v1818 = vld [vmem:[%s2 + $0x7b8] sm:$0xff]
    %v1819 = vld [vmem:[%s2 + $0x7c0] sm:$0xf]
    %v1820 = vld [vmem:[%s2 + $0x7c4] sm:$0xff]
    %v1821 = vld [vmem:[%s2 + $0x7cc] sm:$0xff]
    %v1822 = vld [vmem:[%s2 + $0x7d4] sm:$0xff]
    %v1823 = vld [vmem:[%s2 + $0x7dc] sm:$0xf]
    %v1824 = vld [vmem:[%s2 + $0x7e0] sm:$0xff]
    %v1825 = vld [vmem:[%s2 + $0x7e8] sm:$0xff]
    %v1826 = vld [vmem:[%s2 + $0x7f0] sm:$0xff]
    %v1827 = vld [vmem:[%s2 + $0x7f8] sm:$0xf]
    %v1828 = vld [vmem:[%s2 + $0x7fc] sm:$0xff]
    %v1829 = vld [vmem:[%s2 + $0x804] sm:$0xff]
    %v1830 = vld [vmem:[%s2 + $0x80c] sm:$0xff]
    %v1831 = vld [vmem:[%s2 + $0x814] sm:$0xf]
    %v1832 = vld [vmem:[%s2 + $0x818] sm:$0xff]
    %v1833 = vld [vmem:[%s2 + $0x820] sm:$0xff]
    %v1834 = vld [vmem:[%s2 + $0x828] sm:$0xff]
    %v1835 = vld [vmem:[%s2 + $0x830] sm:$0xf]
    %v1836 = vld [vmem:[%s2 + $0x834] sm:$0xff]
    %v1837 = vld [vmem:[%s2 + $0x83c] sm:$0xff]
    %v1838 = vld [vmem:[%s2 + $0x844] sm:$0xff]
    %v1839 = vld [vmem:[%s2 + $0x84c] sm:$0xf]
    %v1840 = vld [vmem:[%s2 + $0x850] sm:$0xff]
    %v1841 = vld [vmem:[%s2 + $0x858] sm:$0xff]
    %v1842 = vld [vmem:[%s2 + $0x860] sm:$0xff]
    %v1843 = vld [vmem:[%s2 + $0x868] sm:$0xf]
    %v1844 = vld [vmem:[%s2 + $0x86c] sm:$0xff]
    %v1845 = vld [vmem:[%s2 + $0x874] sm:$0xff]
    %v1846 = vld [vmem:[%s2 + $0x87c] sm:$0xff]
    %v1847 = vld [vmem:[%s2 + $0x884] sm:$0xf]
    %v1848 = vld [vmem:[%s2 + $0x888] sm:$0xff]
    %v1849 = vld [vmem:[%s2 + $0x890] sm:$0xff]
    %v1850 = vld [vmem:[%s2 + $0x898] sm:$0xff]
    %v1851 = vld [vmem:[%s2 + $0x8a0] sm:$0xf]
    %v1852 = vld [vmem:[%s2 + $0x8a4] sm:$0xff]
    %v1853 = vld [vmem:[%s2 + $0x8ac] sm:$0xff]
    %v1854 = vld [vmem:[%s2 + $0x8b4] sm:$0xff]
    %v1855 = vld [vmem:[%s2 + $0x8bc] sm:$0xf]
    %v1856 = vld [vmem:[%s2 + $0x8c0] sm:$0xff]
    %v1857 = vld [vmem:[%s2 + $0x8c8] sm:$0xff]
    %v1858 = vld [vmem:[%s2 + $0x8d0] sm:$0xff]
    %v1859 = vld [vmem:[%s2 + $0x8d8] sm:$0xf]
    %v1860 = vld [vmem:[%s2 + $0x8dc] sm:$0xff]
    %v1861 = vld [vmem:[%s2 + $0x8e4] sm:$0xff]
    %v1862 = vld [vmem:[%s2 + $0x8ec] sm:$0xff]
    %v1863 = vld [vmem:[%s2 + $0x8f4] sm:$0xf]
    %v1864 = vld [vmem:[%s2 + $0x8f8] sm:$0xff]
    %v1865 = vld [vmem:[%s2 + $0x900] sm:$0xff]
    %v1866 = vld [vmem:[%s2 + $0x908] sm:$0xff]
    %v1867 = vld [vmem:[%s2 + $0x910] sm:$0xf]
    %v1868 = vld [vmem:[%s2 + $0x914] sm:$0xff]
    %v1869 = vld [vmem:[%s2 + $0x91c] sm:$0xff]
    %v1870 = vld [vmem:[%s2 + $0x924] sm:$0xff]
    %v1871 = vld [vmem:[%s2 + $0x92c] sm:$0xf]
    %v1872 = vld [vmem:[%s2 + $0x930] sm:$0xff]
    %v1873 = vld [vmem:[%s2 + $0x938] sm:$0xff]
    %v1874 = vld [vmem:[%s2 + $0x940] sm:$0xff]
    %v1875 = vld [vmem:[%s2 + $0x948] sm:$0xf]
    %v1876 = vld [vmem:[%s2 + $0x94c] sm:$0xff]
    %v1877 = vld [vmem:[%s2 + $0x954] sm:$0xff]
    %v1878 = vld [vmem:[%s2 + $0x95c] sm:$0xff]
    %v1879 = vld [vmem:[%s2 + $0x964] sm:$0xf]
    %v1880 = vld [vmem:[%s2 + $0x968] sm:$0xff]
    %v1881 = vld [vmem:[%s2 + $0x970] sm:$0xff]
    %v1882 = vld [vmem:[%s2 + $0x978] sm:$0xff]
    %v1883 = vld [vmem:[%s2 + $0x980] sm:$0xf]
    %v1884 = vld [vmem:[%s2 + $0x984] sm:$0xff]
    %v1885 = vld [vmem:[%s2 + $0x98c] sm:$0xff]
    %v1886 = vld [vmem:[%s2 + $0x994] sm:$0xff]
    %v1887 = vld [vmem:[%s2 + $0x99c] sm:$0xf]
    %v1888 = vld [vmem:[%s2 + $0x9a0] sm:$0xff]
    %v1889 = vld [vmem:[%s2 + $0x9a8] sm:$0xff]
    %v1890 = vld [vmem:[%s2 + $0x9b0] sm:$0xff]
    %v1891 = vld [vmem:[%s2 + $0x9b8] sm:$0xf]
    %v1892 = vld [vmem:[%s2 + $0x9bc] sm:$0xff]
    %v1893 = vld [vmem:[%s2 + $0x9c4] sm:$0xff]
    %v1894 = vld [vmem:[%s2 + $0x9cc] sm:$0xff]
    %v1895 = vld [vmem:[%s2 + $0x9d4] sm:$0xf]
    %v1896 = vld [vmem:[%s2 + $0x9d8] sm:$0xff]
    %v1897 = vld [vmem:[%s2 + $0x9e0] sm:$0xff]
    %v1898 = vld [vmem:[%s2 + $0x9e8] sm:$0xff]
    %v1899 = vld [vmem:[%s2 + $0x9f0] sm:$0xf]
    %v1900 = vld [vmem:[%s2 + $0x9f4] sm:$0xff]
    %v1901 = vld [vmem:[%s2 + $0x9fc] sm:$0xff]
    %v1902 = vld [vmem:[%s2 + $0xa04] sm:$0xff]
    %v1903 = vld [vmem:[%s2 + $0xa0c] sm:$0xf]
    %v1904 = vld [vmem:[%s2 + $0xa10] sm:$0xff]
    %v1905 = vld [vmem:[%s2 + $0xa18] sm:$0xff]
    %v1906 = vld [vmem:[%s2 + $0xa20] sm:$0xff]
    %v1907 = vld [vmem:[%s2 + $0xa28] sm:$0xf]
    %v1908 = vld [vmem:[%s2 + $0xa2c] sm:$0xff]
    %v1909 = vld [vmem:[%s2 + $0xa34] sm:$0xff]
    %v1910 = vld [vmem:[%s2 + $0xa3c] sm:$0xff]
    %v1911 = vld [vmem:[%s2 + $0xa44] sm:$0xf]
    %v1912 = vld [vmem:[%s2 + $0xa48] sm:$0xff]
    %v1913 = vld [vmem:[%s2 + $0xa50] sm:$0xff]
    %v1914 = vld [vmem:[%s2 + $0xa58] sm:$0xff]
    %v1915 = vld [vmem:[%s2 + $0xa60] sm:$0xf]
    %v1916 = vld [vmem:[%s2 + $0xa64] sm:$0xff]
    %v1917 = vld [vmem:[%s2 + $0xa6c] sm:$0xff]
    %v1918 = vld [vmem:[%s2 + $0xa74] sm:$0xff]
    %v1919 = vld [vmem:[%s2 + $0xa7c] sm:$0xf]
    %v1920 = vld [vmem:[%s2 + $0xa80] sm:$0xff]
    %v1921 = vld [vmem:[%s2 + $0xa88] sm:$0xff]
    %v1922 = vld [vmem:[%s2 + $0xa90] sm:$0xff]
    %v1923 = vld [vmem:[%s2 + $0xa98] sm:$0xf]
    %v1924 = vld [vmem:[%s2 + $0xa9c] sm:$0xff]
    %v1925 = vld [vmem:[%s2 + $0xaa4] sm:$0xff]
    %v1926 = vld [vmem:[%s2 + $0xaac] sm:$0xff]
    %v1927 = vld [vmem:[%s2 + $0xab4] sm:$0xf]
    %v1928 = vld [vmem:[%s2 + $0xab8] sm:$0xff]
    %v1929 = vld [vmem:[%s2 + $0xac0] sm:$0xff]
    %v1930 = vld [vmem:[%s2 + $0xac8] sm:$0xff]
    %v1931 = vld [vmem:[%s2 + $0xad0] sm:$0xf]
    %v1932 = vld [vmem:[%s2 + $0xad4] sm:$0xff]
    %v1933 = vld [vmem:[%s2 + $0xadc] sm:$0xff]
    %v1934 = vld [vmem:[%s2 + $0xae4] sm:$0xff]
    %v1935 = vld [vmem:[%s2 + $0xaec] sm:$0xf]
    %v1936 = vld [vmem:[%s2 + $0xaf0] sm:$0xff]
    %v1937 = vld [vmem:[%s2 + $0xaf8] sm:$0xff]
    %v1938 = vld [vmem:[%s2 + $0xb00] sm:$0xff]
    %v1939 = vld [vmem:[%s2 + $0xb08] sm:$0xf]
    %v1940 = vld [vmem:[%s2 + $0xb0c] sm:$0xff]
    %v1941 = vld [vmem:[%s2 + $0xb14] sm:$0xff]
    %v1942 = vld [vmem:[%s2 + $0xb1c] sm:$0xff]
    %v1943 = vld [vmem:[%s2 + $0xb24] sm:$0xf]
    %v1944 = vld [vmem:[%s2 + $0xb28] sm:$0xff]
    %v1945 = vld [vmem:[%s2 + $0xb30] sm:$0xff]
    %v1946 = vld [vmem:[%s2 + $0xb38] sm:$0xff]
    %v1947 = vld [vmem:[%s2 + $0xb40] sm:$0xf]
    %v1948 = vld [vmem:[%s2 + $0xb44] sm:$0xff]
    %v1949 = vld [vmem:[%s2 + $0xb4c] sm:$0xff]
    %v1950 = vld [vmem:[%s2 + $0xb54] sm:$0xff]
    %v1951 = vld [vmem:[%s2 + $0xb5c] sm:$0xf]
    %v1952 = vld [vmem:[%s2 + $0xb60] sm:$0xff]
    %v1953 = vld [vmem:[%s2 + $0xb68] sm:$0xff]
    %v1954 = vld [vmem:[%s2 + $0xb70] sm:$0xff]
    %v1955 = vld [vmem:[%s2 + $0xb78] sm:$0xf]
    %v1956 = vld [vmem:[%s2 + $0xb7c] sm:$0xff]
    %v1957 = vld [vmem:[%s2 + $0xb84] sm:$0xff]
    %v1958 = vld [vmem:[%s2 + $0xb8c] sm:$0xff]
    %v1959 = vld [vmem:[%s2 + $0xb94] sm:$0xf]
    %v1960 = vld [vmem:[%s2 + $0xb98] sm:$0xff]
    %v1961 = vld [vmem:[%s2 + $0xba0] sm:$0xff]
    %v1962 = vld [vmem:[%s2 + $0xba8] sm:$0xff]
    %v1963 = vld [vmem:[%s2 + $0xbb0] sm:$0xf]
    %v1964 = vld [vmem:[%s2 + $0xbb4] sm:$0xff]
    %v1965 = vld [vmem:[%s2 + $0xbbc] sm:$0xff]
    %v1966 = vld [vmem:[%s2 + $0xbc4] sm:$0xff]
    %v1967 = vld [vmem:[%s2 + $0xbcc] sm:$0xf]
    %v1968 = vld [vmem:[%s2 + $0xbd0] sm:$0xff]
    %v1969 = vld [vmem:[%s2 + $0xbd8] sm:$0xff]
    %v1970 = vld [vmem:[%s2 + $0xbe0] sm:$0xff]
    %v1971 = vld [vmem:[%s2 + $0xbe8] sm:$0xf]
    %v1972 = vld [vmem:[%s2 + $0xbec] sm:$0xff]
    %v1973 = vld [vmem:[%s2 + $0xbf4] sm:$0xff]
    %v1974 = vld [vmem:[%s2 + $0xbfc] sm:$0xff]
    %v1975 = vld [vmem:[%s2 + $0xc04] sm:$0xf]
    %v1976 = vld [vmem:[%s2 + $0xc08] sm:$0xff]
    %v1977 = vld [vmem:[%s2 + $0xc10] sm:$0xff]
    %v1978 = vld [vmem:[%s2 + $0xc18] sm:$0xff]
    %v1979 = vld [vmem:[%s2 + $0xc20] sm:$0xf]
    %v1980 = vld [vmem:[%s2 + $0xc24] sm:$0xff]
    %v1981 = vld [vmem:[%s2 + $0xc2c] sm:$0xff]
    %v1982 = vld [vmem:[%s2 + $0xc34] sm:$0xff]
    %v1983 = vld [vmem:[%s2 + $0xc3c] sm:$0xf]
    %v1984 = vld [vmem:[%s2 + $0xc40] sm:$0xff]
    %v1985 = vld [vmem:[%s2 + $0xc48] sm:$0xff]
    %v1986 = vld [vmem:[%s2 + $0xc50] sm:$0xff]
    %v1987 = vld [vmem:[%s2 + $0xc58] sm:$0xf]
    %v1988 = vld [vmem:[%s2 + $0xc5c] sm:$0xff]
    %v1989 = vld [vmem:[%s2 + $0xc64] sm:$0xff]
    %v1990 = vld [vmem:[%s2 + $0xc6c] sm:$0xff]
    %v1991 = vld [vmem:[%s2 + $0xc74] sm:$0xf]
    %v1992 = vld [vmem:[%s2 + $0xc78] sm:$0xff]
    %v1993 = vld [vmem:[%s2 + $0xc80] sm:$0xff]
    %v1994 = vld [vmem:[%s2 + $0xc88] sm:$0xff]
    %v1995 = vld [vmem:[%s2 + $0xc90] sm:$0xf]
    %v1996 = vld [vmem:[%s2 + $0xc94] sm:$0xff]
    %v1997 = vld [vmem:[%s2 + $0xc9c] sm:$0xff]
    %v1998 = vld [vmem:[%s2 + $0xca4] sm:$0xff]
    %v1999 = vld [vmem:[%s2 + $0xcac] sm:$0xf]
    %v2000 = vld [vmem:[%s2 + $0xcb0] sm:$0xff]
    %v2001 = vld [vmem:[%s2 + $0xcb8] sm:$0xff]
    %v2002 = vld [vmem:[%s2 + $0xcc0] sm:$0xff]
    %v2003 = vld [vmem:[%s2 + $0xcc8] sm:$0xf]
    %v2004 = vld [vmem:[%s2 + $0xccc] sm:$0xff]
    %v2005 = vld [vmem:[%s2 + $0xcd4] sm:$0xff]
    %v2006 = vld [vmem:[%s2 + $0xcdc] sm:$0xff]
    %v2007 = vld [vmem:[%s2 + $0xce4] sm:$0xf]
    %v2008 = vld [vmem:[%s2 + $0xce8] sm:$0xff]
    %v2009 = vld [vmem:[%s2 + $0xcf0] sm:$0xff]
    %v2010 = vld [vmem:[%s2 + $0xcf8] sm:$0xff]
    %v2011 = vld [vmem:[%s2 + $0xd00] sm:$0xf]
    %v2012 = vld [vmem:[%s2 + $0xd04] sm:$0xff]
    %v2013 = vld [vmem:[%s2 + $0xd0c] sm:$0xff]
    %v2014 = vld [vmem:[%s2 + $0xd14] sm:$0xff]
    %v2015 = vld [vmem:[%s2 + $0xd1c] sm:$0xf]
    %v2016 = vld [vmem:[%s2 + $0xd20] sm:$0xff]
    %v2017 = vld [vmem:[%s2 + $0xd28] sm:$0xff]
    %v2018 = vld [vmem:[%s2 + $0xd30] sm:$0xff]
    %v2019 = vld [vmem:[%s2 + $0xd38] sm:$0xf]
    %v2020 = vld [vmem:[%s2 + $0xd3c] sm:$0xff]
    %v2021 = vld [vmem:[%s2 + $0xd44] sm:$0xff]
    %v2022 = vld [vmem:[%s2 + $0xd4c] sm:$0xff]
    %v2023 = vld [vmem:[%s2 + $0xd54] sm:$0xf]
    %v2024 = vld [vmem:[%s2 + $0xd58] sm:$0xff]
    %v2025 = vld [vmem:[%s2 + $0xd60] sm:$0xff]
    %v2026 = vld [vmem:[%s2 + $0xd68] sm:$0xff]
    %v2027 = vld [vmem:[%s2 + $0xd70] sm:$0xf]
    %v2028 = vld [vmem:[%s2 + $0xd74] sm:$0xff]
    %v2029 = vld [vmem:[%s2 + $0xd7c] sm:$0xff]
    %v2030 = vld [vmem:[%s2 + $0xd84] sm:$0xff]
    %v2031 = vld [vmem:[%s2 + $0xd8c] sm:$0xf]
    %v2032 = vld [vmem:[%s2 + $0xd90] sm:$0xff]
    %v2033 = vld [vmem:[%s2 + $0xd98] sm:$0xff]
    %v2034 = vld [vmem:[%s2 + $0xda0] sm:$0xff]
    %v2035 = vld [vmem:[%s2 + $0xda8] sm:$0xf]
    %v2036 = vld [vmem:[%s2 + $0xdac] sm:$0xff]
    %v2037 = vld [vmem:[%s2 + $0xdb4] sm:$0xff]
    %v2038 = vld [vmem:[%s2 + $0xdbc] sm:$0xff]
    %v2039 = vld [vmem:[%s2 + $0xdc4] sm:$0xf]
    %v2040 = vld [vmem:[%s2 + $0xdc8] sm:$0xff]
    %v2041 = vld [vmem:[%s2 + $0xdd0] sm:$0xff]
    %v2042 = vld [vmem:[%s2 + $0xdd8] sm:$0xff]
    %v2043 = vld [vmem:[%s2 + $0xde0] sm:$0xf]
    %v2044 = vld [vmem:[%s2 + $0xde4] sm:$0xff]
    %v2045 = vld [vmem:[%s2 + $0xdec] sm:$0xff]
    %v2046 = vld [vmem:[%s2 + $0xdf4] sm:$0xff]
    %v2047 = vld [vmem:[%s2 + $0xdfc] sm:$0xf]
    %v2048 = vpack.c.bf16 %v1339, %v1337
    %v2049 = vpack.c.bf16 %v1343, %v1341
    %v2050 = vpack.c.bf16 %v1347, %v1345
    %v2051 = vpack.c.bf16 %v1351, %v1349
    %v2052 = vpack.c.bf16 %v1355, %v1353
    %v2053 = vpack.c.bf16 %v1359, %v1357
    %v2054 = vpack.c.bf16 %v1363, %v1361
    %v2055 = vpack.c.bf16 %v1367, %v1365
    %v2056 = vpack.c.bf16 %v1371, %v1369
    %v2057 = vpack.c.bf16 %v1375, %v1373
    %v2058 = vpack.c.bf16 %v1379, %v1377
    %v2059 = vpack.c.bf16 %v1383, %v1381
    %v2060 = vpack.c.bf16 %v1387, %v1385
    %v2061 = vpack.c.bf16 %v1391, %v1389
    %v2062 = vpack.c.bf16 %v1395, %v1393
    %v2063 = vpack.c.bf16 %v1399, %v1397
    %v2064 = vpack.c.bf16 %v1403, %v1401
    %v2065 = vpack.c.bf16 %v1407, %v1405
    %v2066 = vpack.c.bf16 %v1411, %v1409
    %v2067 = vpack.c.bf16 %v1415, %v1413
    %v2068 = vpack.c.bf16 %v1419, %v1417
    %v2069 = vpack.c.bf16 %v1423, %v1421
    %v2070 = vpack.c.bf16 %v1427, %v1425
    %v2071 = vpack.c.bf16 %v1431, %v1429
    %v2072 = vpack.c.bf16 %v1435, %v1433
    %v2073 = vpack.c.bf16 %v1439, %v1437
    %v2074 = vpack.c.bf16 %v1443, %v1441
    %v2075 = vpack.c.bf16 %v1447, %v1445
    %v2076 = vpack.c.bf16 %v1451, %v1449
    %v2077 = vpack.c.bf16 %v1455, %v1453
    %v2078 = vpack.c.bf16 %v1459, %v1457
    %v2079 = vpack.c.bf16 %v1463, %v1461
    %v2080 = vpack.c.bf16 %v1467, %v1465
    %v2081 = vpack.c.bf16 %v1471, %v1469
    %v2082 = vpack.c.bf16 %v1475, %v1473
    %v2083 = vpack.c.bf16 %v1479, %v1477
    %v2084 = vpack.c.bf16 %v1483, %v1481
    %v2085 = vpack.c.bf16 %v1487, %v1485
    %v2086 = vpack.c.bf16 %v1491, %v1489
    %v2087 = vpack.c.bf16 %v1495, %v1493
    %v2088 = vpack.c.bf16 %v1499, %v1497
    %v2089 = vpack.c.bf16 %v1503, %v1501
    %v2090 = vpack.c.bf16 %v1507, %v1505
    %v2091 = vpack.c.bf16 %v1511, %v1509
    %v2092 = vpack.c.bf16 %v1515, %v1513
    %v2093 = vpack.c.bf16 %v1519, %v1517
    %v2094 = vpack.c.bf16 %v1523, %v1521
    %v2095 = vpack.c.bf16 %v1527, %v1525
    %v2096 = vpack.c.bf16 %v1531, %v1529
    %v2097 = vpack.c.bf16 %v1535, %v1533
    %v2098 = vld [vmem:[%s3] sm:$0xff]
    %v2099 = vld [vmem:[%s3 + $0x8] sm:$0xff]
    %v2100 = vld [vmem:[%s3 + $0x10] sm:$0xff]
    %v2101 = vld [vmem:[%s3 + $0x18] sm:$0xff]
    %v2102 = vld [vmem:[%s3 + $0x20] sm:$0xff]
    %v2103 = vld [vmem:[%s3 + $0x28] sm:$0xff]
    %v2104 = vld [vmem:[%s3 + $0x30] sm:$0xff]
    %v2105 = vld [vmem:[%s3 + $0x38] sm:$0xff]
    %v2106 = vld [vmem:[%s3 + $0x40] sm:$0xff]
    %v2107 = vld [vmem:[%s3 + $0x48] sm:$0xff]
    %v2108 = vld [vmem:[%s3 + $0x50] sm:$0xff]
    %v2109 = vld [vmem:[%s3 + $0x58] sm:$0xff]
    %v2110 = vld [vmem:[%s3 + $0x60] sm:$0xff]
    %v2111 = vld [vmem:[%s3 + $0x68] sm:$0xff]
    %v2112 = vld [vmem:[%s3 + $0x70] sm:$0xff]
    %v2113 = vld [vmem:[%s3 + $0x78] sm:$0xff]
    %v2114 = vld [vmem:[%s3 + $0x80] sm:$0xff]
    %v2115 = vld [vmem:[%s3 + $0x88] sm:$0xff]
    %v2116 = vld [vmem:[%s3 + $0x90] sm:$0xff]
    %v2117 = vld [vmem:[%s3 + $0x98] sm:$0xff]
    %v2118 = vld [vmem:[%s3 + $0xa0] sm:$0xff]
    %v2119 = vld [vmem:[%s3 + $0xa8] sm:$0xff]
    %v2120 = vld [vmem:[%s3 + $0xb0] sm:$0xff]
    %v2121 = vld [vmem:[%s3 + $0xb8] sm:$0xff]
    %v2122 = vld [vmem:[%s3 + $0xc0] sm:$0xff]
    %v2123 = vld [vmem:[%s3 + $0xc8] sm:$0xff]
    %v2124 = vld [vmem:[%s3 + $0xd0] sm:$0xff]
    %v2125 = vld [vmem:[%s3 + $0xd8] sm:$0xff]
    %v2126 = vld [vmem:[%s3 + $0xe0] sm:$0xff]
    %v2127 = vld [vmem:[%s3 + $0xe8] sm:$0xff]
    %v2128 = vld [vmem:[%s3 + $0xf0] sm:$0xff]
    %v2129 = vld [vmem:[%s3 + $0xf8] sm:$0xff]
    %v2130 = vld [vmem:[%s3 + $0x100] sm:$0xff]
    %v2131 = vld [vmem:[%s3 + $0x108] sm:$0xff]
    %v2132 = vld [vmem:[%s3 + $0x110] sm:$0xff]
    %v2133 = vld [vmem:[%s3 + $0x118] sm:$0xff]
    %v2134 = vld [vmem:[%s3 + $0x120] sm:$0xff]
    %v2135 = vld [vmem:[%s3 + $0x128] sm:$0xff]
    %v2136 = vld [vmem:[%s3 + $0x130] sm:$0xff]
    %v2137 = vld [vmem:[%s3 + $0x138] sm:$0xff]
    %v2138 = vld [vmem:[%s3 + $0x140] sm:$0xff]
    %v2139 = vld [vmem:[%s3 + $0x148] sm:$0xff]
    %v2140 = vld [vmem:[%s3 + $0x150] sm:$0xff]
    %v2141 = vld [vmem:[%s3 + $0x158] sm:$0xff]
    %v2142 = vld [vmem:[%s3 + $0x160] sm:$0xff]
    %v2143 = vld [vmem:[%s3 + $0x168] sm:$0xff]
    %v2144 = vld [vmem:[%s3 + $0x170] sm:$0xff]
    %v2145 = vld [vmem:[%s3 + $0x178] sm:$0xff]
    %v2146 = vld [vmem:[%s3 + $0x180] sm:$0xff]
    %v2147 = vld [vmem:[%s3 + $0x188] sm:$0xff]
    %v2148 = vld [vmem:[%s3 + $0x190] sm:$0xff]
    %v2149 = vld [vmem:[%s3 + $0x198] sm:$0xff]
    %v2150 = vld [vmem:[%s3 + $0x1a0] sm:$0xff]
    %v2151 = vld [vmem:[%s3 + $0x1a8] sm:$0xff]
    %v2152 = vld [vmem:[%s3 + $0x1b0] sm:$0xff]
    %v2153 = vld [vmem:[%s3 + $0x1b8] sm:$0xff]
    %v2154 = vld [vmem:[%s3 + $0x1c0] sm:$0xff]
    %v2155 = vld [vmem:[%s3 + $0x1c8] sm:$0xff]
    %v2156 = vld [vmem:[%s3 + $0x1d0] sm:$0xff]
    %v2157 = vld [vmem:[%s3 + $0x1d8] sm:$0xff]
    %v2158 = vld [vmem:[%s3 + $0x1e0] sm:$0xff]
    %v2159 = vld [vmem:[%s3 + $0x1e8] sm:$0xff]
    %v2160 = vld [vmem:[%s3 + $0x1f0] sm:$0xff]
    %v2161 = vld [vmem:[%s3 + $0x1f8] sm:$0xff]
    %v2162 = vld [vmem:[%s3 + $0x200] sm:$0xff]
    %v2163 = vld [vmem:[%s3 + $0x208] sm:$0xff]
    %v2164 = vld [vmem:[%s3 + $0x210] sm:$0xff]
    %v2165 = vld [vmem:[%s3 + $0x218] sm:$0xff]
    %v2166 = vld [vmem:[%s3 + $0x220] sm:$0xff]
    %v2167 = vld [vmem:[%s3 + $0x228] sm:$0xff]
    %v2168 = vld [vmem:[%s3 + $0x230] sm:$0xff]
    %v2169 = vld [vmem:[%s3 + $0x238] sm:$0xff]
    %v2170 = vld [vmem:[%s3 + $0x240] sm:$0xff]
    %v2171 = vld [vmem:[%s3 + $0x248] sm:$0xff]
    %v2172 = vld [vmem:[%s3 + $0x250] sm:$0xff]
    %v2173 = vld [vmem:[%s3 + $0x258] sm:$0xff]
    %v2174 = vld [vmem:[%s3 + $0x260] sm:$0xff]
    %v2175 = vld [vmem:[%s3 + $0x268] sm:$0xff]
    %v2176 = vld [vmem:[%s3 + $0x270] sm:$0xff]
    %v2177 = vld [vmem:[%s3 + $0x278] sm:$0xff]
    %v2178 = vld [vmem:[%s3 + $0x280] sm:$0xff]
    %v2179 = vld [vmem:[%s3 + $0x288] sm:$0xff]
    %v2180 = vld [vmem:[%s3 + $0x290] sm:$0xff]
    %v2181 = vld [vmem:[%s3 + $0x298] sm:$0xff]
    %v2182 = vld [vmem:[%s3 + $0x2a0] sm:$0xff]
    %v2183 = vld [vmem:[%s3 + $0x2a8] sm:$0xff]
    %v2184 = vld [vmem:[%s3 + $0x2b0] sm:$0xff]
    %v2185 = vld [vmem:[%s3 + $0x2b8] sm:$0xff]
    %v2186 = vld [vmem:[%s3 + $0x2c0] sm:$0xff]
    %v2187 = vld [vmem:[%s3 + $0x2c8] sm:$0xff]
    %v2188 = vld [vmem:[%s3 + $0x2d0] sm:$0xff]
    %v2189 = vld [vmem:[%s3 + $0x2d8] sm:$0xff]
    %v2190 = vld [vmem:[%s3 + $0x2e0] sm:$0xff]
    %v2191 = vld [vmem:[%s3 + $0x2e8] sm:$0xff]
    %v2192 = vld [vmem:[%s3 + $0x2f0] sm:$0xff]
    %v2193 = vld [vmem:[%s3 + $0x2f8] sm:$0xff]
    %v2194 = vld [vmem:[%s3 + $0x300] sm:$0xff]
    %v2195 = vld [vmem:[%s3 + $0x308] sm:$0xff]
    %v2196 = vld [vmem:[%s3 + $0x310] sm:$0xff]
    %v2197 = vld [vmem:[%s3 + $0x318] sm:$0xff]
    %v2198 = vld [vmem:[%s3 + $0x320] sm:$0xff]
    %v2199 = vld [vmem:[%s3 + $0x328] sm:$0xff]
    %v2200 = vld [vmem:[%s3 + $0x330] sm:$0xff]
    %v2201 = vld [vmem:[%s3 + $0x338] sm:$0xff]
    %v2202 = vld [vmem:[%s3 + $0x340] sm:$0xff]
    %v2203 = vld [vmem:[%s3 + $0x348] sm:$0xff]
    %v2204 = vld [vmem:[%s3 + $0x350] sm:$0xff]
    %v2205 = vld [vmem:[%s3 + $0x358] sm:$0xff]
    %v2206 = vld [vmem:[%s3 + $0x360] sm:$0xff]
    %v2207 = vld [vmem:[%s3 + $0x368] sm:$0xff]
    %v2208 = vld [vmem:[%s3 + $0x370] sm:$0xff]
    %v2209 = vld [vmem:[%s3 + $0x378] sm:$0xff]
    %v2210 = vld [vmem:[%s3 + $0x380] sm:$0xff]
    %v2211 = vld [vmem:[%s3 + $0x388] sm:$0xff]
    %v2212 = vld [vmem:[%s3 + $0x390] sm:$0xff]
    %v2213 = vld [vmem:[%s3 + $0x398] sm:$0xff]
    %v2214 = vld [vmem:[%s3 + $0x3a0] sm:$0xff]
    %v2215 = vld [vmem:[%s3 + $0x3a8] sm:$0xff]
    %v2216 = vld [vmem:[%s3 + $0x3b0] sm:$0xff]
    %v2217 = vld [vmem:[%s3 + $0x3b8] sm:$0xff]
    %v2218 = vld [vmem:[%s3 + $0x3c0] sm:$0xff]
    %v2219 = vld [vmem:[%s3 + $0x3c8] sm:$0xff]
    %v2220 = vld [vmem:[%s3 + $0x3d0] sm:$0xff]
    %v2221 = vld [vmem:[%s3 + $0x3d8] sm:$0xff]
    %v2222 = vld [vmem:[%s3 + $0x3e0] sm:$0xff]
    %v2223 = vld [vmem:[%s3 + $0x3e8] sm:$0xff]
    %v2224 = vld [vmem:[%s3 + $0x3f0] sm:$0xff]
    %v2225 = vld [vmem:[%s3 + $0x3f8] sm:$0xff]
    %2227 = vset.pattern.permute.xlu0 0
    %2228 = vperm.xlu0 %2227, %v2098
    %v2229 = vpop.permute.xlu0 %2228
    %2232 = vset.pattern.permute.xlu0 0
    %2233 = vperm.xlu0 %2232, %v2099
    %v2234 = vpop.permute.xlu0 %2233
    %2237 = vset.pattern.permute.xlu0 0
    %2238 = vperm.xlu0 %2237, %v2100
    %v2239 = vpop.permute.xlu0 %2238
    %2242 = vset.pattern.permute.xlu0 0
    %2243 = vperm.xlu0 %2242, %v2101
    %v2244 = vpop.permute.xlu0 %2243
    %2247 = vset.pattern.permute.xlu0 0
    %2248 = vperm.xlu0 %2247, %v2102
    %v2249 = vpop.permute.xlu0 %2248
    %2252 = vset.pattern.permute.xlu0 0
    %2253 = vperm.xlu0 %2252, %v2103
    %v2254 = vpop.permute.xlu0 %2253
    %2257 = vset.pattern.permute.xlu0 0
    %2258 = vperm.xlu0 %2257, %v2104
    %v2259 = vpop.permute.xlu0 %2258
    %2262 = vset.pattern.permute.xlu0 0
    %2263 = vperm.xlu0 %2262, %v2105
    %v2264 = vpop.permute.xlu0 %2263
    %2267 = vset.pattern.permute.xlu0 0
    %2268 = vperm.xlu0 %2267, %v2106
    %v2269 = vpop.permute.xlu0 %2268
    %2272 = vset.pattern.permute.xlu0 0
    %2273 = vperm.xlu0 %2272, %v2107
    %v2274 = vpop.permute.xlu0 %2273
    %2277 = vset.pattern.permute.xlu0 0
    %2278 = vperm.xlu0 %2277, %v2108
    %v2279 = vpop.permute.xlu0 %2278
    %2282 = vset.pattern.permute.xlu0 0
    %2283 = vperm.xlu0 %2282, %v2109
    %v2284 = vpop.permute.xlu0 %2283
    %2287 = vset.pattern.permute.xlu0 0
    %2288 = vperm.xlu0 %2287, %v2110
    %v2289 = vpop.permute.xlu0 %2288
    %2292 = vset.pattern.permute.xlu0 0
    %2293 = vperm.xlu0 %2292, %v2111
    %v2294 = vpop.permute.xlu0 %2293
    %2297 = vset.pattern.permute.xlu0 0
    %2298 = vperm.xlu0 %2297, %v2112
    %v2299 = vpop.permute.xlu0 %2298
    %2302 = vset.pattern.permute.xlu0 0
    %2303 = vperm.xlu0 %2302, %v2113
    %v2304 = vpop.permute.xlu0 %2303
    %2307 = vset.pattern.permute.xlu0 0
    %2308 = vperm.xlu0 %2307, %v2114
    %v2309 = vpop.permute.xlu0 %2308
    %2312 = vset.pattern.permute.xlu0 0
    %2313 = vperm.xlu0 %2312, %v2115
    %v2314 = vpop.permute.xlu0 %2313
    %2317 = vset.pattern.permute.xlu0 0
    %2318 = vperm.xlu0 %2317, %v2116
    %v2319 = vpop.permute.xlu0 %2318
    %2322 = vset.pattern.permute.xlu0 0
    %2323 = vperm.xlu0 %2322, %v2117
    %v2324 = vpop.permute.xlu0 %2323
    %2327 = vset.pattern.permute.xlu0 0
    %2328 = vperm.xlu0 %2327, %v2118
    %v2329 = vpop.permute.xlu0 %2328
    %2332 = vset.pattern.permute.xlu0 0
    %2333 = vperm.xlu0 %2332, %v2119
    %v2334 = vpop.permute.xlu0 %2333
    %2337 = vset.pattern.permute.xlu0 0
    %2338 = vperm.xlu0 %2337, %v2120
    %v2339 = vpop.permute.xlu0 %2338
    %2342 = vset.pattern.permute.xlu0 0
    %2343 = vperm.xlu0 %2342, %v2121
    %v2344 = vpop.permute.xlu0 %2343
    %2347 = vset.pattern.permute.xlu0 0
    %2348 = vperm.xlu0 %2347, %v2122
    %v2349 = vpop.permute.xlu0 %2348
    %2352 = vset.pattern.permute.xlu0 0
    %2353 = vperm.xlu0 %2352, %v2123
    %v2354 = vpop.permute.xlu0 %2353
    %2357 = vset.pattern.permute.xlu0 0
    %2358 = vperm.xlu0 %2357, %v2124
    %v2359 = vpop.permute.xlu0 %2358
    %2362 = vset.pattern.permute.xlu0 0
    %2363 = vperm.xlu0 %2362, %v2125
    %v2364 = vpop.permute.xlu0 %2363
    %2367 = vset.pattern.permute.xlu0 0
    %2368 = vperm.xlu0 %2367, %v2126
    %v2369 = vpop.permute.xlu0 %2368
    %2372 = vset.pattern.permute.xlu0 0
    %2373 = vperm.xlu0 %2372, %v2127
    %v2374 = vpop.permute.xlu0 %2373
    %2377 = vset.pattern.permute.xlu0 0
    %2378 = vperm.xlu0 %2377, %v2128
    %v2379 = vpop.permute.xlu0 %2378
    %2382 = vset.pattern.permute.xlu0 0
    %2383 = vperm.xlu0 %2382, %v2129
    %v2384 = vpop.permute.xlu0 %2383
    %2387 = vset.pattern.permute.xlu0 0
    %2388 = vperm.xlu0 %2387, %v2130
    %v2389 = vpop.permute.xlu0 %2388
    %2392 = vset.pattern.permute.xlu0 0
    %2393 = vperm.xlu0 %2392, %v2131
    %v2394 = vpop.permute.xlu0 %2393
    %2397 = vset.pattern.permute.xlu0 0
    %2398 = vperm.xlu0 %2397, %v2132
    %v2399 = vpop.permute.xlu0 %2398
    %2402 = vset.pattern.permute.xlu0 0
    %2403 = vperm.xlu0 %2402, %v2133
    %v2404 = vpop.permute.xlu0 %2403
    %2407 = vset.pattern.permute.xlu0 0
    %2408 = vperm.xlu0 %2407, %v2134
    %v2409 = vpop.permute.xlu0 %2408
    %2412 = vset.pattern.permute.xlu0 0
    %2413 = vperm.xlu0 %2412, %v2135
    %v2414 = vpop.permute.xlu0 %2413
    %2417 = vset.pattern.permute.xlu0 0
    %2418 = vperm.xlu0 %2417, %v2136
    %v2419 = vpop.permute.xlu0 %2418
    %2422 = vset.pattern.permute.xlu0 0
    %2423 = vperm.xlu0 %2422, %v2137
    %v2424 = vpop.permute.xlu0 %2423
    %2427 = vset.pattern.permute.xlu0 0
    %2428 = vperm.xlu0 %2427, %v2138
    %v2429 = vpop.permute.xlu0 %2428
    %2432 = vset.pattern.permute.xlu0 0
    %2433 = vperm.xlu0 %2432, %v2139
    %v2434 = vpop.permute.xlu0 %2433
    %2437 = vset.pattern.permute.xlu0 0
    %2438 = vperm.xlu0 %2437, %v2140
    %v2439 = vpop.permute.xlu0 %2438
    %2442 = vset.pattern.permute.xlu0 0
    %2443 = vperm.xlu0 %2442, %v2141
    %v2444 = vpop.permute.xlu0 %2443
    %2447 = vset.pattern.permute.xlu0 0
    %2448 = vperm.xlu0 %2447, %v2142
    %v2449 = vpop.permute.xlu0 %2448
    %2452 = vset.pattern.permute.xlu0 0
    %2453 = vperm.xlu0 %2452, %v2143
    %v2454 = vpop.permute.xlu0 %2453
    %2457 = vset.pattern.permute.xlu0 0
    %2458 = vperm.xlu0 %2457, %v2144
    %v2459 = vpop.permute.xlu0 %2458
    %2462 = vset.pattern.permute.xlu0 0
    %2463 = vperm.xlu0 %2462, %v2145
    %v2464 = vpop.permute.xlu0 %2463
    %2467 = vset.pattern.permute.xlu0 0
    %2468 = vperm.xlu0 %2467, %v2146
    %v2469 = vpop.permute.xlu0 %2468
    %2472 = vset.pattern.permute.xlu0 0
    %2473 = vperm.xlu0 %2472, %v2147
    %v2474 = vpop.permute.xlu0 %2473
    %2477 = vset.pattern.permute.xlu0 0
    %2478 = vperm.xlu0 %2477, %v2148
    %v2479 = vpop.permute.xlu0 %2478
    %2482 = vset.pattern.permute.xlu0 0
    %2483 = vperm.xlu0 %2482, %v2149
    %v2484 = vpop.permute.xlu0 %2483
    %2487 = vset.pattern.permute.xlu0 0
    %2488 = vperm.xlu0 %2487, %v2150
    %v2489 = vpop.permute.xlu0 %2488
    %2492 = vset.pattern.permute.xlu0 0
    %2493 = vperm.xlu0 %2492, %v2151
    %v2494 = vpop.permute.xlu0 %2493
    %2497 = vset.pattern.permute.xlu0 0
    %2498 = vperm.xlu0 %2497, %v2152
    %v2499 = vpop.permute.xlu0 %2498
    %2502 = vset.pattern.permute.xlu0 0
    %2503 = vperm.xlu0 %2502, %v2153
    %v2504 = vpop.permute.xlu0 %2503
    %2507 = vset.pattern.permute.xlu0 0
    %2508 = vperm.xlu0 %2507, %v2154
    %v2509 = vpop.permute.xlu0 %2508
    %2512 = vset.pattern.permute.xlu0 0
    %2513 = vperm.xlu0 %2512, %v2155
    %v2514 = vpop.permute.xlu0 %2513
    %2517 = vset.pattern.permute.xlu0 0
    %2518 = vperm.xlu0 %2517, %v2156
    %v2519 = vpop.permute.xlu0 %2518
    %2522 = vset.pattern.permute.xlu0 0
    %2523 = vperm.xlu0 %2522, %v2157
    %v2524 = vpop.permute.xlu0 %2523
    %2527 = vset.pattern.permute.xlu0 0
    %2528 = vperm.xlu0 %2527, %v2158
    %v2529 = vpop.permute.xlu0 %2528
    %2532 = vset.pattern.permute.xlu0 0
    %2533 = vperm.xlu0 %2532, %v2159
    %v2534 = vpop.permute.xlu0 %2533
    %2537 = vset.pattern.permute.xlu0 0
    %2538 = vperm.xlu0 %2537, %v2160
    %v2539 = vpop.permute.xlu0 %2538
    %2542 = vset.pattern.permute.xlu0 0
    %2543 = vperm.xlu0 %2542, %v2161
    %v2544 = vpop.permute.xlu0 %2543
    %2547 = vset.pattern.permute.xlu0 0
    %2548 = vperm.xlu0 %2547, %v2162
    %v2549 = vpop.permute.xlu0 %2548
    %2552 = vset.pattern.permute.xlu0 0
    %2553 = vperm.xlu0 %2552, %v2163
    %v2554 = vpop.permute.xlu0 %2553
    %2557 = vset.pattern.permute.xlu0 0
    %2558 = vperm.xlu0 %2557, %v2164
    %v2559 = vpop.permute.xlu0 %2558
    %2562 = vset.pattern.permute.xlu0 0
    %2563 = vperm.xlu0 %2562, %v2165
    %v2564 = vpop.permute.xlu0 %2563
    %2567 = vset.pattern.permute.xlu0 0
    %2568 = vperm.xlu0 %2567, %v2166
    %v2569 = vpop.permute.xlu0 %2568
    %2572 = vset.pattern.permute.xlu0 0
    %2573 = vperm.xlu0 %2572, %v2167
    %v2574 = vpop.permute.xlu0 %2573
    %2577 = vset.pattern.permute.xlu0 0
    %2578 = vperm.xlu0 %2577, %v2168
    %v2579 = vpop.permute.xlu0 %2578
    %2582 = vset.pattern.permute.xlu0 0
    %2583 = vperm.xlu0 %2582, %v2169
    %v2584 = vpop.permute.xlu0 %2583
    %2587 = vset.pattern.permute.xlu0 0
    %2588 = vperm.xlu0 %2587, %v2170
    %v2589 = vpop.permute.xlu0 %2588
    %2592 = vset.pattern.permute.xlu0 0
    %2593 = vperm.xlu0 %2592, %v2171
    %v2594 = vpop.permute.xlu0 %2593
    %2597 = vset.pattern.permute.xlu0 0
    %2598 = vperm.xlu0 %2597, %v2172
    %v2599 = vpop.permute.xlu0 %2598
    %2602 = vset.pattern.permute.xlu0 0
    %2603 = vperm.xlu0 %2602, %v2173
    %v2604 = vpop.permute.xlu0 %2603
    %2607 = vset.pattern.permute.xlu0 0
    %2608 = vperm.xlu0 %2607, %v2174
    %v2609 = vpop.permute.xlu0 %2608
    %2612 = vset.pattern.permute.xlu0 0
    %2613 = vperm.xlu0 %2612, %v2175
    %v2614 = vpop.permute.xlu0 %2613
    %2617 = vset.pattern.permute.xlu0 0
    %2618 = vperm.xlu0 %2617, %v2176
    %v2619 = vpop.permute.xlu0 %2618
    %2622 = vset.pattern.permute.xlu0 0
    %2623 = vperm.xlu0 %2622, %v2177
    %v2624 = vpop.permute.xlu0 %2623
    %2627 = vset.pattern.permute.xlu0 0
    %2628 = vperm.xlu0 %2627, %v2178
    %v2629 = vpop.permute.xlu0 %2628
    %2632 = vset.pattern.permute.xlu0 0
    %2633 = vperm.xlu0 %2632, %v2179
    %v2634 = vpop.permute.xlu0 %2633
    %2637 = vset.pattern.permute.xlu0 0
    %2638 = vperm.xlu0 %2637, %v2180
    %v2639 = vpop.permute.xlu0 %2638
    %2642 = vset.pattern.permute.xlu0 0
    %2643 = vperm.xlu0 %2642, %v2181
    %v2644 = vpop.permute.xlu0 %2643
    %2647 = vset.pattern.permute.xlu0 0
    %2648 = vperm.xlu0 %2647, %v2182
    %v2649 = vpop.permute.xlu0 %2648
    %2652 = vset.pattern.permute.xlu0 0
    %2653 = vperm.xlu0 %2652, %v2183
    %v2654 = vpop.permute.xlu0 %2653
    %2657 = vset.pattern.permute.xlu0 0
    %2658 = vperm.xlu0 %2657, %v2184
    %v2659 = vpop.permute.xlu0 %2658
    %2662 = vset.pattern.permute.xlu0 0
    %2663 = vperm.xlu0 %2662, %v2185
    %v2664 = vpop.permute.xlu0 %2663
    %2667 = vset.pattern.permute.xlu0 0
    %2668 = vperm.xlu0 %2667, %v2186
    %v2669 = vpop.permute.xlu0 %2668
    %2672 = vset.pattern.permute.xlu0 0
    %2673 = vperm.xlu0 %2672, %v2187
    %v2674 = vpop.permute.xlu0 %2673
    %2677 = vset.pattern.permute.xlu0 0
    %2678 = vperm.xlu0 %2677, %v2188
    %v2679 = vpop.permute.xlu0 %2678
    %2682 = vset.pattern.permute.xlu0 0
    %2683 = vperm.xlu0 %2682, %v2189
    %v2684 = vpop.permute.xlu0 %2683
    %2687 = vset.pattern.permute.xlu0 0
    %2688 = vperm.xlu0 %2687, %v2190
    %v2689 = vpop.permute.xlu0 %2688
    %2692 = vset.pattern.permute.xlu0 0
    %2693 = vperm.xlu0 %2692, %v2191
    %v2694 = vpop.permute.xlu0 %2693
    %2697 = vset.pattern.permute.xlu0 0
    %2698 = vperm.xlu0 %2697, %v2192
    %v2699 = vpop.permute.xlu0 %2698
    %2702 = vset.pattern.permute.xlu0 0
    %2703 = vperm.xlu0 %2702, %v2193
    %v2704 = vpop.permute.xlu0 %2703
    %2707 = vset.pattern.permute.xlu0 0
    %2708 = vperm.xlu0 %2707, %v2194
    %v2709 = vpop.permute.xlu0 %2708
    %2712 = vset.pattern.permute.xlu0 0
    %2713 = vperm.xlu0 %2712, %v2195
    %v2714 = vpop.permute.xlu0 %2713
    %2717 = vset.pattern.permute.xlu0 0
    %2718 = vperm.xlu0 %2717, %v2196
    %v2719 = vpop.permute.xlu0 %2718
    %2722 = vset.pattern.permute.xlu0 0
    %2723 = vperm.xlu0 %2722, %v2197
    %v2724 = vpop.permute.xlu0 %2723
    %2727 = vset.pattern.permute.xlu0 0
    %2728 = vperm.xlu0 %2727, %v2198
    %v2729 = vpop.permute.xlu0 %2728
    %2732 = vset.pattern.permute.xlu0 0
    %2733 = vperm.xlu0 %2732, %v2199
    %v2734 = vpop.permute.xlu0 %2733
    %2737 = vset.pattern.permute.xlu0 0
    %2738 = vperm.xlu0 %2737, %v2200
    %v2739 = vpop.permute.xlu0 %2738
    %2742 = vset.pattern.permute.xlu0 0
    %2743 = vperm.xlu0 %2742, %v2201
    %v2744 = vpop.permute.xlu0 %2743
    %2747 = vset.pattern.permute.xlu0 0
    %2748 = vperm.xlu0 %2747, %v2202
    %v2749 = vpop.permute.xlu0 %2748
    %2752 = vset.pattern.permute.xlu0 0
    %2753 = vperm.xlu0 %2752, %v2203
    %v2754 = vpop.permute.xlu0 %2753
    %2757 = vset.pattern.permute.xlu0 0
    %2758 = vperm.xlu0 %2757, %v2204
    %v2759 = vpop.permute.xlu0 %2758
    %2762 = vset.pattern.permute.xlu0 0
    %2763 = vperm.xlu0 %2762, %v2205
    %v2764 = vpop.permute.xlu0 %2763
    %2767 = vset.pattern.permute.xlu0 0
    %2768 = vperm.xlu0 %2767, %v2206
    %v2769 = vpop.permute.xlu0 %2768
    %2772 = vset.pattern.permute.xlu0 0
    %2773 = vperm.xlu0 %2772, %v2207
    %v2774 = vpop.permute.xlu0 %2773
    %2777 = vset.pattern.permute.xlu0 0
    %2778 = vperm.xlu0 %2777, %v2208
    %v2779 = vpop.permute.xlu0 %2778
    %2782 = vset.pattern.permute.xlu0 0
    %2783 = vperm.xlu0 %2782, %v2209
    %v2784 = vpop.permute.xlu0 %2783
    %2787 = vset.pattern.permute.xlu0 0
    %2788 = vperm.xlu0 %2787, %v2210
    %v2789 = vpop.permute.xlu0 %2788
    %2792 = vset.pattern.permute.xlu0 0
    %2793 = vperm.xlu0 %2792, %v2211
    %v2794 = vpop.permute.xlu0 %2793
    %2797 = vset.pattern.permute.xlu0 0
    %2798 = vperm.xlu0 %2797, %v2212
    %v2799 = vpop.permute.xlu0 %2798
    %2802 = vset.pattern.permute.xlu0 0
    %2803 = vperm.xlu0 %2802, %v2213
    %v2804 = vpop.permute.xlu0 %2803
    %2807 = vset.pattern.permute.xlu0 0
    %2808 = vperm.xlu0 %2807, %v2214
    %v2809 = vpop.permute.xlu0 %2808
    %2812 = vset.pattern.permute.xlu0 0
    %2813 = vperm.xlu0 %2812, %v2215
    %v2814 = vpop.permute.xlu0 %2813
    %2817 = vset.pattern.permute.xlu0 0
    %2818 = vperm.xlu0 %2817, %v2216
    %v2819 = vpop.permute.xlu0 %2818
    %2822 = vset.pattern.permute.xlu0 0
    %2823 = vperm.xlu0 %2822, %v2217
    %v2824 = vpop.permute.xlu0 %2823
    %2827 = vset.pattern.permute.xlu0 0
    %2828 = vperm.xlu0 %2827, %v2218
    %v2829 = vpop.permute.xlu0 %2828
    %2832 = vset.pattern.permute.xlu0 0
    %2833 = vperm.xlu0 %2832, %v2219
    %v2834 = vpop.permute.xlu0 %2833
    %2837 = vset.pattern.permute.xlu0 0
    %2838 = vperm.xlu0 %2837, %v2220
    %v2839 = vpop.permute.xlu0 %2838
    %2842 = vset.pattern.permute.xlu0 0
    %2843 = vperm.xlu0 %2842, %v2221
    %v2844 = vpop.permute.xlu0 %2843
    %2847 = vset.pattern.permute.xlu0 0
    %2848 = vperm.xlu0 %2847, %v2222
    %v2849 = vpop.permute.xlu0 %2848
    %2852 = vset.pattern.permute.xlu0 0
    %2853 = vperm.xlu0 %2852, %v2223
    %v2854 = vpop.permute.xlu0 %2853
    %2857 = vset.pattern.permute.xlu0 0
    %2858 = vperm.xlu0 %2857, %v2224
    %v2859 = vpop.permute.xlu0 %2858
    %2862 = vset.pattern.permute.xlu0 0
    %2863 = vperm.xlu0 %2862, %v2225
    %v2864 = vpop.permute.xlu0 %2863
    %v3378 = vunpack.c.l.b16 %v1536
    %v3379 = vunpack.c.h.b16 %v1536
    %v3380 = vunpack.c.l.b16 %v1537
    %v3381 = vunpack.c.h.b16 %v1537
    %v3382 = vunpack.c.l.b16 %v1538
    %v3383 = vunpack.c.h.b16 %v1538
    %v3384 = vunpack.c.l.b16 %v1539
    %v3385 = vunpack.c.l.b16 %v1540
    %v3386 = vunpack.c.h.b16 %v1540
    %v3387 = vunpack.c.l.b16 %v1541
    %v3388 = vunpack.c.h.b16 %v1541
    %v3389 = vunpack.c.l.b16 %v1542
    %v3390 = vunpack.c.h.b16 %v1542
    %v3391 = vunpack.c.l.b16 %v1543
    %v3392 = vunpack.c.l.b16 %v1544
    %v3393 = vunpack.c.h.b16 %v1544
    %v3394 = vunpack.c.l.b16 %v1545
    %v3395 = vunpack.c.h.b16 %v1545
    %v3396 = vunpack.c.l.b16 %v1546
    %v3397 = vunpack.c.h.b16 %v1546
    %v3398 = vunpack.c.l.b16 %v1547
    %v3399 = vunpack.c.l.b16 %v1548
    %v3400 = vunpack.c.h.b16 %v1548
    %v3401 = vunpack.c.l.b16 %v1549
    %v3402 = vunpack.c.h.b16 %v1549
    %v3403 = vunpack.c.l.b16 %v1550
    %v3404 = vunpack.c.h.b16 %v1550
    %v3405 = vunpack.c.l.b16 %v1551
    %v3406 = vunpack.c.l.b16 %v1552
    %v3407 = vunpack.c.h.b16 %v1552
    %v3408 = vunpack.c.l.b16 %v1553
    %v3409 = vunpack.c.h.b16 %v1553
    %v3410 = vunpack.c.l.b16 %v1554
    %v3411 = vunpack.c.h.b16 %v1554
    %v3412 = vunpack.c.l.b16 %v1555
    %v3413 = vunpack.c.l.b16 %v1556
    %v3414 = vunpack.c.h.b16 %v1556
    %v3415 = vunpack.c.l.b16 %v1557
    %v3416 = vunpack.c.h.b16 %v1557
    %v3417 = vunpack.c.l.b16 %v1558
    %v3418 = vunpack.c.h.b16 %v1558
    %v3419 = vunpack.c.l.b16 %v1559
    %v3420 = vunpack.c.l.b16 %v1560
    %v3421 = vunpack.c.h.b16 %v1560
    %v3422 = vunpack.c.l.b16 %v1561
    %v3423 = vunpack.c.h.b16 %v1561
    %v3424 = vunpack.c.l.b16 %v1562
    %v3425 = vunpack.c.h.b16 %v1562
    %v3426 = vunpack.c.l.b16 %v1563
    %v3427 = vunpack.c.l.b16 %v1564
    %v3428 = vunpack.c.h.b16 %v1564
    %v3429 = vunpack.c.l.b16 %v1565
    %v3430 = vunpack.c.h.b16 %v1565
    %v3431 = vunpack.c.l.b16 %v1566
    %v3432 = vunpack.c.h.b16 %v1566
    %v3433 = vunpack.c.l.b16 %v1567
    %v3434 = vunpack.c.l.b16 %v1568
    %v3435 = vunpack.c.h.b16 %v1568
    %v3436 = vunpack.c.l.b16 %v1569
    %v3437 = vunpack.c.h.b16 %v1569
    %v3438 = vunpack.c.l.b16 %v1570
    %v3439 = vunpack.c.h.b16 %v1570
    %v3440 = vunpack.c.l.b16 %v1571
    %v3441 = vunpack.c.l.b16 %v1572
    %v3442 = vunpack.c.h.b16 %v1572
    %v3443 = vunpack.c.l.b16 %v1573
    %v3444 = vunpack.c.h.b16 %v1573
    %v3445 = vunpack.c.l.b16 %v1574
    %v3446 = vunpack.c.h.b16 %v1574
    %v3447 = vunpack.c.l.b16 %v1575
    %v3448 = vunpack.c.l.b16 %v1576
    %v3449 = vunpack.c.h.b16 %v1576
    %v3450 = vunpack.c.l.b16 %v1577
    %v3451 = vunpack.c.h.b16 %v1577
    %v3452 = vunpack.c.l.b16 %v1578
    %v3453 = vunpack.c.h.b16 %v1578
    %v3454 = vunpack.c.l.b16 %v1579
    %v3455 = vunpack.c.l.b16 %v1580
    %v3456 = vunpack.c.h.b16 %v1580
    %v3457 = vunpack.c.l.b16 %v1581
    %v3458 = vunpack.c.h.b16 %v1581
    %v3459 = vunpack.c.l.b16 %v1582
    %v3460 = vunpack.c.h.b16 %v1582
    %v3461 = vunpack.c.l.b16 %v1583
    %v3462 = vunpack.c.l.b16 %v1584
    %v3463 = vunpack.c.h.b16 %v1584
    %v3464 = vunpack.c.l.b16 %v1585
    %v3465 = vunpack.c.h.b16 %v1585
    %v3466 = vunpack.c.l.b16 %v1586
    %v3467 = vunpack.c.h.b16 %v1586
    %v3468 = vunpack.c.l.b16 %v1587
    %v3469 = vunpack.c.l.b16 %v1588
    %v3470 = vunpack.c.h.b16 %v1588
    %v3471 = vunpack.c.l.b16 %v1589
    %v3472 = vunpack.c.h.b16 %v1589
    %v3473 = vunpack.c.l.b16 %v1590
    %v3474 = vunpack.c.h.b16 %v1590
    %v3475 = vunpack.c.l.b16 %v1591
    %v3476 = vunpack.c.l.b16 %v1592
    %v3477 = vunpack.c.h.b16 %v1592
    %v3478 = vunpack.c.l.b16 %v1593
    %v3479 = vunpack.c.h.b16 %v1593
    %v3480 = vunpack.c.l.b16 %v1594
    %v3481 = vunpack.c.h.b16 %v1594
    %v3482 = vunpack.c.l.b16 %v1595
    %v3483 = vunpack.c.l.b16 %v1596
    %v3484 = vunpack.c.h.b16 %v1596
    %v3485 = vunpack.c.l.b16 %v1597
    %v3486 = vunpack.c.h.b16 %v1597
    %v3487 = vunpack.c.l.b16 %v1598
    %v3488 = vunpack.c.h.b16 %v1598
    %v3489 = vunpack.c.l.b16 %v1599
    %v3490 = vunpack.c.l.b16 %v1600
    %v3491 = vunpack.c.h.b16 %v1600
    %v3492 = vunpack.c.l.b16 %v1601
    %v3493 = vunpack.c.h.b16 %v1601
    %v3494 = vunpack.c.l.b16 %v1602
    %v3495 = vunpack.c.h.b16 %v1602
    %v3496 = vunpack.c.l.b16 %v1603
    %v3497 = vunpack.c.l.b16 %v1604
    %v3498 = vunpack.c.h.b16 %v1604
    %v3499 = vunpack.c.l.b16 %v1605
    %v3500 = vunpack.c.h.b16 %v1605
    %v3501 = vunpack.c.l.b16 %v1606
    %v3502 = vunpack.c.h.b16 %v1606
    %v3503 = vunpack.c.l.b16 %v1607
    %v3504 = vunpack.c.l.b16 %v1608
    %v3505 = vunpack.c.h.b16 %v1608
    %v3506 = vunpack.c.l.b16 %v1609
    %v3507 = vunpack.c.h.b16 %v1609
    %v3508 = vunpack.c.l.b16 %v1610
    %v3509 = vunpack.c.h.b16 %v1610
    %v3510 = vunpack.c.l.b16 %v1611
    %v3511 = vunpack.c.l.b16 %v1612
    %v3512 = vunpack.c.h.b16 %v1612
    %v3513 = vunpack.c.l.b16 %v1613
    %v3514 = vunpack.c.h.b16 %v1613
    %v3515 = vunpack.c.l.b16 %v1614
    %v3516 = vunpack.c.h.b16 %v1614
    %v3517 = vunpack.c.l.b16 %v1615
    %v3518 = vunpack.c.l.b16 %v1616
    %v3519 = vunpack.c.h.b16 %v1616
    %v3520 = vunpack.c.l.b16 %v1617
    %v3521 = vunpack.c.h.b16 %v1617
    %v3522 = vunpack.c.l.b16 %v1618
    %v3523 = vunpack.c.h.b16 %v1618
    %v3524 = vunpack.c.l.b16 %v1619
    %v3525 = vunpack.c.l.b16 %v1620
    %v3526 = vunpack.c.h.b16 %v1620
    %v3527 = vunpack.c.l.b16 %v1621
    %v3528 = vunpack.c.h.b16 %v1621
    %v3529 = vunpack.c.l.b16 %v1622
    %v3530 = vunpack.c.h.b16 %v1622
    %v3531 = vunpack.c.l.b16 %v1623
    %v3532 = vunpack.c.l.b16 %v1624
    %v3533 = vunpack.c.h.b16 %v1624
    %v3534 = vunpack.c.l.b16 %v1625
    %v3535 = vunpack.c.h.b16 %v1625
    %v3536 = vunpack.c.l.b16 %v1626
    %v3537 = vunpack.c.h.b16 %v1626
    %v3538 = vunpack.c.l.b16 %v1627
    %v3539 = vunpack.c.l.b16 %v1628
    %v3540 = vunpack.c.h.b16 %v1628
    %v3541 = vunpack.c.l.b16 %v1629
    %v3542 = vunpack.c.h.b16 %v1629
    %v3543 = vunpack.c.l.b16 %v1630
    %v3544 = vunpack.c.h.b16 %v1630
    %v3545 = vunpack.c.l.b16 %v1631
    %v3546 = vunpack.c.l.b16 %v1632
    %v3547 = vunpack.c.h.b16 %v1632
    %v3548 = vunpack.c.l.b16 %v1633
    %v3549 = vunpack.c.h.b16 %v1633
    %v3550 = vunpack.c.l.b16 %v1634
    %v3551 = vunpack.c.h.b16 %v1634
    %v3552 = vunpack.c.l.b16 %v1635
    %v3553 = vunpack.c.l.b16 %v1636
    %v3554 = vunpack.c.h.b16 %v1636
    %v3555 = vunpack.c.l.b16 %v1637
    %v3556 = vunpack.c.h.b16 %v1637
    %v3557 = vunpack.c.l.b16 %v1638
    %v3558 = vunpack.c.h.b16 %v1638
    %v3559 = vunpack.c.l.b16 %v1639
    %v3560 = vunpack.c.l.b16 %v1640
    %v3561 = vunpack.c.h.b16 %v1640
    %v3562 = vunpack.c.l.b16 %v1641
    %v3563 = vunpack.c.h.b16 %v1641
    %v3564 = vunpack.c.l.b16 %v1642
    %v3565 = vunpack.c.h.b16 %v1642
    %v3566 = vunpack.c.l.b16 %v1643
    %v3567 = vunpack.c.l.b16 %v1644
    %v3568 = vunpack.c.h.b16 %v1644
    %v3569 = vunpack.c.l.b16 %v1645
    %v3570 = vunpack.c.h.b16 %v1645
    %v3571 = vunpack.c.l.b16 %v1646
    %v3572 = vunpack.c.h.b16 %v1646
    %v3573 = vunpack.c.l.b16 %v1647
    %v3574 = vunpack.c.l.b16 %v1648
    %v3575 = vunpack.c.h.b16 %v1648
    %v3576 = vunpack.c.l.b16 %v1649
    %v3577 = vunpack.c.h.b16 %v1649
    %v3578 = vunpack.c.l.b16 %v1650
    %v3579 = vunpack.c.h.b16 %v1650
    %v3580 = vunpack.c.l.b16 %v1651
    %v3581 = vunpack.c.l.b16 %v1652
    %v3582 = vunpack.c.h.b16 %v1652
    %v3583 = vunpack.c.l.b16 %v1653
    %v3584 = vunpack.c.h.b16 %v1653
    %v3585 = vunpack.c.l.b16 %v1654
    %v3586 = vunpack.c.h.b16 %v1654
    %v3587 = vunpack.c.l.b16 %v1655
    %v3588 = vunpack.c.l.b16 %v1656
    %v3589 = vunpack.c.h.b16 %v1656
    %v3590 = vunpack.c.l.b16 %v1657
    %v3591 = vunpack.c.h.b16 %v1657
    %v3592 = vunpack.c.l.b16 %v1658
    %v3593 = vunpack.c.h.b16 %v1658
    %v3594 = vunpack.c.l.b16 %v1659
    %v3595 = vunpack.c.l.b16 %v1660
    %v3596 = vunpack.c.h.b16 %v1660
    %v3597 = vunpack.c.l.b16 %v1661
    %v3598 = vunpack.c.h.b16 %v1661
    %v3599 = vunpack.c.l.b16 %v1662
    %v3600 = vunpack.c.h.b16 %v1662
    %v3601 = vunpack.c.l.b16 %v1663
    %v3602 = vunpack.c.l.b16 %v1664
    %v3603 = vunpack.c.h.b16 %v1664
    %v3604 = vunpack.c.l.b16 %v1665
    %v3605 = vunpack.c.h.b16 %v1665
    %v3606 = vunpack.c.l.b16 %v1666
    %v3607 = vunpack.c.h.b16 %v1666
    %v3608 = vunpack.c.l.b16 %v1667
    %v3609 = vunpack.c.l.b16 %v1668
    %v3610 = vunpack.c.h.b16 %v1668
    %v3611 = vunpack.c.l.b16 %v1669
    %v3612 = vunpack.c.h.b16 %v1669
    %v3613 = vunpack.c.l.b16 %v1670
    %v3614 = vunpack.c.h.b16 %v1670
    %v3615 = vunpack.c.l.b16 %v1671
    %v3616 = vunpack.c.l.b16 %v1672
    %v3617 = vunpack.c.h.b16 %v1672
    %v3618 = vunpack.c.l.b16 %v1673
    %v3619 = vunpack.c.h.b16 %v1673
    %v3620 = vunpack.c.l.b16 %v1674
    %v3621 = vunpack.c.h.b16 %v1674
    %v3622 = vunpack.c.l.b16 %v1675
    %v3623 = vunpack.c.l.b16 %v1676
    %v3624 = vunpack.c.h.b16 %v1676
    %v3625 = vunpack.c.l.b16 %v1677
    %v3626 = vunpack.c.h.b16 %v1677
    %v3627 = vunpack.c.l.b16 %v1678
    %v3628 = vunpack.c.h.b16 %v1678
    %v3629 = vunpack.c.l.b16 %v1679
    %v3630 = vunpack.c.l.b16 %v1680
    %v3631 = vunpack.c.h.b16 %v1680
    %v3632 = vunpack.c.l.b16 %v1681
    %v3633 = vunpack.c.h.b16 %v1681
    %v3634 = vunpack.c.l.b16 %v1682
    %v3635 = vunpack.c.h.b16 %v1682
    %v3636 = vunpack.c.l.b16 %v1683
    %v3637 = vunpack.c.l.b16 %v1684
    %v3638 = vunpack.c.h.b16 %v1684
    %v3639 = vunpack.c.l.b16 %v1685
    %v3640 = vunpack.c.h.b16 %v1685
    %v3641 = vunpack.c.l.b16 %v1686
    %v3642 = vunpack.c.h.b16 %v1686
    %v3643 = vunpack.c.l.b16 %v1687
    %v3644 = vunpack.c.l.b16 %v1688
    %v3645 = vunpack.c.h.b16 %v1688
    %v3646 = vunpack.c.l.b16 %v1689
    %v3647 = vunpack.c.h.b16 %v1689
    %v3648 = vunpack.c.l.b16 %v1690
    %v3649 = vunpack.c.h.b16 %v1690
    %v3650 = vunpack.c.l.b16 %v1691
    %v3651 = vunpack.c.l.b16 %v1692
    %v3652 = vunpack.c.h.b16 %v1692
    %v3653 = vunpack.c.l.b16 %v1693
    %v3654 = vunpack.c.h.b16 %v1693
    %v3655 = vunpack.c.l.b16 %v1694
    %v3656 = vunpack.c.h.b16 %v1694
    %v3657 = vunpack.c.l.b16 %v1695
    %v3658 = vunpack.c.l.b16 %v1696
    %v3659 = vunpack.c.h.b16 %v1696
    %v3660 = vunpack.c.l.b16 %v1697
    %v3661 = vunpack.c.h.b16 %v1697
    %v3662 = vunpack.c.l.b16 %v1698
    %v3663 = vunpack.c.h.b16 %v1698
    %v3664 = vunpack.c.l.b16 %v1699
    %v3665 = vunpack.c.l.b16 %v1700
    %v3666 = vunpack.c.h.b16 %v1700
    %v3667 = vunpack.c.l.b16 %v1701
    %v3668 = vunpack.c.h.b16 %v1701
    %v3669 = vunpack.c.l.b16 %v1702
    %v3670 = vunpack.c.h.b16 %v1702
    %v3671 = vunpack.c.l.b16 %v1703
    %v3672 = vunpack.c.l.b16 %v1704
    %v3673 = vunpack.c.h.b16 %v1704
    %v3674 = vunpack.c.l.b16 %v1705
    %v3675 = vunpack.c.h.b16 %v1705
    %v3676 = vunpack.c.l.b16 %v1706
    %v3677 = vunpack.c.h.b16 %v1706
    %v3678 = vunpack.c.l.b16 %v1707
    %v3679 = vunpack.c.l.b16 %v1708
    %v3680 = vunpack.c.h.b16 %v1708
    %v3681 = vunpack.c.l.b16 %v1709
    %v3682 = vunpack.c.h.b16 %v1709
    %v3683 = vunpack.c.l.b16 %v1710
    %v3684 = vunpack.c.h.b16 %v1710
    %v3685 = vunpack.c.l.b16 %v1711
    %v3686 = vunpack.c.l.b16 %v1712
    %v3687 = vunpack.c.h.b16 %v1712
    %v3688 = vunpack.c.l.b16 %v1713
    %v3689 = vunpack.c.h.b16 %v1713
    %v3690 = vunpack.c.l.b16 %v1714
    %v3691 = vunpack.c.h.b16 %v1714
    %v3692 = vunpack.c.l.b16 %v1715
    %v3693 = vunpack.c.l.b16 %v1716
    %v3694 = vunpack.c.h.b16 %v1716
    %v3695 = vunpack.c.l.b16 %v1717
    %v3696 = vunpack.c.h.b16 %v1717
    %v3697 = vunpack.c.l.b16 %v1718
    %v3698 = vunpack.c.h.b16 %v1718
    %v3699 = vunpack.c.l.b16 %v1719
    %v3700 = vunpack.c.l.b16 %v1720
    %v3701 = vunpack.c.h.b16 %v1720
    %v3702 = vunpack.c.l.b16 %v1721
    %v3703 = vunpack.c.h.b16 %v1721
    %v3704 = vunpack.c.l.b16 %v1722
    %v3705 = vunpack.c.h.b16 %v1722
    %v3706 = vunpack.c.l.b16 %v1723
    %v3707 = vunpack.c.l.b16 %v1724
    %v3708 = vunpack.c.h.b16 %v1724
    %v3709 = vunpack.c.l.b16 %v1725
    %v3710 = vunpack.c.h.b16 %v1725
    %v3711 = vunpack.c.l.b16 %v1726
    %v3712 = vunpack.c.h.b16 %v1726
    %v3713 = vunpack.c.l.b16 %v1727
    %v3714 = vunpack.c.l.b16 %v1728
    %v3715 = vunpack.c.h.b16 %v1728
    %v3716 = vunpack.c.l.b16 %v1729
    %v3717 = vunpack.c.h.b16 %v1729
    %v3718 = vunpack.c.l.b16 %v1730
    %v3719 = vunpack.c.h.b16 %v1730
    %v3720 = vunpack.c.l.b16 %v1731
    %v3721 = vunpack.c.l.b16 %v1732
    %v3722 = vunpack.c.h.b16 %v1732
    %v3723 = vunpack.c.l.b16 %v1733
    %v3724 = vunpack.c.h.b16 %v1733
    %v3725 = vunpack.c.l.b16 %v1734
    %v3726 = vunpack.c.h.b16 %v1734
    %v3727 = vunpack.c.l.b16 %v1735
    %v3728 = vunpack.c.l.b16 %v1736
    %v3729 = vunpack.c.h.b16 %v1736
    %v3730 = vunpack.c.l.b16 %v1737
    %v3731 = vunpack.c.h.b16 %v1737
    %v3732 = vunpack.c.l.b16 %v1738
    %v3733 = vunpack.c.h.b16 %v1738
    %v3734 = vunpack.c.l.b16 %v1739
    %v3735 = vunpack.c.l.b16 %v1740
    %v3736 = vunpack.c.h.b16 %v1740
    %v3737 = vunpack.c.l.b16 %v1741
    %v3738 = vunpack.c.h.b16 %v1741
    %v3739 = vunpack.c.l.b16 %v1742
    %v3740 = vunpack.c.h.b16 %v1742
    %v3741 = vunpack.c.l.b16 %v1743
    %v3742 = vunpack.c.l.b16 %v1744
    %v3743 = vunpack.c.h.b16 %v1744
    %v3744 = vunpack.c.l.b16 %v1745
    %v3745 = vunpack.c.h.b16 %v1745
    %v3746 = vunpack.c.l.b16 %v1746
    %v3747 = vunpack.c.h.b16 %v1746
    %v3748 = vunpack.c.l.b16 %v1747
    %v3749 = vunpack.c.l.b16 %v1748
    %v3750 = vunpack.c.h.b16 %v1748
    %v3751 = vunpack.c.l.b16 %v1749
    %v3752 = vunpack.c.h.b16 %v1749
    %v3753 = vunpack.c.l.b16 %v1750
    %v3754 = vunpack.c.h.b16 %v1750
    %v3755 = vunpack.c.l.b16 %v1751
    %v3756 = vunpack.c.l.b16 %v1752
    %v3757 = vunpack.c.h.b16 %v1752
    %v3758 = vunpack.c.l.b16 %v1753
    %v3759 = vunpack.c.h.b16 %v1753
    %v3760 = vunpack.c.l.b16 %v1754
    %v3761 = vunpack.c.h.b16 %v1754
    %v3762 = vunpack.c.l.b16 %v1755
    %v3763 = vunpack.c.l.b16 %v1756
    %v3764 = vunpack.c.h.b16 %v1756
    %v3765 = vunpack.c.l.b16 %v1757
    %v3766 = vunpack.c.h.b16 %v1757
    %v3767 = vunpack.c.l.b16 %v1758
    %v3768 = vunpack.c.h.b16 %v1758
    %v3769 = vunpack.c.l.b16 %v1759
    %v3770 = vunpack.c.l.b16 %v1760
    %v3771 = vunpack.c.h.b16 %v1760
    %v3772 = vunpack.c.l.b16 %v1761
    %v3773 = vunpack.c.h.b16 %v1761
    %v3774 = vunpack.c.l.b16 %v1762
    %v3775 = vunpack.c.h.b16 %v1762
    %v3776 = vunpack.c.l.b16 %v1763
    %v3777 = vunpack.c.l.b16 %v1764
    %v3778 = vunpack.c.h.b16 %v1764
    %v3779 = vunpack.c.l.b16 %v1765
    %v3780 = vunpack.c.h.b16 %v1765
    %v3781 = vunpack.c.l.b16 %v1766
    %v3782 = vunpack.c.h.b16 %v1766
    %v3783 = vunpack.c.l.b16 %v1767
    %v3784 = vunpack.c.l.b16 %v1768
    %v3785 = vunpack.c.h.b16 %v1768
    %v3786 = vunpack.c.l.b16 %v1769
    %v3787 = vunpack.c.h.b16 %v1769
    %v3788 = vunpack.c.l.b16 %v1770
    %v3789 = vunpack.c.h.b16 %v1770
    %v3790 = vunpack.c.l.b16 %v1771
    %v3791 = vunpack.c.l.b16 %v1772
    %v3792 = vunpack.c.h.b16 %v1772
    %v3793 = vunpack.c.l.b16 %v1773
    %v3794 = vunpack.c.h.b16 %v1773
    %v3795 = vunpack.c.l.b16 %v1774
    %v3796 = vunpack.c.h.b16 %v1774
    %v3797 = vunpack.c.l.b16 %v1775
    %v3798 = vunpack.c.l.b16 %v1776
    %v3799 = vunpack.c.h.b16 %v1776
    %v3800 = vunpack.c.l.b16 %v1777
    %v3801 = vunpack.c.h.b16 %v1777
    %v3802 = vunpack.c.l.b16 %v1778
    %v3803 = vunpack.c.h.b16 %v1778
    %v3804 = vunpack.c.l.b16 %v1779
    %v3805 = vunpack.c.l.b16 %v1780
    %v3806 = vunpack.c.h.b16 %v1780
    %v3807 = vunpack.c.l.b16 %v1781
    %v3808 = vunpack.c.h.b16 %v1781
    %v3809 = vunpack.c.l.b16 %v1782
    %v3810 = vunpack.c.h.b16 %v1782
    %v3811 = vunpack.c.l.b16 %v1783
    %v3812 = vunpack.c.l.b16 %v1784
    %v3813 = vunpack.c.h.b16 %v1784
    %v3814 = vunpack.c.l.b16 %v1785
    %v3815 = vunpack.c.h.b16 %v1785
    %v3816 = vunpack.c.l.b16 %v1786
    %v3817 = vunpack.c.h.b16 %v1786
    %v3818 = vunpack.c.l.b16 %v1787
    %v3819 = vunpack.c.l.b16 %v1788
    %v3820 = vunpack.c.h.b16 %v1788
    %v3821 = vunpack.c.l.b16 %v1789
    %v3822 = vunpack.c.h.b16 %v1789
    %v3823 = vunpack.c.l.b16 %v1790
    %v3824 = vunpack.c.h.b16 %v1790
    %v3825 = vunpack.c.l.b16 %v1791
    %v3826 = vunpack.c.l.b16 %v1792
    %v3827 = vunpack.c.h.b16 %v1792
    %v3828 = vunpack.c.l.b16 %v1793
    %v3829 = vunpack.c.h.b16 %v1793
    %v3830 = vunpack.c.l.b16 %v1794
    %v3831 = vunpack.c.h.b16 %v1794
    %v3832 = vunpack.c.l.b16 %v1795
    %v3833 = vunpack.c.l.b16 %v1796
    %v3834 = vunpack.c.h.b16 %v1796
    %v3835 = vunpack.c.l.b16 %v1797
    %v3836 = vunpack.c.h.b16 %v1797
    %v3837 = vunpack.c.l.b16 %v1798
    %v3838 = vunpack.c.h.b16 %v1798
    %v3839 = vunpack.c.l.b16 %v1799
    %v3840 = vunpack.c.l.b16 %v1800
    %v3841 = vunpack.c.h.b16 %v1800
    %v3842 = vunpack.c.l.b16 %v1801
    %v3843 = vunpack.c.h.b16 %v1801
    %v3844 = vunpack.c.l.b16 %v1802
    %v3845 = vunpack.c.h.b16 %v1802
    %v3846 = vunpack.c.l.b16 %v1803
    %v3847 = vunpack.c.l.b16 %v1804
    %v3848 = vunpack.c.h.b16 %v1804
    %v3849 = vunpack.c.l.b16 %v1805
    %v3850 = vunpack.c.h.b16 %v1805
    %v3851 = vunpack.c.l.b16 %v1806
    %v3852 = vunpack.c.h.b16 %v1806
    %v3853 = vunpack.c.l.b16 %v1807
    %v3854 = vunpack.c.l.b16 %v1808
    %v3855 = vunpack.c.h.b16 %v1808
    %v3856 = vunpack.c.l.b16 %v1809
    %v3857 = vunpack.c.h.b16 %v1809
    %v3858 = vunpack.c.l.b16 %v1810
    %v3859 = vunpack.c.h.b16 %v1810
    %v3860 = vunpack.c.l.b16 %v1811
    %v3861 = vunpack.c.l.b16 %v1812
    %v3862 = vunpack.c.h.b16 %v1812
    %v3863 = vunpack.c.l.b16 %v1813
    %v3864 = vunpack.c.h.b16 %v1813
    %v3865 = vunpack.c.l.b16 %v1814
    %v3866 = vunpack.c.h.b16 %v1814
    %v3867 = vunpack.c.l.b16 %v1815
    %v3868 = vunpack.c.l.b16 %v1816
    %v3869 = vunpack.c.h.b16 %v1816
    %v3870 = vunpack.c.l.b16 %v1817
    %v3871 = vunpack.c.h.b16 %v1817
    %v3872 = vunpack.c.l.b16 %v1818
    %v3873 = vunpack.c.h.b16 %v1818
    %v3874 = vunpack.c.l.b16 %v1819
    %v3875 = vunpack.c.l.b16 %v1820
    %v3876 = vunpack.c.h.b16 %v1820
    %v3877 = vunpack.c.l.b16 %v1821
    %v3878 = vunpack.c.h.b16 %v1821
    %v3879 = vunpack.c.l.b16 %v1822
    %v3880 = vunpack.c.h.b16 %v1822
    %v3881 = vunpack.c.l.b16 %v1823
    %v3882 = vunpack.c.l.b16 %v1824
    %v3883 = vunpack.c.h.b16 %v1824
    %v3884 = vunpack.c.l.b16 %v1825
    %v3885 = vunpack.c.h.b16 %v1825
    %v3886 = vunpack.c.l.b16 %v1826
    %v3887 = vunpack.c.h.b16 %v1826
    %v3888 = vunpack.c.l.b16 %v1827
    %v3889 = vunpack.c.l.b16 %v1828
    %v3890 = vunpack.c.h.b16 %v1828
    %v3891 = vunpack.c.l.b16 %v1829
    %v3892 = vunpack.c.h.b16 %v1829
    %v3893 = vunpack.c.l.b16 %v1830
    %v3894 = vunpack.c.h.b16 %v1830
    %v3895 = vunpack.c.l.b16 %v1831
    %v3896 = vunpack.c.l.b16 %v1832
    %v3897 = vunpack.c.h.b16 %v1832
    %v3898 = vunpack.c.l.b16 %v1833
    %v3899 = vunpack.c.h.b16 %v1833
    %v3900 = vunpack.c.l.b16 %v1834
    %v3901 = vunpack.c.h.b16 %v1834
    %v3902 = vunpack.c.l.b16 %v1835
    %v3903 = vunpack.c.l.b16 %v1836
    %v3904 = vunpack.c.h.b16 %v1836
    %v3905 = vunpack.c.l.b16 %v1837
    %v3906 = vunpack.c.h.b16 %v1837
    %v3907 = vunpack.c.l.b16 %v1838
    %v3908 = vunpack.c.h.b16 %v1838
    %v3909 = vunpack.c.l.b16 %v1839
    %v3910 = vunpack.c.l.b16 %v1840
    %v3911 = vunpack.c.h.b16 %v1840
    %v3912 = vunpack.c.l.b16 %v1841
    %v3913 = vunpack.c.h.b16 %v1841
    %v3914 = vunpack.c.l.b16 %v1842
    %v3915 = vunpack.c.h.b16 %v1842
    %v3916 = vunpack.c.l.b16 %v1843
    %v3917 = vunpack.c.l.b16 %v1844
    %v3918 = vunpack.c.h.b16 %v1844
    %v3919 = vunpack.c.l.b16 %v1845
    %v3920 = vunpack.c.h.b16 %v1845
    %v3921 = vunpack.c.l.b16 %v1846
    %v3922 = vunpack.c.h.b16 %v1846
    %v3923 = vunpack.c.l.b16 %v1847
    %v3924 = vunpack.c.l.b16 %v1848
    %v3925 = vunpack.c.h.b16 %v1848
    %v3926 = vunpack.c.l.b16 %v1849
    %v3927 = vunpack.c.h.b16 %v1849
    %v3928 = vunpack.c.l.b16 %v1850
    %v3929 = vunpack.c.h.b16 %v1850
    %v3930 = vunpack.c.l.b16 %v1851
    %v3931 = vunpack.c.l.b16 %v1852
    %v3932 = vunpack.c.h.b16 %v1852
    %v3933 = vunpack.c.l.b16 %v1853
    %v3934 = vunpack.c.h.b16 %v1853
    %v3935 = vunpack.c.l.b16 %v1854
    %v3936 = vunpack.c.h.b16 %v1854
    %v3937 = vunpack.c.l.b16 %v1855
    %v3938 = vunpack.c.l.b16 %v1856
    %v3939 = vunpack.c.h.b16 %v1856
    %v3940 = vunpack.c.l.b16 %v1857
    %v3941 = vunpack.c.h.b16 %v1857
    %v3942 = vunpack.c.l.b16 %v1858
    %v3943 = vunpack.c.h.b16 %v1858
    %v3944 = vunpack.c.l.b16 %v1859
    %v3945 = vunpack.c.l.b16 %v1860
    %v3946 = vunpack.c.h.b16 %v1860
    %v3947 = vunpack.c.l.b16 %v1861
    %v3948 = vunpack.c.h.b16 %v1861
    %v3949 = vunpack.c.l.b16 %v1862
    %v3950 = vunpack.c.h.b16 %v1862
    %v3951 = vunpack.c.l.b16 %v1863
    %v3952 = vunpack.c.l.b16 %v1864
    %v3953 = vunpack.c.h.b16 %v1864
    %v3954 = vunpack.c.l.b16 %v1865
    %v3955 = vunpack.c.h.b16 %v1865
    %v3956 = vunpack.c.l.b16 %v1866
    %v3957 = vunpack.c.h.b16 %v1866
    %v3958 = vunpack.c.l.b16 %v1867
    %v3959 = vunpack.c.l.b16 %v1868
    %v3960 = vunpack.c.h.b16 %v1868
    %v3961 = vunpack.c.l.b16 %v1869
    %v3962 = vunpack.c.h.b16 %v1869
    %v3963 = vunpack.c.l.b16 %v1870
    %v3964 = vunpack.c.h.b16 %v1870
    %v3965 = vunpack.c.l.b16 %v1871
    %v3966 = vunpack.c.l.b16 %v1872
    %v3967 = vunpack.c.h.b16 %v1872
    %v3968 = vunpack.c.l.b16 %v1873
    %v3969 = vunpack.c.h.b16 %v1873
    %v3970 = vunpack.c.l.b16 %v1874
    %v3971 = vunpack.c.h.b16 %v1874
    %v3972 = vunpack.c.l.b16 %v1875
    %v3973 = vunpack.c.l.b16 %v1876
    %v3974 = vunpack.c.h.b16 %v1876
    %v3975 = vunpack.c.l.b16 %v1877
    %v3976 = vunpack.c.h.b16 %v1877
    %v3977 = vunpack.c.l.b16 %v1878
    %v3978 = vunpack.c.h.b16 %v1878
    %v3979 = vunpack.c.l.b16 %v1879
    %v3980 = vunpack.c.l.b16 %v1880
    %v3981 = vunpack.c.h.b16 %v1880
    %v3982 = vunpack.c.l.b16 %v1881
    %v3983 = vunpack.c.h.b16 %v1881
    %v3984 = vunpack.c.l.b16 %v1882
    %v3985 = vunpack.c.h.b16 %v1882
    %v3986 = vunpack.c.l.b16 %v1883
    %v3987 = vunpack.c.l.b16 %v1884
    %v3988 = vunpack.c.h.b16 %v1884
    %v3989 = vunpack.c.l.b16 %v1885
    %v3990 = vunpack.c.h.b16 %v1885
    %v3991 = vunpack.c.l.b16 %v1886
    %v3992 = vunpack.c.h.b16 %v1886
    %v3993 = vunpack.c.l.b16 %v1887
    %v3994 = vunpack.c.l.b16 %v1888
    %v3995 = vunpack.c.h.b16 %v1888
    %v3996 = vunpack.c.l.b16 %v1889
    %v3997 = vunpack.c.h.b16 %v1889
    %v3998 = vunpack.c.l.b16 %v1890
    %v3999 = vunpack.c.h.b16 %v1890
    %v4000 = vunpack.c.l.b16 %v1891
    %v4001 = vunpack.c.l.b16 %v1892
    %v4002 = vunpack.c.h.b16 %v1892
    %v4003 = vunpack.c.l.b16 %v1893
    %v4004 = vunpack.c.h.b16 %v1893
    %v4005 = vunpack.c.l.b16 %v1894
    %v4006 = vunpack.c.h.b16 %v1894
    %v4007 = vunpack.c.l.b16 %v1895
    %v4008 = vunpack.c.l.b16 %v1896
    %v4009 = vunpack.c.h.b16 %v1896
    %v4010 = vunpack.c.l.b16 %v1897
    %v4011 = vunpack.c.h.b16 %v1897
    %v4012 = vunpack.c.l.b16 %v1898
    %v4013 = vunpack.c.h.b16 %v1898
    %v4014 = vunpack.c.l.b16 %v1899
    %v4015 = vunpack.c.l.b16 %v1900
    %v4016 = vunpack.c.h.b16 %v1900
    %v4017 = vunpack.c.l.b16 %v1901
    %v4018 = vunpack.c.h.b16 %v1901
    %v4019 = vunpack.c.l.b16 %v1902
    %v4020 = vunpack.c.h.b16 %v1902
    %v4021 = vunpack.c.l.b16 %v1903
    %v4022 = vunpack.c.l.b16 %v1904
    %v4023 = vunpack.c.h.b16 %v1904
    %v4024 = vunpack.c.l.b16 %v1905
    %v4025 = vunpack.c.h.b16 %v1905
    %v4026 = vunpack.c.l.b16 %v1906
    %v4027 = vunpack.c.h.b16 %v1906
    %v4028 = vunpack.c.l.b16 %v1907
    %v4029 = vunpack.c.l.b16 %v1908
    %v4030 = vunpack.c.h.b16 %v1908
    %v4031 = vunpack.c.l.b16 %v1909
    %v4032 = vunpack.c.h.b16 %v1909
    %v4033 = vunpack.c.l.b16 %v1910
    %v4034 = vunpack.c.h.b16 %v1910
    %v4035 = vunpack.c.l.b16 %v1911
    %v4036 = vunpack.c.l.b16 %v1912
    %v4037 = vunpack.c.h.b16 %v1912
    %v4038 = vunpack.c.l.b16 %v1913
    %v4039 = vunpack.c.h.b16 %v1913
    %v4040 = vunpack.c.l.b16 %v1914
    %v4041 = vunpack.c.h.b16 %v1914
    %v4042 = vunpack.c.l.b16 %v1915
    %v4043 = vunpack.c.l.b16 %v1916
    %v4044 = vunpack.c.h.b16 %v1916
    %v4045 = vunpack.c.l.b16 %v1917
    %v4046 = vunpack.c.h.b16 %v1917
    %v4047 = vunpack.c.l.b16 %v1918
    %v4048 = vunpack.c.h.b16 %v1918
    %v4049 = vunpack.c.l.b16 %v1919
    %v4050 = vunpack.c.l.b16 %v1920
    %v4051 = vunpack.c.h.b16 %v1920
    %v4052 = vunpack.c.l.b16 %v1921
    %v4053 = vunpack.c.h.b16 %v1921
    %v4054 = vunpack.c.l.b16 %v1922
    %v4055 = vunpack.c.h.b16 %v1922
    %v4056 = vunpack.c.l.b16 %v1923
    %v4057 = vunpack.c.l.b16 %v1924
    %v4058 = vunpack.c.h.b16 %v1924
    %v4059 = vunpack.c.l.b16 %v1925
    %v4060 = vunpack.c.h.b16 %v1925
    %v4061 = vunpack.c.l.b16 %v1926
    %v4062 = vunpack.c.h.b16 %v1926
    %v4063 = vunpack.c.l.b16 %v1927
    %v4064 = vunpack.c.l.b16 %v1928
    %v4065 = vunpack.c.h.b16 %v1928
    %v4066 = vunpack.c.l.b16 %v1929
    %v4067 = vunpack.c.h.b16 %v1929
    %v4068 = vunpack.c.l.b16 %v1930
    %v4069 = vunpack.c.h.b16 %v1930
    %v4070 = vunpack.c.l.b16 %v1931
    %v4071 = vunpack.c.l.b16 %v1932
    %v4072 = vunpack.c.h.b16 %v1932
    %v4073 = vunpack.c.l.b16 %v1933
    %v4074 = vunpack.c.h.b16 %v1933
    %v4075 = vunpack.c.l.b16 %v1934
    %v4076 = vunpack.c.h.b16 %v1934
    %v4077 = vunpack.c.l.b16 %v1935
    %v4078 = vunpack.c.l.b16 %v1936
    %v4079 = vunpack.c.h.b16 %v1936
    %v4080 = vunpack.c.l.b16 %v1937
    %v4081 = vunpack.c.h.b16 %v1937
    %v4082 = vunpack.c.l.b16 %v1938
    %v4083 = vunpack.c.h.b16 %v1938
    %v4084 = vunpack.c.l.b16 %v1939
    %v4085 = vunpack.c.l.b16 %v1940
    %v4086 = vunpack.c.h.b16 %v1940
    %v4087 = vunpack.c.l.b16 %v1941
    %v4088 = vunpack.c.h.b16 %v1941
    %v4089 = vunpack.c.l.b16 %v1942
    %v4090 = vunpack.c.h.b16 %v1942
    %v4091 = vunpack.c.l.b16 %v1943
    %v4092 = vunpack.c.l.b16 %v1944
    %v4093 = vunpack.c.h.b16 %v1944
    %v4094 = vunpack.c.l.b16 %v1945
    %v4095 = vunpack.c.h.b16 %v1945
    %v4096 = vunpack.c.l.b16 %v1946
    %v4097 = vunpack.c.h.b16 %v1946
    %v4098 = vunpack.c.l.b16 %v1947
    %v4099 = vunpack.c.l.b16 %v1948
    %v4100 = vunpack.c.h.b16 %v1948
    %v4101 = vunpack.c.l.b16 %v1949
    %v4102 = vunpack.c.h.b16 %v1949
    %v4103 = vunpack.c.l.b16 %v1950
    %v4104 = vunpack.c.h.b16 %v1950
    %v4105 = vunpack.c.l.b16 %v1951
    %v4106 = vunpack.c.l.b16 %v1952
    %v4107 = vunpack.c.h.b16 %v1952
    %v4108 = vunpack.c.l.b16 %v1953
    %v4109 = vunpack.c.h.b16 %v1953
    %v4110 = vunpack.c.l.b16 %v1954
    %v4111 = vunpack.c.h.b16 %v1954
    %v4112 = vunpack.c.l.b16 %v1955
    %v4113 = vunpack.c.l.b16 %v1956
    %v4114 = vunpack.c.h.b16 %v1956
    %v4115 = vunpack.c.l.b16 %v1957
    %v4116 = vunpack.c.h.b16 %v1957
    %v4117 = vunpack.c.l.b16 %v1958
    %v4118 = vunpack.c.h.b16 %v1958
    %v4119 = vunpack.c.l.b16 %v1959
    %v4120 = vunpack.c.l.b16 %v1960
    %v4121 = vunpack.c.h.b16 %v1960
    %v4122 = vunpack.c.l.b16 %v1961
    %v4123 = vunpack.c.h.b16 %v1961
    %v4124 = vunpack.c.l.b16 %v1962
    %v4125 = vunpack.c.h.b16 %v1962
    %v4126 = vunpack.c.l.b16 %v1963
    %v4127 = vunpack.c.l.b16 %v1964
    %v4128 = vunpack.c.h.b16 %v1964
    %v4129 = vunpack.c.l.b16 %v1965
    %v4130 = vunpack.c.h.b16 %v1965
    %v4131 = vunpack.c.l.b16 %v1966
    %v4132 = vunpack.c.h.b16 %v1966
    %v4133 = vunpack.c.l.b16 %v1967
    %v4134 = vunpack.c.l.b16 %v1968
    %v4135 = vunpack.c.h.b16 %v1968
    %v4136 = vunpack.c.l.b16 %v1969
    %v4137 = vunpack.c.h.b16 %v1969
    %v4138 = vunpack.c.l.b16 %v1970
    %v4139 = vunpack.c.h.b16 %v1970
    %v4140 = vunpack.c.l.b16 %v1971
    %v4141 = vunpack.c.l.b16 %v1972
    %v4142 = vunpack.c.h.b16 %v1972
    %v4143 = vunpack.c.l.b16 %v1973
    %v4144 = vunpack.c.h.b16 %v1973
    %v4145 = vunpack.c.l.b16 %v1974
    %v4146 = vunpack.c.h.b16 %v1974
    %v4147 = vunpack.c.l.b16 %v1975
    %v4148 = vunpack.c.l.b16 %v1976
    %v4149 = vunpack.c.h.b16 %v1976
    %v4150 = vunpack.c.l.b16 %v1977
    %v4151 = vunpack.c.h.b16 %v1977
    %v4152 = vunpack.c.l.b16 %v1978
    %v4153 = vunpack.c.h.b16 %v1978
    %v4154 = vunpack.c.l.b16 %v1979
    %v4155 = vunpack.c.l.b16 %v1980
    %v4156 = vunpack.c.h.b16 %v1980
    %v4157 = vunpack.c.l.b16 %v1981
    %v4158 = vunpack.c.h.b16 %v1981
    %v4159 = vunpack.c.l.b16 %v1982
    %v4160 = vunpack.c.h.b16 %v1982
    %v4161 = vunpack.c.l.b16 %v1983
    %v4162 = vunpack.c.l.b16 %v1984
    %v4163 = vunpack.c.h.b16 %v1984
    %v4164 = vunpack.c.l.b16 %v1985
    %v4165 = vunpack.c.h.b16 %v1985
    %v4166 = vunpack.c.l.b16 %v1986
    %v4167 = vunpack.c.h.b16 %v1986
    %v4168 = vunpack.c.l.b16 %v1987
    %v4169 = vunpack.c.l.b16 %v1988
    %v4170 = vunpack.c.h.b16 %v1988
    %v4171 = vunpack.c.l.b16 %v1989
    %v4172 = vunpack.c.h.b16 %v1989
    %v4173 = vunpack.c.l.b16 %v1990
    %v4174 = vunpack.c.h.b16 %v1990
    %v4175 = vunpack.c.l.b16 %v1991
    %v4176 = vunpack.c.l.b16 %v1992
    %v4177 = vunpack.c.h.b16 %v1992
    %v4178 = vunpack.c.l.b16 %v1993
    %v4179 = vunpack.c.h.b16 %v1993
    %v4180 = vunpack.c.l.b16 %v1994
    %v4181 = vunpack.c.h.b16 %v1994
    %v4182 = vunpack.c.l.b16 %v1995
    %v4183 = vunpack.c.l.b16 %v1996
    %v4184 = vunpack.c.h.b16 %v1996
    %v4185 = vunpack.c.l.b16 %v1997
    %v4186 = vunpack.c.h.b16 %v1997
    %v4187 = vunpack.c.l.b16 %v1998
    %v4188 = vunpack.c.h.b16 %v1998
    %v4189 = vunpack.c.l.b16 %v1999
    %v4190 = vunpack.c.l.b16 %v2000
    %v4191 = vunpack.c.h.b16 %v2000
    %v4192 = vunpack.c.l.b16 %v2001
    %v4193 = vunpack.c.h.b16 %v2001
    %v4194 = vunpack.c.l.b16 %v2002
    %v4195 = vunpack.c.h.b16 %v2002
    %v4196 = vunpack.c.l.b16 %v2003
    %v4197 = vunpack.c.l.b16 %v2004
    %v4198 = vunpack.c.h.b16 %v2004
    %v4199 = vunpack.c.l.b16 %v2005
    %v4200 = vunpack.c.h.b16 %v2005
    %v4201 = vunpack.c.l.b16 %v2006
    %v4202 = vunpack.c.h.b16 %v2006
    %v4203 = vunpack.c.l.b16 %v2007
    %v4204 = vunpack.c.l.b16 %v2008
    %v4205 = vunpack.c.h.b16 %v2008
    %v4206 = vunpack.c.l.b16 %v2009
    %v4207 = vunpack.c.h.b16 %v2009
    %v4208 = vunpack.c.l.b16 %v2010
    %v4209 = vunpack.c.h.b16 %v2010
    %v4210 = vunpack.c.l.b16 %v2011
    %v4211 = vunpack.c.l.b16 %v2012
    %v4212 = vunpack.c.h.b16 %v2012
    %v4213 = vunpack.c.l.b16 %v2013
    %v4214 = vunpack.c.h.b16 %v2013
    %v4215 = vunpack.c.l.b16 %v2014
    %v4216 = vunpack.c.h.b16 %v2014
    %v4217 = vunpack.c.l.b16 %v2015
    %v4218 = vunpack.c.l.b16 %v2016
    %v4219 = vunpack.c.h.b16 %v2016
    %v4220 = vunpack.c.l.b16 %v2017
    %v4221 = vunpack.c.h.b16 %v2017
    %v4222 = vunpack.c.l.b16 %v2018
    %v4223 = vunpack.c.h.b16 %v2018
    %v4224 = vunpack.c.l.b16 %v2019
    %v4225 = vunpack.c.l.b16 %v2020
    %v4226 = vunpack.c.h.b16 %v2020
    %v4227 = vunpack.c.l.b16 %v2021
    %v4228 = vunpack.c.h.b16 %v2021
    %v4229 = vunpack.c.l.b16 %v2022
    %v4230 = vunpack.c.h.b16 %v2022
    %v4231 = vunpack.c.l.b16 %v2023
    %v4232 = vunpack.c.l.b16 %v2024
    %v4233 = vunpack.c.h.b16 %v2024
    %v4234 = vunpack.c.l.b16 %v2025
    %v4235 = vunpack.c.h.b16 %v2025
    %v4236 = vunpack.c.l.b16 %v2026
    %v4237 = vunpack.c.h.b16 %v2026
    %v4238 = vunpack.c.l.b16 %v2027
    %v4239 = vunpack.c.l.b16 %v2028
    %v4240 = vunpack.c.h.b16 %v2028
    %v4241 = vunpack.c.l.b16 %v2029
    %v4242 = vunpack.c.h.b16 %v2029
    %v4243 = vunpack.c.l.b16 %v2030
    %v4244 = vunpack.c.h.b16 %v2030
    %v4245 = vunpack.c.l.b16 %v2031
    %v4246 = vunpack.c.l.b16 %v2032
    %v4247 = vunpack.c.h.b16 %v2032
    %v4248 = vunpack.c.l.b16 %v2033
    %v4249 = vunpack.c.h.b16 %v2033
    %v4250 = vunpack.c.l.b16 %v2034
    %v4251 = vunpack.c.h.b16 %v2034
    %v4252 = vunpack.c.l.b16 %v2035
    %v4253 = vunpack.c.l.b16 %v2036
    %v4254 = vunpack.c.h.b16 %v2036
    %v4255 = vunpack.c.l.b16 %v2037
    %v4256 = vunpack.c.h.b16 %v2037
    %v4257 = vunpack.c.l.b16 %v2038
    %v4258 = vunpack.c.h.b16 %v2038
    %v4259 = vunpack.c.l.b16 %v2039
    %v4260 = vunpack.c.l.b16 %v2040
    %v4261 = vunpack.c.h.b16 %v2040
    %v4262 = vunpack.c.l.b16 %v2041
    %v4263 = vunpack.c.h.b16 %v2041
    %v4264 = vunpack.c.l.b16 %v2042
    %v4265 = vunpack.c.h.b16 %v2042
    %v4266 = vunpack.c.l.b16 %v2043
    %v4267 = vunpack.c.l.b16 %v2044
    %v4268 = vunpack.c.h.b16 %v2044
    %v4269 = vunpack.c.l.b16 %v2045
    %v4270 = vunpack.c.h.b16 %v2045
    %v4271 = vunpack.c.l.b16 %v2046
    %v4272 = vunpack.c.h.b16 %v2046
    %v4273 = vunpack.c.l.b16 %v2047
    %v4274 = vpack.c.b16 %v3385, %v3378
    %v4275 = vpack.c.b16 %v3386, %v3379
    %v4276 = vpack.c.b16 %v3387, %v3380
    %v4277 = vpack.c.b16 %v3388, %v3381
    %v4278 = vpack.c.b16 %v3389, %v3382
    %v4279 = vpack.c.b16 %v3390, %v3383
    %v4280 = vpack.c.b16 %v3391, %v3384
    %v4281 = vpack.c.b16 %v3399, %v3392
    %v4282 = vpack.c.b16 %v3400, %v3393
    %v4283 = vpack.c.b16 %v3401, %v3394
    %v4284 = vpack.c.b16 %v3402, %v3395
    %v4285 = vpack.c.b16 %v3403, %v3396
    %v4286 = vpack.c.b16 %v3404, %v3397
    %v4287 = vpack.c.b16 %v3405, %v3398
    %v4288 = vpack.c.b16 %v3413, %v3406
    %v4289 = vpack.c.b16 %v3414, %v3407
    %v4290 = vpack.c.b16 %v3415, %v3408
    %v4291 = vpack.c.b16 %v3416, %v3409
    %v4292 = vpack.c.b16 %v3417, %v3410
    %v4293 = vpack.c.b16 %v3418, %v3411
    %v4294 = vpack.c.b16 %v3419, %v3412
    %v4295 = vpack.c.b16 %v3427, %v3420
    %v4296 = vpack.c.b16 %v3428, %v3421
    %v4297 = vpack.c.b16 %v3429, %v3422
    %v4298 = vpack.c.b16 %v3430, %v3423
    %v4299 = vpack.c.b16 %v3431, %v3424
    %v4300 = vpack.c.b16 %v3432, %v3425
    %v4301 = vpack.c.b16 %v3433, %v3426
    %v4302 = vpack.c.b16 %v3441, %v3434
    %v4303 = vpack.c.b16 %v3442, %v3435
    %v4304 = vpack.c.b16 %v3443, %v3436
    %v4305 = vpack.c.b16 %v3444, %v3437
    %v4306 = vpack.c.b16 %v3445, %v3438
    %v4307 = vpack.c.b16 %v3446, %v3439
    %v4308 = vpack.c.b16 %v3447, %v3440
    %v4309 = vpack.c.b16 %v3455, %v3448
    %v4310 = vpack.c.b16 %v3456, %v3449
    %v4311 = vpack.c.b16 %v3457, %v3450
    %v4312 = vpack.c.b16 %v3458, %v3451
    %v4313 = vpack.c.b16 %v3459, %v3452
    %v4314 = vpack.c.b16 %v3460, %v3453
    %v4315 = vpack.c.b16 %v3461, %v3454
    %v4316 = vpack.c.b16 %v3469, %v3462
    %v4317 = vpack.c.b16 %v3470, %v3463
    %v4318 = vpack.c.b16 %v3471, %v3464
    %v4319 = vpack.c.b16 %v3472, %v3465
    %v4320 = vpack.c.b16 %v3473, %v3466
    %v4321 = vpack.c.b16 %v3474, %v3467
    %v4322 = vpack.c.b16 %v3475, %v3468
    %v4323 = vpack.c.b16 %v3483, %v3476
    %v4324 = vpack.c.b16 %v3484, %v3477
    %v4325 = vpack.c.b16 %v3485, %v3478
    %v4326 = vpack.c.b16 %v3486, %v3479
    %v4327 = vpack.c.b16 %v3487, %v3480
    %v4328 = vpack.c.b16 %v3488, %v3481
    %v4329 = vpack.c.b16 %v3489, %v3482
    %v4330 = vpack.c.b16 %v3497, %v3490
    %v4331 = vpack.c.b16 %v3498, %v3491
    %v4332 = vpack.c.b16 %v3499, %v3492
    %v4333 = vpack.c.b16 %v3500, %v3493
    %v4334 = vpack.c.b16 %v3501, %v3494
    %v4335 = vpack.c.b16 %v3502, %v3495
    %v4336 = vpack.c.b16 %v3503, %v3496
    %v4337 = vpack.c.b16 %v3511, %v3504
    %v4338 = vpack.c.b16 %v3512, %v3505
    %v4339 = vpack.c.b16 %v3513, %v3506
    %v4340 = vpack.c.b16 %v3514, %v3507
    %v4341 = vpack.c.b16 %v3515, %v3508
    %v4342 = vpack.c.b16 %v3516, %v3509
    %v4343 = vpack.c.b16 %v3517, %v3510
    %v4344 = vpack.c.b16 %v3525, %v3518
    %v4345 = vpack.c.b16 %v3526, %v3519
    %v4346 = vpack.c.b16 %v3527, %v3520
    %v4347 = vpack.c.b16 %v3528, %v3521
    %v4348 = vpack.c.b16 %v3529, %v3522
    %v4349 = vpack.c.b16 %v3530, %v3523
    %v4350 = vpack.c.b16 %v3531, %v3524
    %v4351 = vpack.c.b16 %v3539, %v3532
    %v4352 = vpack.c.b16 %v3540, %v3533
    %v4353 = vpack.c.b16 %v3541, %v3534
    %v4354 = vpack.c.b16 %v3542, %v3535
    %v4355 = vpack.c.b16 %v3543, %v3536
    %v4356 = vpack.c.b16 %v3544, %v3537
    %v4357 = vpack.c.b16 %v3545, %v3538
    %v4358 = vpack.c.b16 %v3553, %v3546
    %v4359 = vpack.c.b16 %v3554, %v3547
    %v4360 = vpack.c.b16 %v3555, %v3548
    %v4361 = vpack.c.b16 %v3556, %v3549
    %v4362 = vpack.c.b16 %v3557, %v3550
    %v4363 = vpack.c.b16 %v3558, %v3551
    %v4364 = vpack.c.b16 %v3559, %v3552
    %v4365 = vpack.c.b16 %v3567, %v3560
    %v4366 = vpack.c.b16 %v3568, %v3561
    %v4367 = vpack.c.b16 %v3569, %v3562
    %v4368 = vpack.c.b16 %v3570, %v3563
    %v4369 = vpack.c.b16 %v3571, %v3564
    %v4370 = vpack.c.b16 %v3572, %v3565
    %v4371 = vpack.c.b16 %v3573, %v3566
    %v4372 = vpack.c.b16 %v3581, %v3574
    %v4373 = vpack.c.b16 %v3582, %v3575
    %v4374 = vpack.c.b16 %v3583, %v3576
    %v4375 = vpack.c.b16 %v3584, %v3577
    %v4376 = vpack.c.b16 %v3585, %v3578
    %v4377 = vpack.c.b16 %v3586, %v3579
    %v4378 = vpack.c.b16 %v3587, %v3580
    %v4379 = vpack.c.b16 %v3595, %v3588
    %v4380 = vpack.c.b16 %v3596, %v3589
    %v4381 = vpack.c.b16 %v3597, %v3590
    %v4382 = vpack.c.b16 %v3598, %v3591
    %v4383 = vpack.c.b16 %v3599, %v3592
    %v4384 = vpack.c.b16 %v3600, %v3593
    %v4385 = vpack.c.b16 %v3601, %v3594
    %v4386 = vpack.c.b16 %v3609, %v3602
    %v4387 = vpack.c.b16 %v3610, %v3603
    %v4388 = vpack.c.b16 %v3611, %v3604
    %v4389 = vpack.c.b16 %v3612, %v3605
    %v4390 = vpack.c.b16 %v3613, %v3606
    %v4391 = vpack.c.b16 %v3614, %v3607
    %v4392 = vpack.c.b16 %v3615, %v3608
    %v4393 = vpack.c.b16 %v3623, %v3616
    %v4394 = vpack.c.b16 %v3624, %v3617
    %v4395 = vpack.c.b16 %v3625, %v3618
    %v4396 = vpack.c.b16 %v3626, %v3619
    %v4397 = vpack.c.b16 %v3627, %v3620
    %v4398 = vpack.c.b16 %v3628, %v3621
    %v4399 = vpack.c.b16 %v3629, %v3622
    %v4400 = vpack.c.b16 %v3637, %v3630
    %v4401 = vpack.c.b16 %v3638, %v3631
    %v4402 = vpack.c.b16 %v3639, %v3632
    %v4403 = vpack.c.b16 %v3640, %v3633
    %v4404 = vpack.c.b16 %v3641, %v3634
    %v4405 = vpack.c.b16 %v3642, %v3635
    %v4406 = vpack.c.b16 %v3643, %v3636
    %v4407 = vpack.c.b16 %v3651, %v3644
    %v4408 = vpack.c.b16 %v3652, %v3645
    %v4409 = vpack.c.b16 %v3653, %v3646
    %v4410 = vpack.c.b16 %v3654, %v3647
    %v4411 = vpack.c.b16 %v3655, %v3648
    %v4412 = vpack.c.b16 %v3656, %v3649
    %v4413 = vpack.c.b16 %v3657, %v3650
    %v4414 = vpack.c.b16 %v3665, %v3658
    %v4415 = vpack.c.b16 %v3666, %v3659
    %v4416 = vpack.c.b16 %v3667, %v3660
    %v4417 = vpack.c.b16 %v3668, %v3661
    %v4418 = vpack.c.b16 %v3669, %v3662
    %v4419 = vpack.c.b16 %v3670, %v3663
    %v4420 = vpack.c.b16 %v3671, %v3664
    %v4421 = vpack.c.b16 %v3679, %v3672
    %v4422 = vpack.c.b16 %v3680, %v3673
    %v4423 = vpack.c.b16 %v3681, %v3674
    %v4424 = vpack.c.b16 %v3682, %v3675
    %v4425 = vpack.c.b16 %v3683, %v3676
    %v4426 = vpack.c.b16 %v3684, %v3677
    %v4427 = vpack.c.b16 %v3685, %v3678
    %v4428 = vpack.c.b16 %v3693, %v3686
    %v4429 = vpack.c.b16 %v3694, %v3687
    %v4430 = vpack.c.b16 %v3695, %v3688
    %v4431 = vpack.c.b16 %v3696, %v3689
    %v4432 = vpack.c.b16 %v3697, %v3690
    %v4433 = vpack.c.b16 %v3698, %v3691
    %v4434 = vpack.c.b16 %v3699, %v3692
    %v4435 = vpack.c.b16 %v3707, %v3700
    %v4436 = vpack.c.b16 %v3708, %v3701
    %v4437 = vpack.c.b16 %v3709, %v3702
    %v4438 = vpack.c.b16 %v3710, %v3703
    %v4439 = vpack.c.b16 %v3711, %v3704
    %v4440 = vpack.c.b16 %v3712, %v3705
    %v4441 = vpack.c.b16 %v3713, %v3706
    %v4442 = vpack.c.b16 %v3721, %v3714
    %v4443 = vpack.c.b16 %v3722, %v3715
    %v4444 = vpack.c.b16 %v3723, %v3716
    %v4445 = vpack.c.b16 %v3724, %v3717
    %v4446 = vpack.c.b16 %v3725, %v3718
    %v4447 = vpack.c.b16 %v3726, %v3719
    %v4448 = vpack.c.b16 %v3727, %v3720
    %v4449 = vpack.c.b16 %v3735, %v3728
    %v4450 = vpack.c.b16 %v3736, %v3729
    %v4451 = vpack.c.b16 %v3737, %v3730
    %v4452 = vpack.c.b16 %v3738, %v3731
    %v4453 = vpack.c.b16 %v3739, %v3732
    %v4454 = vpack.c.b16 %v3740, %v3733
    %v4455 = vpack.c.b16 %v3741, %v3734
    %v4456 = vpack.c.b16 %v3749, %v3742
    %v4457 = vpack.c.b16 %v3750, %v3743
    %v4458 = vpack.c.b16 %v3751, %v3744
    %v4459 = vpack.c.b16 %v3752, %v3745
    %v4460 = vpack.c.b16 %v3753, %v3746
    %v4461 = vpack.c.b16 %v3754, %v3747
    %v4462 = vpack.c.b16 %v3755, %v3748
    %v4463 = vpack.c.b16 %v3763, %v3756
    %v4464 = vpack.c.b16 %v3764, %v3757
    %v4465 = vpack.c.b16 %v3765, %v3758
    %v4466 = vpack.c.b16 %v3766, %v3759
    %v4467 = vpack.c.b16 %v3767, %v3760
    %v4468 = vpack.c.b16 %v3768, %v3761
    %v4469 = vpack.c.b16 %v3769, %v3762
    %v4470 = vpack.c.b16 %v3777, %v3770
    %v4471 = vpack.c.b16 %v3778, %v3771
    %v4472 = vpack.c.b16 %v3779, %v3772
    %v4473 = vpack.c.b16 %v3780, %v3773
    %v4474 = vpack.c.b16 %v3781, %v3774
    %v4475 = vpack.c.b16 %v3782, %v3775
    %v4476 = vpack.c.b16 %v3783, %v3776
    %v4477 = vpack.c.b16 %v3791, %v3784
    %v4478 = vpack.c.b16 %v3792, %v3785
    %v4479 = vpack.c.b16 %v3793, %v3786
    %v4480 = vpack.c.b16 %v3794, %v3787
    %v4481 = vpack.c.b16 %v3795, %v3788
    %v4482 = vpack.c.b16 %v3796, %v3789
    %v4483 = vpack.c.b16 %v3797, %v3790
    %v4484 = vpack.c.b16 %v3805, %v3798
    %v4485 = vpack.c.b16 %v3806, %v3799
    %v4486 = vpack.c.b16 %v3807, %v3800
    %v4487 = vpack.c.b16 %v3808, %v3801
    %v4488 = vpack.c.b16 %v3809, %v3802
    %v4489 = vpack.c.b16 %v3810, %v3803
    %v4490 = vpack.c.b16 %v3811, %v3804
    %v4491 = vpack.c.b16 %v3819, %v3812
    %v4492 = vpack.c.b16 %v3820, %v3813
    %v4493 = vpack.c.b16 %v3821, %v3814
    %v4494 = vpack.c.b16 %v3822, %v3815
    %v4495 = vpack.c.b16 %v3823, %v3816
    %v4496 = vpack.c.b16 %v3824, %v3817
    %v4497 = vpack.c.b16 %v3825, %v3818
    %v4498 = vpack.c.b16 %v3833, %v3826
    %v4499 = vpack.c.b16 %v3834, %v3827
    %v4500 = vpack.c.b16 %v3835, %v3828
    %v4501 = vpack.c.b16 %v3836, %v3829
    %v4502 = vpack.c.b16 %v3837, %v3830
    %v4503 = vpack.c.b16 %v3838, %v3831
    %v4504 = vpack.c.b16 %v3839, %v3832
    %v4505 = vpack.c.b16 %v3847, %v3840
    %v4506 = vpack.c.b16 %v3848, %v3841
    %v4507 = vpack.c.b16 %v3849, %v3842
    %v4508 = vpack.c.b16 %v3850, %v3843
    %v4509 = vpack.c.b16 %v3851, %v3844
    %v4510 = vpack.c.b16 %v3852, %v3845
    %v4511 = vpack.c.b16 %v3853, %v3846
    %v4512 = vpack.c.b16 %v3861, %v3854
    %v4513 = vpack.c.b16 %v3862, %v3855
    %v4514 = vpack.c.b16 %v3863, %v3856
    %v4515 = vpack.c.b16 %v3864, %v3857
    %v4516 = vpack.c.b16 %v3865, %v3858
    %v4517 = vpack.c.b16 %v3866, %v3859
    %v4518 = vpack.c.b16 %v3867, %v3860
    %v4519 = vpack.c.b16 %v3875, %v3868
    %v4520 = vpack.c.b16 %v3876, %v3869
    %v4521 = vpack.c.b16 %v3877, %v3870
    %v4522 = vpack.c.b16 %v3878, %v3871
    %v4523 = vpack.c.b16 %v3879, %v3872
    %v4524 = vpack.c.b16 %v3880, %v3873
    %v4525 = vpack.c.b16 %v3881, %v3874
    %v4526 = vpack.c.b16 %v3889, %v3882
    %v4527 = vpack.c.b16 %v3890, %v3883
    %v4528 = vpack.c.b16 %v3891, %v3884
    %v4529 = vpack.c.b16 %v3892, %v3885
    %v4530 = vpack.c.b16 %v3893, %v3886
    %v4531 = vpack.c.b16 %v3894, %v3887
    %v4532 = vpack.c.b16 %v3895, %v3888
    %v4533 = vpack.c.b16 %v3903, %v3896
    %v4534 = vpack.c.b16 %v3904, %v3897
    %v4535 = vpack.c.b16 %v3905, %v3898
    %v4536 = vpack.c.b16 %v3906, %v3899
    %v4537 = vpack.c.b16 %v3907, %v3900
    %v4538 = vpack.c.b16 %v3908, %v3901
    %v4539 = vpack.c.b16 %v3909, %v3902
    %v4540 = vpack.c.b16 %v3917, %v3910
    %v4541 = vpack.c.b16 %v3918, %v3911
    %v4542 = vpack.c.b16 %v3919, %v3912
    %v4543 = vpack.c.b16 %v3920, %v3913
    %v4544 = vpack.c.b16 %v3921, %v3914
    %v4545 = vpack.c.b16 %v3922, %v3915
    %v4546 = vpack.c.b16 %v3923, %v3916
    %v4547 = vpack.c.b16 %v3931, %v3924
    %v4548 = vpack.c.b16 %v3932, %v3925
    %v4549 = vpack.c.b16 %v3933, %v3926
    %v4550 = vpack.c.b16 %v3934, %v3927
    %v4551 = vpack.c.b16 %v3935, %v3928
    %v4552 = vpack.c.b16 %v3936, %v3929
    %v4553 = vpack.c.b16 %v3937, %v3930
    %v4554 = vpack.c.b16 %v3945, %v3938
    %v4555 = vpack.c.b16 %v3946, %v3939
    %v4556 = vpack.c.b16 %v3947, %v3940
    %v4557 = vpack.c.b16 %v3948, %v3941
    %v4558 = vpack.c.b16 %v3949, %v3942
    %v4559 = vpack.c.b16 %v3950, %v3943
    %v4560 = vpack.c.b16 %v3951, %v3944
    %v4561 = vpack.c.b16 %v3959, %v3952
    %v4562 = vpack.c.b16 %v3960, %v3953
    %v4563 = vpack.c.b16 %v3961, %v3954
    %v4564 = vpack.c.b16 %v3962, %v3955
    %v4565 = vpack.c.b16 %v3963, %v3956
    %v4566 = vpack.c.b16 %v3964, %v3957
    %v4567 = vpack.c.b16 %v3965, %v3958
    %v4568 = vpack.c.b16 %v3973, %v3966
    %v4569 = vpack.c.b16 %v3974, %v3967
    %v4570 = vpack.c.b16 %v3975, %v3968
    %v4571 = vpack.c.b16 %v3976, %v3969
    %v4572 = vpack.c.b16 %v3977, %v3970
    %v4573 = vpack.c.b16 %v3978, %v3971
    %v4574 = vpack.c.b16 %v3979, %v3972
    %v4575 = vpack.c.b16 %v3987, %v3980
    %v4576 = vpack.c.b16 %v3988, %v3981
    %v4577 = vpack.c.b16 %v3989, %v3982
    %v4578 = vpack.c.b16 %v3990, %v3983
    %v4579 = vpack.c.b16 %v3991, %v3984
    %v4580 = vpack.c.b16 %v3992, %v3985
    %v4581 = vpack.c.b16 %v3993, %v3986
    %v4582 = vpack.c.b16 %v4001, %v3994
    %v4583 = vpack.c.b16 %v4002, %v3995
    %v4584 = vpack.c.b16 %v4003, %v3996
    %v4585 = vpack.c.b16 %v4004, %v3997
    %v4586 = vpack.c.b16 %v4005, %v3998
    %v4587 = vpack.c.b16 %v4006, %v3999
    %v4588 = vpack.c.b16 %v4007, %v4000
    %v4589 = vpack.c.b16 %v4015, %v4008
    %v4590 = vpack.c.b16 %v4016, %v4009
    %v4591 = vpack.c.b16 %v4017, %v4010
    %v4592 = vpack.c.b16 %v4018, %v4011
    %v4593 = vpack.c.b16 %v4019, %v4012
    %v4594 = vpack.c.b16 %v4020, %v4013
    %v4595 = vpack.c.b16 %v4021, %v4014
    %v4596 = vpack.c.b16 %v4029, %v4022
    %v4597 = vpack.c.b16 %v4030, %v4023
    %v4598 = vpack.c.b16 %v4031, %v4024
    %v4599 = vpack.c.b16 %v4032, %v4025
    %v4600 = vpack.c.b16 %v4033, %v4026
    %v4601 = vpack.c.b16 %v4034, %v4027
    %v4602 = vpack.c.b16 %v4035, %v4028
    %v4603 = vpack.c.b16 %v4043, %v4036
    %v4604 = vpack.c.b16 %v4044, %v4037
    %v4605 = vpack.c.b16 %v4045, %v4038
    %v4606 = vpack.c.b16 %v4046, %v4039
    %v4607 = vpack.c.b16 %v4047, %v4040
    %v4608 = vpack.c.b16 %v4048, %v4041
    %v4609 = vpack.c.b16 %v4049, %v4042
    %v4610 = vpack.c.b16 %v4057, %v4050
    %v4611 = vpack.c.b16 %v4058, %v4051
    %v4612 = vpack.c.b16 %v4059, %v4052
    %v4613 = vpack.c.b16 %v4060, %v4053
    %v4614 = vpack.c.b16 %v4061, %v4054
    %v4615 = vpack.c.b16 %v4062, %v4055
    %v4616 = vpack.c.b16 %v4063, %v4056
    %v4617 = vpack.c.b16 %v4071, %v4064
    %v4618 = vpack.c.b16 %v4072, %v4065
    %v4619 = vpack.c.b16 %v4073, %v4066
    %v4620 = vpack.c.b16 %v4074, %v4067
    %v4621 = vpack.c.b16 %v4075, %v4068
    %v4622 = vpack.c.b16 %v4076, %v4069
    %v4623 = vpack.c.b16 %v4077, %v4070
    %v4624 = vpack.c.b16 %v4085, %v4078
    %v4625 = vpack.c.b16 %v4086, %v4079
    %v4626 = vpack.c.b16 %v4087, %v4080
    %v4627 = vpack.c.b16 %v4088, %v4081
    %v4628 = vpack.c.b16 %v4089, %v4082
    %v4629 = vpack.c.b16 %v4090, %v4083
    %v4630 = vpack.c.b16 %v4091, %v4084
    %v4631 = vpack.c.b16 %v4099, %v4092
    %v4632 = vpack.c.b16 %v4100, %v4093
    %v4633 = vpack.c.b16 %v4101, %v4094
    %v4634 = vpack.c.b16 %v4102, %v4095
    %v4635 = vpack.c.b16 %v4103, %v4096
    %v4636 = vpack.c.b16 %v4104, %v4097
    %v4637 = vpack.c.b16 %v4105, %v4098
    %v4638 = vpack.c.b16 %v4113, %v4106
    %v4639 = vpack.c.b16 %v4114, %v4107
    %v4640 = vpack.c.b16 %v4115, %v4108
    %v4641 = vpack.c.b16 %v4116, %v4109
    %v4642 = vpack.c.b16 %v4117, %v4110
    %v4643 = vpack.c.b16 %v4118, %v4111
    %v4644 = vpack.c.b16 %v4119, %v4112
    %v4645 = vpack.c.b16 %v4127, %v4120
    %v4646 = vpack.c.b16 %v4128, %v4121
    %v4647 = vpack.c.b16 %v4129, %v4122
    %v4648 = vpack.c.b16 %v4130, %v4123
    %v4649 = vpack.c.b16 %v4131, %v4124
    %v4650 = vpack.c.b16 %v4132, %v4125
    %v4651 = vpack.c.b16 %v4133, %v4126
    %v4652 = vpack.c.b16 %v4141, %v4134
    %v4653 = vpack.c.b16 %v4142, %v4135
    %v4654 = vpack.c.b16 %v4143, %v4136
    %v4655 = vpack.c.b16 %v4144, %v4137
    %v4656 = vpack.c.b16 %v4145, %v4138
    %v4657 = vpack.c.b16 %v4146, %v4139
    %v4658 = vpack.c.b16 %v4147, %v4140
    %v4659 = vpack.c.b16 %v4155, %v4148
    %v4660 = vpack.c.b16 %v4156, %v4149
    %v4661 = vpack.c.b16 %v4157, %v4150
    %v4662 = vpack.c.b16 %v4158, %v4151
    %v4663 = vpack.c.b16 %v4159, %v4152
    %v4664 = vpack.c.b16 %v4160, %v4153
    %v4665 = vpack.c.b16 %v4161, %v4154
    %v4666 = vpack.c.b16 %v4169, %v4162
    %v4667 = vpack.c.b16 %v4170, %v4163
    %v4668 = vpack.c.b16 %v4171, %v4164
    %v4669 = vpack.c.b16 %v4172, %v4165
    %v4670 = vpack.c.b16 %v4173, %v4166
    %v4671 = vpack.c.b16 %v4174, %v4167
    %v4672 = vpack.c.b16 %v4175, %v4168
    %v4673 = vpack.c.b16 %v4183, %v4176
    %v4674 = vpack.c.b16 %v4184, %v4177
    %v4675 = vpack.c.b16 %v4185, %v4178
    %v4676 = vpack.c.b16 %v4186, %v4179
    %v4677 = vpack.c.b16 %v4187, %v4180
    %v4678 = vpack.c.b16 %v4188, %v4181
    %v4679 = vpack.c.b16 %v4189, %v4182
    %v4680 = vpack.c.b16 %v4197, %v4190
    %v4681 = vpack.c.b16 %v4198, %v4191
    %v4682 = vpack.c.b16 %v4199, %v4192
    %v4683 = vpack.c.b16 %v4200, %v4193
    %v4684 = vpack.c.b16 %v4201, %v4194
    %v4685 = vpack.c.b16 %v4202, %v4195
    %v4686 = vpack.c.b16 %v4203, %v4196
    %v4687 = vpack.c.b16 %v4211, %v4204
    %v4688 = vpack.c.b16 %v4212, %v4205
    %v4689 = vpack.c.b16 %v4213, %v4206
    %v4690 = vpack.c.b16 %v4214, %v4207
    %v4691 = vpack.c.b16 %v4215, %v4208
    %v4692 = vpack.c.b16 %v4216, %v4209
    %v4693 = vpack.c.b16 %v4217, %v4210
    %v4694 = vpack.c.b16 %v4225, %v4218
    %v4695 = vpack.c.b16 %v4226, %v4219
    %v4696 = vpack.c.b16 %v4227, %v4220
    %v4697 = vpack.c.b16 %v4228, %v4221
    %v4698 = vpack.c.b16 %v4229, %v4222
    %v4699 = vpack.c.b16 %v4230, %v4223
    %v4700 = vpack.c.b16 %v4231, %v4224
    %v4701 = vpack.c.b16 %v4239, %v4232
    %v4702 = vpack.c.b16 %v4240, %v4233
    %v4703 = vpack.c.b16 %v4241, %v4234
    %v4704 = vpack.c.b16 %v4242, %v4235
    %v4705 = vpack.c.b16 %v4243, %v4236
    %v4706 = vpack.c.b16 %v4244, %v4237
    %v4707 = vpack.c.b16 %v4245, %v4238
    %v4708 = vpack.c.b16 %v4253, %v4246
    %v4709 = vpack.c.b16 %v4254, %v4247
    %v4710 = vpack.c.b16 %v4255, %v4248
    %v4711 = vpack.c.b16 %v4256, %v4249
    %v4712 = vpack.c.b16 %v4257, %v4250
    %v4713 = vpack.c.b16 %v4258, %v4251
    %v4714 = vpack.c.b16 %v4259, %v4252
    %v4715 = vpack.c.b16 %v4267, %v4260
    %v4716 = vpack.c.b16 %v4268, %v4261
    %v4717 = vpack.c.b16 %v4269, %v4262
    %v4718 = vpack.c.b16 %v4270, %v4263
    %v4719 = vpack.c.b16 %v4271, %v4264
    %v4720 = vpack.c.b16 %v4272, %v4265
    %v4721 = vpack.c.b16 %v4273, %v4266
    %vm5106 = vcmask 261120
    %v5108 = vsel %vm5106, %v4280, 0
    %v5111 = vsel %vm5106, %v4287, 0
    %v5114 = vsel %vm5106, %v4294, 0
    %v5117 = vsel %vm5106, %v4301, 0
    %v5120 = vsel %vm5106, %v4308, 0
    %v5123 = vsel %vm5106, %v4315, 0
    %v5126 = vsel %vm5106, %v4322, 0
    %v5129 = vsel %vm5106, %v4329, 0
    %v5132 = vsel %vm5106, %v4336, 0
    %v5135 = vsel %vm5106, %v4343, 0
    %v5138 = vsel %vm5106, %v4350, 0
    %v5141 = vsel %vm5106, %v4357, 0
    %v5144 = vsel %vm5106, %v4364, 0
    %v5147 = vsel %vm5106, %v4371, 0
    %v5150 = vsel %vm5106, %v4378, 0
    %v5153 = vsel %vm5106, %v4385, 0
    %v5156 = vsel %vm5106, %v4392, 0
    %v5159 = vsel %vm5106, %v4399, 0
    %v5162 = vsel %vm5106, %v4406, 0
    %v5165 = vsel %vm5106, %v4413, 0
    %v5168 = vsel %vm5106, %v4420, 0
    %v5171 = vsel %vm5106, %v4427, 0
    %v5174 = vsel %vm5106, %v4434, 0
    %v5177 = vsel %vm5106, %v4441, 0
    %v5180 = vsel %vm5106, %v4448, 0
    %v5183 = vsel %vm5106, %v4455, 0
    %v5186 = vsel %vm5106, %v4462, 0
    %v5189 = vsel %vm5106, %v4469, 0
    %v5192 = vsel %vm5106, %v4476, 0
    %v5195 = vsel %vm5106, %v4483, 0
    %v5198 = vsel %vm5106, %v4490, 0
    %v5201 = vsel %vm5106, %v4497, 0
    %v5204 = vsel %vm5106, %v4504, 0
    %v5207 = vsel %vm5106, %v4511, 0
    %v5210 = vsel %vm5106, %v4518, 0
    %v5213 = vsel %vm5106, %v4525, 0
    %v5216 = vsel %vm5106, %v4532, 0
    %v5219 = vsel %vm5106, %v4539, 0
    %v5222 = vsel %vm5106, %v4546, 0
    %v5225 = vsel %vm5106, %v4553, 0
    %v5228 = vsel %vm5106, %v4560, 0
    %v5231 = vsel %vm5106, %v4567, 0
    %v5234 = vsel %vm5106, %v4574, 0
    %v5237 = vsel %vm5106, %v4581, 0
    %v5240 = vsel %vm5106, %v4588, 0
    %v5243 = vsel %vm5106, %v4595, 0
    %v5246 = vsel %vm5106, %v4602, 0
    %v5249 = vsel %vm5106, %v4609, 0
    %v5252 = vsel %vm5106, %v4616, 0
    %v5255 = vsel %vm5106, %v4623, 0
    %v5258 = vsel %vm5106, %v4630, 0
    %v5261 = vsel %vm5106, %v4637, 0
    %v5264 = vsel %vm5106, %v4644, 0
    %v5267 = vsel %vm5106, %v4651, 0
    %v5270 = vsel %vm5106, %v4658, 0
    %v5273 = vsel %vm5106, %v4665, 0
    %v5276 = vsel %vm5106, %v4672, 0
    %v5279 = vsel %vm5106, %v4679, 0
    %v5282 = vsel %vm5106, %v4686, 0
    %v5285 = vsel %vm5106, %v4693, 0
    %v5288 = vsel %vm5106, %v4700, 0
    %v5291 = vsel %vm5106, %v4707, 0
    %v5294 = vsel %vm5106, %v4714, 0
    %v5297 = vsel %vm5106, %v4721, 0
    %5299 = vmatprep.subr.bf16.mxu0 0
    %5300 = vmatpush1.bf16.msra.mxu0 %v2048
    %5301 = vmatprep.subr.bf16.mxu0 0
    %5302 = vmatpush1.bf16.msra.mxu0 %v2049
    %5303 = vmatprep.subr.bf16.mxu0 0
    %5304 = vmatpush1.bf16.msra.mxu0 %v2050
    %5305 = vmatprep.subr.bf16.mxu0 0
    %5306 = vmatpush1.bf16.msra.mxu0 %v2051
    %5307 = vmatprep.subr.bf16.mxu0 0
    %5308 = vmatpush1.bf16.msra.mxu0 %v2052
    %5309 = vmatprep.subr.bf16.mxu0 0
    %5310 = vmatpush1.bf16.msra.mxu0 %v2053
    %5311 = vmatprep.subr.bf16.mxu0 0
    %5312 = vmatpush1.bf16.msra.mxu0 %v2054
    %5313 = vmatprep.subr.bf16.mxu0 0
    %5314 = vmatpush1.bf16.msra.mxu0 %v2055
    %5315 = vmatprep.subr.bf16.mxu0 0
    %5316 = vmatpush1.bf16.msra.mxu0 %v2056
    %5317 = vmatprep.subr.bf16.mxu0 0
    %5318 = vmatpush1.bf16.msra.mxu0 %v2057
    %5319 = vmatprep.subr.bf16.mxu0 0
    %5320 = vmatpush1.bf16.msra.mxu0 %v2058
    %5321 = vmatprep.subr.bf16.mxu0 0
    %5322 = vmatpush1.bf16.msra.mxu0 %v2059
    %5323 = vmatprep.subr.bf16.mxu0 0
    %5324 = vmatpush1.bf16.msra.mxu0 %v2060
    %5325 = vmatprep.subr.bf16.mxu0 0
    %5326 = vmatpush1.bf16.msra.mxu0 %v2061
    %5327 = vmatprep.subr.bf16.mxu0 0
    %5328 = vmatpush1.bf16.msra.mxu0 %v2062
    %5329 = vmatprep.subr.bf16.mxu0 0
    %5330 = vmatpush1.bf16.msra.mxu0 %v2063
    %5331 = vmatprep.mubr.bf16.mxu0 %v4275
    %5332 = vmatmul.mubr.bf16.gmra.mrb[0].mxu0 %v4274
    %v5333 = vpop.f32.mrb[0].mxu0
    %v5334 = vadd.f32 %v2229, %v5333
    %v5335 = vpop.f32.mrb[0].mxu0
    %v5336 = vpop.f32.mrb[0].mxu0
    %v5337 = vadd.f32 %v2234, %v5336
    %v5338 = vpop.f32.mrb[0].mxu0
    %5339 = vmatprep.mubr.bf16.mxu0 %v4282
    %5340 = vmatmul.mubr.bf16.gmra.mrb[0].mxu0 %v4281
    %v5341 = vpop.f32.mrb[0].mxu0
    %v5342 = vadd.f32 %v2239, %v5341
    %v5343 = vpop.f32.mrb[0].mxu0
    %v5344 = vpop.f32.mrb[0].mxu0
    %v5345 = vadd.f32 %v2244, %v5344
    %v5346 = vpop.f32.mrb[0].mxu0
    %5347 = vmatprep.mubr.bf16.mxu0 %v4289
    %5348 = vmatmul.mubr.bf16.gmra.mrb[0].mxu0 %v4288
    %v5349 = vpop.f32.mrb[0].mxu0
    %v5350 = vadd.f32 %v2249, %v5349
    %v5351 = vpop.f32.mrb[0].mxu0
    %v5352 = vpop.f32.mrb[0].mxu0
    %v5353 = vadd.f32 %v2254, %v5352
    %v5354 = vpop.f32.mrb[0].mxu0
    %5355 = vmatprep.mubr.bf16.mxu0 %v4296
    %5356 = vmatmul.mubr.bf16.gmra.mrb[0].mxu0 %v4295
    %v5357 = vpop.f32.mrb[0].mxu0
    %v5358 = vadd.f32 %v2259, %v5357
    %v5359 = vpop.f32.mrb[0].mxu0
    %v5360 = vpop.f32.mrb[0].mxu0
    %v5361 = vadd.f32 %v2264, %v5360
    %v5362 = vpop.f32.mrb[0].mxu0
    %5363 = vmatprep.mubr.bf16.mxu0 %v4303
    %5364 = vmatmul.mubr.bf16.gmra.mrb[0].mxu0 %v4302
    %v5365 = vpop.f32.mrb[0].mxu0
    %v5366 = vadd.f32 %v2269, %v5365
    %v5367 = vpop.f32.mrb[0].mxu0
    %v5368 = vpop.f32.mrb[0].mxu0
    %v5369 = vadd.f32 %v2274, %v5368
    %v5370 = vpop.f32.mrb[0].mxu0
    %5371 = vmatprep.mubr.bf16.mxu0 %v4310
    %5372 = vmatmul.mubr.bf16.gmra.mrb[0].mxu0 %v4309
    %v5373 = vpop.f32.mrb[0].mxu0
    %v5374 = vadd.f32 %v2279, %v5373
    %v5375 = vpop.f32.mrb[0].mxu0
    %v5376 = vpop.f32.mrb[0].mxu0
    %v5377 = vadd.f32 %v2284, %v5376
    %v5378 = vpop.f32.mrb[0].mxu0
    %5379 = vmatprep.mubr.bf16.mxu0 %v4317
    %5380 = vmatmul.mubr.bf16.gmra.mrb[0].mxu0 %v4316
    %v5381 = vpop.f32.mrb[0].mxu0
    %v5382 = vadd.f32 %v2289, %v5381
    %v5383 = vpop.f32.mrb[0].mxu0
    %v5384 = vpop.f32.mrb[0].mxu0
    %v5385 = vadd.f32 %v2294, %v5384
    %v5386 = vpop.f32.mrb[0].mxu0
    %5387 = vmatprep.mubr.bf16.mxu0 %v4324
    %5388 = vmatmul.mubr.bf16.gmra.mrb[0].mxu0 %v4323
    %v5389 = vpop.f32.mrb[0].mxu0
    %v5390 = vadd.f32 %v2299, %v5389
    %v5391 = vpop.f32.mrb[0].mxu0
    %v5392 = vpop.f32.mrb[0].mxu0
    %v5393 = vadd.f32 %v2304, %v5392
    %v5394 = vpop.f32.mrb[0].mxu0
    %5395 = vmatprep.mubr.bf16.mxu0 %v4331
    %5396 = vmatmul.mubr.bf16.gmra.mrb[0].mxu0 %v4330
    %v5397 = vpop.f32.mrb[0].mxu0
    %v5398 = vadd.f32 %v2309, %v5397
    %v5399 = vpop.f32.mrb[0].mxu0
    %v5400 = vpop.f32.mrb[0].mxu0
    %v5401 = vadd.f32 %v2314, %v5400
    %v5402 = vpop.f32.mrb[0].mxu0
    %5403 = vmatprep.mubr.bf16.mxu0 %v4338
    %5404 = vmatmul.mubr.bf16.gmra.mrb[0].mxu0 %v4337
    %v5405 = vpop.f32.mrb[0].mxu0
    %v5406 = vadd.f32 %v2319, %v5405
    %v5407 = vpop.f32.mrb[0].mxu0
    %v5408 = vpop.f32.mrb[0].mxu0
    %v5409 = vadd.f32 %v2324, %v5408
    %v5410 = vpop.f32.mrb[0].mxu0
    %5411 = vmatprep.mubr.bf16.mxu0 %v4345
    %5412 = vmatmul.mubr.bf16.gmra.mrb[0].mxu0 %v4344
    %v5413 = vpop.f32.mrb[0].mxu0
    %v5414 = vadd.f32 %v2329, %v5413
    %v5415 = vpop.f32.mrb[0].mxu0
    %v5416 = vpop.f32.mrb[0].mxu0
    %v5417 = vadd.f32 %v2334, %v5416
    %v5418 = vpop.f32.mrb[0].mxu0
    %5419 = vmatprep.mubr.bf16.mxu0 %v4352
    %5420 = vmatmul.mubr.bf16.gmra.mrb[0].mxu0 %v4351
    %v5421 = vpop.f32.mrb[0].mxu0
    %v5422 = vadd.f32 %v2339, %v5421
    %v5423 = vpop.f32.mrb[0].mxu0
    %v5424 = vpop.f32.mrb[0].mxu0
    %v5425 = vadd.f32 %v2344, %v5424
    %v5426 = vpop.f32.mrb[0].mxu0
    %5427 = vmatprep.mubr.bf16.mxu0 %v4359
    %5428 = vmatmul.mubr.bf16.gmra.mrb[0].mxu0 %v4358
    %v5429 = vpop.f32.mrb[0].mxu0
    %v5430 = vadd.f32 %v2349, %v5429
    %v5431 = vpop.f32.mrb[0].mxu0
    %v5432 = vpop.f32.mrb[0].mxu0
    %v5433 = vadd.f32 %v2354, %v5432
    %v5434 = vpop.f32.mrb[0].mxu0
    %5435 = vmatprep.mubr.bf16.mxu0 %v4366
    %5436 = vmatmul.mubr.bf16.gmra.mrb[0].mxu0 %v4365
    %v5437 = vpop.f32.mrb[0].mxu0
    %v5438 = vadd.f32 %v2359, %v5437
    %v5439 = vpop.f32.mrb[0].mxu0
    %v5440 = vpop.f32.mrb[0].mxu0
    %v5441 = vadd.f32 %v2364, %v5440
    %v5442 = vpop.f32.mrb[0].mxu0
    %5443 = vmatprep.mubr.bf16.mxu0 %v4373
    %5444 = vmatmul.mubr.bf16.gmra.mrb[0].mxu0 %v4372
    %v5445 = vpop.f32.mrb[0].mxu0
    %v5446 = vadd.f32 %v2369, %v5445
    %v5447 = vpop.f32.mrb[0].mxu0
    %v5448 = vpop.f32.mrb[0].mxu0
    %v5449 = vadd.f32 %v2374, %v5448
    %v5450 = vpop.f32.mrb[0].mxu0
    %5451 = vmatprep.mubr.bf16.mxu0 %v4380
    %5452 = vmatmul.mubr.bf16.gmra.mrb[0].mxu0 %v4379
    %v5453 = vpop.f32.mrb[0].mxu0
    %v5454 = vadd.f32 %v2379, %v5453
    %v5455 = vpop.f32.mrb[0].mxu0
    %v5456 = vpop.f32.mrb[0].mxu0
    %v5457 = vadd.f32 %v2384, %v5456
    %v5458 = vpop.f32.mrb[0].mxu0
    %5459 = vmatprep.mubr.bf16.mxu0 %v4387
    %5460 = vmatmul.mubr.bf16.gmra.mrb[0].mxu0 %v4386
    %v5461 = vpop.f32.mrb[0].mxu0
    %v5462 = vadd.f32 %v2389, %v5461
    %v5463 = vpop.f32.mrb[0].mxu0
    %v5464 = vpop.f32.mrb[0].mxu0
    %v5465 = vadd.f32 %v2394, %v5464
    %v5466 = vpop.f32.mrb[0].mxu0
    %5467 = vmatprep.mubr.bf16.mxu0 %v4394
    %5468 = vmatmul.mubr.bf16.gmra.mrb[0].mxu0 %v4393
    %v5469 = vpop.f32.mrb[0].mxu0
    %v5470 = vadd.f32 %v2399, %v5469
    %v5471 = vpop.f32.mrb[0].mxu0
    %v5472 = vpop.f32.mrb[0].mxu0
    %v5473 = vadd.f32 %v2404, %v5472
    %v5474 = vpop.f32.mrb[0].mxu0
    %5475 = vmatprep.mubr.bf16.mxu0 %v4401
    %5476 = vmatmul.mubr.bf16.gmra.mrb[0].mxu0 %v4400
    %v5477 = vpop.f32.mrb[0].mxu0
    %v5478 = vadd.f32 %v2409, %v5477
    %v5479 = vpop.f32.mrb[0].mxu0
    %v5480 = vpop.f32.mrb[0].mxu0
    %v5481 = vadd.f32 %v2414, %v5480
    %v5482 = vpop.f32.mrb[0].mxu0
    %5483 = vmatprep.mubr.bf16.mxu0 %v4408
    %5484 = vmatmul.mubr.bf16.gmra.mrb[0].mxu0 %v4407
    %v5485 = vpop.f32.mrb[0].mxu0
    %v5486 = vadd.f32 %v2419, %v5485
    %v5487 = vpop.f32.mrb[0].mxu0
    %v5488 = vpop.f32.mrb[0].mxu0
    %v5489 = vadd.f32 %v2424, %v5488
    %v5490 = vpop.f32.mrb[0].mxu0
    %5491 = vmatprep.mubr.bf16.mxu0 %v4415
    %5492 = vmatmul.mubr.bf16.gmra.mrb[0].mxu0 %v4414
    %v5493 = vpop.f32.mrb[0].mxu0
    %v5494 = vadd.f32 %v2429, %v5493
    %v5495 = vpop.f32.mrb[0].mxu0
    %v5496 = vpop.f32.mrb[0].mxu0
    %v5497 = vadd.f32 %v2434, %v5496
    %v5498 = vpop.f32.mrb[0].mxu0
    %5499 = vmatprep.mubr.bf16.mxu0 %v4422
    %5500 = vmatmul.mubr.bf16.gmra.mrb[0].mxu0 %v4421
    %v5501 = vpop.f32.mrb[0].mxu0
    %v5502 = vadd.f32 %v2439, %v5501
    %v5503 = vpop.f32.mrb[0].mxu0
    %v5504 = vpop.f32.mrb[0].mxu0
    %v5505 = vadd.f32 %v2444, %v5504
    %v5506 = vpop.f32.mrb[0].mxu0
    %5507 = vmatprep.mubr.bf16.mxu0 %v4429
    %5508 = vmatmul.mubr.bf16.gmra.mrb[0].mxu0 %v4428
    %v5509 = vpop.f32.mrb[0].mxu0
    %v5510 = vadd.f32 %v2449, %v5509
    %v5511 = vpop.f32.mrb[0].mxu0
    %v5512 = vpop.f32.mrb[0].mxu0
    %v5513 = vadd.f32 %v2454, %v5512
    %v5514 = vpop.f32.mrb[0].mxu0
    %5515 = vmatprep.mubr.bf16.mxu0 %v4436
    %5516 = vmatmul.mubr.bf16.gmra.mrb[0].mxu0 %v4435
    %v5517 = vpop.f32.mrb[0].mxu0
    %v5518 = vadd.f32 %v2459, %v5517
    %v5519 = vpop.f32.mrb[0].mxu0
    %v5520 = vpop.f32.mrb[0].mxu0
    %v5521 = vadd.f32 %v2464, %v5520
    %v5522 = vpop.f32.mrb[0].mxu0
    %5523 = vmatprep.mubr.bf16.mxu0 %v4443
    %5524 = vmatmul.mubr.bf16.gmra.mrb[0].mxu0 %v4442
    %v5525 = vpop.f32.mrb[0].mxu0
    %v5526 = vadd.f32 %v2469, %v5525
    %v5527 = vpop.f32.mrb[0].mxu0
    %v5528 = vpop.f32.mrb[0].mxu0
    %v5529 = vadd.f32 %v2474, %v5528
    %v5530 = vpop.f32.mrb[0].mxu0
    %5531 = vmatprep.mubr.bf16.mxu0 %v4450
    %5532 = vmatmul.mubr.bf16.gmra.mrb[0].mxu0 %v4449
    %v5533 = vpop.f32.mrb[0].mxu0
    %v5534 = vadd.f32 %v2479, %v5533
    %v5535 = vpop.f32.mrb[0].mxu0
    %v5536 = vpop.f32.mrb[0].mxu0
    %v5537 = vadd.f32 %v2484, %v5536
    %v5538 = vpop.f32.mrb[0].mxu0
    %5539 = vmatprep.mubr.bf16.mxu0 %v4457
    %5540 = vmatmul.mubr.bf16.gmra.mrb[0].mxu0 %v4456
    %v5541 = vpop.f32.mrb[0].mxu0
    %v5542 = vadd.f32 %v2489, %v5541
    %v5543 = vpop.f32.mrb[0].mxu0
    %v5544 = vpop.f32.mrb[0].mxu0
    %v5545 = vadd.f32 %v2494, %v5544
    %v5546 = vpop.f32.mrb[0].mxu0
    %5547 = vmatprep.mubr.bf16.mxu0 %v4464
    %5548 = vmatmul.mubr.bf16.gmra.mrb[0].mxu0 %v4463
    %v5549 = vpop.f32.mrb[0].mxu0
    %v5550 = vadd.f32 %v2499, %v5549
    %v5551 = vpop.f32.mrb[0].mxu0
    %v5552 = vpop.f32.mrb[0].mxu0
    %v5553 = vadd.f32 %v2504, %v5552
    %v5554 = vpop.f32.mrb[0].mxu0
    %5555 = vmatprep.mubr.bf16.mxu0 %v4471
    %5556 = vmatmul.mubr.bf16.gmra.mrb[0].mxu0 %v4470
    %v5557 = vpop.f32.mrb[0].mxu0
    %v5558 = vadd.f32 %v2509, %v5557
    %v5559 = vpop.f32.mrb[0].mxu0
    %v5560 = vpop.f32.mrb[0].mxu0
    %v5561 = vadd.f32 %v2514, %v5560
    %v5562 = vpop.f32.mrb[0].mxu0
    %5563 = vmatprep.mubr.bf16.mxu0 %v4478
    %5564 = vmatmul.mubr.bf16.gmra.mrb[0].mxu0 %v4477
    %v5565 = vpop.f32.mrb[0].mxu0
    %v5566 = vadd.f32 %v2519, %v5565
    %v5567 = vpop.f32.mrb[0].mxu0
    %v5568 = vpop.f32.mrb[0].mxu0
    %v5569 = vadd.f32 %v2524, %v5568
    %v5570 = vpop.f32.mrb[0].mxu0
    %5571 = vmatprep.mubr.bf16.mxu0 %v4485
    %5572 = vmatmul.mubr.bf16.gmra.mrb[0].mxu0 %v4484
    %v5573 = vpop.f32.mrb[0].mxu0
    %v5574 = vadd.f32 %v2529, %v5573
    %v5575 = vpop.f32.mrb[0].mxu0
    %v5576 = vpop.f32.mrb[0].mxu0
    %v5577 = vadd.f32 %v2534, %v5576
    %v5578 = vpop.f32.mrb[0].mxu0
    %5579 = vmatprep.mubr.bf16.mxu0 %v4492
    %5580 = vmatmul.mubr.bf16.gmra.mrb[0].mxu0 %v4491
    %v5581 = vpop.f32.mrb[0].mxu0
    %v5582 = vadd.f32 %v2539, %v5581
    %v5583 = vpop.f32.mrb[0].mxu0
    %v5584 = vpop.f32.mrb[0].mxu0
    %v5585 = vadd.f32 %v2544, %v5584
    %v5586 = vpop.f32.mrb[0].mxu0
    %5587 = vmatprep.mubr.bf16.mxu0 %v4499
    %5588 = vmatmul.mubr.bf16.gmra.mrb[0].mxu0 %v4498
    %v5589 = vpop.f32.mrb[0].mxu0
    %v5590 = vadd.f32 %v2549, %v5589
    %v5591 = vpop.f32.mrb[0].mxu0
    %v5592 = vpop.f32.mrb[0].mxu0
    %v5593 = vadd.f32 %v2554, %v5592
    %v5594 = vpop.f32.mrb[0].mxu0
    %5595 = vmatprep.mubr.bf16.mxu0 %v4506
    %5596 = vmatmul.mubr.bf16.gmra.mrb[0].mxu0 %v4505
    %v5597 = vpop.f32.mrb[0].mxu0
    %v5598 = vadd.f32 %v2559, %v5597
    %v5599 = vpop.f32.mrb[0].mxu0
    %v5600 = vpop.f32.mrb[0].mxu0
    %v5601 = vadd.f32 %v2564, %v5600
    %v5602 = vpop.f32.mrb[0].mxu0
    %5603 = vmatprep.mubr.bf16.mxu0 %v4513
    %5604 = vmatmul.mubr.bf16.gmra.mrb[0].mxu0 %v4512
    %v5605 = vpop.f32.mrb[0].mxu0
    %v5606 = vadd.f32 %v2569, %v5605
    %v5607 = vpop.f32.mrb[0].mxu0
    %v5608 = vpop.f32.mrb[0].mxu0
    %v5609 = vadd.f32 %v2574, %v5608
    %v5610 = vpop.f32.mrb[0].mxu0
    %5611 = vmatprep.mubr.bf16.mxu0 %v4520
    %5612 = vmatmul.mubr.bf16.gmra.mrb[0].mxu0 %v4519
    %v5613 = vpop.f32.mrb[0].mxu0
    %v5614 = vadd.f32 %v2579, %v5613
    %v5615 = vpop.f32.mrb[0].mxu0
    %v5616 = vpop.f32.mrb[0].mxu0
    %v5617 = vadd.f32 %v2584, %v5616
    %v5618 = vpop.f32.mrb[0].mxu0
    %5619 = vmatprep.mubr.bf16.mxu0 %v4527
    %5620 = vmatmul.mubr.bf16.gmra.mrb[0].mxu0 %v4526
    %v5621 = vpop.f32.mrb[0].mxu0
    %v5622 = vadd.f32 %v2589, %v5621
    %v5623 = vpop.f32.mrb[0].mxu0
    %v5624 = vpop.f32.mrb[0].mxu0
    %v5625 = vadd.f32 %v2594, %v5624
    %v5626 = vpop.f32.mrb[0].mxu0
    %5627 = vmatprep.mubr.bf16.mxu0 %v4534
    %5628 = vmatmul.mubr.bf16.gmra.mrb[0].mxu0 %v4533
    %v5629 = vpop.f32.mrb[0].mxu0
    %v5630 = vadd.f32 %v2599, %v5629
    %v5631 = vpop.f32.mrb[0].mxu0
    %v5632 = vpop.f32.mrb[0].mxu0
    %v5633 = vadd.f32 %v2604, %v5632
    %v5634 = vpop.f32.mrb[0].mxu0
    %5635 = vmatprep.mubr.bf16.mxu0 %v4541
    %5636 = vmatmul.mubr.bf16.gmra.mrb[0].mxu0 %v4540
    %v5637 = vpop.f32.mrb[0].mxu0
    %v5638 = vadd.f32 %v2609, %v5637
    %v5639 = vpop.f32.mrb[0].mxu0
    %v5640 = vpop.f32.mrb[0].mxu0
    %v5641 = vadd.f32 %v2614, %v5640
    %v5642 = vpop.f32.mrb[0].mxu0
    %5643 = vmatprep.mubr.bf16.mxu0 %v4548
    %5644 = vmatmul.mubr.bf16.gmra.mrb[0].mxu0 %v4547
    %v5645 = vpop.f32.mrb[0].mxu0
    %v5646 = vadd.f32 %v2619, %v5645
    %v5647 = vpop.f32.mrb[0].mxu0
    %v5648 = vpop.f32.mrb[0].mxu0
    %v5649 = vadd.f32 %v2624, %v5648
    %v5650 = vpop.f32.mrb[0].mxu0
    %5651 = vmatprep.mubr.bf16.mxu0 %v4555
    %5652 = vmatmul.mubr.bf16.gmra.mrb[0].mxu0 %v4554
    %v5653 = vpop.f32.mrb[0].mxu0
    %v5654 = vadd.f32 %v2629, %v5653
    %v5655 = vpop.f32.mrb[0].mxu0
    %v5656 = vpop.f32.mrb[0].mxu0
    %v5657 = vadd.f32 %v2634, %v5656
    %v5658 = vpop.f32.mrb[0].mxu0
    %5659 = vmatprep.mubr.bf16.mxu0 %v4562
    %5660 = vmatmul.mubr.bf16.gmra.mrb[0].mxu0 %v4561
    %v5661 = vpop.f32.mrb[0].mxu0
    %v5662 = vadd.f32 %v2639, %v5661
    %v5663 = vpop.f32.mrb[0].mxu0
    %v5664 = vpop.f32.mrb[0].mxu0
    %v5665 = vadd.f32 %v2644, %v5664
    %v5666 = vpop.f32.mrb[0].mxu0
    %5667 = vmatprep.mubr.bf16.mxu0 %v4569
    %5668 = vmatmul.mubr.bf16.gmra.mrb[0].mxu0 %v4568
    %v5669 = vpop.f32.mrb[0].mxu0
    %v5670 = vadd.f32 %v2649, %v5669
    %v5671 = vpop.f32.mrb[0].mxu0
    %v5672 = vpop.f32.mrb[0].mxu0
    %v5673 = vadd.f32 %v2654, %v5672
    %v5674 = vpop.f32.mrb[0].mxu0
    %5675 = vmatprep.mubr.bf16.mxu0 %v4576
    %5676 = vmatmul.mubr.bf16.gmra.mrb[0].mxu0 %v4575
    %v5677 = vpop.f32.mrb[0].mxu0
    %v5678 = vadd.f32 %v2659, %v5677
    %v5679 = vpop.f32.mrb[0].mxu0
    %v5680 = vpop.f32.mrb[0].mxu0
    %v5681 = vadd.f32 %v2664, %v5680
    %v5682 = vpop.f32.mrb[0].mxu0
    %5683 = vmatprep.mubr.bf16.mxu0 %v4583
    %5684 = vmatmul.mubr.bf16.gmra.mrb[0].mxu0 %v4582
    %v5685 = vpop.f32.mrb[0].mxu0
    %v5686 = vadd.f32 %v2669, %v5685
    %v5687 = vpop.f32.mrb[0].mxu0
    %v5688 = vpop.f32.mrb[0].mxu0
    %v5689 = vadd.f32 %v2674, %v5688
    %v5690 = vpop.f32.mrb[0].mxu0
    %5691 = vmatprep.mubr.bf16.mxu0 %v4590
    %5692 = vmatmul.mubr.bf16.gmra.mrb[0].mxu0 %v4589
    %v5693 = vpop.f32.mrb[0].mxu0
    %v5694 = vadd.f32 %v2679, %v5693
    %v5695 = vpop.f32.mrb[0].mxu0
    %v5696 = vpop.f32.mrb[0].mxu0
    %v5697 = vadd.f32 %v2684, %v5696
    %v5698 = vpop.f32.mrb[0].mxu0
    %5699 = vmatprep.mubr.bf16.mxu0 %v4597
    %5700 = vmatmul.mubr.bf16.gmra.mrb[0].mxu0 %v4596
    %v5701 = vpop.f32.mrb[0].mxu0
    %v5702 = vadd.f32 %v2689, %v5701
    %v5703 = vpop.f32.mrb[0].mxu0
    %v5704 = vpop.f32.mrb[0].mxu0
    %v5705 = vadd.f32 %v2694, %v5704
    %v5706 = vpop.f32.mrb[0].mxu0
    %5707 = vmatprep.mubr.bf16.mxu0 %v4604
    %5708 = vmatmul.mubr.bf16.gmra.mrb[0].mxu0 %v4603
    %v5709 = vpop.f32.mrb[0].mxu0
    %v5710 = vadd.f32 %v2699, %v5709
    %v5711 = vpop.f32.mrb[0].mxu0
    %v5712 = vpop.f32.mrb[0].mxu0
    %v5713 = vadd.f32 %v2704, %v5712
    %v5714 = vpop.f32.mrb[0].mxu0
    %5715 = vmatprep.mubr.bf16.mxu0 %v4611
    %5716 = vmatmul.mubr.bf16.gmra.mrb[0].mxu0 %v4610
    %v5717 = vpop.f32.mrb[0].mxu0
    %v5718 = vadd.f32 %v2709, %v5717
    %v5719 = vpop.f32.mrb[0].mxu0
    %v5720 = vpop.f32.mrb[0].mxu0
    %v5721 = vadd.f32 %v2714, %v5720
    %v5722 = vpop.f32.mrb[0].mxu0
    %5723 = vmatprep.mubr.bf16.mxu0 %v4618
    %5724 = vmatmul.mubr.bf16.gmra.mrb[0].mxu0 %v4617
    %v5725 = vpop.f32.mrb[0].mxu0
    %v5726 = vadd.f32 %v2719, %v5725
    %v5727 = vpop.f32.mrb[0].mxu0
    %v5728 = vpop.f32.mrb[0].mxu0
    %v5729 = vadd.f32 %v2724, %v5728
    %v5730 = vpop.f32.mrb[0].mxu0
    %5731 = vmatprep.mubr.bf16.mxu0 %v4625
    %5732 = vmatmul.mubr.bf16.gmra.mrb[0].mxu0 %v4624
    %v5733 = vpop.f32.mrb[0].mxu0
    %v5734 = vadd.f32 %v2729, %v5733
    %v5735 = vpop.f32.mrb[0].mxu0
    %v5736 = vpop.f32.mrb[0].mxu0
    %v5737 = vadd.f32 %v2734, %v5736
    %v5738 = vpop.f32.mrb[0].mxu0
    %5739 = vmatprep.mubr.bf16.mxu0 %v4632
    %5740 = vmatmul.mubr.bf16.gmra.mrb[0].mxu0 %v4631
    %v5741 = vpop.f32.mrb[0].mxu0
    %v5742 = vadd.f32 %v2739, %v5741
    %v5743 = vpop.f32.mrb[0].mxu0
    %v5744 = vpop.f32.mrb[0].mxu0
    %v5745 = vadd.f32 %v2744, %v5744
    %v5746 = vpop.f32.mrb[0].mxu0
    %5747 = vmatprep.mubr.bf16.mxu0 %v4639
    %5748 = vmatmul.mubr.bf16.gmra.mrb[0].mxu0 %v4638
    %v5749 = vpop.f32.mrb[0].mxu0
    %v5750 = vadd.f32 %v2749, %v5749
    %v5751 = vpop.f32.mrb[0].mxu0
    %v5752 = vpop.f32.mrb[0].mxu0
    %v5753 = vadd.f32 %v2754, %v5752
    %v5754 = vpop.f32.mrb[0].mxu0
    %5755 = vmatprep.mubr.bf16.mxu0 %v4646
    %5756 = vmatmul.mubr.bf16.gmra.mrb[0].mxu0 %v4645
    %v5757 = vpop.f32.mrb[0].mxu0
    %v5758 = vadd.f32 %v2759, %v5757
    %v5759 = vpop.f32.mrb[0].mxu0
    %v5760 = vpop.f32.mrb[0].mxu0
    %v5761 = vadd.f32 %v2764, %v5760
    %v5762 = vpop.f32.mrb[0].mxu0
    %5763 = vmatprep.mubr.bf16.mxu0 %v4653
    %5764 = vmatmul.mubr.bf16.gmra.mrb[0].mxu0 %v4652
    %v5765 = vpop.f32.mrb[0].mxu0
    %v5766 = vadd.f32 %v2769, %v5765
    %v5767 = vpop.f32.mrb[0].mxu0
    %v5768 = vpop.f32.mrb[0].mxu0
    %v5769 = vadd.f32 %v2774, %v5768
    %v5770 = vpop.f32.mrb[0].mxu0
    %5771 = vmatprep.mubr.bf16.mxu0 %v4660
    %5772 = vmatmul.mubr.bf16.gmra.mrb[0].mxu0 %v4659
    %v5773 = vpop.f32.mrb[0].mxu0
    %v5774 = vadd.f32 %v2779, %v5773
    %v5775 = vpop.f32.mrb[0].mxu0
    %v5776 = vpop.f32.mrb[0].mxu0
    %v5777 = vadd.f32 %v2784, %v5776
    %v5778 = vpop.f32.mrb[0].mxu0
    %5779 = vmatprep.mubr.bf16.mxu0 %v4667
    %5780 = vmatmul.mubr.bf16.gmra.mrb[0].mxu0 %v4666
    %v5781 = vpop.f32.mrb[0].mxu0
    %v5782 = vadd.f32 %v2789, %v5781
    %v5783 = vpop.f32.mrb[0].mxu0
    %v5784 = vpop.f32.mrb[0].mxu0
    %v5785 = vadd.f32 %v2794, %v5784
    %v5786 = vpop.f32.mrb[0].mxu0
    %5787 = vmatprep.mubr.bf16.mxu0 %v4674
    %5788 = vmatmul.mubr.bf16.gmra.mrb[0].mxu0 %v4673
    %v5789 = vpop.f32.mrb[0].mxu0
    %v5790 = vadd.f32 %v2799, %v5789
    %v5791 = vpop.f32.mrb[0].mxu0
    %v5792 = vpop.f32.mrb[0].mxu0
    %v5793 = vadd.f32 %v2804, %v5792
    %v5794 = vpop.f32.mrb[0].mxu0
    %5795 = vmatprep.mubr.bf16.mxu0 %v4681
    %5796 = vmatmul.mubr.bf16.gmra.mrb[0].mxu0 %v4680
    %v5797 = vpop.f32.mrb[0].mxu0
    %v5798 = vadd.f32 %v2809, %v5797
    %v5799 = vpop.f32.mrb[0].mxu0
    %v5800 = vpop.f32.mrb[0].mxu0
    %v5801 = vadd.f32 %v2814, %v5800
    %v5802 = vpop.f32.mrb[0].mxu0
    %5803 = vmatprep.mubr.bf16.mxu0 %v4688
    %5804 = vmatmul.mubr.bf16.gmra.mrb[0].mxu0 %v4687
    %v5805 = vpop.f32.mrb[0].mxu0
    %v5806 = vadd.f32 %v2819, %v5805
    %v5807 = vpop.f32.mrb[0].mxu0
    %v5808 = vpop.f32.mrb[0].mxu0
    %v5809 = vadd.f32 %v2824, %v5808
    %v5810 = vpop.f32.mrb[0].mxu0
    %5811 = vmatprep.mubr.bf16.mxu0 %v4695
    %5812 = vmatmul.mubr.bf16.gmra.mrb[0].mxu0 %v4694
    %v5813 = vpop.f32.mrb[0].mxu0
    %v5814 = vadd.f32 %v2829, %v5813
    %v5815 = vpop.f32.mrb[0].mxu0
    %v5816 = vpop.f32.mrb[0].mxu0
    %v5817 = vadd.f32 %v2834, %v5816
    %v5818 = vpop.f32.mrb[0].mxu0
    %5819 = vmatprep.mubr.bf16.mxu0 %v4702
    %5820 = vmatmul.mubr.bf16.gmra.mrb[0].mxu0 %v4701
    %v5821 = vpop.f32.mrb[0].mxu0
    %v5822 = vadd.f32 %v2839, %v5821
    %v5823 = vpop.f32.mrb[0].mxu0
    %v5824 = vpop.f32.mrb[0].mxu0
    %v5825 = vadd.f32 %v2844, %v5824
    %v5826 = vpop.f32.mrb[0].mxu0
    %5827 = vmatprep.mubr.bf16.mxu0 %v4709
    %5828 = vmatmul.mubr.bf16.gmra.mrb[0].mxu0 %v4708
    %v5829 = vpop.f32.mrb[0].mxu0
    %v5830 = vadd.f32 %v2849, %v5829
    %v5831 = vpop.f32.mrb[0].mxu0
    %v5832 = vpop.f32.mrb[0].mxu0
    %v5833 = vadd.f32 %v2854, %v5832
    %v5834 = vpop.f32.mrb[0].mxu0
    %5835 = vmatprep.mubr.bf16.mxu0 %v4716
    %5836 = vmatmul.mubr.bf16.gmra.mrb[0].mxu0 %v4715
    %v5837 = vpop.f32.mrb[0].mxu0
    %v5838 = vadd.f32 %v2859, %v5837
    %v5839 = vpop.f32.mrb[0].mxu0
    %v5840 = vpop.f32.mrb[0].mxu0
    %v5841 = vadd.f32 %v2864, %v5840
    %v5842 = vpop.f32.mrb[0].mxu0
    %5843 = vdwg.mxu0
    %5844 = vmatprep.subr.bf16.mxu0 0
    %5845 = vmatpush1.bf16.msra.mxu0 %v2064
    %5846 = vmatprep.subr.bf16.mxu0 0
    %5847 = vmatpush1.bf16.msra.mxu0 %v2065
    %5848 = vmatprep.subr.bf16.mxu0 0
    %5849 = vmatpush1.bf16.msra.mxu0 %v2066
    %5850 = vmatprep.subr.bf16.mxu0 0
    %5851 = vmatpush1.bf16.msra.mxu0 %v2067
    %5852 = vmatprep.subr.bf16.mxu0 0
    %5853 = vmatpush1.bf16.msra.mxu0 %v2068
    %5854 = vmatprep.subr.bf16.mxu0 0
    %5855 = vmatpush1.bf16.msra.mxu0 %v2069
    %5856 = vmatprep.subr.bf16.mxu0 0
    %5857 = vmatpush1.bf16.msra.mxu0 %v2070
    %5858 = vmatprep.subr.bf16.mxu0 0
    %5859 = vmatpush1.bf16.msra.mxu0 %v2071
    %5860 = vmatprep.subr.bf16.mxu0 0
    %5861 = vmatpush1.bf16.msra.mxu0 %v2072
    %5862 = vmatprep.subr.bf16.mxu0 0
    %5863 = vmatpush1.bf16.msra.mxu0 %v2073
    %5864 = vmatprep.subr.bf16.mxu0 0
    %5865 = vmatpush1.bf16.msra.mxu0 %v2074
    %5866 = vmatprep.subr.bf16.mxu0 0
    %5867 = vmatpush1.bf16.msra.mxu0 %v2075
    %5868 = vmatprep.subr.bf16.mxu0 0
    %5869 = vmatpush1.bf16.msra.mxu0 %v2076
    %5870 = vmatprep.subr.bf16.mxu0 0
    %5871 = vmatpush1.bf16.msra.mxu0 %v2077
    %5872 = vmatprep.subr.bf16.mxu0 0
    %5873 = vmatpush1.bf16.msra.mxu0 %v2078
    %5874 = vmatprep.subr.bf16.mxu0 0
    %5875 = vmatpush1.bf16.msra.mxu0 %v2079
    %5876 = vmatprep.mubr.bf16.mxu0 %v4277
    %5877 = vmatmul.mubr.bf16.gmra.mrb[0].mxu0 %v4276
    %v5878 = vpop.f32.mrb[0].mxu0
    %v5879 = vadd.f32 %v5334, %v5878
    %v5880 = vpop.f32.mrb[0].mxu0
    %v5881 = vpop.f32.mrb[0].mxu0
    %v5882 = vadd.f32 %v5337, %v5881
    %v5883 = vpop.f32.mrb[0].mxu0
    %5884 = vmatprep.mubr.bf16.mxu0 %v4284
    %5885 = vmatmul.mubr.bf16.gmra.mrb[0].mxu0 %v4283
    %v5886 = vpop.f32.mrb[0].mxu0
    %v5887 = vadd.f32 %v5342, %v5886
    %v5888 = vpop.f32.mrb[0].mxu0
    %v5889 = vpop.f32.mrb[0].mxu0
    %v5890 = vadd.f32 %v5345, %v5889
    %v5891 = vpop.f32.mrb[0].mxu0
    %5892 = vmatprep.mubr.bf16.mxu0 %v4291
    %5893 = vmatmul.mubr.bf16.gmra.mrb[0].mxu0 %v4290
    %v5894 = vpop.f32.mrb[0].mxu0
    %v5895 = vadd.f32 %v5350, %v5894
    %v5896 = vpop.f32.mrb[0].mxu0
    %v5897 = vpop.f32.mrb[0].mxu0
    %v5898 = vadd.f32 %v5353, %v5897
    %v5899 = vpop.f32.mrb[0].mxu0
    %5900 = vmatprep.mubr.bf16.mxu0 %v4298
    %5901 = vmatmul.mubr.bf16.gmra.mrb[0].mxu0 %v4297
    %v5902 = vpop.f32.mrb[0].mxu0
    %v5903 = vadd.f32 %v5358, %v5902
    %v5904 = vpop.f32.mrb[0].mxu0
    %v5905 = vpop.f32.mrb[0].mxu0
    %v5906 = vadd.f32 %v5361, %v5905
    %v5907 = vpop.f32.mrb[0].mxu0
    %5908 = vmatprep.mubr.bf16.mxu0 %v4305
    %5909 = vmatmul.mubr.bf16.gmra.mrb[0].mxu0 %v4304
    %v5910 = vpop.f32.mrb[0].mxu0
    %v5911 = vadd.f32 %v5366, %v5910
    %v5912 = vpop.f32.mrb[0].mxu0
    %v5913 = vpop.f32.mrb[0].mxu0
    %v5914 = vadd.f32 %v5369, %v5913
    %v5915 = vpop.f32.mrb[0].mxu0
    %5916 = vmatprep.mubr.bf16.mxu0 %v4312
    %5917 = vmatmul.mubr.bf16.gmra.mrb[0].mxu0 %v4311
    %v5918 = vpop.f32.mrb[0].mxu0
    %v5919 = vadd.f32 %v5374, %v5918
    %v5920 = vpop.f32.mrb[0].mxu0
    %v5921 = vpop.f32.mrb[0].mxu0
    %v5922 = vadd.f32 %v5377, %v5921
    %v5923 = vpop.f32.mrb[0].mxu0
    %5924 = vmatprep.mubr.bf16.mxu0 %v4319
    %5925 = vmatmul.mubr.bf16.gmra.mrb[0].mxu0 %v4318
    %v5926 = vpop.f32.mrb[0].mxu0
    %v5927 = vadd.f32 %v5382, %v5926
    %v5928 = vpop.f32.mrb[0].mxu0
    %v5929 = vpop.f32.mrb[0].mxu0
    %v5930 = vadd.f32 %v5385, %v5929
    %v5931 = vpop.f32.mrb[0].mxu0
    %5932 = vmatprep.mubr.bf16.mxu0 %v4326
    %5933 = vmatmul.mubr.bf16.gmra.mrb[0].mxu0 %v4325
    %v5934 = vpop.f32.mrb[0].mxu0
    %v5935 = vadd.f32 %v5390, %v5934
    %v5936 = vpop.f32.mrb[0].mxu0
    %v5937 = vpop.f32.mrb[0].mxu0
    %v5938 = vadd.f32 %v5393, %v5937
    %v5939 = vpop.f32.mrb[0].mxu0
    %5940 = vmatprep.mubr.bf16.mxu0 %v4333
    %5941 = vmatmul.mubr.bf16.gmra.mrb[0].mxu0 %v4332
    %v5942 = vpop.f32.mrb[0].mxu0
    %v5943 = vadd.f32 %v5398, %v5942
    %v5944 = vpop.f32.mrb[0].mxu0
    %v5945 = vpop.f32.mrb[0].mxu0
    %v5946 = vadd.f32 %v5401, %v5945
    %v5947 = vpop.f32.mrb[0].mxu0
    %5948 = vmatprep.mubr.bf16.mxu0 %v4340
    %5949 = vmatmul.mubr.bf16.gmra.mrb[0].mxu0 %v4339
    %v5950 = vpop.f32.mrb[0].mxu0
    %v5951 = vadd.f32 %v5406, %v5950
    %v5952 = vpop.f32.mrb[0].mxu0
    %v5953 = vpop.f32.mrb[0].mxu0
    %v5954 = vadd.f32 %v5409, %v5953
    %v5955 = vpop.f32.mrb[0].mxu0
    %5956 = vmatprep.mubr.bf16.mxu0 %v4347
    %5957 = vmatmul.mubr.bf16.gmra.mrb[0].mxu0 %v4346
    %v5958 = vpop.f32.mrb[0].mxu0
    %v5959 = vadd.f32 %v5414, %v5958
    %v5960 = vpop.f32.mrb[0].mxu0
    %v5961 = vpop.f32.mrb[0].mxu0
    %v5962 = vadd.f32 %v5417, %v5961
    %v5963 = vpop.f32.mrb[0].mxu0
    %5964 = vmatprep.mubr.bf16.mxu0 %v4354
    %5965 = vmatmul.mubr.bf16.gmra.mrb[0].mxu0 %v4353
    %v5966 = vpop.f32.mrb[0].mxu0
    %v5967 = vadd.f32 %v5422, %v5966
    %v5968 = vpop.f32.mrb[0].mxu0
    %v5969 = vpop.f32.mrb[0].mxu0
    %v5970 = vadd.f32 %v5425, %v5969
    %v5971 = vpop.f32.mrb[0].mxu0
    %5972 = vmatprep.mubr.bf16.mxu0 %v4361
    %5973 = vmatmul.mubr.bf16.gmra.mrb[0].mxu0 %v4360
    %v5974 = vpop.f32.mrb[0].mxu0
    %v5975 = vadd.f32 %v5430, %v5974
    %v5976 = vpop.f32.mrb[0].mxu0
    %v5977 = vpop.f32.mrb[0].mxu0
    %v5978 = vadd.f32 %v5433, %v5977
    %v5979 = vpop.f32.mrb[0].mxu0
    %5980 = vmatprep.mubr.bf16.mxu0 %v4368
    %5981 = vmatmul.mubr.bf16.gmra.mrb[0].mxu0 %v4367
    %v5982 = vpop.f32.mrb[0].mxu0
    %v5983 = vadd.f32 %v5438, %v5982
    %v5984 = vpop.f32.mrb[0].mxu0
    %v5985 = vpop.f32.mrb[0].mxu0
    %v5986 = vadd.f32 %v5441, %v5985
    %v5987 = vpop.f32.mrb[0].mxu0
    %5988 = vmatprep.mubr.bf16.mxu0 %v4375
    %5989 = vmatmul.mubr.bf16.gmra.mrb[0].mxu0 %v4374
    %v5990 = vpop.f32.mrb[0].mxu0
    %v5991 = vadd.f32 %v5446, %v5990
    %v5992 = vpop.f32.mrb[0].mxu0
    %v5993 = vpop.f32.mrb[0].mxu0
    %v5994 = vadd.f32 %v5449, %v5993
    %v5995 = vpop.f32.mrb[0].mxu0
    %5996 = vmatprep.mubr.bf16.mxu0 %v4382
    %5997 = vmatmul.mubr.bf16.gmra.mrb[0].mxu0 %v4381
    %v5998 = vpop.f32.mrb[0].mxu0
    %v5999 = vadd.f32 %v5454, %v5998
    %v6000 = vpop.f32.mrb[0].mxu0
    %v6001 = vpop.f32.mrb[0].mxu0
    %v6002 = vadd.f32 %v5457, %v6001
    %v6003 = vpop.f32.mrb[0].mxu0
    %6004 = vmatprep.mubr.bf16.mxu0 %v4389
    %6005 = vmatmul.mubr.bf16.gmra.mrb[0].mxu0 %v4388
    %v6006 = vpop.f32.mrb[0].mxu0
    %v6007 = vadd.f32 %v5462, %v6006
    %v6008 = vpop.f32.mrb[0].mxu0
    %v6009 = vpop.f32.mrb[0].mxu0
    %v6010 = vadd.f32 %v5465, %v6009
    %v6011 = vpop.f32.mrb[0].mxu0
    %6012 = vmatprep.mubr.bf16.mxu0 %v4396
    %6013 = vmatmul.mubr.bf16.gmra.mrb[0].mxu0 %v4395
    %v6014 = vpop.f32.mrb[0].mxu0
    %v6015 = vadd.f32 %v5470, %v6014
    %v6016 = vpop.f32.mrb[0].mxu0
    %v6017 = vpop.f32.mrb[0].mxu0
    %v6018 = vadd.f32 %v5473, %v6017
    %v6019 = vpop.f32.mrb[0].mxu0
    %6020 = vmatprep.mubr.bf16.mxu0 %v4403
    %6021 = vmatmul.mubr.bf16.gmra.mrb[0].mxu0 %v4402
    %v6022 = vpop.f32.mrb[0].mxu0
    %v6023 = vadd.f32 %v5478, %v6022
    %v6024 = vpop.f32.mrb[0].mxu0
    %v6025 = vpop.f32.mrb[0].mxu0
    %v6026 = vadd.f32 %v5481, %v6025
    %v6027 = vpop.f32.mrb[0].mxu0
    %6028 = vmatprep.mubr.bf16.mxu0 %v4410
    %6029 = vmatmul.mubr.bf16.gmra.mrb[0].mxu0 %v4409
    %v6030 = vpop.f32.mrb[0].mxu0
    %v6031 = vadd.f32 %v5486, %v6030
    %v6032 = vpop.f32.mrb[0].mxu0
    %v6033 = vpop.f32.mrb[0].mxu0
    %v6034 = vadd.f32 %v5489, %v6033
    %v6035 = vpop.f32.mrb[0].mxu0
    %6036 = vmatprep.mubr.bf16.mxu0 %v4417
    %6037 = vmatmul.mubr.bf16.gmra.mrb[0].mxu0 %v4416
    %v6038 = vpop.f32.mrb[0].mxu0
    %v6039 = vadd.f32 %v5494, %v6038
    %v6040 = vpop.f32.mrb[0].mxu0
    %v6041 = vpop.f32.mrb[0].mxu0
    %v6042 = vadd.f32 %v5497, %v6041
    %v6043 = vpop.f32.mrb[0].mxu0
    %6044 = vmatprep.mubr.bf16.mxu0 %v4424
    %6045 = vmatmul.mubr.bf16.gmra.mrb[0].mxu0 %v4423
    %v6046 = vpop.f32.mrb[0].mxu0
    %v6047 = vadd.f32 %v5502, %v6046
    %v6048 = vpop.f32.mrb[0].mxu0
    %v6049 = vpop.f32.mrb[0].mxu0
    %v6050 = vadd.f32 %v5505, %v6049
    %v6051 = vpop.f32.mrb[0].mxu0
    %6052 = vmatprep.mubr.bf16.mxu0 %v4431
    %6053 = vmatmul.mubr.bf16.gmra.mrb[0].mxu0 %v4430
    %v6054 = vpop.f32.mrb[0].mxu0
    %v6055 = vadd.f32 %v5510, %v6054
    %v6056 = vpop.f32.mrb[0].mxu0
    %v6057 = vpop.f32.mrb[0].mxu0
    %v6058 = vadd.f32 %v5513, %v6057
    %v6059 = vpop.f32.mrb[0].mxu0
    %6060 = vmatprep.mubr.bf16.mxu0 %v4438
    %6061 = vmatmul.mubr.bf16.gmra.mrb[0].mxu0 %v4437
    %v6062 = vpop.f32.mrb[0].mxu0
    %v6063 = vadd.f32 %v5518, %v6062
    %v6064 = vpop.f32.mrb[0].mxu0
    %v6065 = vpop.f32.mrb[0].mxu0
    %v6066 = vadd.f32 %v5521, %v6065
    %v6067 = vpop.f32.mrb[0].mxu0
    %6068 = vmatprep.mubr.bf16.mxu0 %v4445
    %6069 = vmatmul.mubr.bf16.gmra.mrb[0].mxu0 %v4444
    %v6070 = vpop.f32.mrb[0].mxu0
    %v6071 = vadd.f32 %v5526, %v6070
    %v6072 = vpop.f32.mrb[0].mxu0
    %v6073 = vpop.f32.mrb[0].mxu0
    %v6074 = vadd.f32 %v5529, %v6073
    %v6075 = vpop.f32.mrb[0].mxu0
    %6076 = vmatprep.mubr.bf16.mxu0 %v4452
    %6077 = vmatmul.mubr.bf16.gmra.mrb[0].mxu0 %v4451
    %v6078 = vpop.f32.mrb[0].mxu0
    %v6079 = vadd.f32 %v5534, %v6078
    %v6080 = vpop.f32.mrb[0].mxu0
    %v6081 = vpop.f32.mrb[0].mxu0
    %v6082 = vadd.f32 %v5537, %v6081
    %v6083 = vpop.f32.mrb[0].mxu0
    %6084 = vmatprep.mubr.bf16.mxu0 %v4459
    %6085 = vmatmul.mubr.bf16.gmra.mrb[0].mxu0 %v4458
    %v6086 = vpop.f32.mrb[0].mxu0
    %v6087 = vadd.f32 %v5542, %v6086
    %v6088 = vpop.f32.mrb[0].mxu0
    %v6089 = vpop.f32.mrb[0].mxu0
    %v6090 = vadd.f32 %v5545, %v6089
    %v6091 = vpop.f32.mrb[0].mxu0
    %6092 = vmatprep.mubr.bf16.mxu0 %v4466
    %6093 = vmatmul.mubr.bf16.gmra.mrb[0].mxu0 %v4465
    %v6094 = vpop.f32.mrb[0].mxu0
    %v6095 = vadd.f32 %v5550, %v6094
    %v6096 = vpop.f32.mrb[0].mxu0
    %v6097 = vpop.f32.mrb[0].mxu0
    %v6098 = vadd.f32 %v5553, %v6097
    %v6099 = vpop.f32.mrb[0].mxu0
    %6100 = vmatprep.mubr.bf16.mxu0 %v4473
    %6101 = vmatmul.mubr.bf16.gmra.mrb[0].mxu0 %v4472
    %v6102 = vpop.f32.mrb[0].mxu0
    %v6103 = vadd.f32 %v5558, %v6102
    %v6104 = vpop.f32.mrb[0].mxu0
    %v6105 = vpop.f32.mrb[0].mxu0
    %v6106 = vadd.f32 %v5561, %v6105
    %v6107 = vpop.f32.mrb[0].mxu0
    %6108 = vmatprep.mubr.bf16.mxu0 %v4480
    %6109 = vmatmul.mubr.bf16.gmra.mrb[0].mxu0 %v4479
    %v6110 = vpop.f32.mrb[0].mxu0
    %v6111 = vadd.f32 %v5566, %v6110
    %v6112 = vpop.f32.mrb[0].mxu0
    %v6113 = vpop.f32.mrb[0].mxu0
    %v6114 = vadd.f32 %v5569, %v6113
    %v6115 = vpop.f32.mrb[0].mxu0
    %6116 = vmatprep.mubr.bf16.mxu0 %v4487
    %6117 = vmatmul.mubr.bf16.gmra.mrb[0].mxu0 %v4486
    %v6118 = vpop.f32.mrb[0].mxu0
    %v6119 = vadd.f32 %v5574, %v6118
    %v6120 = vpop.f32.mrb[0].mxu0
    %v6121 = vpop.f32.mrb[0].mxu0
    %v6122 = vadd.f32 %v5577, %v6121
    %v6123 = vpop.f32.mrb[0].mxu0
    %6124 = vmatprep.mubr.bf16.mxu0 %v4494
    %6125 = vmatmul.mubr.bf16.gmra.mrb[0].mxu0 %v4493
    %v6126 = vpop.f32.mrb[0].mxu0
    %v6127 = vadd.f32 %v5582, %v6126
    %v6128 = vpop.f32.mrb[0].mxu0
    %v6129 = vpop.f32.mrb[0].mxu0
    %v6130 = vadd.f32 %v5585, %v6129
    %v6131 = vpop.f32.mrb[0].mxu0
    %6132 = vmatprep.mubr.bf16.mxu0 %v4501
    %6133 = vmatmul.mubr.bf16.gmra.mrb[0].mxu0 %v4500
    %v6134 = vpop.f32.mrb[0].mxu0
    %v6135 = vadd.f32 %v5590, %v6134
    %v6136 = vpop.f32.mrb[0].mxu0
    %v6137 = vpop.f32.mrb[0].mxu0
    %v6138 = vadd.f32 %v5593, %v6137
    %v6139 = vpop.f32.mrb[0].mxu0
    %6140 = vmatprep.mubr.bf16.mxu0 %v4508
    %6141 = vmatmul.mubr.bf16.gmra.mrb[0].mxu0 %v4507
    %v6142 = vpop.f32.mrb[0].mxu0
    %v6143 = vadd.f32 %v5598, %v6142
    %v6144 = vpop.f32.mrb[0].mxu0
    %v6145 = vpop.f32.mrb[0].mxu0
    %v6146 = vadd.f32 %v5601, %v6145
    %v6147 = vpop.f32.mrb[0].mxu0
    %6148 = vmatprep.mubr.bf16.mxu0 %v4515
    %6149 = vmatmul.mubr.bf16.gmra.mrb[0].mxu0 %v4514
    %v6150 = vpop.f32.mrb[0].mxu0
    %v6151 = vadd.f32 %v5606, %v6150
    %v6152 = vpop.f32.mrb[0].mxu0
    %v6153 = vpop.f32.mrb[0].mxu0
    %v6154 = vadd.f32 %v5609, %v6153
    %v6155 = vpop.f32.mrb[0].mxu0
    %6156 = vmatprep.mubr.bf16.mxu0 %v4522
    %6157 = vmatmul.mubr.bf16.gmra.mrb[0].mxu0 %v4521
    %v6158 = vpop.f32.mrb[0].mxu0
    %v6159 = vadd.f32 %v5614, %v6158
    %v6160 = vpop.f32.mrb[0].mxu0
    %v6161 = vpop.f32.mrb[0].mxu0
    %v6162 = vadd.f32 %v5617, %v6161
    %v6163 = vpop.f32.mrb[0].mxu0
    %6164 = vmatprep.mubr.bf16.mxu0 %v4529
    %6165 = vmatmul.mubr.bf16.gmra.mrb[0].mxu0 %v4528
    %v6166 = vpop.f32.mrb[0].mxu0
    %v6167 = vadd.f32 %v5622, %v6166
    %v6168 = vpop.f32.mrb[0].mxu0
    %v6169 = vpop.f32.mrb[0].mxu0
    %v6170 = vadd.f32 %v5625, %v6169
    %v6171 = vpop.f32.mrb[0].mxu0
    %6172 = vmatprep.mubr.bf16.mxu0 %v4536
    %6173 = vmatmul.mubr.bf16.gmra.mrb[0].mxu0 %v4535
    %v6174 = vpop.f32.mrb[0].mxu0
    %v6175 = vadd.f32 %v5630, %v6174
    %v6176 = vpop.f32.mrb[0].mxu0
    %v6177 = vpop.f32.mrb[0].mxu0
    %v6178 = vadd.f32 %v5633, %v6177
    %v6179 = vpop.f32.mrb[0].mxu0
    %6180 = vmatprep.mubr.bf16.mxu0 %v4543
    %6181 = vmatmul.mubr.bf16.gmra.mrb[0].mxu0 %v4542
    %v6182 = vpop.f32.mrb[0].mxu0
    %v6183 = vadd.f32 %v5638, %v6182
    %v6184 = vpop.f32.mrb[0].mxu0
    %v6185 = vpop.f32.mrb[0].mxu0
    %v6186 = vadd.f32 %v5641, %v6185
    %v6187 = vpop.f32.mrb[0].mxu0
    %6188 = vmatprep.mubr.bf16.mxu0 %v4550
    %6189 = vmatmul.mubr.bf16.gmra.mrb[0].mxu0 %v4549
    %v6190 = vpop.f32.mrb[0].mxu0
    %v6191 = vadd.f32 %v5646, %v6190
    %v6192 = vpop.f32.mrb[0].mxu0
    %v6193 = vpop.f32.mrb[0].mxu0
    %v6194 = vadd.f32 %v5649, %v6193
    %v6195 = vpop.f32.mrb[0].mxu0
    %6196 = vmatprep.mubr.bf16.mxu0 %v4557
    %6197 = vmatmul.mubr.bf16.gmra.mrb[0].mxu0 %v4556
    %v6198 = vpop.f32.mrb[0].mxu0
    %v6199 = vadd.f32 %v5654, %v6198
    %v6200 = vpop.f32.mrb[0].mxu0
    %v6201 = vpop.f32.mrb[0].mxu0
    %v6202 = vadd.f32 %v5657, %v6201
    %v6203 = vpop.f32.mrb[0].mxu0
    %6204 = vmatprep.mubr.bf16.mxu0 %v4564
    %6205 = vmatmul.mubr.bf16.gmra.mrb[0].mxu0 %v4563
    %v6206 = vpop.f32.mrb[0].mxu0
    %v6207 = vadd.f32 %v5662, %v6206
    %v6208 = vpop.f32.mrb[0].mxu0
    %v6209 = vpop.f32.mrb[0].mxu0
    %v6210 = vadd.f32 %v5665, %v6209
    %v6211 = vpop.f32.mrb[0].mxu0
    %6212 = vmatprep.mubr.bf16.mxu0 %v4571
    %6213 = vmatmul.mubr.bf16.gmra.mrb[0].mxu0 %v4570
    %v6214 = vpop.f32.mrb[0].mxu0
    %v6215 = vadd.f32 %v5670, %v6214
    %v6216 = vpop.f32.mrb[0].mxu0
    %v6217 = vpop.f32.mrb[0].mxu0
    %v6218 = vadd.f32 %v5673, %v6217
    %v6219 = vpop.f32.mrb[0].mxu0
    %6220 = vmatprep.mubr.bf16.mxu0 %v4578
    %6221 = vmatmul.mubr.bf16.gmra.mrb[0].mxu0 %v4577
    %v6222 = vpop.f32.mrb[0].mxu0
    %v6223 = vadd.f32 %v5678, %v6222
    %v6224 = vpop.f32.mrb[0].mxu0
    %v6225 = vpop.f32.mrb[0].mxu0
    %v6226 = vadd.f32 %v5681, %v6225
    %v6227 = vpop.f32.mrb[0].mxu0
    %6228 = vmatprep.mubr.bf16.mxu0 %v4585
    %6229 = vmatmul.mubr.bf16.gmra.mrb[0].mxu0 %v4584
    %v6230 = vpop.f32.mrb[0].mxu0
    %v6231 = vadd.f32 %v5686, %v6230
    %v6232 = vpop.f32.mrb[0].mxu0
    %v6233 = vpop.f32.mrb[0].mxu0
    %v6234 = vadd.f32 %v5689, %v6233
    %v6235 = vpop.f32.mrb[0].mxu0
    %6236 = vmatprep.mubr.bf16.mxu0 %v4592
    %6237 = vmatmul.mubr.bf16.gmra.mrb[0].mxu0 %v4591
    %v6238 = vpop.f32.mrb[0].mxu0
    %v6239 = vadd.f32 %v5694, %v6238
    %v6240 = vpop.f32.mrb[0].mxu0
    %v6241 = vpop.f32.mrb[0].mxu0
    %v6242 = vadd.f32 %v5697, %v6241
    %v6243 = vpop.f32.mrb[0].mxu0
    %6244 = vmatprep.mubr.bf16.mxu0 %v4599
    %6245 = vmatmul.mubr.bf16.gmra.mrb[0].mxu0 %v4598
    %v6246 = vpop.f32.mrb[0].mxu0
    %v6247 = vadd.f32 %v5702, %v6246
    %v6248 = vpop.f32.mrb[0].mxu0
    %v6249 = vpop.f32.mrb[0].mxu0
    %v6250 = vadd.f32 %v5705, %v6249
    %v6251 = vpop.f32.mrb[0].mxu0
    %6252 = vmatprep.mubr.bf16.mxu0 %v4606
    %6253 = vmatmul.mubr.bf16.gmra.mrb[0].mxu0 %v4605
    %v6254 = vpop.f32.mrb[0].mxu0
    %v6255 = vadd.f32 %v5710, %v6254
    %v6256 = vpop.f32.mrb[0].mxu0
    %v6257 = vpop.f32.mrb[0].mxu0
    %v6258 = vadd.f32 %v5713, %v6257
    %v6259 = vpop.f32.mrb[0].mxu0
    %6260 = vmatprep.mubr.bf16.mxu0 %v4613
    %6261 = vmatmul.mubr.bf16.gmra.mrb[0].mxu0 %v4612
    %v6262 = vpop.f32.mrb[0].mxu0
    %v6263 = vadd.f32 %v5718, %v6262
    %v6264 = vpop.f32.mrb[0].mxu0
    %v6265 = vpop.f32.mrb[0].mxu0
    %v6266 = vadd.f32 %v5721, %v6265
    %v6267 = vpop.f32.mrb[0].mxu0
    %6268 = vmatprep.mubr.bf16.mxu0 %v4620
    %6269 = vmatmul.mubr.bf16.gmra.mrb[0].mxu0 %v4619
    %v6270 = vpop.f32.mrb[0].mxu0
    %v6271 = vadd.f32 %v5726, %v6270
    %v6272 = vpop.f32.mrb[0].mxu0
    %v6273 = vpop.f32.mrb[0].mxu0
    %v6274 = vadd.f32 %v5729, %v6273
    %v6275 = vpop.f32.mrb[0].mxu0
    %6276 = vmatprep.mubr.bf16.mxu0 %v4627
    %6277 = vmatmul.mubr.bf16.gmra.mrb[0].mxu0 %v4626
    %v6278 = vpop.f32.mrb[0].mxu0
    %v6279 = vadd.f32 %v5734, %v6278
    %v6280 = vpop.f32.mrb[0].mxu0
    %v6281 = vpop.f32.mrb[0].mxu0
    %v6282 = vadd.f32 %v5737, %v6281
    %v6283 = vpop.f32.mrb[0].mxu0
    %6284 = vmatprep.mubr.bf16.mxu0 %v4634
    %6285 = vmatmul.mubr.bf16.gmra.mrb[0].mxu0 %v4633
    %v6286 = vpop.f32.mrb[0].mxu0
    %v6287 = vadd.f32 %v5742, %v6286
    %v6288 = vpop.f32.mrb[0].mxu0
    %v6289 = vpop.f32.mrb[0].mxu0
    %v6290 = vadd.f32 %v5745, %v6289
    %v6291 = vpop.f32.mrb[0].mxu0
    %6292 = vmatprep.mubr.bf16.mxu0 %v4641
    %6293 = vmatmul.mubr.bf16.gmra.mrb[0].mxu0 %v4640
    %v6294 = vpop.f32.mrb[0].mxu0
    %v6295 = vadd.f32 %v5750, %v6294
    %v6296 = vpop.f32.mrb[0].mxu0
    %v6297 = vpop.f32.mrb[0].mxu0
    %v6298 = vadd.f32 %v5753, %v6297
    %v6299 = vpop.f32.mrb[0].mxu0
    %6300 = vmatprep.mubr.bf16.mxu0 %v4648
    %6301 = vmatmul.mubr.bf16.gmra.mrb[0].mxu0 %v4647
    %v6302 = vpop.f32.mrb[0].mxu0
    %v6303 = vadd.f32 %v5758, %v6302
    %v6304 = vpop.f32.mrb[0].mxu0
    %v6305 = vpop.f32.mrb[0].mxu0
    %v6306 = vadd.f32 %v5761, %v6305
    %v6307 = vpop.f32.mrb[0].mxu0
    %6308 = vmatprep.mubr.bf16.mxu0 %v4655
    %6309 = vmatmul.mubr.bf16.gmra.mrb[0].mxu0 %v4654
    %v6310 = vpop.f32.mrb[0].mxu0
    %v6311 = vadd.f32 %v5766, %v6310
    %v6312 = vpop.f32.mrb[0].mxu0
    %v6313 = vpop.f32.mrb[0].mxu0
    %v6314 = vadd.f32 %v5769, %v6313
    %v6315 = vpop.f32.mrb[0].mxu0
    %6316 = vmatprep.mubr.bf16.mxu0 %v4662
    %6317 = vmatmul.mubr.bf16.gmra.mrb[0].mxu0 %v4661
    %v6318 = vpop.f32.mrb[0].mxu0
    %v6319 = vadd.f32 %v5774, %v6318
    %v6320 = vpop.f32.mrb[0].mxu0
    %v6321 = vpop.f32.mrb[0].mxu0
    %v6322 = vadd.f32 %v5777, %v6321
    %v6323 = vpop.f32.mrb[0].mxu0
    %6324 = vmatprep.mubr.bf16.mxu0 %v4669
    %6325 = vmatmul.mubr.bf16.gmra.mrb[0].mxu0 %v4668
    %v6326 = vpop.f32.mrb[0].mxu0
    %v6327 = vadd.f32 %v5782, %v6326
    %v6328 = vpop.f32.mrb[0].mxu0
    %v6329 = vpop.f32.mrb[0].mxu0
    %v6330 = vadd.f32 %v5785, %v6329
    %v6331 = vpop.f32.mrb[0].mxu0
    %6332 = vmatprep.mubr.bf16.mxu0 %v4676
    %6333 = vmatmul.mubr.bf16.gmra.mrb[0].mxu0 %v4675
    %v6334 = vpop.f32.mrb[0].mxu0
    %v6335 = vadd.f32 %v5790, %v6334
    %v6336 = vpop.f32.mrb[0].mxu0
    %v6337 = vpop.f32.mrb[0].mxu0
    %v6338 = vadd.f32 %v5793, %v6337
    %v6339 = vpop.f32.mrb[0].mxu0
    %6340 = vmatprep.mubr.bf16.mxu0 %v4683
    %6341 = vmatmul.mubr.bf16.gmra.mrb[0].mxu0 %v4682
    %v6342 = vpop.f32.mrb[0].mxu0
    %v6343 = vadd.f32 %v5798, %v6342
    %v6344 = vpop.f32.mrb[0].mxu0
    %v6345 = vpop.f32.mrb[0].mxu0
    %v6346 = vadd.f32 %v5801, %v6345
    %v6347 = vpop.f32.mrb[0].mxu0
    %6348 = vmatprep.mubr.bf16.mxu0 %v4690
    %6349 = vmatmul.mubr.bf16.gmra.mrb[0].mxu0 %v4689
    %v6350 = vpop.f32.mrb[0].mxu0
    %v6351 = vadd.f32 %v5806, %v6350
    %v6352 = vpop.f32.mrb[0].mxu0
    %v6353 = vpop.f32.mrb[0].mxu0
    %v6354 = vadd.f32 %v5809, %v6353
    %v6355 = vpop.f32.mrb[0].mxu0
    %6356 = vmatprep.mubr.bf16.mxu0 %v4697
    %6357 = vmatmul.mubr.bf16.gmra.mrb[0].mxu0 %v4696
    %v6358 = vpop.f32.mrb[0].mxu0
    %v6359 = vadd.f32 %v5814, %v6358
    %v6360 = vpop.f32.mrb[0].mxu0
    %v6361 = vpop.f32.mrb[0].mxu0
    %v6362 = vadd.f32 %v5817, %v6361
    %v6363 = vpop.f32.mrb[0].mxu0
    %6364 = vmatprep.mubr.bf16.mxu0 %v4704
    %6365 = vmatmul.mubr.bf16.gmra.mrb[0].mxu0 %v4703
    %v6366 = vpop.f32.mrb[0].mxu0
    %v6367 = vadd.f32 %v5822, %v6366
    %v6368 = vpop.f32.mrb[0].mxu0
    %v6369 = vpop.f32.mrb[0].mxu0
    %v6370 = vadd.f32 %v5825, %v6369
    %v6371 = vpop.f32.mrb[0].mxu0
    %6372 = vmatprep.mubr.bf16.mxu0 %v4711
    %6373 = vmatmul.mubr.bf16.gmra.mrb[0].mxu0 %v4710
    %v6374 = vpop.f32.mrb[0].mxu0
    %v6375 = vadd.f32 %v5830, %v6374
    %v6376 = vpop.f32.mrb[0].mxu0
    %v6377 = vpop.f32.mrb[0].mxu0
    %v6378 = vadd.f32 %v5833, %v6377
    %v6379 = vpop.f32.mrb[0].mxu0
    %6380 = vmatprep.mubr.bf16.mxu0 %v4718
    %6381 = vmatmul.mubr.bf16.gmra.mrb[0].mxu0 %v4717
    %v6382 = vpop.f32.mrb[0].mxu0
    %v6383 = vadd.f32 %v5838, %v6382
    %v6384 = vpop.f32.mrb[0].mxu0
    %v6385 = vpop.f32.mrb[0].mxu0
    %v6386 = vadd.f32 %v5841, %v6385
    %v6387 = vpop.f32.mrb[0].mxu0
    %6388 = vdwg.mxu0
    %6389 = vmatprep.subr.bf16.mxu0 0
    %6390 = vmatpush1.bf16.msra.mxu0 %v2080
    %6391 = vmatprep.subr.bf16.mxu0 0
    %6392 = vmatpush1.bf16.msra.mxu0 %v2081
    %6393 = vmatprep.subr.bf16.mxu0 0
    %6394 = vmatpush1.bf16.msra.mxu0 %v2082
    %6395 = vmatprep.subr.bf16.mxu0 0
    %6396 = vmatpush1.bf16.msra.mxu0 %v2083
    %6397 = vmatprep.subr.bf16.mxu0 0
    %6398 = vmatpush1.bf16.msra.mxu0 %v2084
    %6399 = vmatprep.subr.bf16.mxu0 0
    %6400 = vmatpush1.bf16.msra.mxu0 %v2085
    %6401 = vmatprep.subr.bf16.mxu0 0
    %6402 = vmatpush1.bf16.msra.mxu0 %v2086
    %6403 = vmatprep.subr.bf16.mxu0 0
    %6404 = vmatpush1.bf16.msra.mxu0 %v2087
    %6405 = vmatprep.subr.bf16.mxu0 0
    %6406 = vmatpush1.bf16.msra.mxu0 %v2088
    %6407 = vmatprep.subr.bf16.mxu0 0
    %6408 = vmatpush1.bf16.msra.mxu0 %v2089
    %6409 = vmatprep.subr.bf16.mxu0 0
    %6410 = vmatpush1.bf16.msra.mxu0 %v2090
    %6411 = vmatprep.subr.bf16.mxu0 0
    %6412 = vmatpush1.bf16.msra.mxu0 %v2091
    %6413 = vmatprep.subr.bf16.mxu0 0
    %6414 = vmatpush1.bf16.msra.mxu0 %v2092
    %6415 = vmatprep.subr.bf16.mxu0 0
    %6416 = vmatpush1.bf16.msra.mxu0 %v2093
    %6417 = vmatprep.subr.bf16.mxu0 0
    %6418 = vmatpush1.bf16.msra.mxu0 %v2094
    %6419 = vmatprep.subr.bf16.mxu0 0
    %6420 = vmatpush1.bf16.msra.mxu0 %v2095
    %6421 = vmatprep.mubr.bf16.mxu0 %v4279
    %6422 = vmatmul.mubr.bf16.gmra.mrb[0].mxu0 %v4278
    %v6423 = vpop.f32.mrb[0].mxu0
    %v6424 = vadd.f32 %v5879, %v6423
    %v6425 = vpop.f32.mrb[0].mxu0
    %v6426 = vpop.f32.mrb[0].mxu0
    %v6427 = vadd.f32 %v5882, %v6426
    %v6428 = vpop.f32.mrb[0].mxu0
    %6429 = vmatprep.mubr.bf16.mxu0 %v4286
    %6430 = vmatmul.mubr.bf16.gmra.mrb[0].mxu0 %v4285
    %v6431 = vpop.f32.mrb[0].mxu0
    %v6432 = vadd.f32 %v5887, %v6431
    %v6433 = vpop.f32.mrb[0].mxu0
    %v6434 = vpop.f32.mrb[0].mxu0
    %v6435 = vadd.f32 %v5890, %v6434
    %v6436 = vpop.f32.mrb[0].mxu0
    %6437 = vmatprep.mubr.bf16.mxu0 %v4293
    %6438 = vmatmul.mubr.bf16.gmra.mrb[0].mxu0 %v4292
    %v6439 = vpop.f32.mrb[0].mxu0
    %v6440 = vadd.f32 %v5895, %v6439
    %v6441 = vpop.f32.mrb[0].mxu0
    %v6442 = vpop.f32.mrb[0].mxu0
    %v6443 = vadd.f32 %v5898, %v6442
    %v6444 = vpop.f32.mrb[0].mxu0
    %6445 = vmatprep.mubr.bf16.mxu0 %v4300
    %6446 = vmatmul.mubr.bf16.gmra.mrb[0].mxu0 %v4299
    %v6447 = vpop.f32.mrb[0].mxu0
    %v6448 = vadd.f32 %v5903, %v6447
    %v6449 = vpop.f32.mrb[0].mxu0
    %v6450 = vpop.f32.mrb[0].mxu0
    %v6451 = vadd.f32 %v5906, %v6450
    %v6452 = vpop.f32.mrb[0].mxu0
    %6453 = vmatprep.mubr.bf16.mxu0 %v4307
    %6454 = vmatmul.mubr.bf16.gmra.mrb[0].mxu0 %v4306
    %v6455 = vpop.f32.mrb[0].mxu0
    %v6456 = vadd.f32 %v5911, %v6455
    %v6457 = vpop.f32.mrb[0].mxu0
    %v6458 = vpop.f32.mrb[0].mxu0
    %v6459 = vadd.f32 %v5914, %v6458
    %v6460 = vpop.f32.mrb[0].mxu0
    %6461 = vmatprep.mubr.bf16.mxu0 %v4314
    %6462 = vmatmul.mubr.bf16.gmra.mrb[0].mxu0 %v4313
    %v6463 = vpop.f32.mrb[0].mxu0
    %v6464 = vadd.f32 %v5919, %v6463
    %v6465 = vpop.f32.mrb[0].mxu0
    %v6466 = vpop.f32.mrb[0].mxu0
    %v6467 = vadd.f32 %v5922, %v6466
    %v6468 = vpop.f32.mrb[0].mxu0
    %6469 = vmatprep.mubr.bf16.mxu0 %v4321
    %6470 = vmatmul.mubr.bf16.gmra.mrb[0].mxu0 %v4320
    %v6471 = vpop.f32.mrb[0].mxu0
    %v6472 = vadd.f32 %v5927, %v6471
    %v6473 = vpop.f32.mrb[0].mxu0
    %v6474 = vpop.f32.mrb[0].mxu0
    %v6475 = vadd.f32 %v5930, %v6474
    %v6476 = vpop.f32.mrb[0].mxu0
    %6477 = vmatprep.mubr.bf16.mxu0 %v4328
    %6478 = vmatmul.mubr.bf16.gmra.mrb[0].mxu0 %v4327
    %v6479 = vpop.f32.mrb[0].mxu0
    %v6480 = vadd.f32 %v5935, %v6479
    %v6481 = vpop.f32.mrb[0].mxu0
    %v6482 = vpop.f32.mrb[0].mxu0
    %v6483 = vadd.f32 %v5938, %v6482
    %v6484 = vpop.f32.mrb[0].mxu0
    %6485 = vmatprep.mubr.bf16.mxu0 %v4335
    %6486 = vmatmul.mubr.bf16.gmra.mrb[0].mxu0 %v4334
    %v6487 = vpop.f32.mrb[0].mxu0
    %v6488 = vadd.f32 %v5943, %v6487
    %v6489 = vpop.f32.mrb[0].mxu0
    %v6490 = vpop.f32.mrb[0].mxu0
    %v6491 = vadd.f32 %v5946, %v6490
    %v6492 = vpop.f32.mrb[0].mxu0
    %6493 = vmatprep.mubr.bf16.mxu0 %v4342
    %6494 = vmatmul.mubr.bf16.gmra.mrb[0].mxu0 %v4341
    %v6495 = vpop.f32.mrb[0].mxu0
    %v6496 = vadd.f32 %v5951, %v6495
    %v6497 = vpop.f32.mrb[0].mxu0
    %v6498 = vpop.f32.mrb[0].mxu0
    %v6499 = vadd.f32 %v5954, %v6498
    %v6500 = vpop.f32.mrb[0].mxu0
    %6501 = vmatprep.mubr.bf16.mxu0 %v4349
    %6502 = vmatmul.mubr.bf16.gmra.mrb[0].mxu0 %v4348
    %v6503 = vpop.f32.mrb[0].mxu0
    %v6504 = vadd.f32 %v5959, %v6503
    %v6505 = vpop.f32.mrb[0].mxu0
    %v6506 = vpop.f32.mrb[0].mxu0
    %v6507 = vadd.f32 %v5962, %v6506
    %v6508 = vpop.f32.mrb[0].mxu0
    %6509 = vmatprep.mubr.bf16.mxu0 %v4356
    %6510 = vmatmul.mubr.bf16.gmra.mrb[0].mxu0 %v4355
    %v6511 = vpop.f32.mrb[0].mxu0
    %v6512 = vadd.f32 %v5967, %v6511
    %v6513 = vpop.f32.mrb[0].mxu0
    %v6514 = vpop.f32.mrb[0].mxu0
    %v6515 = vadd.f32 %v5970, %v6514
    %v6516 = vpop.f32.mrb[0].mxu0
    %6517 = vmatprep.mubr.bf16.mxu0 %v4363
    %6518 = vmatmul.mubr.bf16.gmra.mrb[0].mxu0 %v4362
    %v6519 = vpop.f32.mrb[0].mxu0
    %v6520 = vadd.f32 %v5975, %v6519
    %v6521 = vpop.f32.mrb[0].mxu0
    %v6522 = vpop.f32.mrb[0].mxu0
    %v6523 = vadd.f32 %v5978, %v6522
    %v6524 = vpop.f32.mrb[0].mxu0
    %6525 = vmatprep.mubr.bf16.mxu0 %v4370
    %6526 = vmatmul.mubr.bf16.gmra.mrb[0].mxu0 %v4369
    %v6527 = vpop.f32.mrb[0].mxu0
    %v6528 = vadd.f32 %v5983, %v6527
    %v6529 = vpop.f32.mrb[0].mxu0
    %v6530 = vpop.f32.mrb[0].mxu0
    %v6531 = vadd.f32 %v5986, %v6530
    %v6532 = vpop.f32.mrb[0].mxu0
    %6533 = vmatprep.mubr.bf16.mxu0 %v4377
    %6534 = vmatmul.mubr.bf16.gmra.mrb[0].mxu0 %v4376
    %v6535 = vpop.f32.mrb[0].mxu0
    %v6536 = vadd.f32 %v5991, %v6535
    %v6537 = vpop.f32.mrb[0].mxu0
    %v6538 = vpop.f32.mrb[0].mxu0
    %v6539 = vadd.f32 %v5994, %v6538
    %v6540 = vpop.f32.mrb[0].mxu0
    %6541 = vmatprep.mubr.bf16.mxu0 %v4384
    %6542 = vmatmul.mubr.bf16.gmra.mrb[0].mxu0 %v4383
    %v6543 = vpop.f32.mrb[0].mxu0
    %v6544 = vadd.f32 %v5999, %v6543
    %v6545 = vpop.f32.mrb[0].mxu0
    %v6546 = vpop.f32.mrb[0].mxu0
    %v6547 = vadd.f32 %v6002, %v6546
    %v6548 = vpop.f32.mrb[0].mxu0
    %6549 = vmatprep.mubr.bf16.mxu0 %v4391
    %6550 = vmatmul.mubr.bf16.gmra.mrb[0].mxu0 %v4390
    %v6551 = vpop.f32.mrb[0].mxu0
    %v6552 = vadd.f32 %v6007, %v6551
    %v6553 = vpop.f32.mrb[0].mxu0
    %v6554 = vpop.f32.mrb[0].mxu0
    %v6555 = vadd.f32 %v6010, %v6554
    %v6556 = vpop.f32.mrb[0].mxu0
    %6557 = vmatprep.mubr.bf16.mxu0 %v4398
    %6558 = vmatmul.mubr.bf16.gmra.mrb[0].mxu0 %v4397
    %v6559 = vpop.f32.mrb[0].mxu0
    %v6560 = vadd.f32 %v6015, %v6559
    %v6561 = vpop.f32.mrb[0].mxu0
    %v6562 = vpop.f32.mrb[0].mxu0
    %v6563 = vadd.f32 %v6018, %v6562
    %v6564 = vpop.f32.mrb[0].mxu0
    %6565 = vmatprep.mubr.bf16.mxu0 %v4405
    %6566 = vmatmul.mubr.bf16.gmra.mrb[0].mxu0 %v4404
    %v6567 = vpop.f32.mrb[0].mxu0
    %v6568 = vadd.f32 %v6023, %v6567
    %v6569 = vpop.f32.mrb[0].mxu0
    %v6570 = vpop.f32.mrb[0].mxu0
    %v6571 = vadd.f32 %v6026, %v6570
    %v6572 = vpop.f32.mrb[0].mxu0
    %6573 = vmatprep.mubr.bf16.mxu0 %v4412
    %6574 = vmatmul.mubr.bf16.gmra.mrb[0].mxu0 %v4411
    %v6575 = vpop.f32.mrb[0].mxu0
    %v6576 = vadd.f32 %v6031, %v6575
    %v6577 = vpop.f32.mrb[0].mxu0
    %v6578 = vpop.f32.mrb[0].mxu0
    %v6579 = vadd.f32 %v6034, %v6578
    %v6580 = vpop.f32.mrb[0].mxu0
    %6581 = vmatprep.mubr.bf16.mxu0 %v4419
    %6582 = vmatmul.mubr.bf16.gmra.mrb[0].mxu0 %v4418
    %v6583 = vpop.f32.mrb[0].mxu0
    %v6584 = vadd.f32 %v6039, %v6583
    %v6585 = vpop.f32.mrb[0].mxu0
    %v6586 = vpop.f32.mrb[0].mxu0
    %v6587 = vadd.f32 %v6042, %v6586
    %v6588 = vpop.f32.mrb[0].mxu0
    %6589 = vmatprep.mubr.bf16.mxu0 %v4426
    %6590 = vmatmul.mubr.bf16.gmra.mrb[0].mxu0 %v4425
    %v6591 = vpop.f32.mrb[0].mxu0
    %v6592 = vadd.f32 %v6047, %v6591
    %v6593 = vpop.f32.mrb[0].mxu0
    %v6594 = vpop.f32.mrb[0].mxu0
    %v6595 = vadd.f32 %v6050, %v6594
    %v6596 = vpop.f32.mrb[0].mxu0
    %6597 = vmatprep.mubr.bf16.mxu0 %v4433
    %6598 = vmatmul.mubr.bf16.gmra.mrb[0].mxu0 %v4432
    %v6599 = vpop.f32.mrb[0].mxu0
    %v6600 = vadd.f32 %v6055, %v6599
    %v6601 = vpop.f32.mrb[0].mxu0
    %v6602 = vpop.f32.mrb[0].mxu0
    %v6603 = vadd.f32 %v6058, %v6602
    %v6604 = vpop.f32.mrb[0].mxu0
    %6605 = vmatprep.mubr.bf16.mxu0 %v4440
    %6606 = vmatmul.mubr.bf16.gmra.mrb[0].mxu0 %v4439
    %v6607 = vpop.f32.mrb[0].mxu0
    %v6608 = vadd.f32 %v6063, %v6607
    %v6609 = vpop.f32.mrb[0].mxu0
    %v6610 = vpop.f32.mrb[0].mxu0
    %v6611 = vadd.f32 %v6066, %v6610
    %v6612 = vpop.f32.mrb[0].mxu0
    %6613 = vmatprep.mubr.bf16.mxu0 %v4447
    %6614 = vmatmul.mubr.bf16.gmra.mrb[0].mxu0 %v4446
    %v6615 = vpop.f32.mrb[0].mxu0
    %v6616 = vadd.f32 %v6071, %v6615
    %v6617 = vpop.f32.mrb[0].mxu0
    %v6618 = vpop.f32.mrb[0].mxu0
    %v6619 = vadd.f32 %v6074, %v6618
    %v6620 = vpop.f32.mrb[0].mxu0
    %6621 = vmatprep.mubr.bf16.mxu0 %v4454
    %6622 = vmatmul.mubr.bf16.gmra.mrb[0].mxu0 %v4453
    %v6623 = vpop.f32.mrb[0].mxu0
    %v6624 = vadd.f32 %v6079, %v6623
    %v6625 = vpop.f32.mrb[0].mxu0
    %v6626 = vpop.f32.mrb[0].mxu0
    %v6627 = vadd.f32 %v6082, %v6626
    %v6628 = vpop.f32.mrb[0].mxu0
    %6629 = vmatprep.mubr.bf16.mxu0 %v4461
    %6630 = vmatmul.mubr.bf16.gmra.mrb[0].mxu0 %v4460
    %v6631 = vpop.f32.mrb[0].mxu0
    %v6632 = vadd.f32 %v6087, %v6631
    %v6633 = vpop.f32.mrb[0].mxu0
    %v6634 = vpop.f32.mrb[0].mxu0
    %v6635 = vadd.f32 %v6090, %v6634
    %v6636 = vpop.f32.mrb[0].mxu0
    %6637 = vmatprep.mubr.bf16.mxu0 %v4468
    %6638 = vmatmul.mubr.bf16.gmra.mrb[0].mxu0 %v4467
    %v6639 = vpop.f32.mrb[0].mxu0
    %v6640 = vadd.f32 %v6095, %v6639
    %v6641 = vpop.f32.mrb[0].mxu0
    %v6642 = vpop.f32.mrb[0].mxu0
    %v6643 = vadd.f32 %v6098, %v6642
    %v6644 = vpop.f32.mrb[0].mxu0
    %6645 = vmatprep.mubr.bf16.mxu0 %v4475
    %6646 = vmatmul.mubr.bf16.gmra.mrb[0].mxu0 %v4474
    %v6647 = vpop.f32.mrb[0].mxu0
    %v6648 = vadd.f32 %v6103, %v6647
    %v6649 = vpop.f32.mrb[0].mxu0
    %v6650 = vpop.f32.mrb[0].mxu0
    %v6651 = vadd.f32 %v6106, %v6650
    %v6652 = vpop.f32.mrb[0].mxu0
    %6653 = vmatprep.mubr.bf16.mxu0 %v4482
    %6654 = vmatmul.mubr.bf16.gmra.mrb[0].mxu0 %v4481
    %v6655 = vpop.f32.mrb[0].mxu0
    %v6656 = vadd.f32 %v6111, %v6655
    %v6657 = vpop.f32.mrb[0].mxu0
    %v6658 = vpop.f32.mrb[0].mxu0
    %v6659 = vadd.f32 %v6114, %v6658
    %v6660 = vpop.f32.mrb[0].mxu0
    %6661 = vmatprep.mubr.bf16.mxu0 %v4489
    %6662 = vmatmul.mubr.bf16.gmra.mrb[0].mxu0 %v4488
    %v6663 = vpop.f32.mrb[0].mxu0
    %v6664 = vadd.f32 %v6119, %v6663
    %v6665 = vpop.f32.mrb[0].mxu0
    %v6666 = vpop.f32.mrb[0].mxu0
    %v6667 = vadd.f32 %v6122, %v6666
    %v6668 = vpop.f32.mrb[0].mxu0
    %6669 = vmatprep.mubr.bf16.mxu0 %v4496
    %6670 = vmatmul.mubr.bf16.gmra.mrb[0].mxu0 %v4495
    %v6671 = vpop.f32.mrb[0].mxu0
    %v6672 = vadd.f32 %v6127, %v6671
    %v6673 = vpop.f32.mrb[0].mxu0
    %v6674 = vpop.f32.mrb[0].mxu0
    %v6675 = vadd.f32 %v6130, %v6674
    %v6676 = vpop.f32.mrb[0].mxu0
    %6677 = vmatprep.mubr.bf16.mxu0 %v4503
    %6678 = vmatmul.mubr.bf16.gmra.mrb[0].mxu0 %v4502
    %v6679 = vpop.f32.mrb[0].mxu0
    %v6680 = vadd.f32 %v6135, %v6679
    %v6681 = vpop.f32.mrb[0].mxu0
    %v6682 = vpop.f32.mrb[0].mxu0
    %v6683 = vadd.f32 %v6138, %v6682
    %v6684 = vpop.f32.mrb[0].mxu0
    %6685 = vmatprep.mubr.bf16.mxu0 %v4510
    %6686 = vmatmul.mubr.bf16.gmra.mrb[0].mxu0 %v4509
    %v6687 = vpop.f32.mrb[0].mxu0
    %v6688 = vadd.f32 %v6143, %v6687
    %v6689 = vpop.f32.mrb[0].mxu0
    %v6690 = vpop.f32.mrb[0].mxu0
    %v6691 = vadd.f32 %v6146, %v6690
    %v6692 = vpop.f32.mrb[0].mxu0
    %6693 = vmatprep.mubr.bf16.mxu0 %v4517
    %6694 = vmatmul.mubr.bf16.gmra.mrb[0].mxu0 %v4516
    %v6695 = vpop.f32.mrb[0].mxu0
    %v6696 = vadd.f32 %v6151, %v6695
    %v6697 = vpop.f32.mrb[0].mxu0
    %v6698 = vpop.f32.mrb[0].mxu0
    %v6699 = vadd.f32 %v6154, %v6698
    %v6700 = vpop.f32.mrb[0].mxu0
    %6701 = vmatprep.mubr.bf16.mxu0 %v4524
    %6702 = vmatmul.mubr.bf16.gmra.mrb[0].mxu0 %v4523
    %v6703 = vpop.f32.mrb[0].mxu0
    %v6704 = vadd.f32 %v6159, %v6703
    %v6705 = vpop.f32.mrb[0].mxu0
    %v6706 = vpop.f32.mrb[0].mxu0
    %v6707 = vadd.f32 %v6162, %v6706
    %v6708 = vpop.f32.mrb[0].mxu0
    %6709 = vmatprep.mubr.bf16.mxu0 %v4531
    %6710 = vmatmul.mubr.bf16.gmra.mrb[0].mxu0 %v4530
    %v6711 = vpop.f32.mrb[0].mxu0
    %v6712 = vadd.f32 %v6167, %v6711
    %v6713 = vpop.f32.mrb[0].mxu0
    %v6714 = vpop.f32.mrb[0].mxu0
    %v6715 = vadd.f32 %v6170, %v6714
    %v6716 = vpop.f32.mrb[0].mxu0
    %6717 = vmatprep.mubr.bf16.mxu0 %v4538
    %6718 = vmatmul.mubr.bf16.gmra.mrb[0].mxu0 %v4537
    %v6719 = vpop.f32.mrb[0].mxu0
    %v6720 = vadd.f32 %v6175, %v6719
    %v6721 = vpop.f32.mrb[0].mxu0
    %v6722 = vpop.f32.mrb[0].mxu0
    %v6723 = vadd.f32 %v6178, %v6722
    %v6724 = vpop.f32.mrb[0].mxu0
    %6725 = vmatprep.mubr.bf16.mxu0 %v4545
    %6726 = vmatmul.mubr.bf16.gmra.mrb[0].mxu0 %v4544
    %v6727 = vpop.f32.mrb[0].mxu0
    %v6728 = vadd.f32 %v6183, %v6727
    %v6729 = vpop.f32.mrb[0].mxu0
    %v6730 = vpop.f32.mrb[0].mxu0
    %v6731 = vadd.f32 %v6186, %v6730
    %v6732 = vpop.f32.mrb[0].mxu0
    %6733 = vmatprep.mubr.bf16.mxu0 %v4552
    %6734 = vmatmul.mubr.bf16.gmra.mrb[0].mxu0 %v4551
    %v6735 = vpop.f32.mrb[0].mxu0
    %v6736 = vadd.f32 %v6191, %v6735
    %v6737 = vpop.f32.mrb[0].mxu0
    %v6738 = vpop.f32.mrb[0].mxu0
    %v6739 = vadd.f32 %v6194, %v6738
    %v6740 = vpop.f32.mrb[0].mxu0
    %6741 = vmatprep.mubr.bf16.mxu0 %v4559
    %6742 = vmatmul.mubr.bf16.gmra.mrb[0].mxu0 %v4558
    %v6743 = vpop.f32.mrb[0].mxu0
    %v6744 = vadd.f32 %v6199, %v6743
    %v6745 = vpop.f32.mrb[0].mxu0
    %v6746 = vpop.f32.mrb[0].mxu0
    %v6747 = vadd.f32 %v6202, %v6746
    %v6748 = vpop.f32.mrb[0].mxu0
    %6749 = vmatprep.mubr.bf16.mxu0 %v4566
    %6750 = vmatmul.mubr.bf16.gmra.mrb[0].mxu0 %v4565
    %v6751 = vpop.f32.mrb[0].mxu0
    %v6752 = vadd.f32 %v6207, %v6751
    %v6753 = vpop.f32.mrb[0].mxu0
    %v6754 = vpop.f32.mrb[0].mxu0
    %v6755 = vadd.f32 %v6210, %v6754
    %v6756 = vpop.f32.mrb[0].mxu0
    %6757 = vmatprep.mubr.bf16.mxu0 %v4573
    %6758 = vmatmul.mubr.bf16.gmra.mrb[0].mxu0 %v4572
    %v6759 = vpop.f32.mrb[0].mxu0
    %v6760 = vadd.f32 %v6215, %v6759
    %v6761 = vpop.f32.mrb[0].mxu0
    %v6762 = vpop.f32.mrb[0].mxu0
    %v6763 = vadd.f32 %v6218, %v6762
    %v6764 = vpop.f32.mrb[0].mxu0
    %6765 = vmatprep.mubr.bf16.mxu0 %v4580
    %6766 = vmatmul.mubr.bf16.gmra.mrb[0].mxu0 %v4579
    %v6767 = vpop.f32.mrb[0].mxu0
    %v6768 = vadd.f32 %v6223, %v6767
    %v6769 = vpop.f32.mrb[0].mxu0
    %v6770 = vpop.f32.mrb[0].mxu0
    %v6771 = vadd.f32 %v6226, %v6770
    %v6772 = vpop.f32.mrb[0].mxu0
    %6773 = vmatprep.mubr.bf16.mxu0 %v4587
    %6774 = vmatmul.mubr.bf16.gmra.mrb[0].mxu0 %v4586
    %v6775 = vpop.f32.mrb[0].mxu0
    %v6776 = vadd.f32 %v6231, %v6775
    %v6777 = vpop.f32.mrb[0].mxu0
    %v6778 = vpop.f32.mrb[0].mxu0
    %v6779 = vadd.f32 %v6234, %v6778
    %v6780 = vpop.f32.mrb[0].mxu0
    %6781 = vmatprep.mubr.bf16.mxu0 %v4594
    %6782 = vmatmul.mubr.bf16.gmra.mrb[0].mxu0 %v4593
    %v6783 = vpop.f32.mrb[0].mxu0
    %v6784 = vadd.f32 %v6239, %v6783
    %v6785 = vpop.f32.mrb[0].mxu0
    %v6786 = vpop.f32.mrb[0].mxu0
    %v6787 = vadd.f32 %v6242, %v6786
    %v6788 = vpop.f32.mrb[0].mxu0
    %6789 = vmatprep.mubr.bf16.mxu0 %v4601
    %6790 = vmatmul.mubr.bf16.gmra.mrb[0].mxu0 %v4600
    %v6791 = vpop.f32.mrb[0].mxu0
    %v6792 = vadd.f32 %v6247, %v6791
    %v6793 = vpop.f32.mrb[0].mxu0
    %v6794 = vpop.f32.mrb[0].mxu0
    %v6795 = vadd.f32 %v6250, %v6794
    %v6796 = vpop.f32.mrb[0].mxu0
    %6797 = vmatprep.mubr.bf16.mxu0 %v4608
    %6798 = vmatmul.mubr.bf16.gmra.mrb[0].mxu0 %v4607
    %v6799 = vpop.f32.mrb[0].mxu0
    %v6800 = vadd.f32 %v6255, %v6799
    %v6801 = vpop.f32.mrb[0].mxu0
    %v6802 = vpop.f32.mrb[0].mxu0
    %v6803 = vadd.f32 %v6258, %v6802
    %v6804 = vpop.f32.mrb[0].mxu0
    %6805 = vmatprep.mubr.bf16.mxu0 %v4615
    %6806 = vmatmul.mubr.bf16.gmra.mrb[0].mxu0 %v4614
    %v6807 = vpop.f32.mrb[0].mxu0
    %v6808 = vadd.f32 %v6263, %v6807
    %v6809 = vpop.f32.mrb[0].mxu0
    %v6810 = vpop.f32.mrb[0].mxu0
    %v6811 = vadd.f32 %v6266, %v6810
    %v6812 = vpop.f32.mrb[0].mxu0
    %6813 = vmatprep.mubr.bf16.mxu0 %v4622
    %6814 = vmatmul.mubr.bf16.gmra.mrb[0].mxu0 %v4621
    %v6815 = vpop.f32.mrb[0].mxu0
    %v6816 = vadd.f32 %v6271, %v6815
    %v6817 = vpop.f32.mrb[0].mxu0
    %v6818 = vpop.f32.mrb[0].mxu0
    %v6819 = vadd.f32 %v6274, %v6818
    %v6820 = vpop.f32.mrb[0].mxu0
    %6821 = vmatprep.mubr.bf16.mxu0 %v4629
    %6822 = vmatmul.mubr.bf16.gmra.mrb[0].mxu0 %v4628
    %v6823 = vpop.f32.mrb[0].mxu0
    %v6824 = vadd.f32 %v6279, %v6823
    %v6825 = vpop.f32.mrb[0].mxu0
    %v6826 = vpop.f32.mrb[0].mxu0
    %v6827 = vadd.f32 %v6282, %v6826
    %v6828 = vpop.f32.mrb[0].mxu0
    %6829 = vmatprep.mubr.bf16.mxu0 %v4636
    %6830 = vmatmul.mubr.bf16.gmra.mrb[0].mxu0 %v4635
    %v6831 = vpop.f32.mrb[0].mxu0
    %v6832 = vadd.f32 %v6287, %v6831
    %v6833 = vpop.f32.mrb[0].mxu0
    %v6834 = vpop.f32.mrb[0].mxu0
    %v6835 = vadd.f32 %v6290, %v6834
    %v6836 = vpop.f32.mrb[0].mxu0
    %6837 = vmatprep.mubr.bf16.mxu0 %v4643
    %6838 = vmatmul.mubr.bf16.gmra.mrb[0].mxu0 %v4642
    %v6839 = vpop.f32.mrb[0].mxu0
    %v6840 = vadd.f32 %v6295, %v6839
    %v6841 = vpop.f32.mrb[0].mxu0
    %v6842 = vpop.f32.mrb[0].mxu0
    %v6843 = vadd.f32 %v6298, %v6842
    %v6844 = vpop.f32.mrb[0].mxu0
    %6845 = vmatprep.mubr.bf16.mxu0 %v4650
    %6846 = vmatmul.mubr.bf16.gmra.mrb[0].mxu0 %v4649
    %v6847 = vpop.f32.mrb[0].mxu0
    %v6848 = vadd.f32 %v6303, %v6847
    %v6849 = vpop.f32.mrb[0].mxu0
    %v6850 = vpop.f32.mrb[0].mxu0
    %v6851 = vadd.f32 %v6306, %v6850
    %v6852 = vpop.f32.mrb[0].mxu0
    %6853 = vmatprep.mubr.bf16.mxu0 %v4657
    %6854 = vmatmul.mubr.bf16.gmra.mrb[0].mxu0 %v4656
    %v6855 = vpop.f32.mrb[0].mxu0
    %v6856 = vadd.f32 %v6311, %v6855
    %v6857 = vpop.f32.mrb[0].mxu0
    %v6858 = vpop.f32.mrb[0].mxu0
    %v6859 = vadd.f32 %v6314, %v6858
    %v6860 = vpop.f32.mrb[0].mxu0
    %6861 = vmatprep.mubr.bf16.mxu0 %v4664
    %6862 = vmatmul.mubr.bf16.gmra.mrb[0].mxu0 %v4663
    %v6863 = vpop.f32.mrb[0].mxu0
    %v6864 = vadd.f32 %v6319, %v6863
    %v6865 = vpop.f32.mrb[0].mxu0
    %v6866 = vpop.f32.mrb[0].mxu0
    %v6867 = vadd.f32 %v6322, %v6866
    %v6868 = vpop.f32.mrb[0].mxu0
    %6869 = vmatprep.mubr.bf16.mxu0 %v4671
    %6870 = vmatmul.mubr.bf16.gmra.mrb[0].mxu0 %v4670
    %v6871 = vpop.f32.mrb[0].mxu0
    %v6872 = vadd.f32 %v6327, %v6871
    %v6873 = vpop.f32.mrb[0].mxu0
    %v6874 = vpop.f32.mrb[0].mxu0
    %v6875 = vadd.f32 %v6330, %v6874
    %v6876 = vpop.f32.mrb[0].mxu0
    %6877 = vmatprep.mubr.bf16.mxu0 %v4678
    %6878 = vmatmul.mubr.bf16.gmra.mrb[0].mxu0 %v4677
    %v6879 = vpop.f32.mrb[0].mxu0
    %v6880 = vadd.f32 %v6335, %v6879
    %v6881 = vpop.f32.mrb[0].mxu0
    %v6882 = vpop.f32.mrb[0].mxu0
    %v6883 = vadd.f32 %v6338, %v6882
    %v6884 = vpop.f32.mrb[0].mxu0
    %6885 = vmatprep.mubr.bf16.mxu0 %v4685
    %6886 = vmatmul.mubr.bf16.gmra.mrb[0].mxu0 %v4684
    %v6887 = vpop.f32.mrb[0].mxu0
    %v6888 = vadd.f32 %v6343, %v6887
    %v6889 = vpop.f32.mrb[0].mxu0
    %v6890 = vpop.f32.mrb[0].mxu0
    %v6891 = vadd.f32 %v6346, %v6890
    %v6892 = vpop.f32.mrb[0].mxu0
    %6893 = vmatprep.mubr.bf16.mxu0 %v4692
    %6894 = vmatmul.mubr.bf16.gmra.mrb[0].mxu0 %v4691
    %v6895 = vpop.f32.mrb[0].mxu0
    %v6896 = vadd.f32 %v6351, %v6895
    %v6897 = vpop.f32.mrb[0].mxu0
    %v6898 = vpop.f32.mrb[0].mxu0
    %v6899 = vadd.f32 %v6354, %v6898
    %v6900 = vpop.f32.mrb[0].mxu0
    %6901 = vmatprep.mubr.bf16.mxu0 %v4699
    %6902 = vmatmul.mubr.bf16.gmra.mrb[0].mxu0 %v4698
    %v6903 = vpop.f32.mrb[0].mxu0
    %v6904 = vadd.f32 %v6359, %v6903
    %v6905 = vpop.f32.mrb[0].mxu0
    %v6906 = vpop.f32.mrb[0].mxu0
    %v6907 = vadd.f32 %v6362, %v6906
    %v6908 = vpop.f32.mrb[0].mxu0
    %6909 = vmatprep.mubr.bf16.mxu0 %v4706
    %6910 = vmatmul.mubr.bf16.gmra.mrb[0].mxu0 %v4705
    %v6911 = vpop.f32.mrb[0].mxu0
    %v6912 = vadd.f32 %v6367, %v6911
    %v6913 = vpop.f32.mrb[0].mxu0
    %v6914 = vpop.f32.mrb[0].mxu0
    %v6915 = vadd.f32 %v6370, %v6914
    %v6916 = vpop.f32.mrb[0].mxu0
    %6917 = vmatprep.mubr.bf16.mxu0 %v4713
    %6918 = vmatmul.mubr.bf16.gmra.mrb[0].mxu0 %v4712
    %v6919 = vpop.f32.mrb[0].mxu0
    %v6920 = vadd.f32 %v6375, %v6919
    %v6921 = vpop.f32.mrb[0].mxu0
    %v6922 = vpop.f32.mrb[0].mxu0
    %v6923 = vadd.f32 %v6378, %v6922
    %v6924 = vpop.f32.mrb[0].mxu0
    %6925 = vmatprep.mubr.bf16.mxu0 %v4720
    %6926 = vmatmul.mubr.bf16.gmra.mrb[0].mxu0 %v4719
    %v6927 = vpop.f32.mrb[0].mxu0
    %v6928 = vadd.f32 %v6383, %v6927
    %v6929 = vpop.f32.mrb[0].mxu0
    %v6930 = vpop.f32.mrb[0].mxu0
    %v6931 = vadd.f32 %v6386, %v6930
    %v6932 = vpop.f32.mrb[0].mxu0
    %6933 = vdwg.mxu0
    %6934 = vmatprep.subr.bf16.mxu0 0
    %6935 = vmatpush1.bf16.msra.mxu0 %v2096
    %6936 = vmatprep.subr.bf16.mxu0 0
    %6937 = vmatpush1.bf16.msra.mxu0 %v2097
    %6938 = vmatprep.subr.bf16.mxu0 0
    %6939 = vmatpush1.bf16.msra.mxu0 0
    %6940 = vmatprep.subr.bf16.mxu0 0
    %6941 = vmatpush1.bf16.msra.mxu0 0
    %6942 = vmatprep.subr.bf16.mxu0 0
    %6943 = vmatpush1.bf16.msra.mxu0 0
    %6944 = vmatprep.subr.bf16.mxu0 0
    %6945 = vmatpush1.bf16.msra.mxu0 0
    %6946 = vmatprep.subr.bf16.mxu0 0
    %6947 = vmatpush1.bf16.msra.mxu0 0
    %6948 = vmatprep.subr.bf16.mxu0 0
    %6949 = vmatpush1.bf16.msra.mxu0 0
    %6950 = vmatprep.subr.bf16.mxu0 0
    %6951 = vmatpush1.bf16.msra.mxu0 0
    %6952 = vmatprep.subr.bf16.mxu0 0
    %6953 = vmatpush1.bf16.msra.mxu0 0
    %6954 = vmatprep.subr.bf16.mxu0 0
    %6955 = vmatpush1.bf16.msra.mxu0 0
    %6956 = vmatprep.subr.bf16.mxu0 0
    %6957 = vmatpush1.bf16.msra.mxu0 0
    %6958 = vmatprep.subr.bf16.mxu0 0
    %6959 = vmatpush1.bf16.msra.mxu0 0
    %6960 = vmatprep.subr.bf16.mxu0 0
    %6961 = vmatpush1.bf16.msra.mxu0 0
    %6962 = vmatprep.subr.bf16.mxu0 0
    %6963 = vmatpush1.bf16.msra.mxu0 0
    %6964 = vmatprep.subr.bf16.mxu0 0
    %6965 = vmatpush1.bf16.msra.mxu0 0
    %6966 = vmatprep.mubr.bf16.mxu0 0
    %6967 = vmatmul.mubr.bf16.gmra.mrb[0].mxu0 %v5108
    %v6968 = vpop.f32.mrb[0].mxu0
    %v6969 = vadd.f32 %v6424, %v6968
    %v6970 = vpop.f32.mrb[0].mxu0
    %v6971 = vpop.f32.mrb[0].mxu0
    %v6972 = vadd.f32 %v6427, %v6971
    %v6973 = vpop.f32.mrb[0].mxu0
    %6974 = vmatprep.mubr.bf16.mxu0 0
    %6975 = vmatmul.mubr.bf16.gmra.mrb[0].mxu0 %v5111
    %v6976 = vpop.f32.mrb[0].mxu0
    %v6977 = vadd.f32 %v6432, %v6976
    %v6978 = vpop.f32.mrb[0].mxu0
    %v6979 = vpop.f32.mrb[0].mxu0
    %v6980 = vadd.f32 %v6435, %v6979
    %v6981 = vpop.f32.mrb[0].mxu0
    %6982 = vmatprep.mubr.bf16.mxu0 0
    %6983 = vmatmul.mubr.bf16.gmra.mrb[0].mxu0 %v5114
    %v6984 = vpop.f32.mrb[0].mxu0
    %v6985 = vadd.f32 %v6440, %v6984
    %v6986 = vpop.f32.mrb[0].mxu0
    %v6987 = vpop.f32.mrb[0].mxu0
    %v6988 = vadd.f32 %v6443, %v6987
    %v6989 = vpop.f32.mrb[0].mxu0
    %6990 = vmatprep.mubr.bf16.mxu0 0
    %6991 = vmatmul.mubr.bf16.gmra.mrb[0].mxu0 %v5117
    %v6992 = vpop.f32.mrb[0].mxu0
    %v6993 = vadd.f32 %v6448, %v6992
    %v6994 = vpop.f32.mrb[0].mxu0
    %v6995 = vpop.f32.mrb[0].mxu0
    %v6996 = vadd.f32 %v6451, %v6995
    %v6997 = vpop.f32.mrb[0].mxu0
    %6998 = vmatprep.mubr.bf16.mxu0 0
    %6999 = vmatmul.mubr.bf16.gmra.mrb[0].mxu0 %v5120
    %v7000 = vpop.f32.mrb[0].mxu0
    %v7001 = vadd.f32 %v6456, %v7000
    %v7002 = vpop.f32.mrb[0].mxu0
    %v7003 = vpop.f32.mrb[0].mxu0
    %v7004 = vadd.f32 %v6459, %v7003
    %v7005 = vpop.f32.mrb[0].mxu0
    %7006 = vmatprep.mubr.bf16.mxu0 0
    %7007 = vmatmul.mubr.bf16.gmra.mrb[0].mxu0 %v5123
    %v7008 = vpop.f32.mrb[0].mxu0
    %v7009 = vadd.f32 %v6464, %v7008
    %v7010 = vpop.f32.mrb[0].mxu0
    %v7011 = vpop.f32.mrb[0].mxu0
    %v7012 = vadd.f32 %v6467, %v7011
    %v7013 = vpop.f32.mrb[0].mxu0
    %7014 = vmatprep.mubr.bf16.mxu0 0
    %7015 = vmatmul.mubr.bf16.gmra.mrb[0].mxu0 %v5126
    %v7016 = vpop.f32.mrb[0].mxu0
    %v7017 = vadd.f32 %v6472, %v7016
    %v7018 = vpop.f32.mrb[0].mxu0
    %v7019 = vpop.f32.mrb[0].mxu0
    %v7020 = vadd.f32 %v6475, %v7019
    %v7021 = vpop.f32.mrb[0].mxu0
    %7022 = vmatprep.mubr.bf16.mxu0 0
    %7023 = vmatmul.mubr.bf16.gmra.mrb[0].mxu0 %v5129
    %v7024 = vpop.f32.mrb[0].mxu0
    %v7025 = vadd.f32 %v6480, %v7024
    %v7026 = vpop.f32.mrb[0].mxu0
    %v7027 = vpop.f32.mrb[0].mxu0
    %v7028 = vadd.f32 %v6483, %v7027
    %v7029 = vpop.f32.mrb[0].mxu0
    %7030 = vmatprep.mubr.bf16.mxu0 0
    %7031 = vmatmul.mubr.bf16.gmra.mrb[0].mxu0 %v5132
    %v7032 = vpop.f32.mrb[0].mxu0
    %v7033 = vadd.f32 %v6488, %v7032
    %v7034 = vpop.f32.mrb[0].mxu0
    %v7035 = vpop.f32.mrb[0].mxu0
    %v7036 = vadd.f32 %v6491, %v7035
    %v7037 = vpop.f32.mrb[0].mxu0
    %7038 = vmatprep.mubr.bf16.mxu0 0
    %7039 = vmatmul.mubr.bf16.gmra.mrb[0].mxu0 %v5135
    %v7040 = vpop.f32.mrb[0].mxu0
    %v7041 = vadd.f32 %v6496, %v7040
    %v7042 = vpop.f32.mrb[0].mxu0
    %v7043 = vpop.f32.mrb[0].mxu0
    %v7044 = vadd.f32 %v6499, %v7043
    %v7045 = vpop.f32.mrb[0].mxu0
    %7046 = vmatprep.mubr.bf16.mxu0 0
    %7047 = vmatmul.mubr.bf16.gmra.mrb[0].mxu0 %v5138
    %v7048 = vpop.f32.mrb[0].mxu0
    %v7049 = vadd.f32 %v6504, %v7048
    %v7050 = vpop.f32.mrb[0].mxu0
    %v7051 = vpop.f32.mrb[0].mxu0
    %v7052 = vadd.f32 %v6507, %v7051
    %v7053 = vpop.f32.mrb[0].mxu0
    %7054 = vmatprep.mubr.bf16.mxu0 0
    %7055 = vmatmul.mubr.bf16.gmra.mrb[0].mxu0 %v5141
    %v7056 = vpop.f32.mrb[0].mxu0
    %v7057 = vadd.f32 %v6512, %v7056
    %v7058 = vpop.f32.mrb[0].mxu0
    %v7059 = vpop.f32.mrb[0].mxu0
    %v7060 = vadd.f32 %v6515, %v7059
    %v7061 = vpop.f32.mrb[0].mxu0
    %7062 = vmatprep.mubr.bf16.mxu0 0
    %7063 = vmatmul.mubr.bf16.gmra.mrb[0].mxu0 %v5144
    %v7064 = vpop.f32.mrb[0].mxu0
    %v7065 = vadd.f32 %v6520, %v7064
    %v7066 = vpop.f32.mrb[0].mxu0
    %v7067 = vpop.f32.mrb[0].mxu0
    %v7068 = vadd.f32 %v6523, %v7067
    %v7069 = vpop.f32.mrb[0].mxu0
    %7070 = vmatprep.mubr.bf16.mxu0 0
    %7071 = vmatmul.mubr.bf16.gmra.mrb[0].mxu0 %v5147
    %v7072 = vpop.f32.mrb[0].mxu0
    %v7073 = vadd.f32 %v6528, %v7072
    %v7074 = vpop.f32.mrb[0].mxu0
    %v7075 = vpop.f32.mrb[0].mxu0
    %v7076 = vadd.f32 %v6531, %v7075
    %v7077 = vpop.f32.mrb[0].mxu0
    %7078 = vmatprep.mubr.bf16.mxu0 0
    %7079 = vmatmul.mubr.bf16.gmra.mrb[0].mxu0 %v5150
    %v7080 = vpop.f32.mrb[0].mxu0
    %v7081 = vadd.f32 %v6536, %v7080
    %v7082 = vpop.f32.mrb[0].mxu0
    %v7083 = vpop.f32.mrb[0].mxu0
    %v7084 = vadd.f32 %v6539, %v7083
    %v7085 = vpop.f32.mrb[0].mxu0
    %7086 = vmatprep.mubr.bf16.mxu0 0
    %7087 = vmatmul.mubr.bf16.gmra.mrb[0].mxu0 %v5153
    %v7088 = vpop.f32.mrb[0].mxu0
    %v7089 = vadd.f32 %v6544, %v7088
    %v7090 = vpop.f32.mrb[0].mxu0
    %v7091 = vpop.f32.mrb[0].mxu0
    %v7092 = vadd.f32 %v6547, %v7091
    %v7093 = vpop.f32.mrb[0].mxu0
    %7094 = vmatprep.mubr.bf16.mxu0 0
    %7095 = vmatmul.mubr.bf16.gmra.mrb[0].mxu0 %v5156
    %v7096 = vpop.f32.mrb[0].mxu0
    %v7097 = vadd.f32 %v6552, %v7096
    %v7098 = vpop.f32.mrb[0].mxu0
    %v7099 = vpop.f32.mrb[0].mxu0
    %v7100 = vadd.f32 %v6555, %v7099
    %v7101 = vpop.f32.mrb[0].mxu0
    %7102 = vmatprep.mubr.bf16.mxu0 0
    %7103 = vmatmul.mubr.bf16.gmra.mrb[0].mxu0 %v5159
    %v7104 = vpop.f32.mrb[0].mxu0
    %v7105 = vadd.f32 %v6560, %v7104
    %v7106 = vpop.f32.mrb[0].mxu0
    %v7107 = vpop.f32.mrb[0].mxu0
    %v7108 = vadd.f32 %v6563, %v7107
    %v7109 = vpop.f32.mrb[0].mxu0
    %7110 = vmatprep.mubr.bf16.mxu0 0
    %7111 = vmatmul.mubr.bf16.gmra.mrb[0].mxu0 %v5162
    %v7112 = vpop.f32.mrb[0].mxu0
    %v7113 = vadd.f32 %v6568, %v7112
    %v7114 = vpop.f32.mrb[0].mxu0
    %v7115 = vpop.f32.mrb[0].mxu0
    %v7116 = vadd.f32 %v6571, %v7115
    %v7117 = vpop.f32.mrb[0].mxu0
    %7118 = vmatprep.mubr.bf16.mxu0 0
    %7119 = vmatmul.mubr.bf16.gmra.mrb[0].mxu0 %v5165
    %v7120 = vpop.f32.mrb[0].mxu0
    %v7121 = vadd.f32 %v6576, %v7120
    %v7122 = vpop.f32.mrb[0].mxu0
    %v7123 = vpop.f32.mrb[0].mxu0
    %v7124 = vadd.f32 %v6579, %v7123
    %v7125 = vpop.f32.mrb[0].mxu0
    %7126 = vmatprep.mubr.bf16.mxu0 0
    %7127 = vmatmul.mubr.bf16.gmra.mrb[0].mxu0 %v5168
    %v7128 = vpop.f32.mrb[0].mxu0
    %v7129 = vadd.f32 %v6584, %v7128
    %v7130 = vpop.f32.mrb[0].mxu0
    %v7131 = vpop.f32.mrb[0].mxu0
    %v7132 = vadd.f32 %v6587, %v7131
    %v7133 = vpop.f32.mrb[0].mxu0
    %7134 = vmatprep.mubr.bf16.mxu0 0
    %7135 = vmatmul.mubr.bf16.gmra.mrb[0].mxu0 %v5171
    %v7136 = vpop.f32.mrb[0].mxu0
    %v7137 = vadd.f32 %v6592, %v7136
    %v7138 = vpop.f32.mrb[0].mxu0
    %v7139 = vpop.f32.mrb[0].mxu0
    %v7140 = vadd.f32 %v6595, %v7139
    %v7141 = vpop.f32.mrb[0].mxu0
    %7142 = vmatprep.mubr.bf16.mxu0 0
    %7143 = vmatmul.mubr.bf16.gmra.mrb[0].mxu0 %v5174
    %v7144 = vpop.f32.mrb[0].mxu0
    %v7145 = vadd.f32 %v6600, %v7144
    %v7146 = vpop.f32.mrb[0].mxu0
    %v7147 = vpop.f32.mrb[0].mxu0
    %v7148 = vadd.f32 %v6603, %v7147
    %v7149 = vpop.f32.mrb[0].mxu0
    %7150 = vmatprep.mubr.bf16.mxu0 0
    %7151 = vmatmul.mubr.bf16.gmra.mrb[0].mxu0 %v5177
    %v7152 = vpop.f32.mrb[0].mxu0
    %v7153 = vadd.f32 %v6608, %v7152
    %v7154 = vpop.f32.mrb[0].mxu0
    %v7155 = vpop.f32.mrb[0].mxu0
    %v7156 = vadd.f32 %v6611, %v7155
    %v7157 = vpop.f32.mrb[0].mxu0
    %7158 = vmatprep.mubr.bf16.mxu0 0
    %7159 = vmatmul.mubr.bf16.gmra.mrb[0].mxu0 %v5180
    %v7160 = vpop.f32.mrb[0].mxu0
    %v7161 = vadd.f32 %v6616, %v7160
    %v7162 = vpop.f32.mrb[0].mxu0
    %v7163 = vpop.f32.mrb[0].mxu0
    %v7164 = vadd.f32 %v6619, %v7163
    %v7165 = vpop.f32.mrb[0].mxu0
    %7166 = vmatprep.mubr.bf16.mxu0 0
    %7167 = vmatmul.mubr.bf16.gmra.mrb[0].mxu0 %v5183
    %v7168 = vpop.f32.mrb[0].mxu0
    %v7169 = vadd.f32 %v6624, %v7168
    %v7170 = vpop.f32.mrb[0].mxu0
    %v7171 = vpop.f32.mrb[0].mxu0
    %v7172 = vadd.f32 %v6627, %v7171
    %v7173 = vpop.f32.mrb[0].mxu0
    %7174 = vmatprep.mubr.bf16.mxu0 0
    %7175 = vmatmul.mubr.bf16.gmra.mrb[0].mxu0 %v5186
    %v7176 = vpop.f32.mrb[0].mxu0
    %v7177 = vadd.f32 %v6632, %v7176
    %v7178 = vpop.f32.mrb[0].mxu0
    %v7179 = vpop.f32.mrb[0].mxu0
    %v7180 = vadd.f32 %v6635, %v7179
    %v7181 = vpop.f32.mrb[0].mxu0
    %7182 = vmatprep.mubr.bf16.mxu0 0
    %7183 = vmatmul.mubr.bf16.gmra.mrb[0].mxu0 %v5189
    %v7184 = vpop.f32.mrb[0].mxu0
    %v7185 = vadd.f32 %v6640, %v7184
    %v7186 = vpop.f32.mrb[0].mxu0
    %v7187 = vpop.f32.mrb[0].mxu0
    %v7188 = vadd.f32 %v6643, %v7187
    %v7189 = vpop.f32.mrb[0].mxu0
    %7190 = vmatprep.mubr.bf16.mxu0 0
    %7191 = vmatmul.mubr.bf16.gmra.mrb[0].mxu0 %v5192
    %v7192 = vpop.f32.mrb[0].mxu0
    %v7193 = vadd.f32 %v6648, %v7192
    %v7194 = vpop.f32.mrb[0].mxu0
    %v7195 = vpop.f32.mrb[0].mxu0
    %v7196 = vadd.f32 %v6651, %v7195
    %v7197 = vpop.f32.mrb[0].mxu0
    %7198 = vmatprep.mubr.bf16.mxu0 0
    %7199 = vmatmul.mubr.bf16.gmra.mrb[0].mxu0 %v5195
    %v7200 = vpop.f32.mrb[0].mxu0
    %v7201 = vadd.f32 %v6656, %v7200
    %v7202 = vpop.f32.mrb[0].mxu0
    %v7203 = vpop.f32.mrb[0].mxu0
    %v7204 = vadd.f32 %v6659, %v7203
    %v7205 = vpop.f32.mrb[0].mxu0
    %7206 = vmatprep.mubr.bf16.mxu0 0
    %7207 = vmatmul.mubr.bf16.gmra.mrb[0].mxu0 %v5198
    %v7208 = vpop.f32.mrb[0].mxu0
    %v7209 = vadd.f32 %v6664, %v7208
    %v7210 = vpop.f32.mrb[0].mxu0
    %v7211 = vpop.f32.mrb[0].mxu0
    %v7212 = vadd.f32 %v6667, %v7211
    %v7213 = vpop.f32.mrb[0].mxu0
    %7214 = vmatprep.mubr.bf16.mxu0 0
    %7215 = vmatmul.mubr.bf16.gmra.mrb[0].mxu0 %v5201
    %v7216 = vpop.f32.mrb[0].mxu0
    %v7217 = vadd.f32 %v6672, %v7216
    %v7218 = vpop.f32.mrb[0].mxu0
    %v7219 = vpop.f32.mrb[0].mxu0
    %v7220 = vadd.f32 %v6675, %v7219
    %v7221 = vpop.f32.mrb[0].mxu0
    %7222 = vmatprep.mubr.bf16.mxu0 0
    %7223 = vmatmul.mubr.bf16.gmra.mrb[0].mxu0 %v5204
    %v7224 = vpop.f32.mrb[0].mxu0
    %v7225 = vadd.f32 %v6680, %v7224
    %v7226 = vpop.f32.mrb[0].mxu0
    %v7227 = vpop.f32.mrb[0].mxu0
    %v7228 = vadd.f32 %v6683, %v7227
    %v7229 = vpop.f32.mrb[0].mxu0
    %7230 = vmatprep.mubr.bf16.mxu0 0
    %7231 = vmatmul.mubr.bf16.gmra.mrb[0].mxu0 %v5207
    %v7232 = vpop.f32.mrb[0].mxu0
    %v7233 = vadd.f32 %v6688, %v7232
    %v7234 = vpop.f32.mrb[0].mxu0
    %v7235 = vpop.f32.mrb[0].mxu0
    %v7236 = vadd.f32 %v6691, %v7235
    %v7237 = vpop.f32.mrb[0].mxu0
    %7238 = vmatprep.mubr.bf16.mxu0 0
    %7239 = vmatmul.mubr.bf16.gmra.mrb[0].mxu0 %v5210
    %v7240 = vpop.f32.mrb[0].mxu0
    %v7241 = vadd.f32 %v6696, %v7240
    %v7242 = vpop.f32.mrb[0].mxu0
    %v7243 = vpop.f32.mrb[0].mxu0
    %v7244 = vadd.f32 %v6699, %v7243
    %v7245 = vpop.f32.mrb[0].mxu0
    %7246 = vmatprep.mubr.bf16.mxu0 0
    %7247 = vmatmul.mubr.bf16.gmra.mrb[0].mxu0 %v5213
    %v7248 = vpop.f32.mrb[0].mxu0
    %v7249 = vadd.f32 %v6704, %v7248
    %v7250 = vpop.f32.mrb[0].mxu0
    %v7251 = vpop.f32.mrb[0].mxu0
    %v7252 = vadd.f32 %v6707, %v7251
    %v7253 = vpop.f32.mrb[0].mxu0
    %7254 = vmatprep.mubr.bf16.mxu0 0
    %7255 = vmatmul.mubr.bf16.gmra.mrb[0].mxu0 %v5216
    %v7256 = vpop.f32.mrb[0].mxu0
    %v7257 = vadd.f32 %v6712, %v7256
    %v7258 = vpop.f32.mrb[0].mxu0
    %v7259 = vpop.f32.mrb[0].mxu0
    %v7260 = vadd.f32 %v6715, %v7259
    %v7261 = vpop.f32.mrb[0].mxu0
    %7262 = vmatprep.mubr.bf16.mxu0 0
    %7263 = vmatmul.mubr.bf16.gmra.mrb[0].mxu0 %v5219
    %v7264 = vpop.f32.mrb[0].mxu0
    %v7265 = vadd.f32 %v6720, %v7264
    %v7266 = vpop.f32.mrb[0].mxu0
    %v7267 = vpop.f32.mrb[0].mxu0
    %v7268 = vadd.f32 %v6723, %v7267
    %v7269 = vpop.f32.mrb[0].mxu0
    %7270 = vmatprep.mubr.bf16.mxu0 0
    %7271 = vmatmul.mubr.bf16.gmra.mrb[0].mxu0 %v5222
    %v7272 = vpop.f32.mrb[0].mxu0
    %v7273 = vadd.f32 %v6728, %v7272
    %v7274 = vpop.f32.mrb[0].mxu0
    %v7275 = vpop.f32.mrb[0].mxu0
    %v7276 = vadd.f32 %v6731, %v7275
    %v7277 = vpop.f32.mrb[0].mxu0
    %7278 = vmatprep.mubr.bf16.mxu0 0
    %7279 = vmatmul.mubr.bf16.gmra.mrb[0].mxu0 %v5225
    %v7280 = vpop.f32.mrb[0].mxu0
    %v7281 = vadd.f32 %v6736, %v7280
    %v7282 = vpop.f32.mrb[0].mxu0
    %v7283 = vpop.f32.mrb[0].mxu0
    %v7284 = vadd.f32 %v6739, %v7283
    %v7285 = vpop.f32.mrb[0].mxu0
    %7286 = vmatprep.mubr.bf16.mxu0 0
    %7287 = vmatmul.mubr.bf16.gmra.mrb[0].mxu0 %v5228
    %v7288 = vpop.f32.mrb[0].mxu0
    %v7289 = vadd.f32 %v6744, %v7288
    %v7290 = vpop.f32.mrb[0].mxu0
    %v7291 = vpop.f32.mrb[0].mxu0
    %v7292 = vadd.f32 %v6747, %v7291
    %v7293 = vpop.f32.mrb[0].mxu0
    %7294 = vmatprep.mubr.bf16.mxu0 0
    %7295 = vmatmul.mubr.bf16.gmra.mrb[0].mxu0 %v5231
    %v7296 = vpop.f32.mrb[0].mxu0
    %v7297 = vadd.f32 %v6752, %v7296
    %v7298 = vpop.f32.mrb[0].mxu0
    %v7299 = vpop.f32.mrb[0].mxu0
    %v7300 = vadd.f32 %v6755, %v7299
    %v7301 = vpop.f32.mrb[0].mxu0
    %7302 = vmatprep.mubr.bf16.mxu0 0
    %7303 = vmatmul.mubr.bf16.gmra.mrb[0].mxu0 %v5234
    %v7304 = vpop.f32.mrb[0].mxu0
    %v7305 = vadd.f32 %v6760, %v7304
    %v7306 = vpop.f32.mrb[0].mxu0
    %v7307 = vpop.f32.mrb[0].mxu0
    %v7308 = vadd.f32 %v6763, %v7307
    %v7309 = vpop.f32.mrb[0].mxu0
    %7310 = vmatprep.mubr.bf16.mxu0 0
    %7311 = vmatmul.mubr.bf16.gmra.mrb[0].mxu0 %v5237
    %v7312 = vpop.f32.mrb[0].mxu0
    %v7313 = vadd.f32 %v6768, %v7312
    %v7314 = vpop.f32.mrb[0].mxu0
    %v7315 = vpop.f32.mrb[0].mxu0
    %v7316 = vadd.f32 %v6771, %v7315
    %v7317 = vpop.f32.mrb[0].mxu0
    %7318 = vmatprep.mubr.bf16.mxu0 0
    %7319 = vmatmul.mubr.bf16.gmra.mrb[0].mxu0 %v5240
    %v7320 = vpop.f32.mrb[0].mxu0
    %v7321 = vadd.f32 %v6776, %v7320
    %v7322 = vpop.f32.mrb[0].mxu0
    %v7323 = vpop.f32.mrb[0].mxu0
    %v7324 = vadd.f32 %v6779, %v7323
    %v7325 = vpop.f32.mrb[0].mxu0
    %7326 = vmatprep.mubr.bf16.mxu0 0
    %7327 = vmatmul.mubr.bf16.gmra.mrb[0].mxu0 %v5243
    %v7328 = vpop.f32.mrb[0].mxu0
    %v7329 = vadd.f32 %v6784, %v7328
    %v7330 = vpop.f32.mrb[0].mxu0
    %v7331 = vpop.f32.mrb[0].mxu0
    %v7332 = vadd.f32 %v6787, %v7331
    %v7333 = vpop.f32.mrb[0].mxu0
    %7334 = vmatprep.mubr.bf16.mxu0 0
    %7335 = vmatmul.mubr.bf16.gmra.mrb[0].mxu0 %v5246
    %v7336 = vpop.f32.mrb[0].mxu0
    %v7337 = vadd.f32 %v6792, %v7336
    %v7338 = vpop.f32.mrb[0].mxu0
    %v7339 = vpop.f32.mrb[0].mxu0
    %v7340 = vadd.f32 %v6795, %v7339
    %v7341 = vpop.f32.mrb[0].mxu0
    %7342 = vmatprep.mubr.bf16.mxu0 0
    %7343 = vmatmul.mubr.bf16.gmra.mrb[0].mxu0 %v5249
    %v7344 = vpop.f32.mrb[0].mxu0
    %v7345 = vadd.f32 %v6800, %v7344
    %v7346 = vpop.f32.mrb[0].mxu0
    %v7347 = vpop.f32.mrb[0].mxu0
    %v7348 = vadd.f32 %v6803, %v7347
    %v7349 = vpop.f32.mrb[0].mxu0
    %7350 = vmatprep.mubr.bf16.mxu0 0
    %7351 = vmatmul.mubr.bf16.gmra.mrb[0].mxu0 %v5252
    %v7352 = vpop.f32.mrb[0].mxu0
    %v7353 = vadd.f32 %v6808, %v7352
    %v7354 = vpop.f32.mrb[0].mxu0
    %v7355 = vpop.f32.mrb[0].mxu0
    %v7356 = vadd.f32 %v6811, %v7355
    %v7357 = vpop.f32.mrb[0].mxu0
    %7358 = vmatprep.mubr.bf16.mxu0 0
    %7359 = vmatmul.mubr.bf16.gmra.mrb[0].mxu0 %v5255
    %v7360 = vpop.f32.mrb[0].mxu0
    %v7361 = vadd.f32 %v6816, %v7360
    %v7362 = vpop.f32.mrb[0].mxu0
    %v7363 = vpop.f32.mrb[0].mxu0
    %v7364 = vadd.f32 %v6819, %v7363
    %v7365 = vpop.f32.mrb[0].mxu0
    %7366 = vmatprep.mubr.bf16.mxu0 0
    %7367 = vmatmul.mubr.bf16.gmra.mrb[0].mxu0 %v5258
    %v7368 = vpop.f32.mrb[0].mxu0
    %v7369 = vadd.f32 %v6824, %v7368
    %v7370 = vpop.f32.mrb[0].mxu0
    %v7371 = vpop.f32.mrb[0].mxu0
    %v7372 = vadd.f32 %v6827, %v7371
    %v7373 = vpop.f32.mrb[0].mxu0
    %7374 = vmatprep.mubr.bf16.mxu0 0
    %7375 = vmatmul.mubr.bf16.gmra.mrb[0].mxu0 %v5261
    %v7376 = vpop.f32.mrb[0].mxu0
    %v7377 = vadd.f32 %v6832, %v7376
    %v7378 = vpop.f32.mrb[0].mxu0
    %v7379 = vpop.f32.mrb[0].mxu0
    %v7380 = vadd.f32 %v6835, %v7379
    %v7381 = vpop.f32.mrb[0].mxu0
    %7382 = vmatprep.mubr.bf16.mxu0 0
    %7383 = vmatmul.mubr.bf16.gmra.mrb[0].mxu0 %v5264
    %v7384 = vpop.f32.mrb[0].mxu0
    %v7385 = vadd.f32 %v6840, %v7384
    %v7386 = vpop.f32.mrb[0].mxu0
    %v7387 = vpop.f32.mrb[0].mxu0
    %v7388 = vadd.f32 %v6843, %v7387
    %v7389 = vpop.f32.mrb[0].mxu0
    %7390 = vmatprep.mubr.bf16.mxu0 0
    %7391 = vmatmul.mubr.bf16.gmra.mrb[0].mxu0 %v5267
    %v7392 = vpop.f32.mrb[0].mxu0
    %v7393 = vadd.f32 %v6848, %v7392
    %v7394 = vpop.f32.mrb[0].mxu0
    %v7395 = vpop.f32.mrb[0].mxu0
    %v7396 = vadd.f32 %v6851, %v7395
    %v7397 = vpop.f32.mrb[0].mxu0
    %7398 = vmatprep.mubr.bf16.mxu0 0
    %7399 = vmatmul.mubr.bf16.gmra.mrb[0].mxu0 %v5270
    %v7400 = vpop.f32.mrb[0].mxu0
    %v7401 = vadd.f32 %v6856, %v7400
    %v7402 = vpop.f32.mrb[0].mxu0
    %v7403 = vpop.f32.mrb[0].mxu0
    %v7404 = vadd.f32 %v6859, %v7403
    %v7405 = vpop.f32.mrb[0].mxu0
    %7406 = vmatprep.mubr.bf16.mxu0 0
    %7407 = vmatmul.mubr.bf16.gmra.mrb[0].mxu0 %v5273
    %v7408 = vpop.f32.mrb[0].mxu0
    %v7409 = vadd.f32 %v6864, %v7408
    %v7410 = vpop.f32.mrb[0].mxu0
    %v7411 = vpop.f32.mrb[0].mxu0
    %v7412 = vadd.f32 %v6867, %v7411
    %v7413 = vpop.f32.mrb[0].mxu0
    %7414 = vmatprep.mubr.bf16.mxu0 0
    %7415 = vmatmul.mubr.bf16.gmra.mrb[0].mxu0 %v5276
    %v7416 = vpop.f32.mrb[0].mxu0
    %v7417 = vadd.f32 %v6872, %v7416
    %v7418 = vpop.f32.mrb[0].mxu0
    %v7419 = vpop.f32.mrb[0].mxu0
    %v7420 = vadd.f32 %v6875, %v7419
    %v7421 = vpop.f32.mrb[0].mxu0
    %7422 = vmatprep.mubr.bf16.mxu0 0
    %7423 = vmatmul.mubr.bf16.gmra.mrb[0].mxu0 %v5279
    %v7424 = vpop.f32.mrb[0].mxu0
    %v7425 = vadd.f32 %v6880, %v7424
    %v7426 = vpop.f32.mrb[0].mxu0
    %v7427 = vpop.f32.mrb[0].mxu0
    %v7428 = vadd.f32 %v6883, %v7427
    %v7429 = vpop.f32.mrb[0].mxu0
    %7430 = vmatprep.mubr.bf16.mxu0 0
    %7431 = vmatmul.mubr.bf16.gmra.mrb[0].mxu0 %v5282
    %v7432 = vpop.f32.mrb[0].mxu0
    %v7433 = vadd.f32 %v6888, %v7432
    %v7434 = vpop.f32.mrb[0].mxu0
    %v7435 = vpop.f32.mrb[0].mxu0
    %v7436 = vadd.f32 %v6891, %v7435
    %v7437 = vpop.f32.mrb[0].mxu0
    %7438 = vmatprep.mubr.bf16.mxu0 0
    %7439 = vmatmul.mubr.bf16.gmra.mrb[0].mxu0 %v5285
    %v7440 = vpop.f32.mrb[0].mxu0
    %v7441 = vadd.f32 %v6896, %v7440
    %v7442 = vpop.f32.mrb[0].mxu0
    %v7443 = vpop.f32.mrb[0].mxu0
    %v7444 = vadd.f32 %v6899, %v7443
    %v7445 = vpop.f32.mrb[0].mxu0
    %7446 = vmatprep.mubr.bf16.mxu0 0
    %7447 = vmatmul.mubr.bf16.gmra.mrb[0].mxu0 %v5288
    %v7448 = vpop.f32.mrb[0].mxu0
    %v7449 = vadd.f32 %v6904, %v7448
    %v7450 = vpop.f32.mrb[0].mxu0
    %v7451 = vpop.f32.mrb[0].mxu0
    %v7452 = vadd.f32 %v6907, %v7451
    %v7453 = vpop.f32.mrb[0].mxu0
    %7454 = vmatprep.mubr.bf16.mxu0 0
    %7455 = vmatmul.mubr.bf16.gmra.mrb[0].mxu0 %v5291
    %v7456 = vpop.f32.mrb[0].mxu0
    %v7457 = vadd.f32 %v6912, %v7456
    %v7458 = vpop.f32.mrb[0].mxu0
    %v7459 = vpop.f32.mrb[0].mxu0
    %v7460 = vadd.f32 %v6915, %v7459
    %v7461 = vpop.f32.mrb[0].mxu0
    %7462 = vmatprep.mubr.bf16.mxu0 0
    %7463 = vmatmul.mubr.bf16.gmra.mrb[0].mxu0 %v5294
    %v7464 = vpop.f32.mrb[0].mxu0
    %v7465 = vadd.f32 %v6920, %v7464
    %v7466 = vpop.f32.mrb[0].mxu0
    %v7467 = vpop.f32.mrb[0].mxu0
    %v7468 = vadd.f32 %v6923, %v7467
    %v7469 = vpop.f32.mrb[0].mxu0
    %7470 = vmatprep.mubr.bf16.mxu0 0
    %7471 = vmatmul.mubr.bf16.gmra.mrb[0].mxu0 %v5297
    %v7472 = vpop.f32.mrb[0].mxu0
    %v7473 = vadd.f32 %v6928, %v7472
    %v7474 = vpop.f32.mrb[0].mxu0
    %v7475 = vpop.f32.mrb[0].mxu0
    %v7476 = vadd.f32 %v6931, %v7475
    %v7477 = vpop.f32.mrb[0].mxu0
    %7478 = vdwg.mxu0
    %v7479 = vld [vmem:[%s4] sm:$0xff]
    %v7480 = vld [vmem:[%s4 + $0x8] sm:$0xff]
    %v7481 = vld [vmem:[%s4 + $0x10] sm:$0xff]
    %v7482 = vld [vmem:[%s4 + $0x18] sm:$0xff]
    %v7483 = vld [vmem:[%s4 + $0x20] sm:$0xff]
    %v7484 = vld [vmem:[%s4 + $0x28] sm:$0xff]
    %v7485 = vld [vmem:[%s4 + $0x30] sm:$0xff]
    %v7486 = vld [vmem:[%s4 + $0x38] sm:$0xff]
    %v7487 = vld [vmem:[%s4 + $0x40] sm:$0xff]
    %v7488 = vld [vmem:[%s4 + $0x48] sm:$0xff]
    %v7489 = vld [vmem:[%s4 + $0x50] sm:$0xff]
    %v7490 = vld [vmem:[%s4 + $0x58] sm:$0xff]
    %v7491 = vld [vmem:[%s4 + $0x60] sm:$0xff]
    %v7492 = vld [vmem:[%s4 + $0x68] sm:$0xff]
    %v7493 = vld [vmem:[%s4 + $0x70] sm:$0xff]
    %v7494 = vld [vmem:[%s4 + $0x78] sm:$0xff]
    %s7495 = sld [smem:[#allocation2]]
    %v7496 = vstv %s7495
    %7497 = vmatprep.subr.mxu0 0.0
    %7498 = vmatpush1.msra.mxu0 %v6969
    %7499 = vmatprep.subr.mxu0 0.0
    %7500 = vmatpush1.msra.mxu0 %v6972
    %7501 = vmatprep.subr.mxu0 0.0
    %7502 = vmatpush1.msra.mxu0 %v6977
    %7503 = vmatprep.subr.mxu0 0.0
    %7504 = vmatpush1.msra.mxu0 %v6980
    %7505 = vmatprep.subr.mxu0 0.0
    %7506 = vmatpush1.msra.mxu0 %v6985
    %7507 = vmatprep.subr.mxu0 0.0
    %7508 = vmatpush1.msra.mxu0 %v6988
    %7509 = vmatprep.subr.mxu0 0.0
    %7510 = vmatpush1.msra.mxu0 %v6993
    %7511 = vmatprep.subr.mxu0 0.0
    %7512 = vmatpush1.msra.mxu0 %v6996
    %7513 = vmatprep.subr.mxu0 0.0
    %7514 = vmatpush1.msra.mxu0 %v7001
    %7515 = vmatprep.subr.mxu0 0.0
    %7516 = vmatpush1.msra.mxu0 %v7004
    %7517 = vmatprep.subr.mxu0 0.0
    %7518 = vmatpush1.msra.mxu0 %v7009
    %7519 = vmatprep.subr.mxu0 0.0
    %7520 = vmatpush1.msra.mxu0 %v7012
    %7521 = vmatprep.subr.mxu0 0.0
    %7522 = vmatpush1.msra.mxu0 %v7017
    %7523 = vmatprep.subr.mxu0 0.0
    %7524 = vmatpush1.msra.mxu0 %v7020
    %7525 = vmatprep.subr.mxu0 0.0
    %7526 = vmatpush1.msra.mxu0 %v7025
    %7527 = vmatprep.subr.mxu0 0.0
    %7528 = vmatpush1.msra.mxu0 %v7028
    %7529 = vmatprep.subr.mxu0 0.0
    %7530 = vmatpush1.msra.mxu0 %v7033
    %7531 = vmatprep.subr.mxu0 0.0
    %7532 = vmatpush1.msra.mxu0 %v7036
    %7533 = vmatprep.subr.mxu0 0.0
    %7534 = vmatpush1.msra.mxu0 %v7041
    %7535 = vmatprep.subr.mxu0 0.0
    %7536 = vmatpush1.msra.mxu0 %v7044
    %7537 = vmatprep.subr.mxu0 0.0
    %7538 = vmatpush1.msra.mxu0 %v7049
    %7539 = vmatprep.subr.mxu0 0.0
    %7540 = vmatpush1.msra.mxu0 %v7052
    %7541 = vmatprep.subr.mxu0 0.0
    %7542 = vmatpush1.msra.mxu0 %v7057
    %7543 = vmatprep.subr.mxu0 0.0
    %7544 = vmatpush1.msra.mxu0 %v7060
    %7545 = vmatprep.subr.mxu0 0.0
    %7546 = vmatpush1.msra.mxu0 %v7065
    %7547 = vmatprep.subr.mxu0 0.0
    %7548 = vmatpush1.msra.mxu0 %v7068
    %7549 = vmatprep.subr.mxu0 0.0
    %7550 = vmatpush1.msra.mxu0 %v7073
    %7551 = vmatprep.subr.mxu0 0.0
    %7552 = vmatpush1.msra.mxu0 %v7076
    %7553 = vmatprep.subr.mxu0 0.0
    %7554 = vmatpush1.msra.mxu0 %v7081
    %7555 = vmatprep.subr.mxu0 0.0
    %7556 = vmatpush1.msra.mxu0 %v7084
    %7557 = vmatprep.subr.mxu0 0.0
    %7558 = vmatpush1.msra.mxu0 %v7089
    %7559 = vmatprep.subr.mxu0 0.0
    %7560 = vmatpush1.msra.mxu0 %v7092
    %7561 = vmatprep.mubr.f32.mxu0 %v7480
    %7562 = vmatmul.mubr.f32.gmra.mrb[0].mxu0 %v7479
    %v7563 = vpop.f32.mrb[0].mxu0
    %v7564 = vadd.f32 %v7496, %v7563
    %v7565 = vpop.f32.mrb[0].mxu0
    %7566 = vmatprep.mubr.f32.mxu0 %v7488
    %7567 = vmatmul.mubr.f32.gmra.mrb[0].mxu0 %v7487
    %v7568 = vpop.f32.mrb[0].mxu0
    %v7569 = vadd.f32 %v7496, %v7568
    %v7570 = vpop.f32.mrb[0].mxu0
    %7571 = vdwg.mxu0
    %7572 = vmatprep.subr.mxu0 0.0
    %7573 = vmatpush1.msra.mxu0 %v7097
    %7574 = vmatprep.subr.mxu0 0.0
    %7575 = vmatpush1.msra.mxu0 %v7100
    %7576 = vmatprep.subr.mxu0 0.0
    %7577 = vmatpush1.msra.mxu0 %v7105
    %7578 = vmatprep.subr.mxu0 0.0
    %7579 = vmatpush1.msra.mxu0 %v7108
    %7580 = vmatprep.subr.mxu0 0.0
    %7581 = vmatpush1.msra.mxu0 %v7113
    %7582 = vmatprep.subr.mxu0 0.0
    %7583 = vmatpush1.msra.mxu0 %v7116
    %7584 = vmatprep.subr.mxu0 0.0
    %7585 = vmatpush1.msra.mxu0 %v7121
    %7586 = vmatprep.subr.mxu0 0.0
    %7587 = vmatpush1.msra.mxu0 %v7124
    %7588 = vmatprep.subr.mxu0 0.0
    %7589 = vmatpush1.msra.mxu0 %v7129
    %7590 = vmatprep.subr.mxu0 0.0
    %7591 = vmatpush1.msra.mxu0 %v7132
    %7592 = vmatprep.subr.mxu0 0.0
    %7593 = vmatpush1.msra.mxu0 %v7137
    %7594 = vmatprep.subr.mxu0 0.0
    %7595 = vmatpush1.msra.mxu0 %v7140
    %7596 = vmatprep.subr.mxu0 0.0
    %7597 = vmatpush1.msra.mxu0 %v7145
    %7598 = vmatprep.subr.mxu0 0.0
    %7599 = vmatpush1.msra.mxu0 %v7148
    %7600 = vmatprep.subr.mxu0 0.0
    %7601 = vmatpush1.msra.mxu0 %v7153
    %7602 = vmatprep.subr.mxu0 0.0
    %7603 = vmatpush1.msra.mxu0 %v7156
    %7604 = vmatprep.subr.mxu0 0.0
    %7605 = vmatpush1.msra.mxu0 %v7161
    %7606 = vmatprep.subr.mxu0 0.0
    %7607 = vmatpush1.msra.mxu0 %v7164
    %7608 = vmatprep.subr.mxu0 0.0
    %7609 = vmatpush1.msra.mxu0 %v7169
    %7610 = vmatprep.subr.mxu0 0.0
    %7611 = vmatpush1.msra.mxu0 %v7172
    %7612 = vmatprep.subr.mxu0 0.0
    %7613 = vmatpush1.msra.mxu0 %v7177
    %7614 = vmatprep.subr.mxu0 0.0
    %7615 = vmatpush1.msra.mxu0 %v7180
    %7616 = vmatprep.subr.mxu0 0.0
    %7617 = vmatpush1.msra.mxu0 %v7185
    %7618 = vmatprep.subr.mxu0 0.0
    %7619 = vmatpush1.msra.mxu0 %v7188
    %7620 = vmatprep.subr.mxu0 0.0
    %7621 = vmatpush1.msra.mxu0 %v7193
    %7622 = vmatprep.subr.mxu0 0.0
    %7623 = vmatpush1.msra.mxu0 %v7196
    %7624 = vmatprep.subr.mxu0 0.0
    %7625 = vmatpush1.msra.mxu0 %v7201
    %7626 = vmatprep.subr.mxu0 0.0
    %7627 = vmatpush1.msra.mxu0 %v7204
    %7628 = vmatprep.subr.mxu0 0.0
    %7629 = vmatpush1.msra.mxu0 %v7209
    %7630 = vmatprep.subr.mxu0 0.0
    %7631 = vmatpush1.msra.mxu0 %v7212
    %7632 = vmatprep.subr.mxu0 0.0
    %7633 = vmatpush1.msra.mxu0 %v7217
    %7634 = vmatprep.subr.mxu0 0.0
    %7635 = vmatpush1.msra.mxu0 %v7220
    %7636 = vmatprep.mubr.f32.mxu0 %v7482
    %7637 = vmatmul.mubr.f32.gmra.mrb[0].mxu0 %v7481
    %v7638 = vpop.f32.mrb[0].mxu0
    %v7639 = vadd.f32 %v7564, %v7638
    %v7640 = vpop.f32.mrb[0].mxu0
    %7641 = vmatprep.mubr.f32.mxu0 %v7490
    %7642 = vmatmul.mubr.f32.gmra.mrb[0].mxu0 %v7489
    %v7643 = vpop.f32.mrb[0].mxu0
    %v7644 = vadd.f32 %v7569, %v7643
    %v7645 = vpop.f32.mrb[0].mxu0
    %7646 = vdwg.mxu0
    %7647 = vmatprep.subr.mxu0 0.0
    %7648 = vmatpush1.msra.mxu0 %v7225
    %7649 = vmatprep.subr.mxu0 0.0
    %7650 = vmatpush1.msra.mxu0 %v7228
    %7651 = vmatprep.subr.mxu0 0.0
    %7652 = vmatpush1.msra.mxu0 %v7233
    %7653 = vmatprep.subr.mxu0 0.0
    %7654 = vmatpush1.msra.mxu0 %v7236
    %7655 = vmatprep.subr.mxu0 0.0
    %7656 = vmatpush1.msra.mxu0 %v7241
    %7657 = vmatprep.subr.mxu0 0.0
    %7658 = vmatpush1.msra.mxu0 %v7244
    %7659 = vmatprep.subr.mxu0 0.0
    %7660 = vmatpush1.msra.mxu0 %v7249
    %7661 = vmatprep.subr.mxu0 0.0
    %7662 = vmatpush1.msra.mxu0 %v7252
    %7663 = vmatprep.subr.mxu0 0.0
    %7664 = vmatpush1.msra.mxu0 %v7257
    %7665 = vmatprep.subr.mxu0 0.0
    %7666 = vmatpush1.msra.mxu0 %v7260
    %7667 = vmatprep.subr.mxu0 0.0
    %7668 = vmatpush1.msra.mxu0 %v7265
    %7669 = vmatprep.subr.mxu0 0.0
    %7670 = vmatpush1.msra.mxu0 %v7268
    %7671 = vmatprep.subr.mxu0 0.0
    %7672 = vmatpush1.msra.mxu0 %v7273
    %7673 = vmatprep.subr.mxu0 0.0
    %7674 = vmatpush1.msra.mxu0 %v7276
    %7675 = vmatprep.subr.mxu0 0.0
    %7676 = vmatpush1.msra.mxu0 %v7281
    %7677 = vmatprep.subr.mxu0 0.0
    %7678 = vmatpush1.msra.mxu0 %v7284
    %7679 = vmatprep.subr.mxu0 0.0
    %7680 = vmatpush1.msra.mxu0 %v7289
    %7681 = vmatprep.subr.mxu0 0.0
    %7682 = vmatpush1.msra.mxu0 %v7292
    %7683 = vmatprep.subr.mxu0 0.0
    %7684 = vmatpush1.msra.mxu0 %v7297
    %7685 = vmatprep.subr.mxu0 0.0
    %7686 = vmatpush1.msra.mxu0 %v7300
    %7687 = vmatprep.subr.mxu0 0.0
    %7688 = vmatpush1.msra.mxu0 %v7305
    %7689 = vmatprep.subr.mxu0 0.0
    %7690 = vmatpush1.msra.mxu0 %v7308
    %7691 = vmatprep.subr.mxu0 0.0
    %7692 = vmatpush1.msra.mxu0 %v7313
    %7693 = vmatprep.subr.mxu0 0.0
    %7694 = vmatpush1.msra.mxu0 %v7316
    %7695 = vmatprep.subr.mxu0 0.0
    %7696 = vmatpush1.msra.mxu0 %v7321
    %7697 = vmatprep.subr.mxu0 0.0
    %7698 = vmatpush1.msra.mxu0 %v7324
    %7699 = vmatprep.subr.mxu0 0.0
    %7700 = vmatpush1.msra.mxu0 %v7329
    %7701 = vmatprep.subr.mxu0 0.0
    %7702 = vmatpush1.msra.mxu0 %v7332
    %7703 = vmatprep.subr.mxu0 0.0
    %7704 = vmatpush1.msra.mxu0 %v7337
    %7705 = vmatprep.subr.mxu0 0.0
    %7706 = vmatpush1.msra.mxu0 %v7340
    %7707 = vmatprep.subr.mxu0 0.0
    %7708 = vmatpush1.msra.mxu0 %v7345
    %7709 = vmatprep.subr.mxu0 0.0
    %7710 = vmatpush1.msra.mxu0 %v7348
    %7711 = vmatprep.mubr.f32.mxu0 %v7484
    %7712 = vmatmul.mubr.f32.gmra.mrb[0].mxu0 %v7483
    %v7713 = vpop.f32.mrb[0].mxu0
    %v7714 = vadd.f32 %v7639, %v7713
    %v7715 = vpop.f32.mrb[0].mxu0
    %7716 = vmatprep.mubr.f32.mxu0 %v7492
    %7717 = vmatmul.mubr.f32.gmra.mrb[0].mxu0 %v7491
    %v7718 = vpop.f32.mrb[0].mxu0
    %v7719 = vadd.f32 %v7644, %v7718
    %v7720 = vpop.f32.mrb[0].mxu0
    %7721 = vdwg.mxu0
    %7722 = vmatprep.subr.mxu0 0.0
    %7723 = vmatpush1.msra.mxu0 %v7353
    %7724 = vmatprep.subr.mxu0 0.0
    %7725 = vmatpush1.msra.mxu0 %v7356
    %7726 = vmatprep.subr.mxu0 0.0
    %7727 = vmatpush1.msra.mxu0 %v7361
    %7728 = vmatprep.subr.mxu0 0.0
    %7729 = vmatpush1.msra.mxu0 %v7364
    %7730 = vmatprep.subr.mxu0 0.0
    %7731 = vmatpush1.msra.mxu0 %v7369
    %7732 = vmatprep.subr.mxu0 0.0
    %7733 = vmatpush1.msra.mxu0 %v7372
    %7734 = vmatprep.subr.mxu0 0.0
    %7735 = vmatpush1.msra.mxu0 %v7377
    %7736 = vmatprep.subr.mxu0 0.0
    %7737 = vmatpush1.msra.mxu0 %v7380
    %7738 = vmatprep.subr.mxu0 0.0
    %7739 = vmatpush1.msra.mxu0 %v7385
    %7740 = vmatprep.subr.mxu0 0.0
    %7741 = vmatpush1.msra.mxu0 %v7388
    %7742 = vmatprep.subr.mxu0 0.0
    %7743 = vmatpush1.msra.mxu0 %v7393
    %7744 = vmatprep.subr.mxu0 0.0
    %7745 = vmatpush1.msra.mxu0 %v7396
    %7746 = vmatprep.subr.mxu0 0.0
    %7747 = vmatpush1.msra.mxu0 %v7401
    %7748 = vmatprep.subr.mxu0 0.0
    %7749 = vmatpush1.msra.mxu0 %v7404
    %7750 = vmatprep.subr.mxu0 0.0
    %7751 = vmatpush1.msra.mxu0 %v7409
    %7752 = vmatprep.subr.mxu0 0.0
    %7753 = vmatpush1.msra.mxu0 %v7412
    %7754 = vmatprep.subr.mxu0 0.0
    %7755 = vmatpush1.msra.mxu0 %v7417
    %7756 = vmatprep.subr.mxu0 0.0
    %7757 = vmatpush1.msra.mxu0 %v7420
    %7758 = vmatprep.subr.mxu0 0.0
    %7759 = vmatpush1.msra.mxu0 %v7425
    %7760 = vmatprep.subr.mxu0 0.0
    %7761 = vmatpush1.msra.mxu0 %v7428
    %7762 = vmatprep.subr.mxu0 0.0
    %7763 = vmatpush1.msra.mxu0 %v7433
    %7764 = vmatprep.subr.mxu0 0.0
    %7765 = vmatpush1.msra.mxu0 %v7436
    %7766 = vmatprep.subr.mxu0 0.0
    %7767 = vmatpush1.msra.mxu0 %v7441
    %7768 = vmatprep.subr.mxu0 0.0
    %7769 = vmatpush1.msra.mxu0 %v7444
    %7770 = vmatprep.subr.mxu0 0.0
    %7771 = vmatpush1.msra.mxu0 %v7449
    %7772 = vmatprep.subr.mxu0 0.0
    %7773 = vmatpush1.msra.mxu0 %v7452
    %7774 = vmatprep.subr.mxu0 0.0
    %7775 = vmatpush1.msra.mxu0 %v7457
    %7776 = vmatprep.subr.mxu0 0.0
    %7777 = vmatpush1.msra.mxu0 %v7460
    %7778 = vmatprep.subr.mxu0 0.0
    %7779 = vmatpush1.msra.mxu0 %v7465
    %7780 = vmatprep.subr.mxu0 0.0
    %7781 = vmatpush1.msra.mxu0 %v7468
    %7782 = vmatprep.subr.mxu0 0.0
    %7783 = vmatpush1.msra.mxu0 %v7473
    %7784 = vmatprep.subr.mxu0 0.0
    %7785 = vmatpush1.msra.mxu0 %v7476
    %7786 = vmatprep.mubr.f32.mxu0 %v7486
    %7787 = vmatmul.mubr.f32.gmra.mrb[0].mxu0 %v7485
    %v7788 = vpop.f32.mrb[0].mxu0
    %v7789 = vadd.f32 %v7714, %v7788
    %v7790 = vpop.f32.mrb[0].mxu0
    %7791 = vmatprep.mubr.f32.mxu0 %v7494
    %7792 = vmatmul.mubr.f32.gmra.mrb[0].mxu0 %v7493
    %v7793 = vpop.f32.mrb[0].mxu0
    %v7794 = vadd.f32 %v7719, %v7793
    %v7795 = vpop.f32.mrb[0].mxu0
    %7796 = vdwg.mxu0
    %v7797 = vxor.u32 %v7789, 2147483648
    %v7798 = vxor.u32 %v7794, 2147483648
    %v7799 = vmul.f32 %v7797, 1.442695
    %v7800 = vpow.pop %v7799
    %v7801 = vmul.f32 %v7798, 1.442695
    %v7802 = vpow.pop %v7801
    %v7803 = vadd.f32 %v7800, 1.0
    %v7804 = vadd.f32 %v7802, 1.0
    %v7805 = vrcp.pop %v7803
    %v7806 = vmul.f32 1.0, %v7805
    %v7807 = vrcp.pop %v7804
    %v7808 = vmul.f32 1.0, %v7807
    %v7809 = vld [vmem:[%s6] sm:$0xff]
    %v7810 = vld [vmem:[%s6 + $0x8] sm:$0xff]
    %v7811 = vld [vmem:[%s6 + $0x10] sm:$0xff]
    %v7812 = vld [vmem:[%s6 + $0x18] sm:$0xff]
    %v7813 = vld [vmem:[%s6 + $0x20] sm:$0xff]
    %v7814 = vld [vmem:[%s6 + $0x28] sm:$0xff]
    %v7815 = vld [vmem:[%s6 + $0x30] sm:$0xff]
    %v7816 = vld [vmem:[%s6 + $0x38] sm:$0xff]
    %v7817 = vld [vmem:[%s6 + $0x40] sm:$0xff]
    %v7818 = vld [vmem:[%s6 + $0x48] sm:$0xff]
    %v7819 = vld [vmem:[%s6 + $0x50] sm:$0xff]
    %v7820 = vld [vmem:[%s6 + $0x58] sm:$0xff]
    %v7821 = vld [vmem:[%s6 + $0x60] sm:$0xff]
    %v7822 = vld [vmem:[%s6 + $0x68] sm:$0xff]
    %v7823 = vld [vmem:[%s6 + $0x70] sm:$0xff]
    %v7824 = vld [vmem:[%s6 + $0x78] sm:$0xff]
    %v7825 = vld [vmem:[%s6 + $0x80] sm:$0xff]
    %v7826 = vld [vmem:[%s6 + $0x88] sm:$0xff]
    %v7827 = vld [vmem:[%s6 + $0x90] sm:$0xff]
    %v7828 = vld [vmem:[%s6 + $0x98] sm:$0xff]
    %v7829 = vld [vmem:[%s6 + $0xa0] sm:$0xff]
    %v7830 = vld [vmem:[%s6 + $0xa8] sm:$0xff]
    %v7831 = vld [vmem:[%s6 + $0xb0] sm:$0xff]
    %v7832 = vld [vmem:[%s6 + $0xb8] sm:$0xff]
    %v7833 = vld [vmem:[%s6 + $0xc0] sm:$0xff]
    %v7834 = vld [vmem:[%s6 + $0xc8] sm:$0xff]
    %v7835 = vld [vmem:[%s6 + $0xd0] sm:$0xff]
    %v7836 = vld [vmem:[%s6 + $0xd8] sm:$0xff]
    %v7837 = vld [vmem:[%s6 + $0xe0] sm:$0xff]
    %v7838 = vld [vmem:[%s6 + $0xe8] sm:$0xff]
    %v7839 = vld [vmem:[%s6 + $0xf0] sm:$0xff]
    %v7840 = vld [vmem:[%s6 + $0xf8] sm:$0xff]
    %v7841 = vld [vmem:[%s6 + $0x100] sm:$0xff]
    %v7842 = vld [vmem:[%s6 + $0x108] sm:$0xff]
    %v7843 = vld [vmem:[%s6 + $0x110] sm:$0xff]
    %v7844 = vld [vmem:[%s6 + $0x118] sm:$0xff]
    %v7845 = vld [vmem:[%s6 + $0x120] sm:$0xff]
    %v7846 = vld [vmem:[%s6 + $0x128] sm:$0xff]
    %v7847 = vld [vmem:[%s6 + $0x130] sm:$0xff]
    %v7848 = vld [vmem:[%s6 + $0x138] sm:$0xff]
    %v7849 = vld [vmem:[%s6 + $0x140] sm:$0xff]
    %v7850 = vld [vmem:[%s6 + $0x148] sm:$0xff]
    %v7851 = vld [vmem:[%s6 + $0x150] sm:$0xff]
    %v7852 = vld [vmem:[%s6 + $0x158] sm:$0xff]
    %v7853 = vld [vmem:[%s6 + $0x160] sm:$0xff]
    %v7854 = vld [vmem:[%s6 + $0x168] sm:$0xff]
    %v7855 = vld [vmem:[%s6 + $0x170] sm:$0xff]
    %v7856 = vld [vmem:[%s6 + $0x178] sm:$0xff]
    %v7857 = vld [vmem:[%s6 + $0x180] sm:$0xff]
    %v7858 = vld [vmem:[%s6 + $0x188] sm:$0xff]
    %v7859 = vld [vmem:[%s6 + $0x190] sm:$0xff]
    %v7860 = vld [vmem:[%s6 + $0x198] sm:$0xff]
    %v7861 = vld [vmem:[%s6 + $0x1a0] sm:$0xff]
    %v7862 = vld [vmem:[%s6 + $0x1a8] sm:$0xff]
    %v7863 = vld [vmem:[%s6 + $0x1b0] sm:$0xff]
    %v7864 = vld [vmem:[%s6 + $0x1b8] sm:$0xff]
    %v7865 = vld [vmem:[%s6 + $0x1c0] sm:$0xff]
    %v7866 = vld [vmem:[%s6 + $0x1c8] sm:$0xff]
    %v7867 = vld [vmem:[%s6 + $0x1d0] sm:$0xff]
    %v7868 = vld [vmem:[%s6 + $0x1d8] sm:$0xff]
    %v7869 = vld [vmem:[%s6 + $0x1e0] sm:$0xff]
    %v7870 = vld [vmem:[%s6 + $0x1e8] sm:$0xff]
    %v7871 = vld [vmem:[%s6 + $0x1f0] sm:$0xff]
    %v7872 = vld [vmem:[%s6 + $0x1f8] sm:$0xff]
    %v7873 = vld [vmem:[%s6 + $0x200] sm:$0xff]
    %v7874 = vld [vmem:[%s6 + $0x208] sm:$0xff]
    %v7875 = vld [vmem:[%s6 + $0x210] sm:$0xff]
    %v7876 = vld [vmem:[%s6 + $0x218] sm:$0xff]
    %v7877 = vld [vmem:[%s6 + $0x220] sm:$0xff]
    %v7878 = vld [vmem:[%s6 + $0x228] sm:$0xff]
    %v7879 = vld [vmem:[%s6 + $0x230] sm:$0xff]
    %v7880 = vld [vmem:[%s6 + $0x238] sm:$0xff]
    %v7881 = vld [vmem:[%s6 + $0x240] sm:$0xff]
    %v7882 = vld [vmem:[%s6 + $0x248] sm:$0xff]
    %v7883 = vld [vmem:[%s6 + $0x250] sm:$0xff]
    %v7884 = vld [vmem:[%s6 + $0x258] sm:$0xff]
    %v7885 = vld [vmem:[%s6 + $0x260] sm:$0xff]
    %v7886 = vld [vmem:[%s6 + $0x268] sm:$0xff]
    %v7887 = vld [vmem:[%s6 + $0x270] sm:$0xff]
    %v7888 = vld [vmem:[%s6 + $0x278] sm:$0xff]
    %v7889 = vld [vmem:[%s6 + $0x280] sm:$0xff]
    %v7890 = vld [vmem:[%s6 + $0x288] sm:$0xff]
    %v7891 = vld [vmem:[%s6 + $0x290] sm:$0xff]
    %v7892 = vld [vmem:[%s6 + $0x298] sm:$0xff]
    %v7893 = vld [vmem:[%s6 + $0x2a0] sm:$0xff]
    %v7894 = vld [vmem:[%s6 + $0x2a8] sm:$0xff]
    %v7895 = vld [vmem:[%s6 + $0x2b0] sm:$0xff]
    %v7896 = vld [vmem:[%s6 + $0x2b8] sm:$0xff]
    %v7897 = vld [vmem:[%s6 + $0x2c0] sm:$0xff]
    %v7898 = vld [vmem:[%s6 + $0x2c8] sm:$0xff]
    %v7899 = vld [vmem:[%s6 + $0x2d0] sm:$0xff]
    %v7900 = vld [vmem:[%s6 + $0x2d8] sm:$0xff]
    %v7901 = vld [vmem:[%s6 + $0x2e0] sm:$0xff]
    %v7902 = vld [vmem:[%s6 + $0x2e8] sm:$0xff]
    %v7903 = vld [vmem:[%s6 + $0x2f0] sm:$0xff]
    %v7904 = vld [vmem:[%s6 + $0x2f8] sm:$0xff]
    %v7905 = vld [vmem:[%s6 + $0x300] sm:$0xff]
    %v7906 = vld [vmem:[%s6 + $0x308] sm:$0xff]
    %v7907 = vld [vmem:[%s6 + $0x310] sm:$0xff]
    %v7908 = vld [vmem:[%s6 + $0x318] sm:$0xff]
    %v7909 = vld [vmem:[%s6 + $0x320] sm:$0xff]
    %v7910 = vld [vmem:[%s6 + $0x328] sm:$0xff]
    %v7911 = vld [vmem:[%s6 + $0x330] sm:$0xff]
    %v7912 = vld [vmem:[%s6 + $0x338] sm:$0xff]
    %v7913 = vld [vmem:[%s6 + $0x340] sm:$0xff]
    %v7914 = vld [vmem:[%s6 + $0x348] sm:$0xff]
    %v7915 = vld [vmem:[%s6 + $0x350] sm:$0xff]
    %v7916 = vld [vmem:[%s6 + $0x358] sm:$0xff]
    %v7917 = vld [vmem:[%s6 + $0x360] sm:$0xff]
    %v7918 = vld [vmem:[%s6 + $0x368] sm:$0xff]
    %v7919 = vld [vmem:[%s6 + $0x370] sm:$0xff]
    %v7920 = vld [vmem:[%s6 + $0x378] sm:$0xff]
    %v7921 = vld [vmem:[%s6 + $0x380] sm:$0xff]
    %v7922 = vld [vmem:[%s6 + $0x388] sm:$0xff]
    %v7923 = vld [vmem:[%s6 + $0x390] sm:$0xff]
    %v7924 = vld [vmem:[%s6 + $0x398] sm:$0xff]
    %v7925 = vld [vmem:[%s6 + $0x3a0] sm:$0xff]
    %v7926 = vld [vmem:[%s6 + $0x3a8] sm:$0xff]
    %v7927 = vld [vmem:[%s6 + $0x3b0] sm:$0xff]
    %v7928 = vld [vmem:[%s6 + $0x3b8] sm:$0xff]
    %v7929 = vld [vmem:[%s6 + $0x3c0] sm:$0xff]
    %v7930 = vld [vmem:[%s6 + $0x3c8] sm:$0xff]
    %v7931 = vld [vmem:[%s6 + $0x3d0] sm:$0xff]
    %v7932 = vld [vmem:[%s6 + $0x3d8] sm:$0xff]
    %v7933 = vld [vmem:[%s6 + $0x3e0] sm:$0xff]
    %v7934 = vld [vmem:[%s6 + $0x3e8] sm:$0xff]
    %v7935 = vld [vmem:[%s6 + $0x3f0] sm:$0xff]
    %v7936 = vld [vmem:[%s6 + $0x3f8] sm:$0xff]
    %vm7937 = vcmask 130048
    %v7939 = vsel %vm7937, %v7809, 0
    %v7942 = vsel %vm7937, %v7810, 0
    %v7945 = vsel %vm7937, %v7811, 0
    %v7948 = vsel %vm7937, %v7812, 0
    %v7951 = vsel %vm7937, %v7813, 0
    %v7954 = vsel %vm7937, %v7814, 0
    %v7957 = vsel %vm7937, %v7815, 0
    %v7960 = vsel %vm7937, %v7816, 0
    %v7963 = vsel %vm7937, %v7817, 0
    %v7966 = vsel %vm7937, %v7818, 0
    %v7969 = vsel %vm7937, %v7819, 0
    %v7972 = vsel %vm7937, %v7820, 0
    %v7975 = vsel %vm7937, %v7821, 0
    %v7978 = vsel %vm7937, %v7822, 0
    %v7981 = vsel %vm7937, %v7823, 0
    %v7984 = vsel %vm7937, %v7824, 0
    %v7987 = vsel %vm7937, %v7825, 0
    %v7990 = vsel %vm7937, %v7826, 0
    %v7993 = vsel %vm7937, %v7827, 0
    %v7996 = vsel %vm7937, %v7828, 0
    %v7999 = vsel %vm7937, %v7829, 0
    %v8002 = vsel %vm7937, %v7830, 0
    %v8005 = vsel %vm7937, %v7831, 0
    %v8008 = vsel %vm7937, %v7832, 0
    %v8011 = vsel %vm7937, %v7833, 0
    %v8014 = vsel %vm7937, %v7834, 0
    %v8017 = vsel %vm7937, %v7835, 0
    %v8020 = vsel %vm7937, %v7836, 0
    %v8023 = vsel %vm7937, %v7837, 0
    %v8026 = vsel %vm7937, %v7838, 0
    %v8029 = vsel %vm7937, %v7839, 0
    %v8032 = vsel %vm7937, %v7840, 0
    %v8035 = vsel %vm7937, %v7841, 0
    %v8038 = vsel %vm7937, %v7842, 0
    %v8041 = vsel %vm7937, %v7843, 0
    %v8044 = vsel %vm7937, %v7844, 0
    %v8047 = vsel %vm7937, %v7845, 0
    %v8050 = vsel %vm7937, %v7846, 0
    %v8053 = vsel %vm7937, %v7847, 0
    %v8056 = vsel %vm7937, %v7848, 0
    %v8059 = vsel %vm7937, %v7849, 0
    %v8062 = vsel %vm7937, %v7850, 0
    %v8065 = vsel %vm7937, %v7851, 0
    %v8068 = vsel %vm7937, %v7852, 0
    %v8071 = vsel %vm7937, %v7853, 0
    %v8074 = vsel %vm7937, %v7854, 0
    %v8077 = vsel %vm7937, %v7855, 0
    %v8080 = vsel %vm7937, %v7856, 0
    %v8083 = vsel %vm7937, %v7857, 0
    %v8086 = vsel %vm7937, %v7858, 0
    %v8089 = vsel %vm7937, %v7859, 0
    %v8092 = vsel %vm7937, %v7860, 0
    %v8095 = vsel %vm7937, %v7861, 0
    %v8098 = vsel %vm7937, %v7862, 0
    %v8101 = vsel %vm7937, %v7863, 0
    %v8104 = vsel %vm7937, %v7864, 0
    %v8107 = vsel %vm7937, %v7865, 0
    %v8110 = vsel %vm7937, %v7866, 0
    %v8113 = vsel %vm7937, %v7867, 0
    %v8116 = vsel %vm7937, %v7868, 0
    %v8119 = vsel %vm7937, %v7869, 0
    %v8122 = vsel %vm7937, %v7870, 0
    %v8125 = vsel %vm7937, %v7871, 0
    %v8128 = vsel %vm7937, %v7872, 0
    %v8131 = vsel %vm7937, %v7873, 0
    %v8134 = vsel %vm7937, %v7874, 0
    %v8137 = vsel %vm7937, %v7875, 0
    %v8140 = vsel %vm7937, %v7876, 0
    %v8143 = vsel %vm7937, %v7877, 0
    %v8146 = vsel %vm7937, %v7878, 0
    %v8149 = vsel %vm7937, %v7879, 0
    %v8152 = vsel %vm7937, %v7880, 0
    %v8155 = vsel %vm7937, %v7881, 0
    %v8158 = vsel %vm7937, %v7882, 0
    %v8161 = vsel %vm7937, %v7883, 0
    %v8164 = vsel %vm7937, %v7884, 0
    %v8167 = vsel %vm7937, %v7885, 0
    %v8170 = vsel %vm7937, %v7886, 0
    %v8173 = vsel %vm7937, %v7887, 0
    %v8176 = vsel %vm7937, %v7888, 0
    %v8179 = vsel %vm7937, %v7889, 0
    %v8182 = vsel %vm7937, %v7890, 0
    %v8185 = vsel %vm7937, %v7891, 0
    %v8188 = vsel %vm7937, %v7892, 0
    %v8191 = vsel %vm7937, %v7893, 0
    %v8194 = vsel %vm7937, %v7894, 0
    %v8197 = vsel %vm7937, %v7895, 0
    %v8200 = vsel %vm7937, %v7896, 0
    %v8203 = vsel %vm7937, %v7897, 0
    %v8206 = vsel %vm7937, %v7898, 0
    %v8209 = vsel %vm7937, %v7899, 0
    %v8212 = vsel %vm7937, %v7900, 0
    %v8215 = vsel %vm7937, %v7901, 0
    %v8218 = vsel %vm7937, %v7902, 0
    %v8221 = vsel %vm7937, %v7903, 0
    %v8224 = vsel %vm7937, %v7904, 0
    %v8227 = vsel %vm7937, %v7905, 0
    %v8230 = vsel %vm7937, %v7906, 0
    %v8233 = vsel %vm7937, %v7907, 0
    %v8236 = vsel %vm7937, %v7908, 0
    %v8239 = vsel %vm7937, %v7909, 0
    %v8242 = vsel %vm7937, %v7910, 0
    %v8245 = vsel %vm7937, %v7911, 0
    %v8248 = vsel %vm7937, %v7912, 0
    %v8251 = vsel %vm7937, %v7913, 0
    %v8254 = vsel %vm7937, %v7914, 0
    %v8257 = vsel %vm7937, %v7915, 0
    %v8260 = vsel %vm7937, %v7916, 0
    %v8263 = vsel %vm7937, %v7917, 0
    %v8266 = vsel %vm7937, %v7918, 0
    %v8269 = vsel %vm7937, %v7919, 0
    %v8272 = vsel %vm7937, %v7920, 0
    %v8275 = vsel %vm7937, %v7921, 0
    %v8278 = vsel %vm7937, %v7922, 0
    %v8281 = vsel %vm7937, %v7923, 0
    %v8284 = vsel %vm7937, %v7924, 0
    %v8287 = vsel %vm7937, %v7925, 0
    %v8290 = vsel %vm7937, %v7926, 0
    %v8293 = vsel %vm7937, %v7927, 0
    %v8296 = vsel %vm7937, %v7928, 0
    %v8299 = vsel %vm7937, %v7929, 0
    %v8302 = vsel %vm7937, %v7930, 0
    %v8305 = vsel %vm7937, %v7931, 0
    %v8308 = vsel %vm7937, %v7932, 0
    %v8311 = vsel %vm7937, %v7933, 0
    %v8314 = vsel %vm7937, %v7934, 0
    %v8317 = vsel %vm7937, %v7935, 0
    %v8320 = vsel %vm7937, %v7936, 0
    %8322 = vmatprep.subr.mxu0 0.0
    %8323 = vmatpush1.msra.mxu0 %v7806
    %8324 = vmatprep.subr.mxu0 0.0
    %8325 = vmatpush1.msra.mxu0 %v7808
    %8326 = vmatprep.subr.mxu0 0.0
    %8327 = vmatpush1.msra.mxu0 0.0
    %8328 = vmatprep.subr.mxu0 0.0
    %8329 = vmatpush1.msra.mxu0 0.0
    %8330 = vmatprep.subr.mxu0 0.0
    %8331 = vmatpush1.msra.mxu0 0.0
    %8332 = vmatprep.subr.mxu0 0.0
    %8333 = vmatpush1.msra.mxu0 0.0
    %8334 = vmatprep.subr.mxu0 0.0
    %8335 = vmatpush1.msra.mxu0 0.0
    %8336 = vmatprep.subr.mxu0 0.0
    %8337 = vmatpush1.msra.mxu0 0.0
    %8338 = vmatprep.subr.mxu0 0.0
    %8339 = vmatpush1.msra.mxu0 0.0
    %8340 = vmatprep.subr.mxu0 0.0
    %8341 = vmatpush1.msra.mxu0 0.0
    %8342 = vmatprep.subr.mxu0 0.0
    %8343 = vmatpush1.msra.mxu0 0.0
    %8344 = vmatprep.subr.mxu0 0.0
    %8345 = vmatpush1.msra.mxu0 0.0
    %8346 = vmatprep.subr.mxu0 0.0
    %8347 = vmatpush1.msra.mxu0 0.0
    %8348 = vmatprep.subr.mxu0 0.0
    %8349 = vmatpush1.msra.mxu0 0.0
    %8350 = vmatprep.subr.mxu0 0.0
    %8351 = vmatpush1.msra.mxu0 0.0
    %8352 = vmatprep.subr.mxu0 0.0
    %8353 = vmatpush1.msra.mxu0 0.0
    %8354 = vmatprep.subr.mxu0 0.0
    %8355 = vmatpush1.msra.mxu0 0.0
    %8356 = vmatprep.subr.mxu0 0.0
    %8357 = vmatpush1.msra.mxu0 0.0
    %8358 = vmatprep.subr.mxu0 0.0
    %8359 = vmatpush1.msra.mxu0 0.0
    %8360 = vmatprep.subr.mxu0 0.0
    %8361 = vmatpush1.msra.mxu0 0.0
    %8362 = vmatprep.subr.mxu0 0.0
    %8363 = vmatpush1.msra.mxu0 0.0
    %8364 = vmatprep.subr.mxu0 0.0
    %8365 = vmatpush1.msra.mxu0 0.0
    %8366 = vmatprep.subr.mxu0 0.0
    %8367 = vmatpush1.msra.mxu0 0.0
    %8368 = vmatprep.subr.mxu0 0.0
    %8369 = vmatpush1.msra.mxu0 0.0
    %8370 = vmatprep.subr.mxu0 0.0
    %8371 = vmatpush1.msra.mxu0 0.0
    %8372 = vmatprep.subr.mxu0 0.0
    %8373 = vmatpush1.msra.mxu0 0.0
    %8374 = vmatprep.subr.mxu0 0.0
    %8375 = vmatpush1.msra.mxu0 0.0
    %8376 = vmatprep.subr.mxu0 0.0
    %8377 = vmatpush1.msra.mxu0 0.0
    %8378 = vmatprep.subr.mxu0 0.0
    %8379 = vmatpush1.msra.mxu0 0.0
    %8380 = vmatprep.subr.mxu0 0.0
    %8381 = vmatpush1.msra.mxu0 0.0
    %8382 = vmatprep.subr.mxu0 0.0
    %8383 = vmatpush1.msra.mxu0 0.0
    %8384 = vmatprep.subr.mxu0 0.0
    %8385 = vmatpush1.msra.mxu0 0.0
    %8386 = vmatprep.mubr.f32.mxu0 0.0
    %8387 = vmatmul.mubr.f32.gmra.mrb[0].mxu0 %v7939
    %v8388 = vpop.f32.mrb[0].mxu0
    %v8389 = vadd.f32 0.0, %v8388
    %v8390 = vpop.f32.mrb[0].mxu0
    %8391 = vmatprep.mubr.f32.mxu0 0.0
    %8392 = vmatmul.mubr.f32.gmra.mrb[0].mxu0 %v7942
    %v8393 = vpop.f32.mrb[0].mxu0
    %v8394 = vadd.f32 0.0, %v8393
    %v8395 = vpop.f32.mrb[0].mxu0
    %8396 = vmatprep.mubr.f32.mxu0 0.0
    %8397 = vmatmul.mubr.f32.gmra.mrb[0].mxu0 %v7945
    %v8398 = vpop.f32.mrb[0].mxu0
    %v8399 = vadd.f32 0.0, %v8398
    %v8400 = vpop.f32.mrb[0].mxu0
    %8401 = vmatprep.mubr.f32.mxu0 0.0
    %8402 = vmatmul.mubr.f32.gmra.mrb[0].mxu0 %v7948
    %v8403 = vpop.f32.mrb[0].mxu0
    %v8404 = vadd.f32 0.0, %v8403
    %v8405 = vpop.f32.mrb[0].mxu0
    %8406 = vmatprep.mubr.f32.mxu0 0.0
    %8407 = vmatmul.mubr.f32.gmra.mrb[0].mxu0 %v7951
    %v8408 = vpop.f32.mrb[0].mxu0
    %v8409 = vadd.f32 0.0, %v8408
    %v8410 = vpop.f32.mrb[0].mxu0
    %8411 = vmatprep.mubr.f32.mxu0 0.0
    %8412 = vmatmul.mubr.f32.gmra.mrb[0].mxu0 %v7954
    %v8413 = vpop.f32.mrb[0].mxu0
    %v8414 = vadd.f32 0.0, %v8413
    %v8415 = vpop.f32.mrb[0].mxu0
    %8416 = vmatprep.mubr.f32.mxu0 0.0
    %8417 = vmatmul.mubr.f32.gmra.mrb[0].mxu0 %v7957
    %v8418 = vpop.f32.mrb[0].mxu0
    %v8419 = vadd.f32 0.0, %v8418
    %v8420 = vpop.f32.mrb[0].mxu0
    %8421 = vmatprep.mubr.f32.mxu0 0.0
    %8422 = vmatmul.mubr.f32.gmra.mrb[0].mxu0 %v7960
    %v8423 = vpop.f32.mrb[0].mxu0
    %v8424 = vadd.f32 0.0, %v8423
    %v8425 = vpop.f32.mrb[0].mxu0
    %8426 = vmatprep.mubr.f32.mxu0 0.0
    %8427 = vmatmul.mubr.f32.gmra.mrb[0].mxu0 %v7963
    %v8428 = vpop.f32.mrb[0].mxu0
    %v8429 = vadd.f32 0.0, %v8428
    %v8430 = vpop.f32.mrb[0].mxu0
    %8431 = vmatprep.mubr.f32.mxu0 0.0
    %8432 = vmatmul.mubr.f32.gmra.mrb[0].mxu0 %v7966
    %v8433 = vpop.f32.mrb[0].mxu0
    %v8434 = vadd.f32 0.0, %v8433
    %v8435 = vpop.f32.mrb[0].mxu0
    %8436 = vmatprep.mubr.f32.mxu0 0.0
    %8437 = vmatmul.mubr.f32.gmra.mrb[0].mxu0 %v7969
    %v8438 = vpop.f32.mrb[0].mxu0
    %v8439 = vadd.f32 0.0, %v8438
    %v8440 = vpop.f32.mrb[0].mxu0
    %8441 = vmatprep.mubr.f32.mxu0 0.0
    %8442 = vmatmul.mubr.f32.gmra.mrb[0].mxu0 %v7972
    %v8443 = vpop.f32.mrb[0].mxu0
    %v8444 = vadd.f32 0.0, %v8443
    %v8445 = vpop.f32.mrb[0].mxu0
    %8446 = vmatprep.mubr.f32.mxu0 0.0
    %8447 = vmatmul.mubr.f32.gmra.mrb[0].mxu0 %v7975
    %v8448 = vpop.f32.mrb[0].mxu0
    %v8449 = vadd.f32 0.0, %v8448
    %v8450 = vpop.f32.mrb[0].mxu0
    %8451 = vmatprep.mubr.f32.mxu0 0.0
    %8452 = vmatmul.mubr.f32.gmra.mrb[0].mxu0 %v7978
    %v8453 = vpop.f32.mrb[0].mxu0
    %v8454 = vadd.f32 0.0, %v8453
    %v8455 = vpop.f32.mrb[0].mxu0
    %8456 = vmatprep.mubr.f32.mxu0 0.0
    %8457 = vmatmul.mubr.f32.gmra.mrb[0].mxu0 %v7981
    %v8458 = vpop.f32.mrb[0].mxu0
    %v8459 = vadd.f32 0.0, %v8458
    %v8460 = vpop.f32.mrb[0].mxu0
    %8461 = vmatprep.mubr.f32.mxu0 0.0
    %8462 = vmatmul.mubr.f32.gmra.mrb[0].mxu0 %v7984
    %v8463 = vpop.f32.mrb[0].mxu0
    %v8464 = vadd.f32 0.0, %v8463
    %v8465 = vpop.f32.mrb[0].mxu0
    %8466 = vmatprep.mubr.f32.mxu0 0.0
    %8467 = vmatmul.mubr.f32.gmra.mrb[0].mxu0 %v7987
    %v8468 = vpop.f32.mrb[0].mxu0
    %v8469 = vadd.f32 0.0, %v8468
    %v8470 = vpop.f32.mrb[0].mxu0
    %8471 = vmatprep.mubr.f32.mxu0 0.0
    %8472 = vmatmul.mubr.f32.gmra.mrb[0].mxu0 %v7990
    %v8473 = vpop.f32.mrb[0].mxu0
    %v8474 = vadd.f32 0.0, %v8473
    %v8475 = vpop.f32.mrb[0].mxu0
    %8476 = vmatprep.mubr.f32.mxu0 0.0
    %8477 = vmatmul.mubr.f32.gmra.mrb[0].mxu0 %v7993
    %v8478 = vpop.f32.mrb[0].mxu0
    %v8479 = vadd.f32 0.0, %v8478
    %v8480 = vpop.f32.mrb[0].mxu0
    %8481 = vmatprep.mubr.f32.mxu0 0.0
    %8482 = vmatmul.mubr.f32.gmra.mrb[0].mxu0 %v7996
    %v8483 = vpop.f32.mrb[0].mxu0
    %v8484 = vadd.f32 0.0, %v8483
    %v8485 = vpop.f32.mrb[0].mxu0
    %8486 = vmatprep.mubr.f32.mxu0 0.0
    %8487 = vmatmul.mubr.f32.gmra.mrb[0].mxu0 %v7999
    %v8488 = vpop.f32.mrb[0].mxu0
    %v8489 = vadd.f32 0.0, %v8488
    %v8490 = vpop.f32.mrb[0].mxu0
    %8491 = vmatprep.mubr.f32.mxu0 0.0
    %8492 = vmatmul.mubr.f32.gmra.mrb[0].mxu0 %v8002
    %v8493 = vpop.f32.mrb[0].mxu0
    %v8494 = vadd.f32 0.0, %v8493
    %v8495 = vpop.f32.mrb[0].mxu0
    %8496 = vmatprep.mubr.f32.mxu0 0.0
    %8497 = vmatmul.mubr.f32.gmra.mrb[0].mxu0 %v8005
    %v8498 = vpop.f32.mrb[0].mxu0
    %v8499 = vadd.f32 0.0, %v8498
    %v8500 = vpop.f32.mrb[0].mxu0
    %8501 = vmatprep.mubr.f32.mxu0 0.0
    %8502 = vmatmul.mubr.f32.gmra.mrb[0].mxu0 %v8008
    %v8503 = vpop.f32.mrb[0].mxu0
    %v8504 = vadd.f32 0.0, %v8503
    %v8505 = vpop.f32.mrb[0].mxu0
    %8506 = vmatprep.mubr.f32.mxu0 0.0
    %8507 = vmatmul.mubr.f32.gmra.mrb[0].mxu0 %v8011
    %v8508 = vpop.f32.mrb[0].mxu0
    %v8509 = vadd.f32 0.0, %v8508
    %v8510 = vpop.f32.mrb[0].mxu0
    %8511 = vmatprep.mubr.f32.mxu0 0.0
    %8512 = vmatmul.mubr.f32.gmra.mrb[0].mxu0 %v8014
    %v8513 = vpop.f32.mrb[0].mxu0
    %v8514 = vadd.f32 0.0, %v8513
    %v8515 = vpop.f32.mrb[0].mxu0
    %8516 = vmatprep.mubr.f32.mxu0 0.0
    %8517 = vmatmul.mubr.f32.gmra.mrb[0].mxu0 %v8017
    %v8518 = vpop.f32.mrb[0].mxu0
    %v8519 = vadd.f32 0.0, %v8518
    %v8520 = vpop.f32.mrb[0].mxu0
    %8521 = vmatprep.mubr.f32.mxu0 0.0
    %8522 = vmatmul.mubr.f32.gmra.mrb[0].mxu0 %v8020
    %v8523 = vpop.f32.mrb[0].mxu0
    %v8524 = vadd.f32 0.0, %v8523
    %v8525 = vpop.f32.mrb[0].mxu0
    %8526 = vmatprep.mubr.f32.mxu0 0.0
    %8527 = vmatmul.mubr.f32.gmra.mrb[0].mxu0 %v8023
    %v8528 = vpop.f32.mrb[0].mxu0
    %v8529 = vadd.f32 0.0, %v8528
    %v8530 = vpop.f32.mrb[0].mxu0
    %8531 = vmatprep.mubr.f32.mxu0 0.0
    %8532 = vmatmul.mubr.f32.gmra.mrb[0].mxu0 %v8026
    %v8533 = vpop.f32.mrb[0].mxu0
    %v8534 = vadd.f32 0.0, %v8533
    %v8535 = vpop.f32.mrb[0].mxu0
    %8536 = vmatprep.mubr.f32.mxu0 0.0
    %8537 = vmatmul.mubr.f32.gmra.mrb[0].mxu0 %v8029
    %v8538 = vpop.f32.mrb[0].mxu0
    %v8539 = vadd.f32 0.0, %v8538
    %v8540 = vpop.f32.mrb[0].mxu0
    %8541 = vmatprep.mubr.f32.mxu0 0.0
    %8542 = vmatmul.mubr.f32.gmra.mrb[0].mxu0 %v8032
    %v8543 = vpop.f32.mrb[0].mxu0
    %v8544 = vadd.f32 0.0, %v8543
    %v8545 = vpop.f32.mrb[0].mxu0
    %8546 = vmatprep.mubr.f32.mxu0 0.0
    %8547 = vmatmul.mubr.f32.gmra.mrb[0].mxu0 %v8035
    %v8548 = vpop.f32.mrb[0].mxu0
    %v8549 = vadd.f32 0.0, %v8548
    %v8550 = vpop.f32.mrb[0].mxu0
    %8551 = vmatprep.mubr.f32.mxu0 0.0
    %8552 = vmatmul.mubr.f32.gmra.mrb[0].mxu0 %v8038
    %v8553 = vpop.f32.mrb[0].mxu0
    %v8554 = vadd.f32 0.0, %v8553
    %v8555 = vpop.f32.mrb[0].mxu0
    %8556 = vmatprep.mubr.f32.mxu0 0.0
    %8557 = vmatmul.mubr.f32.gmra.mrb[0].mxu0 %v8041
    %v8558 = vpop.f32.mrb[0].mxu0
    %v8559 = vadd.f32 0.0, %v8558
    %v8560 = vpop.f32.mrb[0].mxu0
    %8561 = vmatprep.mubr.f32.mxu0 0.0
    %8562 = vmatmul.mubr.f32.gmra.mrb[0].mxu0 %v8044
    %v8563 = vpop.f32.mrb[0].mxu0
    %v8564 = vadd.f32 0.0, %v8563
    %v8565 = vpop.f32.mrb[0].mxu0
    %8566 = vmatprep.mubr.f32.mxu0 0.0
    %8567 = vmatmul.mubr.f32.gmra.mrb[0].mxu0 %v8047
    %v8568 = vpop.f32.mrb[0].mxu0
    %v8569 = vadd.f32 0.0, %v8568
    %v8570 = vpop.f32.mrb[0].mxu0
    %8571 = vmatprep.mubr.f32.mxu0 0.0
    %8572 = vmatmul.mubr.f32.gmra.mrb[0].mxu0 %v8050
    %v8573 = vpop.f32.mrb[0].mxu0
    %v8574 = vadd.f32 0.0, %v8573
    %v8575 = vpop.f32.mrb[0].mxu0
    %8576 = vmatprep.mubr.f32.mxu0 0.0
    %8577 = vmatmul.mubr.f32.gmra.mrb[0].mxu0 %v8053
    %v8578 = vpop.f32.mrb[0].mxu0
    %v8579 = vadd.f32 0.0, %v8578
    %v8580 = vpop.f32.mrb[0].mxu0
    %8581 = vmatprep.mubr.f32.mxu0 0.0
    %8582 = vmatmul.mubr.f32.gmra.mrb[0].mxu0 %v8056
    %v8583 = vpop.f32.mrb[0].mxu0
    %v8584 = vadd.f32 0.0, %v8583
    %v8585 = vpop.f32.mrb[0].mxu0
    %8586 = vmatprep.mubr.f32.mxu0 0.0
    %8587 = vmatmul.mubr.f32.gmra.mrb[0].mxu0 %v8059
    %v8588 = vpop.f32.mrb[0].mxu0
    %v8589 = vadd.f32 0.0, %v8588
    %v8590 = vpop.f32.mrb[0].mxu0
    %8591 = vmatprep.mubr.f32.mxu0 0.0
    %8592 = vmatmul.mubr.f32.gmra.mrb[0].mxu0 %v8062
    %v8593 = vpop.f32.mrb[0].mxu0
    %v8594 = vadd.f32 0.0, %v8593
    %v8595 = vpop.f32.mrb[0].mxu0
    %8596 = vmatprep.mubr.f32.mxu0 0.0
    %8597 = vmatmul.mubr.f32.gmra.mrb[0].mxu0 %v8065
    %v8598 = vpop.f32.mrb[0].mxu0
    %v8599 = vadd.f32 0.0, %v8598
    %v8600 = vpop.f32.mrb[0].mxu0
    %8601 = vmatprep.mubr.f32.mxu0 0.0
    %8602 = vmatmul.mubr.f32.gmra.mrb[0].mxu0 %v8068
    %v8603 = vpop.f32.mrb[0].mxu0
    %v8604 = vadd.f32 0.0, %v8603
    %v8605 = vpop.f32.mrb[0].mxu0
    %8606 = vmatprep.mubr.f32.mxu0 0.0
    %8607 = vmatmul.mubr.f32.gmra.mrb[0].mxu0 %v8071
    %v8608 = vpop.f32.mrb[0].mxu0
    %v8609 = vadd.f32 0.0, %v8608
    %v8610 = vpop.f32.mrb[0].mxu0
    %8611 = vmatprep.mubr.f32.mxu0 0.0
    %8612 = vmatmul.mubr.f32.gmra.mrb[0].mxu0 %v8074
    %v8613 = vpop.f32.mrb[0].mxu0
    %v8614 = vadd.f32 0.0, %v8613
    %v8615 = vpop.f32.mrb[0].mxu0
    %8616 = vmatprep.mubr.f32.mxu0 0.0
    %8617 = vmatmul.mubr.f32.gmra.mrb[0].mxu0 %v8077
    %v8618 = vpop.f32.mrb[0].mxu0
    %v8619 = vadd.f32 0.0, %v8618
    %v8620 = vpop.f32.mrb[0].mxu0
    %8621 = vmatprep.mubr.f32.mxu0 0.0
    %8622 = vmatmul.mubr.f32.gmra.mrb[0].mxu0 %v8080
    %v8623 = vpop.f32.mrb[0].mxu0
    %v8624 = vadd.f32 0.0, %v8623
    %v8625 = vpop.f32.mrb[0].mxu0
    %8626 = vmatprep.mubr.f32.mxu0 0.0
    %8627 = vmatmul.mubr.f32.gmra.mrb[0].mxu0 %v8083
    %v8628 = vpop.f32.mrb[0].mxu0
    %v8629 = vadd.f32 0.0, %v8628
    %v8630 = vpop.f32.mrb[0].mxu0
    %8631 = vmatprep.mubr.f32.mxu0 0.0
    %8632 = vmatmul.mubr.f32.gmra.mrb[0].mxu0 %v8086
    %v8633 = vpop.f32.mrb[0].mxu0
    %v8634 = vadd.f32 0.0, %v8633
    %v8635 = vpop.f32.mrb[0].mxu0
    %8636 = vmatprep.mubr.f32.mxu0 0.0
    %8637 = vmatmul.mubr.f32.gmra.mrb[0].mxu0 %v8089
    %v8638 = vpop.f32.mrb[0].mxu0
    %v8639 = vadd.f32 0.0, %v8638
    %v8640 = vpop.f32.mrb[0].mxu0
    %8641 = vmatprep.mubr.f32.mxu0 0.0
    %8642 = vmatmul.mubr.f32.gmra.mrb[0].mxu0 %v8092
    %v8643 = vpop.f32.mrb[0].mxu0
    %v8644 = vadd.f32 0.0, %v8643
    %v8645 = vpop.f32.mrb[0].mxu0
    %8646 = vmatprep.mubr.f32.mxu0 0.0
    %8647 = vmatmul.mubr.f32.gmra.mrb[0].mxu0 %v8095
    %v8648 = vpop.f32.mrb[0].mxu0
    %v8649 = vadd.f32 0.0, %v8648
    %v8650 = vpop.f32.mrb[0].mxu0
    %8651 = vmatprep.mubr.f32.mxu0 0.0
    %8652 = vmatmul.mubr.f32.gmra.mrb[0].mxu0 %v8098
    %v8653 = vpop.f32.mrb[0].mxu0
    %v8654 = vadd.f32 0.0, %v8653
    %v8655 = vpop.f32.mrb[0].mxu0
    %8656 = vmatprep.mubr.f32.mxu0 0.0
    %8657 = vmatmul.mubr.f32.gmra.mrb[0].mxu0 %v8101
    %v8658 = vpop.f32.mrb[0].mxu0
    %v8659 = vadd.f32 0.0, %v8658
    %v8660 = vpop.f32.mrb[0].mxu0
    %8661 = vmatprep.mubr.f32.mxu0 0.0
    %8662 = vmatmul.mubr.f32.gmra.mrb[0].mxu0 %v8104
    %v8663 = vpop.f32.mrb[0].mxu0
    %v8664 = vadd.f32 0.0, %v8663
    %v8665 = vpop.f32.mrb[0].mxu0
    %8666 = vmatprep.mubr.f32.mxu0 0.0
    %8667 = vmatmul.mubr.f32.gmra.mrb[0].mxu0 %v8107
    %v8668 = vpop.f32.mrb[0].mxu0
    %v8669 = vadd.f32 0.0, %v8668
    %v8670 = vpop.f32.mrb[0].mxu0
    %8671 = vmatprep.mubr.f32.mxu0 0.0
    %8672 = vmatmul.mubr.f32.gmra.mrb[0].mxu0 %v8110
    %v8673 = vpop.f32.mrb[0].mxu0
    %v8674 = vadd.f32 0.0, %v8673
    %v8675 = vpop.f32.mrb[0].mxu0
    %8676 = vmatprep.mubr.f32.mxu0 0.0
    %8677 = vmatmul.mubr.f32.gmra.mrb[0].mxu0 %v8113
    %v8678 = vpop.f32.mrb[0].mxu0
    %v8679 = vadd.f32 0.0, %v8678
    %v8680 = vpop.f32.mrb[0].mxu0
    %8681 = vmatprep.mubr.f32.mxu0 0.0
    %8682 = vmatmul.mubr.f32.gmra.mrb[0].mxu0 %v8116
    %v8683 = vpop.f32.mrb[0].mxu0
    %v8684 = vadd.f32 0.0, %v8683
    %v8685 = vpop.f32.mrb[0].mxu0
    %8686 = vmatprep.mubr.f32.mxu0 0.0
    %8687 = vmatmul.mubr.f32.gmra.mrb[0].mxu0 %v8119
    %v8688 = vpop.f32.mrb[0].mxu0
    %v8689 = vadd.f32 0.0, %v8688
    %v8690 = vpop.f32.mrb[0].mxu0
    %8691 = vmatprep.mubr.f32.mxu0 0.0
    %8692 = vmatmul.mubr.f32.gmra.mrb[0].mxu0 %v8122
    %v8693 = vpop.f32.mrb[0].mxu0
    %v8694 = vadd.f32 0.0, %v8693
    %v8695 = vpop.f32.mrb[0].mxu0
    %8696 = vmatprep.mubr.f32.mxu0 0.0
    %8697 = vmatmul.mubr.f32.gmra.mrb[0].mxu0 %v8125
    %v8698 = vpop.f32.mrb[0].mxu0
    %v8699 = vadd.f32 0.0, %v8698
    %v8700 = vpop.f32.mrb[0].mxu0
    %8701 = vmatprep.mubr.f32.mxu0 0.0
    %8702 = vmatmul.mubr.f32.gmra.mrb[0].mxu0 %v8128
    %v8703 = vpop.f32.mrb[0].mxu0
    %v8704 = vadd.f32 0.0, %v8703
    %v8705 = vpop.f32.mrb[0].mxu0
    %8706 = vmatprep.mubr.f32.mxu0 0.0
    %8707 = vmatmul.mubr.f32.gmra.mrb[0].mxu0 %v8131
    %v8708 = vpop.f32.mrb[0].mxu0
    %v8709 = vadd.f32 0.0, %v8708
    %v8710 = vpop.f32.mrb[0].mxu0
    %8711 = vmatprep.mubr.f32.mxu0 0.0
    %8712 = vmatmul.mubr.f32.gmra.mrb[0].mxu0 %v8134
    %v8713 = vpop.f32.mrb[0].mxu0
    %v8714 = vadd.f32 0.0, %v8713
    %v8715 = vpop.f32.mrb[0].mxu0
    %8716 = vmatprep.mubr.f32.mxu0 0.0
    %8717 = vmatmul.mubr.f32.gmra.mrb[0].mxu0 %v8137
    %v8718 = vpop.f32.mrb[0].mxu0
    %v8719 = vadd.f32 0.0, %v8718
    %v8720 = vpop.f32.mrb[0].mxu0
    %8721 = vmatprep.mubr.f32.mxu0 0.0
    %8722 = vmatmul.mubr.f32.gmra.mrb[0].mxu0 %v8140
    %v8723 = vpop.f32.mrb[0].mxu0
    %v8724 = vadd.f32 0.0, %v8723
    %v8725 = vpop.f32.mrb[0].mxu0
    %8726 = vmatprep.mubr.f32.mxu0 0.0
    %8727 = vmatmul.mubr.f32.gmra.mrb[0].mxu0 %v8143
    %v8728 = vpop.f32.mrb[0].mxu0
    %v8729 = vadd.f32 0.0, %v8728
    %v8730 = vpop.f32.mrb[0].mxu0
    %8731 = vmatprep.mubr.f32.mxu0 0.0
    %8732 = vmatmul.mubr.f32.gmra.mrb[0].mxu0 %v8146
    %v8733 = vpop.f32.mrb[0].mxu0
    %v8734 = vadd.f32 0.0, %v8733
    %v8735 = vpop.f32.mrb[0].mxu0
    %8736 = vmatprep.mubr.f32.mxu0 0.0
    %8737 = vmatmul.mubr.f32.gmra.mrb[0].mxu0 %v8149
    %v8738 = vpop.f32.mrb[0].mxu0
    %v8739 = vadd.f32 0.0, %v8738
    %v8740 = vpop.f32.mrb[0].mxu0
    %8741 = vmatprep.mubr.f32.mxu0 0.0
    %8742 = vmatmul.mubr.f32.gmra.mrb[0].mxu0 %v8152
    %v8743 = vpop.f32.mrb[0].mxu0
    %v8744 = vadd.f32 0.0, %v8743
    %v8745 = vpop.f32.mrb[0].mxu0
    %8746 = vmatprep.mubr.f32.mxu0 0.0
    %8747 = vmatmul.mubr.f32.gmra.mrb[0].mxu0 %v8155
    %v8748 = vpop.f32.mrb[0].mxu0
    %v8749 = vadd.f32 0.0, %v8748
    %v8750 = vpop.f32.mrb[0].mxu0
    %8751 = vmatprep.mubr.f32.mxu0 0.0
    %8752 = vmatmul.mubr.f32.gmra.mrb[0].mxu0 %v8158
    %v8753 = vpop.f32.mrb[0].mxu0
    %v8754 = vadd.f32 0.0, %v8753
    %v8755 = vpop.f32.mrb[0].mxu0
    %8756 = vmatprep.mubr.f32.mxu0 0.0
    %8757 = vmatmul.mubr.f32.gmra.mrb[0].mxu0 %v8161
    %v8758 = vpop.f32.mrb[0].mxu0
    %v8759 = vadd.f32 0.0, %v8758
    %v8760 = vpop.f32.mrb[0].mxu0
    %8761 = vmatprep.mubr.f32.mxu0 0.0
    %8762 = vmatmul.mubr.f32.gmra.mrb[0].mxu0 %v8164
    %v8763 = vpop.f32.mrb[0].mxu0
    %v8764 = vadd.f32 0.0, %v8763
    %v8765 = vpop.f32.mrb[0].mxu0
    %8766 = vmatprep.mubr.f32.mxu0 0.0
    %8767 = vmatmul.mubr.f32.gmra.mrb[0].mxu0 %v8167
    %v8768 = vpop.f32.mrb[0].mxu0
    %v8769 = vadd.f32 0.0, %v8768
    %v8770 = vpop.f32.mrb[0].mxu0
    %8771 = vmatprep.mubr.f32.mxu0 0.0
    %8772 = vmatmul.mubr.f32.gmra.mrb[0].mxu0 %v8170
    %v8773 = vpop.f32.mrb[0].mxu0
    %v8774 = vadd.f32 0.0, %v8773
    %v8775 = vpop.f32.mrb[0].mxu0
    %8776 = vmatprep.mubr.f32.mxu0 0.0
    %8777 = vmatmul.mubr.f32.gmra.mrb[0].mxu0 %v8173
    %v8778 = vpop.f32.mrb[0].mxu0
    %v8779 = vadd.f32 0.0, %v8778
    %v8780 = vpop.f32.mrb[0].mxu0
    %8781 = vmatprep.mubr.f32.mxu0 0.0
    %8782 = vmatmul.mubr.f32.gmra.mrb[0].mxu0 %v8176
    %v8783 = vpop.f32.mrb[0].mxu0
    %v8784 = vadd.f32 0.0, %v8783
    %v8785 = vpop.f32.mrb[0].mxu0
    %8786 = vmatprep.mubr.f32.mxu0 0.0
    %8787 = vmatmul.mubr.f32.gmra.mrb[0].mxu0 %v8179
    %v8788 = vpop.f32.mrb[0].mxu0
    %v8789 = vadd.f32 0.0, %v8788
    %v8790 = vpop.f32.mrb[0].mxu0
    %8791 = vmatprep.mubr.f32.mxu0 0.0
    %8792 = vmatmul.mubr.f32.gmra.mrb[0].mxu0 %v8182
    %v8793 = vpop.f32.mrb[0].mxu0
    %v8794 = vadd.f32 0.0, %v8793
    %v8795 = vpop.f32.mrb[0].mxu0
    %8796 = vmatprep.mubr.f32.mxu0 0.0
    %8797 = vmatmul.mubr.f32.gmra.mrb[0].mxu0 %v8185
    %v8798 = vpop.f32.mrb[0].mxu0
    %v8799 = vadd.f32 0.0, %v8798
    %v8800 = vpop.f32.mrb[0].mxu0
    %8801 = vmatprep.mubr.f32.mxu0 0.0
    %8802 = vmatmul.mubr.f32.gmra.mrb[0].mxu0 %v8188
    %v8803 = vpop.f32.mrb[0].mxu0
    %v8804 = vadd.f32 0.0, %v8803
    %v8805 = vpop.f32.mrb[0].mxu0
    %8806 = vmatprep.mubr.f32.mxu0 0.0
    %8807 = vmatmul.mubr.f32.gmra.mrb[0].mxu0 %v8191
    %v8808 = vpop.f32.mrb[0].mxu0
    %v8809 = vadd.f32 0.0, %v8808
    %v8810 = vpop.f32.mrb[0].mxu0
    %8811 = vmatprep.mubr.f32.mxu0 0.0
    %8812 = vmatmul.mubr.f32.gmra.mrb[0].mxu0 %v8194
    %v8813 = vpop.f32.mrb[0].mxu0
    %v8814 = vadd.f32 0.0, %v8813
    %v8815 = vpop.f32.mrb[0].mxu0
    %8816 = vmatprep.mubr.f32.mxu0 0.0
    %8817 = vmatmul.mubr.f32.gmra.mrb[0].mxu0 %v8197
    %v8818 = vpop.f32.mrb[0].mxu0
    %v8819 = vadd.f32 0.0, %v8818
    %v8820 = vpop.f32.mrb[0].mxu0
    %8821 = vmatprep.mubr.f32.mxu0 0.0
    %8822 = vmatmul.mubr.f32.gmra.mrb[0].mxu0 %v8200
    %v8823 = vpop.f32.mrb[0].mxu0
    %v8824 = vadd.f32 0.0, %v8823
    %v8825 = vpop.f32.mrb[0].mxu0
    %8826 = vmatprep.mubr.f32.mxu0 0.0
    %8827 = vmatmul.mubr.f32.gmra.mrb[0].mxu0 %v8203
    %v8828 = vpop.f32.mrb[0].mxu0
    %v8829 = vadd.f32 0.0, %v8828
    %v8830 = vpop.f32.mrb[0].mxu0
    %8831 = vmatprep.mubr.f32.mxu0 0.0
    %8832 = vmatmul.mubr.f32.gmra.mrb[0].mxu0 %v8206
    %v8833 = vpop.f32.mrb[0].mxu0
    %v8834 = vadd.f32 0.0, %v8833
    %v8835 = vpop.f32.mrb[0].mxu0
    %8836 = vmatprep.mubr.f32.mxu0 0.0
    %8837 = vmatmul.mubr.f32.gmra.mrb[0].mxu0 %v8209
    %v8838 = vpop.f32.mrb[0].mxu0
    %v8839 = vadd.f32 0.0, %v8838
    %v8840 = vpop.f32.mrb[0].mxu0
    %8841 = vmatprep.mubr.f32.mxu0 0.0
    %8842 = vmatmul.mubr.f32.gmra.mrb[0].mxu0 %v8212
    %v8843 = vpop.f32.mrb[0].mxu0
    %v8844 = vadd.f32 0.0, %v8843
    %v8845 = vpop.f32.mrb[0].mxu0
    %8846 = vmatprep.mubr.f32.mxu0 0.0
    %8847 = vmatmul.mubr.f32.gmra.mrb[0].mxu0 %v8215
    %v8848 = vpop.f32.mrb[0].mxu0
    %v8849 = vadd.f32 0.0, %v8848
    %v8850 = vpop.f32.mrb[0].mxu0
    %8851 = vmatprep.mubr.f32.mxu0 0.0
    %8852 = vmatmul.mubr.f32.gmra.mrb[0].mxu0 %v8218
    %v8853 = vpop.f32.mrb[0].mxu0
    %v8854 = vadd.f32 0.0, %v8853
    %v8855 = vpop.f32.mrb[0].mxu0
    %8856 = vmatprep.mubr.f32.mxu0 0.0
    %8857 = vmatmul.mubr.f32.gmra.mrb[0].mxu0 %v8221
    %v8858 = vpop.f32.mrb[0].mxu0
    %v8859 = vadd.f32 0.0, %v8858
    %v8860 = vpop.f32.mrb[0].mxu0
    %8861 = vmatprep.mubr.f32.mxu0 0.0
    %8862 = vmatmul.mubr.f32.gmra.mrb[0].mxu0 %v8224
    %v8863 = vpop.f32.mrb[0].mxu0
    %v8864 = vadd.f32 0.0, %v8863
    %v8865 = vpop.f32.mrb[0].mxu0
    %8866 = vmatprep.mubr.f32.mxu0 0.0
    %8867 = vmatmul.mubr.f32.gmra.mrb[0].mxu0 %v8227
    %v8868 = vpop.f32.mrb[0].mxu0
    %v8869 = vadd.f32 0.0, %v8868
    %v8870 = vpop.f32.mrb[0].mxu0
    %8871 = vmatprep.mubr.f32.mxu0 0.0
    %8872 = vmatmul.mubr.f32.gmra.mrb[0].mxu0 %v8230
    %v8873 = vpop.f32.mrb[0].mxu0
    %v8874 = vadd.f32 0.0, %v8873
    %v8875 = vpop.f32.mrb[0].mxu0
    %8876 = vmatprep.mubr.f32.mxu0 0.0
    %8877 = vmatmul.mubr.f32.gmra.mrb[0].mxu0 %v8233
    %v8878 = vpop.f32.mrb[0].mxu0
    %v8879 = vadd.f32 0.0, %v8878
    %v8880 = vpop.f32.mrb[0].mxu0
    %8881 = vmatprep.mubr.f32.mxu0 0.0
    %8882 = vmatmul.mubr.f32.gmra.mrb[0].mxu0 %v8236
    %v8883 = vpop.f32.mrb[0].mxu0
    %v8884 = vadd.f32 0.0, %v8883
    %v8885 = vpop.f32.mrb[0].mxu0
    %8886 = vmatprep.mubr.f32.mxu0 0.0
    %8887 = vmatmul.mubr.f32.gmra.mrb[0].mxu0 %v8239
    %v8888 = vpop.f32.mrb[0].mxu0
    %v8889 = vadd.f32 0.0, %v8888
    %v8890 = vpop.f32.mrb[0].mxu0
    %8891 = vmatprep.mubr.f32.mxu0 0.0
    %8892 = vmatmul.mubr.f32.gmra.mrb[0].mxu0 %v8242
    %v8893 = vpop.f32.mrb[0].mxu0
    %v8894 = vadd.f32 0.0, %v8893
    %v8895 = vpop.f32.mrb[0].mxu0
    %8896 = vmatprep.mubr.f32.mxu0 0.0
    %8897 = vmatmul.mubr.f32.gmra.mrb[0].mxu0 %v8245
    %v8898 = vpop.f32.mrb[0].mxu0
    %v8899 = vadd.f32 0.0, %v8898
    %v8900 = vpop.f32.mrb[0].mxu0
    %8901 = vmatprep.mubr.f32.mxu0 0.0
    %8902 = vmatmul.mubr.f32.gmra.mrb[0].mxu0 %v8248
    %v8903 = vpop.f32.mrb[0].mxu0
    %v8904 = vadd.f32 0.0, %v8903
    %v8905 = vpop.f32.mrb[0].mxu0
    %8906 = vmatprep.mubr.f32.mxu0 0.0
    %8907 = vmatmul.mubr.f32.gmra.mrb[0].mxu0 %v8251
    %v8908 = vpop.f32.mrb[0].mxu0
    %v8909 = vadd.f32 0.0, %v8908
    %v8910 = vpop.f32.mrb[0].mxu0
    %8911 = vmatprep.mubr.f32.mxu0 0.0
    %8912 = vmatmul.mubr.f32.gmra.mrb[0].mxu0 %v8254
    %v8913 = vpop.f32.mrb[0].mxu0
    %v8914 = vadd.f32 0.0, %v8913
    %v8915 = vpop.f32.mrb[0].mxu0
    %8916 = vmatprep.mubr.f32.mxu0 0.0
    %8917 = vmatmul.mubr.f32.gmra.mrb[0].mxu0 %v8257
    %v8918 = vpop.f32.mrb[0].mxu0
    %v8919 = vadd.f32 0.0, %v8918
    %v8920 = vpop.f32.mrb[0].mxu0
    %8921 = vmatprep.mubr.f32.mxu0 0.0
    %8922 = vmatmul.mubr.f32.gmra.mrb[0].mxu0 %v8260
    %v8923 = vpop.f32.mrb[0].mxu0
    %v8924 = vadd.f32 0.0, %v8923
    %v8925 = vpop.f32.mrb[0].mxu0
    %8926 = vmatprep.mubr.f32.mxu0 0.0
    %8927 = vmatmul.mubr.f32.gmra.mrb[0].mxu0 %v8263
    %v8928 = vpop.f32.mrb[0].mxu0
    %v8929 = vadd.f32 0.0, %v8928
    %v8930 = vpop.f32.mrb[0].mxu0
    %8931 = vmatprep.mubr.f32.mxu0 0.0
    %8932 = vmatmul.mubr.f32.gmra.mrb[0].mxu0 %v8266
    %v8933 = vpop.f32.mrb[0].mxu0
    %v8934 = vadd.f32 0.0, %v8933
    %v8935 = vpop.f32.mrb[0].mxu0
    %8936 = vmatprep.mubr.f32.mxu0 0.0
    %8937 = vmatmul.mubr.f32.gmra.mrb[0].mxu0 %v8269
    %v8938 = vpop.f32.mrb[0].mxu0
    %v8939 = vadd.f32 0.0, %v8938
    %v8940 = vpop.f32.mrb[0].mxu0
    %8941 = vmatprep.mubr.f32.mxu0 0.0
    %8942 = vmatmul.mubr.f32.gmra.mrb[0].mxu0 %v8272
    %v8943 = vpop.f32.mrb[0].mxu0
    %v8944 = vadd.f32 0.0, %v8943
    %v8945 = vpop.f32.mrb[0].mxu0
    %8946 = vmatprep.mubr.f32.mxu0 0.0
    %8947 = vmatmul.mubr.f32.gmra.mrb[0].mxu0 %v8275
    %v8948 = vpop.f32.mrb[0].mxu0
    %v8949 = vadd.f32 0.0, %v8948
    %v8950 = vpop.f32.mrb[0].mxu0
    %8951 = vmatprep.mubr.f32.mxu0 0.0
    %8952 = vmatmul.mubr.f32.gmra.mrb[0].mxu0 %v8278
    %v8953 = vpop.f32.mrb[0].mxu0
    %v8954 = vadd.f32 0.0, %v8953
    %v8955 = vpop.f32.mrb[0].mxu0
    %8956 = vmatprep.mubr.f32.mxu0 0.0
    %8957 = vmatmul.mubr.f32.gmra.mrb[0].mxu0 %v8281
    %v8958 = vpop.f32.mrb[0].mxu0
    %v8959 = vadd.f32 0.0, %v8958
    %v8960 = vpop.f32.mrb[0].mxu0
    %8961 = vmatprep.mubr.f32.mxu0 0.0
    %8962 = vmatmul.mubr.f32.gmra.mrb[0].mxu0 %v8284
    %v8963 = vpop.f32.mrb[0].mxu0
    %v8964 = vadd.f32 0.0, %v8963
    %v8965 = vpop.f32.mrb[0].mxu0
    %8966 = vmatprep.mubr.f32.mxu0 0.0
    %8967 = vmatmul.mubr.f32.gmra.mrb[0].mxu0 %v8287
    %v8968 = vpop.f32.mrb[0].mxu0
    %v8969 = vadd.f32 0.0, %v8968
    %v8970 = vpop.f32.mrb[0].mxu0
    %8971 = vmatprep.mubr.f32.mxu0 0.0
    %8972 = vmatmul.mubr.f32.gmra.mrb[0].mxu0 %v8290
    %v8973 = vpop.f32.mrb[0].mxu0
    %v8974 = vadd.f32 0.0, %v8973
    %v8975 = vpop.f32.mrb[0].mxu0
    %8976 = vmatprep.mubr.f32.mxu0 0.0
    %8977 = vmatmul.mubr.f32.gmra.mrb[0].mxu0 %v8293
    %v8978 = vpop.f32.mrb[0].mxu0
    %v8979 = vadd.f32 0.0, %v8978
    %v8980 = vpop.f32.mrb[0].mxu0
    %8981 = vmatprep.mubr.f32.mxu0 0.0
    %8982 = vmatmul.mubr.f32.gmra.mrb[0].mxu0 %v8296
    %v8983 = vpop.f32.mrb[0].mxu0
    %v8984 = vadd.f32 0.0, %v8983
    %v8985 = vpop.f32.mrb[0].mxu0
    %8986 = vmatprep.mubr.f32.mxu0 0.0
    %8987 = vmatmul.mubr.f32.gmra.mrb[0].mxu0 %v8299
    %v8988 = vpop.f32.mrb[0].mxu0
    %v8989 = vadd.f32 0.0, %v8988
    %v8990 = vpop.f32.mrb[0].mxu0
    %8991 = vmatprep.mubr.f32.mxu0 0.0
    %8992 = vmatmul.mubr.f32.gmra.mrb[0].mxu0 %v8302
    %v8993 = vpop.f32.mrb[0].mxu0
    %v8994 = vadd.f32 0.0, %v8993
    %v8995 = vpop.f32.mrb[0].mxu0
    %8996 = vmatprep.mubr.f32.mxu0 0.0
    %8997 = vmatmul.mubr.f32.gmra.mrb[0].mxu0 %v8305
    %v8998 = vpop.f32.mrb[0].mxu0
    %v8999 = vadd.f32 0.0, %v8998
    %v9000 = vpop.f32.mrb[0].mxu0
    %9001 = vmatprep.mubr.f32.mxu0 0.0
    %9002 = vmatmul.mubr.f32.gmra.mrb[0].mxu0 %v8308
    %v9003 = vpop.f32.mrb[0].mxu0
    %v9004 = vadd.f32 0.0, %v9003
    %v9005 = vpop.f32.mrb[0].mxu0
    %9006 = vmatprep.mubr.f32.mxu0 0.0
    %9007 = vmatmul.mubr.f32.gmra.mrb[0].mxu0 %v8311
    %v9008 = vpop.f32.mrb[0].mxu0
    %v9009 = vadd.f32 0.0, %v9008
    %v9010 = vpop.f32.mrb[0].mxu0
    %9011 = vmatprep.mubr.f32.mxu0 0.0
    %9012 = vmatmul.mubr.f32.gmra.mrb[0].mxu0 %v8314
    %v9013 = vpop.f32.mrb[0].mxu0
    %v9014 = vadd.f32 0.0, %v9013
    %v9015 = vpop.f32.mrb[0].mxu0
    %9016 = vmatprep.mubr.f32.mxu0 0.0
    %9017 = vmatmul.mubr.f32.gmra.mrb[0].mxu0 %v8317
    %v9018 = vpop.f32.mrb[0].mxu0
    %v9019 = vadd.f32 0.0, %v9018
    %v9020 = vpop.f32.mrb[0].mxu0
    %9021 = vmatprep.mubr.f32.mxu0 0.0
    %9022 = vmatmul.mubr.f32.gmra.mrb[0].mxu0 %v8320
    %v9023 = vpop.f32.mrb[0].mxu0
    %v9024 = vadd.f32 0.0, %v9023
    %v9025 = vpop.f32.mrb[0].mxu0
    %9026 = vdwg.mxu0
    %v9027 = vmul.f32 %v6969, %v8389
    %v9028 = vmul.f32 %v6972, %v8394
    %v9029 = vmul.f32 %v6977, %v8399
    %v9030 = vmul.f32 %v6980, %v8404
    %v9031 = vmul.f32 %v6985, %v8409
    %v9032 = vmul.f32 %v6988, %v8414
    %v9033 = vmul.f32 %v6993, %v8419
    %v9034 = vmul.f32 %v6996, %v8424
    %v9035 = vmul.f32 %v7001, %v8429
    %v9036 = vmul.f32 %v7004, %v8434
    %v9037 = vmul.f32 %v7009, %v8439
    %v9038 = vmul.f32 %v7012, %v8444
    %v9039 = vmul.f32 %v7017, %v8449
    %v9040 = vmul.f32 %v7020, %v8454
    %v9041 = vmul.f32 %v7025, %v8459
    %v9042 = vmul.f32 %v7028, %v8464
    %v9043 = vmul.f32 %v7033, %v8469
    %v9044 = vmul.f32 %v7036, %v8474
    %v9045 = vmul.f32 %v7041, %v8479
    %v9046 = vmul.f32 %v7044, %v8484
    %v9047 = vmul.f32 %v7049, %v8489
    %v9048 = vmul.f32 %v7052, %v8494
    %v9049 = vmul.f32 %v7057, %v8499
    %v9050 = vmul.f32 %v7060, %v8504
    %v9051 = vmul.f32 %v7065, %v8509
    %v9052 = vmul.f32 %v7068, %v8514
    %v9053 = vmul.f32 %v7073, %v8519
    %v9054 = vmul.f32 %v7076, %v8524
    %v9055 = vmul.f32 %v7081, %v8529
    %v9056 = vmul.f32 %v7084, %v8534
    %v9057 = vmul.f32 %v7089, %v8539
    %v9058 = vmul.f32 %v7092, %v8544
    %v9059 = vmul.f32 %v7097, %v8549
    %v9060 = vmul.f32 %v7100, %v8554
    %v9061 = vmul.f32 %v7105, %v8559
    %v9062 = vmul.f32 %v7108, %v8564
    %v9063 = vmul.f32 %v7113, %v8569
    %v9064 = vmul.f32 %v7116, %v8574
    %v9065 = vmul.f32 %v7121, %v8579
    %v9066 = vmul.f32 %v7124, %v8584
    %v9067 = vmul.f32 %v7129, %v8589
    %v9068 = vmul.f32 %v7132, %v8594
    %v9069 = vmul.f32 %v7137, %v8599
    %v9070 = vmul.f32 %v7140, %v8604
    %v9071 = vmul.f32 %v7145, %v8609
    %v9072 = vmul.f32 %v7148, %v8614
    %v9073 = vmul.f32 %v7153, %v8619
    %v9074 = vmul.f32 %v7156, %v8624
    %v9075 = vmul.f32 %v7161, %v8629
    %v9076 = vmul.f32 %v7164, %v8634
    %v9077 = vmul.f32 %v7169, %v8639
    %v9078 = vmul.f32 %v7172, %v8644
    %v9079 = vmul.f32 %v7177, %v8649
    %v9080 = vmul.f32 %v7180, %v8654
    %v9081 = vmul.f32 %v7185, %v8659
    %v9082 = vmul.f32 %v7188, %v8664
    %v9083 = vmul.f32 %v7193, %v8669
    %v9084 = vmul.f32 %v7196, %v8674
    %v9085 = vmul.f32 %v7201, %v8679
    %v9086 = vmul.f32 %v7204, %v8684
    %v9087 = vmul.f32 %v7209, %v8689
    %v9088 = vmul.f32 %v7212, %v8694
    %v9089 = vmul.f32 %v7217, %v8699
    %v9090 = vmul.f32 %v7220, %v8704
    %v9091 = vmul.f32 %v7225, %v8709
    %v9092 = vmul.f32 %v7228, %v8714
    %v9093 = vmul.f32 %v7233, %v8719
    %v9094 = vmul.f32 %v7236, %v8724
    %v9095 = vmul.f32 %v7241, %v8729
    %v9096 = vmul.f32 %v7244, %v8734
    %v9097 = vmul.f32 %v7249, %v8739
    %v9098 = vmul.f32 %v7252, %v8744
    %v9099 = vmul.f32 %v7257, %v8749
    %v9100 = vmul.f32 %v7260, %v8754
    %v9101 = vmul.f32 %v7265, %v8759
    %v9102 = vmul.f32 %v7268, %v8764
    %v9103 = vmul.f32 %v7273, %v8769
    %v9104 = vmul.f32 %v7276, %v8774
    %v9105 = vmul.f32 %v7281, %v8779
    %v9106 = vmul.f32 %v7284, %v8784
    %v9107 = vmul.f32 %v7289, %v8789
    %v9108 = vmul.f32 %v7292, %v8794
    %v9109 = vmul.f32 %v7297, %v8799
    %v9110 = vmul.f32 %v7300, %v8804
    %v9111 = vmul.f32 %v7305, %v8809
    %v9112 = vmul.f32 %v7308, %v8814
    %v9113 = vmul.f32 %v7313, %v8819
    %v9114 = vmul.f32 %v7316, %v8824
    %v9115 = vmul.f32 %v7321, %v8829
    %v9116 = vmul.f32 %v7324, %v8834
    %v9117 = vmul.f32 %v7329, %v8839
    %v9118 = vmul.f32 %v7332, %v8844
    %v9119 = vmul.f32 %v7337, %v8849
    %v9120 = vmul.f32 %v7340, %v8854
    %v9121 = vmul.f32 %v7345, %v8859
    %v9122 = vmul.f32 %v7348, %v8864
    %v9123 = vmul.f32 %v7353, %v8869
    %v9124 = vmul.f32 %v7356, %v8874
    %v9125 = vmul.f32 %v7361, %v8879
    %v9126 = vmul.f32 %v7364, %v8884
    %v9127 = vmul.f32 %v7369, %v8889
    %v9128 = vmul.f32 %v7372, %v8894
    %v9129 = vmul.f32 %v7377, %v8899
    %v9130 = vmul.f32 %v7380, %v8904
    %v9131 = vmul.f32 %v7385, %v8909
    %v9132 = vmul.f32 %v7388, %v8914
    %v9133 = vmul.f32 %v7393, %v8919
    %v9134 = vmul.f32 %v7396, %v8924
    %v9135 = vmul.f32 %v7401, %v8929
    %v9136 = vmul.f32 %v7404, %v8934
    %v9137 = vmul.f32 %v7409, %v8939
    %v9138 = vmul.f32 %v7412, %v8944
    %v9139 = vmul.f32 %v7417, %v8949
    %v9140 = vmul.f32 %v7420, %v8954
    %v9141 = vmul.f32 %v7425, %v8959
    %v9142 = vmul.f32 %v7428, %v8964
    %v9143 = vmul.f32 %v7433, %v8969
    %v9144 = vmul.f32 %v7436, %v8974
    %v9145 = vmul.f32 %v7441, %v8979
    %v9146 = vmul.f32 %v7444, %v8984
    %v9147 = vmul.f32 %v7449, %v8989
    %v9148 = vmul.f32 %v7452, %v8994
    %v9149 = vmul.f32 %v7457, %v8999
    %v9150 = vmul.f32 %v7460, %v9004
    %v9151 = vmul.f32 %v7465, %v9009
    %v9152 = vmul.f32 %v7468, %v9014
    %v9153 = vmul.f32 %v7473, %v9019
    %v9154 = vmul.f32 %v7476, %v9024
    %v9155 = vld [vmem:[%s7] sm:$0xff]
    %v9156 = vld [vmem:[%s7 + $0x8] sm:$0xff]
    %v9157 = vld [vmem:[%s7 + $0x10] sm:$0xff]
    %v9158 = vld [vmem:[%s7 + $0x18] sm:$0xff]
    %v9159 = vld [vmem:[%s7 + $0x20] sm:$0xff]
    %v9160 = vld [vmem:[%s7 + $0x28] sm:$0xff]
    %v9161 = vld [vmem:[%s7 + $0x30] sm:$0xff]
    %v9162 = vld [vmem:[%s7 + $0x38] sm:$0xff]
    %v9163 = vld [vmem:[%s7 + $0x40] sm:$0xff]
    %v9164 = vld [vmem:[%s7 + $0x48] sm:$0xff]
    %v9165 = vld [vmem:[%s7 + $0x50] sm:$0xff]
    %v9166 = vld [vmem:[%s7 + $0x58] sm:$0xff]
    %v9167 = vld [vmem:[%s7 + $0x60] sm:$0xff]
    %v9168 = vld [vmem:[%s7 + $0x68] sm:$0xff]
    %v9169 = vld [vmem:[%s7 + $0x70] sm:$0xff]
    %v9170 = vld [vmem:[%s7 + $0x78] sm:$0xff]
    %v9171 = vld [vmem:[%s7 + $0x80] sm:$0xff]
    %v9172 = vld [vmem:[%s7 + $0x88] sm:$0xff]
    %v9173 = vld [vmem:[%s7 + $0x90] sm:$0xff]
    %v9174 = vld [vmem:[%s7 + $0x98] sm:$0xff]
    %v9175 = vld [vmem:[%s7 + $0xa0] sm:$0xff]
    %v9176 = vld [vmem:[%s7 + $0xa8] sm:$0xff]
    %v9177 = vld [vmem:[%s7 + $0xb0] sm:$0xff]
    %v9178 = vld [vmem:[%s7 + $0xb8] sm:$0xff]
    %v9179 = vld [vmem:[%s7 + $0xc0] sm:$0xff]
    %v9180 = vld [vmem:[%s7 + $0xc8] sm:$0xff]
    %v9181 = vld [vmem:[%s7 + $0xd0] sm:$0xff]
    %v9182 = vld [vmem:[%s7 + $0xd8] sm:$0xff]
    %v9183 = vld [vmem:[%s7 + $0xe0] sm:$0xff]
    %v9184 = vld [vmem:[%s7 + $0xe8] sm:$0xff]
    %v9185 = vld [vmem:[%s7 + $0xf0] sm:$0xff]
    %v9186 = vld [vmem:[%s7 + $0xf8] sm:$0xff]
    %v9187 = vld [vmem:[%s7 + $0x100] sm:$0xff]
    %v9188 = vld [vmem:[%s7 + $0x108] sm:$0xff]
    %v9189 = vld [vmem:[%s7 + $0x110] sm:$0xff]
    %v9190 = vld [vmem:[%s7 + $0x118] sm:$0xff]
    %v9191 = vld [vmem:[%s7 + $0x120] sm:$0xff]
    %v9192 = vld [vmem:[%s7 + $0x128] sm:$0xff]
    %v9193 = vld [vmem:[%s7 + $0x130] sm:$0xff]
    %v9194 = vld [vmem:[%s7 + $0x138] sm:$0xff]
    %v9195 = vld [vmem:[%s7 + $0x140] sm:$0xff]
    %v9196 = vld [vmem:[%s7 + $0x148] sm:$0xff]
    %v9197 = vld [vmem:[%s7 + $0x150] sm:$0xff]
    %v9198 = vld [vmem:[%s7 + $0x158] sm:$0xff]
    %v9199 = vld [vmem:[%s7 + $0x160] sm:$0xff]
    %v9200 = vld [vmem:[%s7 + $0x168] sm:$0xff]
    %v9201 = vld [vmem:[%s7 + $0x170] sm:$0xff]
    %v9202 = vld [vmem:[%s7 + $0x178] sm:$0xff]
    %v9203 = vld [vmem:[%s7 + $0x180] sm:$0xff]
    %v9204 = vld [vmem:[%s7 + $0x188] sm:$0xff]
    %v9205 = vld [vmem:[%s7 + $0x190] sm:$0xff]
    %v9206 = vld [vmem:[%s7 + $0x198] sm:$0xff]
    %v9207 = vld [vmem:[%s7 + $0x1a0] sm:$0xff]
    %v9208 = vld [vmem:[%s7 + $0x1a8] sm:$0xff]
    %v9209 = vld [vmem:[%s7 + $0x1b0] sm:$0xff]
    %v9210 = vld [vmem:[%s7 + $0x1b8] sm:$0xff]
    %v9211 = vld [vmem:[%s7 + $0x1c0] sm:$0xff]
    %v9212 = vld [vmem:[%s7 + $0x1c8] sm:$0xff]
    %v9213 = vld [vmem:[%s7 + $0x1d0] sm:$0xff]
    %v9214 = vld [vmem:[%s7 + $0x1d8] sm:$0xff]
    %v9215 = vld [vmem:[%s7 + $0x1e0] sm:$0xff]
    %v9216 = vld [vmem:[%s7 + $0x1e8] sm:$0xff]
    %v9217 = vld [vmem:[%s7 + $0x1f0] sm:$0xff]
    %v9218 = vld [vmem:[%s7 + $0x1f8] sm:$0xff]
    %v9219 = vld [vmem:[%s7 + $0x200] sm:$0xff]
    %v9220 = vld [vmem:[%s7 + $0x208] sm:$0xff]
    %v9221 = vld [vmem:[%s7 + $0x210] sm:$0xff]
    %v9222 = vld [vmem:[%s7 + $0x218] sm:$0xff]
    %v9223 = vld [vmem:[%s7 + $0x220] sm:$0xff]
    %v9224 = vld [vmem:[%s7 + $0x228] sm:$0xff]
    %v9225 = vld [vmem:[%s7 + $0x230] sm:$0xff]
    %v9226 = vld [vmem:[%s7 + $0x238] sm:$0xff]
    %v9227 = vld [vmem:[%s7 + $0x240] sm:$0xff]
    %v9228 = vld [vmem:[%s7 + $0x248] sm:$0xff]
    %v9229 = vld [vmem:[%s7 + $0x250] sm:$0xff]
    %v9230 = vld [vmem:[%s7 + $0x258] sm:$0xff]
    %v9231 = vld [vmem:[%s7 + $0x260] sm:$0xff]
    %v9232 = vld [vmem:[%s7 + $0x268] sm:$0xff]
    %v9233 = vld [vmem:[%s7 + $0x270] sm:$0xff]
    %v9234 = vld [vmem:[%s7 + $0x278] sm:$0xff]
    %v9235 = vld [vmem:[%s7 + $0x280] sm:$0xff]
    %v9236 = vld [vmem:[%s7 + $0x288] sm:$0xff]
    %v9237 = vld [vmem:[%s7 + $0x290] sm:$0xff]
    %v9238 = vld [vmem:[%s7 + $0x298] sm:$0xff]
    %v9239 = vld [vmem:[%s7 + $0x2a0] sm:$0xff]
    %v9240 = vld [vmem:[%s7 + $0x2a8] sm:$0xff]
    %v9241 = vld [vmem:[%s7 + $0x2b0] sm:$0xff]
    %v9242 = vld [vmem:[%s7 + $0x2b8] sm:$0xff]
    %v9243 = vld [vmem:[%s7 + $0x2c0] sm:$0xff]
    %v9244 = vld [vmem:[%s7 + $0x2c8] sm:$0xff]
    %v9245 = vld [vmem:[%s7 + $0x2d0] sm:$0xff]
    %v9246 = vld [vmem:[%s7 + $0x2d8] sm:$0xff]
    %v9247 = vld [vmem:[%s7 + $0x2e0] sm:$0xff]
    %v9248 = vld [vmem:[%s7 + $0x2e8] sm:$0xff]
    %v9249 = vld [vmem:[%s7 + $0x2f0] sm:$0xff]
    %v9250 = vld [vmem:[%s7 + $0x2f8] sm:$0xff]
    %v9251 = vld [vmem:[%s7 + $0x300] sm:$0xff]
    %v9252 = vld [vmem:[%s7 + $0x308] sm:$0xff]
    %v9253 = vld [vmem:[%s7 + $0x310] sm:$0xff]
    %v9254 = vld [vmem:[%s7 + $0x318] sm:$0xff]
    %v9255 = vld [vmem:[%s7 + $0x320] sm:$0xff]
    %v9256 = vld [vmem:[%s7 + $0x328] sm:$0xff]
    %v9257 = vld [vmem:[%s7 + $0x330] sm:$0xff]
    %v9258 = vld [vmem:[%s7 + $0x338] sm:$0xff]
    %v9259 = vld [vmem:[%s7 + $0x340] sm:$0xff]
    %v9260 = vld [vmem:[%s7 + $0x348] sm:$0xff]
    %v9261 = vld [vmem:[%s7 + $0x350] sm:$0xff]
    %v9262 = vld [vmem:[%s7 + $0x358] sm:$0xff]
    %v9263 = vld [vmem:[%s7 + $0x360] sm:$0xff]
    %v9264 = vld [vmem:[%s7 + $0x368] sm:$0xff]
    %v9265 = vld [vmem:[%s7 + $0x370] sm:$0xff]
    %v9266 = vld [vmem:[%s7 + $0x378] sm:$0xff]
    %v9267 = vld [vmem:[%s7 + $0x380] sm:$0xff]
    %v9268 = vld [vmem:[%s7 + $0x388] sm:$0xff]
    %v9269 = vld [vmem:[%s7 + $0x390] sm:$0xff]
    %v9270 = vld [vmem:[%s7 + $0x398] sm:$0xff]
    %v9271 = vld [vmem:[%s7 + $0x3a0] sm:$0xff]
    %v9272 = vld [vmem:[%s7 + $0x3a8] sm:$0xff]
    %v9273 = vld [vmem:[%s7 + $0x3b0] sm:$0xff]
    %v9274 = vld [vmem:[%s7 + $0x3b8] sm:$0xff]
    %v9275 = vld [vmem:[%s7 + $0x3c0] sm:$0xff]
    %v9276 = vld [vmem:[%s7 + $0x3c8] sm:$0xff]
    %v9277 = vld [vmem:[%s7 + $0x3d0] sm:$0xff]
    %v9278 = vld [vmem:[%s7 + $0x3d8] sm:$0xff]
    %v9279 = vld [vmem:[%s7 + $0x3e0] sm:$0xff]
    %v9280 = vld [vmem:[%s7 + $0x3e8] sm:$0xff]
    %v9281 = vld [vmem:[%s7 + $0x3f0] sm:$0xff]
    %v9282 = vld [vmem:[%s7 + $0x3f8] sm:$0xff]
    %9284 = vset.pattern.permute.xlu0 0
    %9285 = vperm.xlu0 %9284, %v9155
    %v9286 = vpop.permute.xlu0 %9285
    %9289 = vset.pattern.permute.xlu0 0
    %9290 = vperm.xlu0 %9289, %v9156
    %v9291 = vpop.permute.xlu0 %9290
    %9294 = vset.pattern.permute.xlu0 0
    %9295 = vperm.xlu0 %9294, %v9157
    %v9296 = vpop.permute.xlu0 %9295
    %9299 = vset.pattern.permute.xlu0 0
    %9300 = vperm.xlu0 %9299, %v9158
    %v9301 = vpop.permute.xlu0 %9300
    %9304 = vset.pattern.permute.xlu0 0
    %9305 = vperm.xlu0 %9304, %v9159
    %v9306 = vpop.permute.xlu0 %9305
    %9309 = vset.pattern.permute.xlu0 0
    %9310 = vperm.xlu0 %9309, %v9160
    %v9311 = vpop.permute.xlu0 %9310
    %9314 = vset.pattern.permute.xlu0 0
    %9315 = vperm.xlu0 %9314, %v9161
    %v9316 = vpop.permute.xlu0 %9315
    %9319 = vset.pattern.permute.xlu0 0
    %9320 = vperm.xlu0 %9319, %v9162
    %v9321 = vpop.permute.xlu0 %9320
    %9324 = vset.pattern.permute.xlu0 0
    %9325 = vperm.xlu0 %9324, %v9163
    %v9326 = vpop.permute.xlu0 %9325
    %9329 = vset.pattern.permute.xlu0 0
    %9330 = vperm.xlu0 %9329, %v9164
    %v9331 = vpop.permute.xlu0 %9330
    %9334 = vset.pattern.permute.xlu0 0
    %9335 = vperm.xlu0 %9334, %v9165
    %v9336 = vpop.permute.xlu0 %9335
    %9339 = vset.pattern.permute.xlu0 0
    %9340 = vperm.xlu0 %9339, %v9166
    %v9341 = vpop.permute.xlu0 %9340
    %9344 = vset.pattern.permute.xlu0 0
    %9345 = vperm.xlu0 %9344, %v9167
    %v9346 = vpop.permute.xlu0 %9345
    %9349 = vset.pattern.permute.xlu0 0
    %9350 = vperm.xlu0 %9349, %v9168
    %v9351 = vpop.permute.xlu0 %9350
    %9354 = vset.pattern.permute.xlu0 0
    %9355 = vperm.xlu0 %9354, %v9169
    %v9356 = vpop.permute.xlu0 %9355
    %9359 = vset.pattern.permute.xlu0 0
    %9360 = vperm.xlu0 %9359, %v9170
    %v9361 = vpop.permute.xlu0 %9360
    %9364 = vset.pattern.permute.xlu0 0
    %9365 = vperm.xlu0 %9364, %v9171
    %v9366 = vpop.permute.xlu0 %9365
    %9369 = vset.pattern.permute.xlu0 0
    %9370 = vperm.xlu0 %9369, %v9172
    %v9371 = vpop.permute.xlu0 %9370
    %9374 = vset.pattern.permute.xlu0 0
    %9375 = vperm.xlu0 %9374, %v9173
    %v9376 = vpop.permute.xlu0 %9375
    %9379 = vset.pattern.permute.xlu0 0
    %9380 = vperm.xlu0 %9379, %v9174
    %v9381 = vpop.permute.xlu0 %9380
    %9384 = vset.pattern.permute.xlu0 0
    %9385 = vperm.xlu0 %9384, %v9175
    %v9386 = vpop.permute.xlu0 %9385
    %9389 = vset.pattern.permute.xlu0 0
    %9390 = vperm.xlu0 %9389, %v9176
    %v9391 = vpop.permute.xlu0 %9390
    %9394 = vset.pattern.permute.xlu0 0
    %9395 = vperm.xlu0 %9394, %v9177
    %v9396 = vpop.permute.xlu0 %9395
    %9399 = vset.pattern.permute.xlu0 0
    %9400 = vperm.xlu0 %9399, %v9178
    %v9401 = vpop.permute.xlu0 %9400
    %9404 = vset.pattern.permute.xlu0 0
    %9405 = vperm.xlu0 %9404, %v9179
    %v9406 = vpop.permute.xlu0 %9405
    %9409 = vset.pattern.permute.xlu0 0
    %9410 = vperm.xlu0 %9409, %v9180
    %v9411 = vpop.permute.xlu0 %9410
    %9414 = vset.pattern.permute.xlu0 0
    %9415 = vperm.xlu0 %9414, %v9181
    %v9416 = vpop.permute.xlu0 %9415
    %9419 = vset.pattern.permute.xlu0 0
    %9420 = vperm.xlu0 %9419, %v9182
    %v9421 = vpop.permute.xlu0 %9420
    %9424 = vset.pattern.permute.xlu0 0
    %9425 = vperm.xlu0 %9424, %v9183
    %v9426 = vpop.permute.xlu0 %9425
    %9429 = vset.pattern.permute.xlu0 0
    %9430 = vperm.xlu0 %9429, %v9184
    %v9431 = vpop.permute.xlu0 %9430
    %9434 = vset.pattern.permute.xlu0 0
    %9435 = vperm.xlu0 %9434, %v9185
    %v9436 = vpop.permute.xlu0 %9435
    %9439 = vset.pattern.permute.xlu0 0
    %9440 = vperm.xlu0 %9439, %v9186
    %v9441 = vpop.permute.xlu0 %9440
    %9444 = vset.pattern.permute.xlu0 0
    %9445 = vperm.xlu0 %9444, %v9187
    %v9446 = vpop.permute.xlu0 %9445
    %9449 = vset.pattern.permute.xlu0 0
    %9450 = vperm.xlu0 %9449, %v9188
    %v9451 = vpop.permute.xlu0 %9450
    %9454 = vset.pattern.permute.xlu0 0
    %9455 = vperm.xlu0 %9454, %v9189
    %v9456 = vpop.permute.xlu0 %9455
    %9459 = vset.pattern.permute.xlu0 0
    %9460 = vperm.xlu0 %9459, %v9190
    %v9461 = vpop.permute.xlu0 %9460
    %9464 = vset.pattern.permute.xlu0 0
    %9465 = vperm.xlu0 %9464, %v9191
    %v9466 = vpop.permute.xlu0 %9465
    %9469 = vset.pattern.permute.xlu0 0
    %9470 = vperm.xlu0 %9469, %v9192
    %v9471 = vpop.permute.xlu0 %9470
    %9474 = vset.pattern.permute.xlu0 0
    %9475 = vperm.xlu0 %9474, %v9193
    %v9476 = vpop.permute.xlu0 %9475
    %9479 = vset.pattern.permute.xlu0 0
    %9480 = vperm.xlu0 %9479, %v9194
    %v9481 = vpop.permute.xlu0 %9480
    %9484 = vset.pattern.permute.xlu0 0
    %9485 = vperm.xlu0 %9484, %v9195
    %v9486 = vpop.permute.xlu0 %9485
    %9489 = vset.pattern.permute.xlu0 0
    %9490 = vperm.xlu0 %9489, %v9196
    %v9491 = vpop.permute.xlu0 %9490
    %9494 = vset.pattern.permute.xlu0 0
    %9495 = vperm.xlu0 %9494, %v9197
    %v9496 = vpop.permute.xlu0 %9495
    %9499 = vset.pattern.permute.xlu0 0
    %9500 = vperm.xlu0 %9499, %v9198
    %v9501 = vpop.permute.xlu0 %9500
    %9504 = vset.pattern.permute.xlu0 0
    %9505 = vperm.xlu0 %9504, %v9199
    %v9506 = vpop.permute.xlu0 %9505
    %9509 = vset.pattern.permute.xlu0 0
    %9510 = vperm.xlu0 %9509, %v9200
    %v9511 = vpop.permute.xlu0 %9510
    %9514 = vset.pattern.permute.xlu0 0
    %9515 = vperm.xlu0 %9514, %v9201
    %v9516 = vpop.permute.xlu0 %9515
    %9519 = vset.pattern.permute.xlu0 0
    %9520 = vperm.xlu0 %9519, %v9202
    %v9521 = vpop.permute.xlu0 %9520
    %9524 = vset.pattern.permute.xlu0 0
    %9525 = vperm.xlu0 %9524, %v9203
    %v9526 = vpop.permute.xlu0 %9525
    %9529 = vset.pattern.permute.xlu0 0
    %9530 = vperm.xlu0 %9529, %v9204
    %v9531 = vpop.permute.xlu0 %9530
    %9534 = vset.pattern.permute.xlu0 0
    %9535 = vperm.xlu0 %9534, %v9205
    %v9536 = vpop.permute.xlu0 %9535
    %9539 = vset.pattern.permute.xlu0 0
    %9540 = vperm.xlu0 %9539, %v9206
    %v9541 = vpop.permute.xlu0 %9540
    %9544 = vset.pattern.permute.xlu0 0
    %9545 = vperm.xlu0 %9544, %v9207
    %v9546 = vpop.permute.xlu0 %9545
    %9549 = vset.pattern.permute.xlu0 0
    %9550 = vperm.xlu0 %9549, %v9208
    %v9551 = vpop.permute.xlu0 %9550
    %9554 = vset.pattern.permute.xlu0 0
    %9555 = vperm.xlu0 %9554, %v9209
    %v9556 = vpop.permute.xlu0 %9555
    %9559 = vset.pattern.permute.xlu0 0
    %9560 = vperm.xlu0 %9559, %v9210
    %v9561 = vpop.permute.xlu0 %9560
    %9564 = vset.pattern.permute.xlu0 0
    %9565 = vperm.xlu0 %9564, %v9211
    %v9566 = vpop.permute.xlu0 %9565
    %9569 = vset.pattern.permute.xlu0 0
    %9570 = vperm.xlu0 %9569, %v9212
    %v9571 = vpop.permute.xlu0 %9570
    %9574 = vset.pattern.permute.xlu0 0
    %9575 = vperm.xlu0 %9574, %v9213
    %v9576 = vpop.permute.xlu0 %9575
    %9579 = vset.pattern.permute.xlu0 0
    %9580 = vperm.xlu0 %9579, %v9214
    %v9581 = vpop.permute.xlu0 %9580
    %9584 = vset.pattern.permute.xlu0 0
    %9585 = vperm.xlu0 %9584, %v9215
    %v9586 = vpop.permute.xlu0 %9585
    %9589 = vset.pattern.permute.xlu0 0
    %9590 = vperm.xlu0 %9589, %v9216
    %v9591 = vpop.permute.xlu0 %9590
    %9594 = vset.pattern.permute.xlu0 0
    %9595 = vperm.xlu0 %9594, %v9217
    %v9596 = vpop.permute.xlu0 %9595
    %9599 = vset.pattern.permute.xlu0 0
    %9600 = vperm.xlu0 %9599, %v9218
    %v9601 = vpop.permute.xlu0 %9600
    %9604 = vset.pattern.permute.xlu0 0
    %9605 = vperm.xlu0 %9604, %v9219
    %v9606 = vpop.permute.xlu0 %9605
    %9609 = vset.pattern.permute.xlu0 0
    %9610 = vperm.xlu0 %9609, %v9220
    %v9611 = vpop.permute.xlu0 %9610
    %9614 = vset.pattern.permute.xlu0 0
    %9615 = vperm.xlu0 %9614, %v9221
    %v9616 = vpop.permute.xlu0 %9615
    %9619 = vset.pattern.permute.xlu0 0
    %9620 = vperm.xlu0 %9619, %v9222
    %v9621 = vpop.permute.xlu0 %9620
    %9624 = vset.pattern.permute.xlu0 0
    %9625 = vperm.xlu0 %9624, %v9223
    %v9626 = vpop.permute.xlu0 %9625
    %9629 = vset.pattern.permute.xlu0 0
    %9630 = vperm.xlu0 %9629, %v9224
    %v9631 = vpop.permute.xlu0 %9630
    %9634 = vset.pattern.permute.xlu0 0
    %9635 = vperm.xlu0 %9634, %v9225
    %v9636 = vpop.permute.xlu0 %9635
    %9639 = vset.pattern.permute.xlu0 0
    %9640 = vperm.xlu0 %9639, %v9226
    %v9641 = vpop.permute.xlu0 %9640
    %9644 = vset.pattern.permute.xlu0 0
    %9645 = vperm.xlu0 %9644, %v9227
    %v9646 = vpop.permute.xlu0 %9645
    %9649 = vset.pattern.permute.xlu0 0
    %9650 = vperm.xlu0 %9649, %v9228
    %v9651 = vpop.permute.xlu0 %9650
    %9654 = vset.pattern.permute.xlu0 0
    %9655 = vperm.xlu0 %9654, %v9229
    %v9656 = vpop.permute.xlu0 %9655
    %9659 = vset.pattern.permute.xlu0 0
    %9660 = vperm.xlu0 %9659, %v9230
    %v9661 = vpop.permute.xlu0 %9660
    %9664 = vset.pattern.permute.xlu0 0
    %9665 = vperm.xlu0 %9664, %v9231
    %v9666 = vpop.permute.xlu0 %9665
    %9669 = vset.pattern.permute.xlu0 0
    %9670 = vperm.xlu0 %9669, %v9232
    %v9671 = vpop.permute.xlu0 %9670
    %9674 = vset.pattern.permute.xlu0 0
    %9675 = vperm.xlu0 %9674, %v9233
    %v9676 = vpop.permute.xlu0 %9675
    %9679 = vset.pattern.permute.xlu0 0
    %9680 = vperm.xlu0 %9679, %v9234
    %v9681 = vpop.permute.xlu0 %9680
    %9684 = vset.pattern.permute.xlu0 0
    %9685 = vperm.xlu0 %9684, %v9235
    %v9686 = vpop.permute.xlu0 %9685
    %9689 = vset.pattern.permute.xlu0 0
    %9690 = vperm.xlu0 %9689, %v9236
    %v9691 = vpop.permute.xlu0 %9690
    %9694 = vset.pattern.permute.xlu0 0
    %9695 = vperm.xlu0 %9694, %v9237
    %v9696 = vpop.permute.xlu0 %9695
    %9699 = vset.pattern.permute.xlu0 0
    %9700 = vperm.xlu0 %9699, %v9238
    %v9701 = vpop.permute.xlu0 %9700
    %9704 = vset.pattern.permute.xlu0 0
    %9705 = vperm.xlu0 %9704, %v9239
    %v9706 = vpop.permute.xlu0 %9705
    %9709 = vset.pattern.permute.xlu0 0
    %9710 = vperm.xlu0 %9709, %v9240
    %v9711 = vpop.permute.xlu0 %9710
    %9714 = vset.pattern.permute.xlu0 0
    %9715 = vperm.xlu0 %9714, %v9241
    %v9716 = vpop.permute.xlu0 %9715
    %9719 = vset.pattern.permute.xlu0 0
    %9720 = vperm.xlu0 %9719, %v9242
    %v9721 = vpop.permute.xlu0 %9720
    %9724 = vset.pattern.permute.xlu0 0
    %9725 = vperm.xlu0 %9724, %v9243
    %v9726 = vpop.permute.xlu0 %9725
    %9729 = vset.pattern.permute.xlu0 0
    %9730 = vperm.xlu0 %9729, %v9244
    %v9731 = vpop.permute.xlu0 %9730
    %9734 = vset.pattern.permute.xlu0 0
    %9735 = vperm.xlu0 %9734, %v9245
    %v9736 = vpop.permute.xlu0 %9735
    %9739 = vset.pattern.permute.xlu0 0
    %9740 = vperm.xlu0 %9739, %v9246
    %v9741 = vpop.permute.xlu0 %9740
    %9744 = vset.pattern.permute.xlu0 0
    %9745 = vperm.xlu0 %9744, %v9247
    %v9746 = vpop.permute.xlu0 %9745
    %9749 = vset.pattern.permute.xlu0 0
    %9750 = vperm.xlu0 %9749, %v9248
    %v9751 = vpop.permute.xlu0 %9750
    %9754 = vset.pattern.permute.xlu0 0
    %9755 = vperm.xlu0 %9754, %v9249
    %v9756 = vpop.permute.xlu0 %9755
    %9759 = vset.pattern.permute.xlu0 0
    %9760 = vperm.xlu0 %9759, %v9250
    %v9761 = vpop.permute.xlu0 %9760
    %9764 = vset.pattern.permute.xlu0 0
    %9765 = vperm.xlu0 %9764, %v9251
    %v9766 = vpop.permute.xlu0 %9765
    %9769 = vset.pattern.permute.xlu0 0
    %9770 = vperm.xlu0 %9769, %v9252
    %v9771 = vpop.permute.xlu0 %9770
    %9774 = vset.pattern.permute.xlu0 0
    %9775 = vperm.xlu0 %9774, %v9253
    %v9776 = vpop.permute.xlu0 %9775
    %9779 = vset.pattern.permute.xlu0 0
    %9780 = vperm.xlu0 %9779, %v9254
    %v9781 = vpop.permute.xlu0 %9780
    %9784 = vset.pattern.permute.xlu0 0
    %9785 = vperm.xlu0 %9784, %v9255
    %v9786 = vpop.permute.xlu0 %9785
    %9789 = vset.pattern.permute.xlu0 0
    %9790 = vperm.xlu0 %9789, %v9256
    %v9791 = vpop.permute.xlu0 %9790
    %9794 = vset.pattern.permute.xlu0 0
    %9795 = vperm.xlu0 %9794, %v9257
    %v9796 = vpop.permute.xlu0 %9795
    %9799 = vset.pattern.permute.xlu0 0
    %9800 = vperm.xlu0 %9799, %v9258
    %v9801 = vpop.permute.xlu0 %9800
    %9804 = vset.pattern.permute.xlu0 0
    %9805 = vperm.xlu0 %9804, %v9259
    %v9806 = vpop.permute.xlu0 %9805
    %9809 = vset.pattern.permute.xlu0 0
    %9810 = vperm.xlu0 %9809, %v9260
    %v9811 = vpop.permute.xlu0 %9810
    %9814 = vset.pattern.permute.xlu0 0
    %9815 = vperm.xlu0 %9814, %v9261
    %v9816 = vpop.permute.xlu0 %9815
    %9819 = vset.pattern.permute.xlu0 0
    %9820 = vperm.xlu0 %9819, %v9262
    %v9821 = vpop.permute.xlu0 %9820
    %9824 = vset.pattern.permute.xlu0 0
    %9825 = vperm.xlu0 %9824, %v9263
    %v9826 = vpop.permute.xlu0 %9825
    %9829 = vset.pattern.permute.xlu0 0
    %9830 = vperm.xlu0 %9829, %v9264
    %v9831 = vpop.permute.xlu0 %9830
    %9834 = vset.pattern.permute.xlu0 0
    %9835 = vperm.xlu0 %9834, %v9265
    %v9836 = vpop.permute.xlu0 %9835
    %9839 = vset.pattern.permute.xlu0 0
    %9840 = vperm.xlu0 %9839, %v9266
    %v9841 = vpop.permute.xlu0 %9840
    %9844 = vset.pattern.permute.xlu0 0
    %9845 = vperm.xlu0 %9844, %v9267
    %v9846 = vpop.permute.xlu0 %9845
    %9849 = vset.pattern.permute.xlu0 0
    %9850 = vperm.xlu0 %9849, %v9268
    %v9851 = vpop.permute.xlu0 %9850
    %9854 = vset.pattern.permute.xlu0 0
    %9855 = vperm.xlu0 %9854, %v9269
    %v9856 = vpop.permute.xlu0 %9855
    %9859 = vset.pattern.permute.xlu0 0
    %9860 = vperm.xlu0 %9859, %v9270
    %v9861 = vpop.permute.xlu0 %9860
    %9864 = vset.pattern.permute.xlu0 0
    %9865 = vperm.xlu0 %9864, %v9271
    %v9866 = vpop.permute.xlu0 %9865
    %9869 = vset.pattern.permute.xlu0 0
    %9870 = vperm.xlu0 %9869, %v9272
    %v9871 = vpop.permute.xlu0 %9870
    %9874 = vset.pattern.permute.xlu0 0
    %9875 = vperm.xlu0 %9874, %v9273
    %v9876 = vpop.permute.xlu0 %9875
    %9879 = vset.pattern.permute.xlu0 0
    %9880 = vperm.xlu0 %9879, %v9274
    %v9881 = vpop.permute.xlu0 %9880
    %9884 = vset.pattern.permute.xlu0 0
    %9885 = vperm.xlu0 %9884, %v9275
    %v9886 = vpop.permute.xlu0 %9885
    %9889 = vset.pattern.permute.xlu0 0
    %9890 = vperm.xlu0 %9889, %v9276
    %v9891 = vpop.permute.xlu0 %9890
    %9894 = vset.pattern.permute.xlu0 0
    %9895 = vperm.xlu0 %9894, %v9277
    %v9896 = vpop.permute.xlu0 %9895
    %9899 = vset.pattern.permute.xlu0 0
    %9900 = vperm.xlu0 %9899, %v9278
    %v9901 = vpop.permute.xlu0 %9900
    %9904 = vset.pattern.permute.xlu0 0
    %9905 = vperm.xlu0 %9904, %v9279
    %v9906 = vpop.permute.xlu0 %9905
    %9909 = vset.pattern.permute.xlu0 0
    %9910 = vperm.xlu0 %9909, %v9280
    %v9911 = vpop.permute.xlu0 %9910
    %9914 = vset.pattern.permute.xlu0 0
    %9915 = vperm.xlu0 %9914, %v9281
    %v9916 = vpop.permute.xlu0 %9915
    %9919 = vset.pattern.permute.xlu0 0
    %9920 = vperm.xlu0 %9919, %v9282
    %v9921 = vpop.permute.xlu0 %9920
    %v9923 = vadd.f32 %v9027, %v9286
    %v9924 = vadd.f32 %v9028, %v9291
    %v9925 = vadd.f32 %v9029, %v9296
    %v9926 = vadd.f32 %v9030, %v9301
    %v9927 = vadd.f32 %v9031, %v9306
    %v9928 = vadd.f32 %v9032, %v9311
    %v9929 = vadd.f32 %v9033, %v9316
    %v9930 = vadd.f32 %v9034, %v9321
    %v9931 = vadd.f32 %v9035, %v9326
    %v9932 = vadd.f32 %v9036, %v9331
    %v9933 = vadd.f32 %v9037, %v9336
    %v9934 = vadd.f32 %v9038, %v9341
    %v9935 = vadd.f32 %v9039, %v9346
    %v9936 = vadd.f32 %v9040, %v9351
    %v9937 = vadd.f32 %v9041, %v9356
    %v9938 = vadd.f32 %v9042, %v9361
    %v9939 = vadd.f32 %v9043, %v9366
    %v9940 = vadd.f32 %v9044, %v9371
    %v9941 = vadd.f32 %v9045, %v9376
    %v9942 = vadd.f32 %v9046, %v9381
    %v9943 = vadd.f32 %v9047, %v9386
    %v9944 = vadd.f32 %v9048, %v9391
    %v9945 = vadd.f32 %v9049, %v9396
    %v9946 = vadd.f32 %v9050, %v9401
    %v9947 = vadd.f32 %v9051, %v9406
    %v9948 = vadd.f32 %v9052, %v9411
    %v9949 = vadd.f32 %v9053, %v9416
    %v9950 = vadd.f32 %v9054, %v9421
    %v9951 = vadd.f32 %v9055, %v9426
    %v9952 = vadd.f32 %v9056, %v9431
    %v9953 = vadd.f32 %v9057, %v9436
    %v9954 = vadd.f32 %v9058, %v9441
    %v9955 = vadd.f32 %v9059, %v9446
    %v9956 = vadd.f32 %v9060, %v9451
    %v9957 = vadd.f32 %v9061, %v9456
    %v9958 = vadd.f32 %v9062, %v9461
    %v9959 = vadd.f32 %v9063, %v9466
    %v9960 = vadd.f32 %v9064, %v9471
    %v9961 = vadd.f32 %v9065, %v9476
    %v9962 = vadd.f32 %v9066, %v9481
    %v9963 = vadd.f32 %v9067, %v9486
    %v9964 = vadd.f32 %v9068, %v9491
    %v9965 = vadd.f32 %v9069, %v9496
    %v9966 = vadd.f32 %v9070, %v9501
    %v9967 = vadd.f32 %v9071, %v9506
    %v9968 = vadd.f32 %v9072, %v9511
    %v9969 = vadd.f32 %v9073, %v9516
    %v9970 = vadd.f32 %v9074, %v9521
    %v9971 = vadd.f32 %v9075, %v9526
    %v9972 = vadd.f32 %v9076, %v9531
    %v9973 = vadd.f32 %v9077, %v9536
    %v9974 = vadd.f32 %v9078, %v9541
    %v9975 = vadd.f32 %v9079, %v9546
    %v9976 = vadd.f32 %v9080, %v9551
    %v9977 = vadd.f32 %v9081, %v9556
    %v9978 = vadd.f32 %v9082, %v9561
    %v9979 = vadd.f32 %v9083, %v9566
    %v9980 = vadd.f32 %v9084, %v9571
    %v9981 = vadd.f32 %v9085, %v9576
    %v9982 = vadd.f32 %v9086, %v9581
    %v9983 = vadd.f32 %v9087, %v9586
    %v9984 = vadd.f32 %v9088, %v9591
    %v9985 = vadd.f32 %v9089, %v9596
    %v9986 = vadd.f32 %v9090, %v9601
    %v9987 = vadd.f32 %v9091, %v9606
    %v9988 = vadd.f32 %v9092, %v9611
    %v9989 = vadd.f32 %v9093, %v9616
    %v9990 = vadd.f32 %v9094, %v9621
    %v9991 = vadd.f32 %v9095, %v9626
    %v9992 = vadd.f32 %v9096, %v9631
    %v9993 = vadd.f32 %v9097, %v9636
    %v9994 = vadd.f32 %v9098, %v9641
    %v9995 = vadd.f32 %v9099, %v9646
    %v9996 = vadd.f32 %v9100, %v9651
    %v9997 = vadd.f32 %v9101, %v9656
    %v9998 = vadd.f32 %v9102, %v9661
    %v9999 = vadd.f32 %v9103, %v9666
    %v10000 = vadd.f32 %v9104, %v9671
    %v10001 = vadd.f32 %v9105, %v9676
    %v10002 = vadd.f32 %v9106, %v9681
    %v10003 = vadd.f32 %v9107, %v9686
    %v10004 = vadd.f32 %v9108, %v9691
    %v10005 = vadd.f32 %v9109, %v9696
    %v10006 = vadd.f32 %v9110, %v9701
    %v10007 = vadd.f32 %v9111, %v9706
    %v10008 = vadd.f32 %v9112, %v9711
    %v10009 = vadd.f32 %v9113, %v9716
    %v10010 = vadd.f32 %v9114, %v9721
    %v10011 = vadd.f32 %v9115, %v9726
    %v10012 = vadd.f32 %v9116, %v9731
    %v10013 = vadd.f32 %v9117, %v9736
    %v10014 = vadd.f32 %v9118, %v9741
    %v10015 = vadd.f32 %v9119, %v9746
    %v10016 = vadd.f32 %v9120, %v9751
    %v10017 = vadd.f32 %v9121, %v9756
    %v10018 = vadd.f32 %v9122, %v9761
    %v10019 = vadd.f32 %v9123, %v9766
    %v10020 = vadd.f32 %v9124, %v9771
    %v10021 = vadd.f32 %v9125, %v9776
    %v10022 = vadd.f32 %v9126, %v9781
    %v10023 = vadd.f32 %v9127, %v9786
    %v10024 = vadd.f32 %v9128, %v9791
    %v10025 = vadd.f32 %v9129, %v9796
    %v10026 = vadd.f32 %v9130, %v9801
    %v10027 = vadd.f32 %v9131, %v9806
    %v10028 = vadd.f32 %v9132, %v9811
    %v10029 = vadd.f32 %v9133, %v9816
    %v10030 = vadd.f32 %v9134, %v9821
    %v10031 = vadd.f32 %v9135, %v9826
    %v10032 = vadd.f32 %v9136, %v9831
    %v10033 = vadd.f32 %v9137, %v9836
    %v10034 = vadd.f32 %v9138, %v9841
    %v10035 = vadd.f32 %v9139, %v9846
    %v10036 = vadd.f32 %v9140, %v9851
    %v10037 = vadd.f32 %v9141, %v9856
    %v10038 = vadd.f32 %v9142, %v9861
    %v10039 = vadd.f32 %v9143, %v9866
    %v10040 = vadd.f32 %v9144, %v9871
    %v10041 = vadd.f32 %v9145, %v9876
    %v10042 = vadd.f32 %v9146, %v9881
    %v10043 = vadd.f32 %v9147, %v9886
    %v10044 = vadd.f32 %v9148, %v9891
    %v10045 = vadd.f32 %v9149, %v9896
    %v10046 = vadd.f32 %v9150, %v9901
    %v10047 = vadd.f32 %v9151, %v9906
    %v10048 = vadd.f32 %v9152, %v9911
    %v10049 = vadd.f32 %v9153, %v9916
    %v10050 = vadd.f32 %v9154, %v9921
    %v10051 = vxor.u32 %v9923, 2147483648
    %v10052 = vxor.u32 %v9924, 2147483648
    %v10053 = vxor.u32 %v9925, 2147483648
    %v10054 = vxor.u32 %v9926, 2147483648
    %v10055 = vxor.u32 %v9927, 2147483648
    %v10056 = vxor.u32 %v9928, 2147483648
    %v10057 = vxor.u32 %v9929, 2147483648
    %v10058 = vxor.u32 %v9930, 2147483648
    %v10059 = vxor.u32 %v9931, 2147483648
    %v10060 = vxor.u32 %v9932, 2147483648
    %v10061 = vxor.u32 %v9933, 2147483648
    %v10062 = vxor.u32 %v9934, 2147483648
    %v10063 = vxor.u32 %v9935, 2147483648
    %v10064 = vxor.u32 %v9936, 2147483648
    %v10065 = vxor.u32 %v9937, 2147483648
    %v10066 = vxor.u32 %v9938, 2147483648
    %v10067 = vxor.u32 %v9939, 2147483648
    %v10068 = vxor.u32 %v9940, 2147483648
    %v10069 = vxor.u32 %v9941, 2147483648
    %v10070 = vxor.u32 %v9942, 2147483648
    %v10071 = vxor.u32 %v9943, 2147483648
    %v10072 = vxor.u32 %v9944, 2147483648
    %v10073 = vxor.u32 %v9945, 2147483648
    %v10074 = vxor.u32 %v9946, 2147483648
    %v10075 = vxor.u32 %v9947, 2147483648
    %v10076 = vxor.u32 %v9948, 2147483648
    %v10077 = vxor.u32 %v9949, 2147483648
    %v10078 = vxor.u32 %v9950, 2147483648
    %v10079 = vxor.u32 %v9951, 2147483648
    %v10080 = vxor.u32 %v9952, 2147483648
    %v10081 = vxor.u32 %v9953, 2147483648
    %v10082 = vxor.u32 %v9954, 2147483648
    %v10083 = vxor.u32 %v9955, 2147483648
    %v10084 = vxor.u32 %v9956, 2147483648
    %v10085 = vxor.u32 %v9957, 2147483648
    %v10086 = vxor.u32 %v9958, 2147483648
    %v10087 = vxor.u32 %v9959, 2147483648
    %v10088 = vxor.u32 %v9960, 2147483648
    %v10089 = vxor.u32 %v9961, 2147483648
    %v10090 = vxor.u32 %v9962, 2147483648
    %v10091 = vxor.u32 %v9963, 2147483648
    %v10092 = vxor.u32 %v9964, 2147483648
    %v10093 = vxor.u32 %v9965, 2147483648
    %v10094 = vxor.u32 %v9966, 2147483648
    %v10095 = vxor.u32 %v9967, 2147483648
    %v10096 = vxor.u32 %v9968, 2147483648
    %v10097 = vxor.u32 %v9969, 2147483648
    %v10098 = vxor.u32 %v9970, 2147483648
    %v10099 = vxor.u32 %v9971, 2147483648
    %v10100 = vxor.u32 %v9972, 2147483648
    %v10101 = vxor.u32 %v9973, 2147483648
    %v10102 = vxor.u32 %v9974, 2147483648
    %v10103 = vxor.u32 %v9975, 2147483648
    %v10104 = vxor.u32 %v9976, 2147483648
    %v10105 = vxor.u32 %v9977, 2147483648
    %v10106 = vxor.u32 %v9978, 2147483648
    %v10107 = vxor.u32 %v9979, 2147483648
    %v10108 = vxor.u32 %v9980, 2147483648
    %v10109 = vxor.u32 %v9981, 2147483648
    %v10110 = vxor.u32 %v9982, 2147483648
    %v10111 = vxor.u32 %v9983, 2147483648
    %v10112 = vxor.u32 %v9984, 2147483648
    %v10113 = vxor.u32 %v9985, 2147483648
    %v10114 = vxor.u32 %v9986, 2147483648
    %v10115 = vxor.u32 %v9987, 2147483648
    %v10116 = vxor.u32 %v9988, 2147483648
    %v10117 = vxor.u32 %v9989, 2147483648
    %v10118 = vxor.u32 %v9990, 2147483648
    %v10119 = vxor.u32 %v9991, 2147483648
    %v10120 = vxor.u32 %v9992, 2147483648
    %v10121 = vxor.u32 %v9993, 2147483648
    %v10122 = vxor.u32 %v9994, 2147483648
    %v10123 = vxor.u32 %v9995, 2147483648
    %v10124 = vxor.u32 %v9996, 2147483648
    %v10125 = vxor.u32 %v9997, 2147483648
    %v10126 = vxor.u32 %v9998, 2147483648
    %v10127 = vxor.u32 %v9999, 2147483648
    %v10128 = vxor.u32 %v10000, 2147483648
    %v10129 = vxor.u32 %v10001, 2147483648
    %v10130 = vxor.u32 %v10002, 2147483648
    %v10131 = vxor.u32 %v10003, 2147483648
    %v10132 = vxor.u32 %v10004, 2147483648
    %v10133 = vxor.u32 %v10005, 2147483648
    %v10134 = vxor.u32 %v10006, 2147483648
    %v10135 = vxor.u32 %v10007, 2147483648
    %v10136 = vxor.u32 %v10008, 2147483648
    %v10137 = vxor.u32 %v10009, 2147483648
    %v10138 = vxor.u32 %v10010, 2147483648
    %v10139 = vxor.u32 %v10011, 2147483648
    %v10140 = vxor.u32 %v10012, 2147483648
    %v10141 = vxor.u32 %v10013, 2147483648
    %v10142 = vxor.u32 %v10014, 2147483648
    %v10143 = vxor.u32 %v10015, 2147483648
    %v10144 = vxor.u32 %v10016, 2147483648
    %v10145 = vxor.u32 %v10017, 2147483648
    %v10146 = vxor.u32 %v10018, 2147483648
    %v10147 = vxor.u32 %v10019, 2147483648
    %v10148 = vxor.u32 %v10020, 2147483648
    %v10149 = vxor.u32 %v10021, 2147483648
    %v10150 = vxor.u32 %v10022, 2147483648
    %v10151 = vxor.u32 %v10023, 2147483648
    %v10152 = vxor.u32 %v10024, 2147483648
    %v10153 = vxor.u32 %v10025, 2147483648
    %v10154 = vxor.u32 %v10026, 2147483648
    %v10155 = vxor.u32 %v10027, 2147483648
    %v10156 = vxor.u32 %v10028, 2147483648
    %v10157 = vxor.u32 %v10029, 2147483648
    %v10158 = vxor.u32 %v10030, 2147483648
    %v10159 = vxor.u32 %v10031, 2147483648
    %v10160 = vxor.u32 %v10032, 2147483648
    %v10161 = vxor.u32 %v10033, 2147483648
    %v10162 = vxor.u32 %v10034, 2147483648
    %v10163 = vxor.u32 %v10035, 2147483648
    %v10164 = vxor.u32 %v10036, 2147483648
    %v10165 = vxor.u32 %v10037, 2147483648
    %v10166 = vxor.u32 %v10038, 2147483648
    %v10167 = vxor.u32 %v10039, 2147483648
    %v10168 = vxor.u32 %v10040, 2147483648
    %v10169 = vxor.u32 %v10041, 2147483648
    %v10170 = vxor.u32 %v10042, 2147483648
    %v10171 = vxor.u32 %v10043, 2147483648
    %v10172 = vxor.u32 %v10044, 2147483648
    %v10173 = vxor.u32 %v10045, 2147483648
    %v10174 = vxor.u32 %v10046, 2147483648
    %v10175 = vxor.u32 %v10047, 2147483648
    %v10176 = vxor.u32 %v10048, 2147483648
    %v10177 = vxor.u32 %v10049, 2147483648
    %v10178 = vxor.u32 %v10050, 2147483648
    %v10179 = vmul.f32 %v10051, 1.442695
    %v10180 = vpow.pop %v10179
    %v10181 = vmul.f32 %v10052, 1.442695
    %v10182 = vpow.pop %v10181
    %v10183 = vmul.f32 %v10053, 1.442695
    %v10184 = vpow.pop %v10183
    %v10185 = vmul.f32 %v10054, 1.442695
    %v10186 = vpow.pop %v10185
    %v10187 = vmul.f32 %v10055, 1.442695
    %v10188 = vpow.pop %v10187
    %v10189 = vmul.f32 %v10056, 1.442695
    %v10190 = vpow.pop %v10189
    %v10191 = vmul.f32 %v10057, 1.442695
    %v10192 = vpow.pop %v10191
    %v10193 = vmul.f32 %v10058, 1.442695
    %v10194 = vpow.pop %v10193
    %v10195 = vmul.f32 %v10059, 1.442695
    %v10196 = vpow.pop %v10195
    %v10197 = vmul.f32 %v10060, 1.442695
    %v10198 = vpow.pop %v10197
    %v10199 = vmul.f32 %v10061, 1.442695
    %v10200 = vpow.pop %v10199
    %v10201 = vmul.f32 %v10062, 1.442695
    %v10202 = vpow.pop %v10201
    %v10203 = vmul.f32 %v10063, 1.442695
    %v10204 = vpow.pop %v10203
    %v10205 = vmul.f32 %v10064, 1.442695
    %v10206 = vpow.pop %v10205
    %v10207 = vmul.f32 %v10065, 1.442695
    %v10208 = vpow.pop %v10207
    %v10209 = vmul.f32 %v10066, 1.442695
    %v10210 = vpow.pop %v10209
    %v10211 = vmul.f32 %v10067, 1.442695
    %v10212 = vpow.pop %v10211
    %v10213 = vmul.f32 %v10068, 1.442695
    %v10214 = vpow.pop %v10213
    %v10215 = vmul.f32 %v10069, 1.442695
    %v10216 = vpow.pop %v10215
    %v10217 = vmul.f32 %v10070, 1.442695
    %v10218 = vpow.pop %v10217
    %v10219 = vmul.f32 %v10071, 1.442695
    %v10220 = vpow.pop %v10219
    %v10221 = vmul.f32 %v10072, 1.442695
    %v10222 = vpow.pop %v10221
    %v10223 = vmul.f32 %v10073, 1.442695
    %v10224 = vpow.pop %v10223
    %v10225 = vmul.f32 %v10074, 1.442695
    %v10226 = vpow.pop %v10225
    %v10227 = vmul.f32 %v10075, 1.442695
    %v10228 = vpow.pop %v10227
    %v10229 = vmul.f32 %v10076, 1.442695
    %v10230 = vpow.pop %v10229
    %v10231 = vmul.f32 %v10077, 1.442695
    %v10232 = vpow.pop %v10231
    %v10233 = vmul.f32 %v10078, 1.442695
    %v10234 = vpow.pop %v10233
    %v10235 = vmul.f32 %v10079, 1.442695
    %v10236 = vpow.pop %v10235
    %v10237 = vmul.f32 %v10080, 1.442695
    %v10238 = vpow.pop %v10237
    %v10239 = vmul.f32 %v10081, 1.442695
    %v10240 = vpow.pop %v10239
    %v10241 = vmul.f32 %v10082, 1.442695
    %v10242 = vpow.pop %v10241
    %v10243 = vmul.f32 %v10083, 1.442695
    %v10244 = vpow.pop %v10243
    %v10245 = vmul.f32 %v10084, 1.442695
    %v10246 = vpow.pop %v10245
    %v10247 = vmul.f32 %v10085, 1.442695
    %v10248 = vpow.pop %v10247
    %v10249 = vmul.f32 %v10086, 1.442695
    %v10250 = vpow.pop %v10249
    %v10251 = vmul.f32 %v10087, 1.442695
    %v10252 = vpow.pop %v10251
    %v10253 = vmul.f32 %v10088, 1.442695
    %v10254 = vpow.pop %v10253
    %v10255 = vmul.f32 %v10089, 1.442695
    %v10256 = vpow.pop %v10255
    %v10257 = vmul.f32 %v10090, 1.442695
    %v10258 = vpow.pop %v10257
    %v10259 = vmul.f32 %v10091, 1.442695
    %v10260 = vpow.pop %v10259
    %v10261 = vmul.f32 %v10092, 1.442695
    %v10262 = vpow.pop %v10261
    %v10263 = vmul.f32 %v10093, 1.442695
    %v10264 = vpow.pop %v10263
    %v10265 = vmul.f32 %v10094, 1.442695
    %v10266 = vpow.pop %v10265
    %v10267 = vmul.f32 %v10095, 1.442695
    %v10268 = vpow.pop %v10267
    %v10269 = vmul.f32 %v10096, 1.442695
    %v10270 = vpow.pop %v10269
    %v10271 = vmul.f32 %v10097, 1.442695
    %v10272 = vpow.pop %v10271
    %v10273 = vmul.f32 %v10098, 1.442695
    %v10274 = vpow.pop %v10273
    %v10275 = vmul.f32 %v10099, 1.442695
    %v10276 = vpow.pop %v10275
    %v10277 = vmul.f32 %v10100, 1.442695
    %v10278 = vpow.pop %v10277
    %v10279 = vmul.f32 %v10101, 1.442695
    %v10280 = vpow.pop %v10279
    %v10281 = vmul.f32 %v10102, 1.442695
    %v10282 = vpow.pop %v10281
    %v10283 = vmul.f32 %v10103, 1.442695
    %v10284 = vpow.pop %v10283
    %v10285 = vmul.f32 %v10104, 1.442695
    %v10286 = vpow.pop %v10285
    %v10287 = vmul.f32 %v10105, 1.442695
    %v10288 = vpow.pop %v10287
    %v10289 = vmul.f32 %v10106, 1.442695
    %v10290 = vpow.pop %v10289
    %v10291 = vmul.f32 %v10107, 1.442695
    %v10292 = vpow.pop %v10291
    %v10293 = vmul.f32 %v10108, 1.442695
    %v10294 = vpow.pop %v10293
    %v10295 = vmul.f32 %v10109, 1.442695
    %v10296 = vpow.pop %v10295
    %v10297 = vmul.f32 %v10110, 1.442695
    %v10298 = vpow.pop %v10297
    %v10299 = vmul.f32 %v10111, 1.442695
    %v10300 = vpow.pop %v10299
    %v10301 = vmul.f32 %v10112, 1.442695
    %v10302 = vpow.pop %v10301
    %v10303 = vmul.f32 %v10113, 1.442695
    %v10304 = vpow.pop %v10303
    %v10305 = vmul.f32 %v10114, 1.442695
    %v10306 = vpow.pop %v10305
    %v10307 = vmul.f32 %v10115, 1.442695
    %v10308 = vpow.pop %v10307
    %v10309 = vmul.f32 %v10116, 1.442695
    %v10310 = vpow.pop %v10309
    %v10311 = vmul.f32 %v10117, 1.442695
    %v10312 = vpow.pop %v10311
    %v10313 = vmul.f32 %v10118, 1.442695
    %v10314 = vpow.pop %v10313
    %v10315 = vmul.f32 %v10119, 1.442695
    %v10316 = vpow.pop %v10315
    %v10317 = vmul.f32 %v10120, 1.442695
    %v10318 = vpow.pop %v10317
    %v10319 = vmul.f32 %v10121, 1.442695
    %v10320 = vpow.pop %v10319
    %v10321 = vmul.f32 %v10122, 1.442695
    %v10322 = vpow.pop %v10321
    %v10323 = vmul.f32 %v10123, 1.442695
    %v10324 = vpow.pop %v10323
    %v10325 = vmul.f32 %v10124, 1.442695
    %v10326 = vpow.pop %v10325
    %v10327 = vmul.f32 %v10125, 1.442695
    %v10328 = vpow.pop %v10327
    %v10329 = vmul.f32 %v10126, 1.442695
    %v10330 = vpow.pop %v10329
    %v10331 = vmul.f32 %v10127, 1.442695
    %v10332 = vpow.pop %v10331
    %v10333 = vmul.f32 %v10128, 1.442695
    %v10334 = vpow.pop %v10333
    %v10335 = vmul.f32 %v10129, 1.442695
    %v10336 = vpow.pop %v10335
    %v10337 = vmul.f32 %v10130, 1.442695
    %v10338 = vpow.pop %v10337
    %v10339 = vmul.f32 %v10131, 1.442695
    %v10340 = vpow.pop %v10339
    %v10341 = vmul.f32 %v10132, 1.442695
    %v10342 = vpow.pop %v10341
    %v10343 = vmul.f32 %v10133, 1.442695
    %v10344 = vpow.pop %v10343
    %v10345 = vmul.f32 %v10134, 1.442695
    %v10346 = vpow.pop %v10345
    %v10347 = vmul.f32 %v10135, 1.442695
    %v10348 = vpow.pop %v10347
    %v10349 = vmul.f32 %v10136, 1.442695
    %v10350 = vpow.pop %v10349
    %v10351 = vmul.f32 %v10137, 1.442695
    %v10352 = vpow.pop %v10351
    %v10353 = vmul.f32 %v10138, 1.442695
    %v10354 = vpow.pop %v10353
    %v10355 = vmul.f32 %v10139, 1.442695
    %v10356 = vpow.pop %v10355
    %v10357 = vmul.f32 %v10140, 1.442695
    %v10358 = vpow.pop %v10357
    %v10359 = vmul.f32 %v10141, 1.442695
    %v10360 = vpow.pop %v10359
    %v10361 = vmul.f32 %v10142, 1.442695
    %v10362 = vpow.pop %v10361
    %v10363 = vmul.f32 %v10143, 1.442695
    %v10364 = vpow.pop %v10363
    %v10365 = vmul.f32 %v10144, 1.442695
    %v10366 = vpow.pop %v10365
    %v10367 = vmul.f32 %v10145, 1.442695
    %v10368 = vpow.pop %v10367
    %v10369 = vmul.f32 %v10146, 1.442695
    %v10370 = vpow.pop %v10369
    %v10371 = vmul.f32 %v10147, 1.442695
    %v10372 = vpow.pop %v10371
    %v10373 = vmul.f32 %v10148, 1.442695
    %v10374 = vpow.pop %v10373
    %v10375 = vmul.f32 %v10149, 1.442695
    %v10376 = vpow.pop %v10375
    %v10377 = vmul.f32 %v10150, 1.442695
    %v10378 = vpow.pop %v10377
    %v10379 = vmul.f32 %v10151, 1.442695
    %v10380 = vpow.pop %v10379
    %v10381 = vmul.f32 %v10152, 1.442695
    %v10382 = vpow.pop %v10381
    %v10383 = vmul.f32 %v10153, 1.442695
    %v10384 = vpow.pop %v10383
    %v10385 = vmul.f32 %v10154, 1.442695
    %v10386 = vpow.pop %v10385
    %v10387 = vmul.f32 %v10155, 1.442695
    %v10388 = vpow.pop %v10387
    %v10389 = vmul.f32 %v10156, 1.442695
    %v10390 = vpow.pop %v10389
    %v10391 = vmul.f32 %v10157, 1.442695
    %v10392 = vpow.pop %v10391
    %v10393 = vmul.f32 %v10158, 1.442695
    %v10394 = vpow.pop %v10393
    %v10395 = vmul.f32 %v10159, 1.442695
    %v10396 = vpow.pop %v10395
    %v10397 = vmul.f32 %v10160, 1.442695
    %v10398 = vpow.pop %v10397
    %v10399 = vmul.f32 %v10161, 1.442695
    %v10400 = vpow.pop %v10399
    %v10401 = vmul.f32 %v10162, 1.442695
    %v10402 = vpow.pop %v10401
    %v10403 = vmul.f32 %v10163, 1.442695
    %v10404 = vpow.pop %v10403
    %v10405 = vmul.f32 %v10164, 1.442695
    %v10406 = vpow.pop %v10405
    %v10407 = vmul.f32 %v10165, 1.442695
    %v10408 = vpow.pop %v10407
    %v10409 = vmul.f32 %v10166, 1.442695
    %v10410 = vpow.pop %v10409
    %v10411 = vmul.f32 %v10167, 1.442695
    %v10412 = vpow.pop %v10411
    %v10413 = vmul.f32 %v10168, 1.442695
    %v10414 = vpow.pop %v10413
    %v10415 = vmul.f32 %v10169, 1.442695
    %v10416 = vpow.pop %v10415
    %v10417 = vmul.f32 %v10170, 1.442695
    %v10418 = vpow.pop %v10417
    %v10419 = vmul.f32 %v10171, 1.442695
    %v10420 = vpow.pop %v10419
    %v10421 = vmul.f32 %v10172, 1.442695
    %v10422 = vpow.pop %v10421
    %v10423 = vmul.f32 %v10173, 1.442695
    %v10424 = vpow.pop %v10423
    %v10425 = vmul.f32 %v10174, 1.442695
    %v10426 = vpow.pop %v10425
    %v10427 = vmul.f32 %v10175, 1.442695
    %v10428 = vpow.pop %v10427
    %v10429 = vmul.f32 %v10176, 1.442695
    %v10430 = vpow.pop %v10429
    %v10431 = vmul.f32 %v10177, 1.442695
    %v10432 = vpow.pop %v10431
    %v10433 = vmul.f32 %v10178, 1.442695
    %v10434 = vpow.pop %v10433
    %v10435 = vadd.f32 %v10180, 1.0
    %v10436 = vadd.f32 %v10182, 1.0
    %v10437 = vadd.f32 %v10184, 1.0
    %v10438 = vadd.f32 %v10186, 1.0
    %v10439 = vadd.f32 %v10188, 1.0
    %v10440 = vadd.f32 %v10190, 1.0
    %v10441 = vadd.f32 %v10192, 1.0
    %v10442 = vadd.f32 %v10194, 1.0
    %v10443 = vadd.f32 %v10196, 1.0
    %v10444 = vadd.f32 %v10198, 1.0
    %v10445 = vadd.f32 %v10200, 1.0
    %v10446 = vadd.f32 %v10202, 1.0
    %v10447 = vadd.f32 %v10204, 1.0
    %v10448 = vadd.f32 %v10206, 1.0
    %v10449 = vadd.f32 %v10208, 1.0
    %v10450 = vadd.f32 %v10210, 1.0
    %v10451 = vadd.f32 %v10212, 1.0
    %v10452 = vadd.f32 %v10214, 1.0
    %v10453 = vadd.f32 %v10216, 1.0
    %v10454 = vadd.f32 %v10218, 1.0
    %v10455 = vadd.f32 %v10220, 1.0
    %v10456 = vadd.f32 %v10222, 1.0
    %v10457 = vadd.f32 %v10224, 1.0
    %v10458 = vadd.f32 %v10226, 1.0
    %v10459 = vadd.f32 %v10228, 1.0
    %v10460 = vadd.f32 %v10230, 1.0
    %v10461 = vadd.f32 %v10232, 1.0
    %v10462 = vadd.f32 %v10234, 1.0
    %v10463 = vadd.f32 %v10236, 1.0
    %v10464 = vadd.f32 %v10238, 1.0
    %v10465 = vadd.f32 %v10240, 1.0
    %v10466 = vadd.f32 %v10242, 1.0
    %v10467 = vadd.f32 %v10244, 1.0
    %v10468 = vadd.f32 %v10246, 1.0
    %v10469 = vadd.f32 %v10248, 1.0
    %v10470 = vadd.f32 %v10250, 1.0
    %v10471 = vadd.f32 %v10252, 1.0
    %v10472 = vadd.f32 %v10254, 1.0
    %v10473 = vadd.f32 %v10256, 1.0
    %v10474 = vadd.f32 %v10258, 1.0
    %v10475 = vadd.f32 %v10260, 1.0
    %v10476 = vadd.f32 %v10262, 1.0
    %v10477 = vadd.f32 %v10264, 1.0
    %v10478 = vadd.f32 %v10266, 1.0
    %v10479 = vadd.f32 %v10268, 1.0
    %v10480 = vadd.f32 %v10270, 1.0
    %v10481 = vadd.f32 %v10272, 1.0
    %v10482 = vadd.f32 %v10274, 1.0
    %v10483 = vadd.f32 %v10276, 1.0
    %v10484 = vadd.f32 %v10278, 1.0
    %v10485 = vadd.f32 %v10280, 1.0
    %v10486 = vadd.f32 %v10282, 1.0
    %v10487 = vadd.f32 %v10284, 1.0
    %v10488 = vadd.f32 %v10286, 1.0
    %v10489 = vadd.f32 %v10288, 1.0
    %v10490 = vadd.f32 %v10290, 1.0
    %v10491 = vadd.f32 %v10292, 1.0
    %v10492 = vadd.f32 %v10294, 1.0
    %v10493 = vadd.f32 %v10296, 1.0
    %v10494 = vadd.f32 %v10298, 1.0
    %v10495 = vadd.f32 %v10300, 1.0
    %v10496 = vadd.f32 %v10302, 1.0
    %v10497 = vadd.f32 %v10304, 1.0
    %v10498 = vadd.f32 %v10306, 1.0
    %v10499 = vadd.f32 %v10308, 1.0
    %v10500 = vadd.f32 %v10310, 1.0
    %v10501 = vadd.f32 %v10312, 1.0
    %v10502 = vadd.f32 %v10314, 1.0
    %v10503 = vadd.f32 %v10316, 1.0
    %v10504 = vadd.f32 %v10318, 1.0
    %v10505 = vadd.f32 %v10320, 1.0
    %v10506 = vadd.f32 %v10322, 1.0
    %v10507 = vadd.f32 %v10324, 1.0
    %v10508 = vadd.f32 %v10326, 1.0
    %v10509 = vadd.f32 %v10328, 1.0
    %v10510 = vadd.f32 %v10330, 1.0
    %v10511 = vadd.f32 %v10332, 1.0
    %v10512 = vadd.f32 %v10334, 1.0
    %v10513 = vadd.f32 %v10336, 1.0
    %v10514 = vadd.f32 %v10338, 1.0
    %v10515 = vadd.f32 %v10340, 1.0
    %v10516 = vadd.f32 %v10342, 1.0
    %v10517 = vadd.f32 %v10344, 1.0
    %v10518 = vadd.f32 %v10346, 1.0
    %v10519 = vadd.f32 %v10348, 1.0
    %v10520 = vadd.f32 %v10350, 1.0
    %v10521 = vadd.f32 %v10352, 1.0
    %v10522 = vadd.f32 %v10354, 1.0
    %v10523 = vadd.f32 %v10356, 1.0
    %v10524 = vadd.f32 %v10358, 1.0
    %v10525 = vadd.f32 %v10360, 1.0
    %v10526 = vadd.f32 %v10362, 1.0
    %v10527 = vadd.f32 %v10364, 1.0
    %v10528 = vadd.f32 %v10366, 1.0
    %v10529 = vadd.f32 %v10368, 1.0
    %v10530 = vadd.f32 %v10370, 1.0
    %v10531 = vadd.f32 %v10372, 1.0
    %v10532 = vadd.f32 %v10374, 1.0
    %v10533 = vadd.f32 %v10376, 1.0
    %v10534 = vadd.f32 %v10378, 1.0
    %v10535 = vadd.f32 %v10380, 1.0
    %v10536 = vadd.f32 %v10382, 1.0
    %v10537 = vadd.f32 %v10384, 1.0
    %v10538 = vadd.f32 %v10386, 1.0
    %v10539 = vadd.f32 %v10388, 1.0
    %v10540 = vadd.f32 %v10390, 1.0
    %v10541 = vadd.f32 %v10392, 1.0
    %v10542 = vadd.f32 %v10394, 1.0
    %v10543 = vadd.f32 %v10396, 1.0
    %v10544 = vadd.f32 %v10398, 1.0
    %v10545 = vadd.f32 %v10400, 1.0
    %v10546 = vadd.f32 %v10402, 1.0
    %v10547 = vadd.f32 %v10404, 1.0
    %v10548 = vadd.f32 %v10406, 1.0
    %v10549 = vadd.f32 %v10408, 1.0
    %v10550 = vadd.f32 %v10410, 1.0
    %v10551 = vadd.f32 %v10412, 1.0
    %v10552 = vadd.f32 %v10414, 1.0
    %v10553 = vadd.f32 %v10416, 1.0
    %v10554 = vadd.f32 %v10418, 1.0
    %v10555 = vadd.f32 %v10420, 1.0
    %v10556 = vadd.f32 %v10422, 1.0
    %v10557 = vadd.f32 %v10424, 1.0
    %v10558 = vadd.f32 %v10426, 1.0
    %v10559 = vadd.f32 %v10428, 1.0
    %v10560 = vadd.f32 %v10430, 1.0
    %v10561 = vadd.f32 %v10432, 1.0
    %v10562 = vadd.f32 %v10434, 1.0
    %v10563 = vrcp.pop %v10435
    %v10564 = vmul.f32 1.0, %v10563
    %v10565 = vrcp.pop %v10436
    %v10566 = vmul.f32 1.0, %v10565
    %v10567 = vrcp.pop %v10437
    %v10568 = vmul.f32 1.0, %v10567
    %v10569 = vrcp.pop %v10438
    %v10570 = vmul.f32 1.0, %v10569
    %v10571 = vrcp.pop %v10439
    %v10572 = vmul.f32 1.0, %v10571
    %v10573 = vrcp.pop %v10440
    %v10574 = vmul.f32 1.0, %v10573
    %v10575 = vrcp.pop %v10441
    %v10576 = vmul.f32 1.0, %v10575
    %v10577 = vrcp.pop %v10442
    %v10578 = vmul.f32 1.0, %v10577
    %v10579 = vrcp.pop %v10443
    %v10580 = vmul.f32 1.0, %v10579
    %v10581 = vrcp.pop %v10444
    %v10582 = vmul.f32 1.0, %v10581
    %v10583 = vrcp.pop %v10445
    %v10584 = vmul.f32 1.0, %v10583
    %v10585 = vrcp.pop %v10446
    %v10586 = vmul.f32 1.0, %v10585
    %v10587 = vrcp.pop %v10447
    %v10588 = vmul.f32 1.0, %v10587
    %v10589 = vrcp.pop %v10448
    %v10590 = vmul.f32 1.0, %v10589
    %v10591 = vrcp.pop %v10449
    %v10592 = vmul.f32 1.0, %v10591
    %v10593 = vrcp.pop %v10450
    %v10594 = vmul.f32 1.0, %v10593
    %v10595 = vrcp.pop %v10451
    %v10596 = vmul.f32 1.0, %v10595
    %v10597 = vrcp.pop %v10452
    %v10598 = vmul.f32 1.0, %v10597
    %v10599 = vrcp.pop %v10453
    %v10600 = vmul.f32 1.0, %v10599
    %v10601 = vrcp.pop %v10454
    %v10602 = vmul.f32 1.0, %v10601
    %v10603 = vrcp.pop %v10455
    %v10604 = vmul.f32 1.0, %v10603
    %v10605 = vrcp.pop %v10456
    %v10606 = vmul.f32 1.0, %v10605
    %v10607 = vrcp.pop %v10457
    %v10608 = vmul.f32 1.0, %v10607
    %v10609 = vrcp.pop %v10458
    %v10610 = vmul.f32 1.0, %v10609
    %v10611 = vrcp.pop %v10459
    %v10612 = vmul.f32 1.0, %v10611
    %v10613 = vrcp.pop %v10460
    %v10614 = vmul.f32 1.0, %v10613
    %v10615 = vrcp.pop %v10461
    %v10616 = vmul.f32 1.0, %v10615
    %v10617 = vrcp.pop %v10462
    %v10618 = vmul.f32 1.0, %v10617
    %v10619 = vrcp.pop %v10463
    %v10620 = vmul.f32 1.0, %v10619
    %v10621 = vrcp.pop %v10464
    %v10622 = vmul.f32 1.0, %v10621
    %v10623 = vrcp.pop %v10465
    %v10624 = vmul.f32 1.0, %v10623
    %v10625 = vrcp.pop %v10466
    %v10626 = vmul.f32 1.0, %v10625
    %v10627 = vrcp.pop %v10467
    %v10628 = vmul.f32 1.0, %v10627
    %v10629 = vrcp.pop %v10468
    %v10630 = vmul.f32 1.0, %v10629
    %v10631 = vrcp.pop %v10469
    %v10632 = vmul.f32 1.0, %v10631
    %v10633 = vrcp.pop %v10470
    %v10634 = vmul.f32 1.0, %v10633
    %v10635 = vrcp.pop %v10471
    %v10636 = vmul.f32 1.0, %v10635
    %v10637 = vrcp.pop %v10472
    %v10638 = vmul.f32 1.0, %v10637
    %v10639 = vrcp.pop %v10473
    %v10640 = vmul.f32 1.0, %v10639
    %v10641 = vrcp.pop %v10474
    %v10642 = vmul.f32 1.0, %v10641
    %v10643 = vrcp.pop %v10475
    %v10644 = vmul.f32 1.0, %v10643
    %v10645 = vrcp.pop %v10476
    %v10646 = vmul.f32 1.0, %v10645
    %v10647 = vrcp.pop %v10477
    %v10648 = vmul.f32 1.0, %v10647
    %v10649 = vrcp.pop %v10478
    %v10650 = vmul.f32 1.0, %v10649
    %v10651 = vrcp.pop %v10479
    %v10652 = vmul.f32 1.0, %v10651
    %v10653 = vrcp.pop %v10480
    %v10654 = vmul.f32 1.0, %v10653
    %v10655 = vrcp.pop %v10481
    %v10656 = vmul.f32 1.0, %v10655
    %v10657 = vrcp.pop %v10482
    %v10658 = vmul.f32 1.0, %v10657
    %v10659 = vrcp.pop %v10483
    %v10660 = vmul.f32 1.0, %v10659
    %v10661 = vrcp.pop %v10484
    %v10662 = vmul.f32 1.0, %v10661
    %v10663 = vrcp.pop %v10485
    %v10664 = vmul.f32 1.0, %v10663
    %v10665 = vrcp.pop %v10486
    %v10666 = vmul.f32 1.0, %v10665
    %v10667 = vrcp.pop %v10487
    %v10668 = vmul.f32 1.0, %v10667
    %v10669 = vrcp.pop %v10488
    %v10670 = vmul.f32 1.0, %v10669
    %v10671 = vrcp.pop %v10489
    %v10672 = vmul.f32 1.0, %v10671
    %v10673 = vrcp.pop %v10490
    %v10674 = vmul.f32 1.0, %v10673
    %v10675 = vrcp.pop %v10491
    %v10676 = vmul.f32 1.0, %v10675
    %v10677 = vrcp.pop %v10492
    %v10678 = vmul.f32 1.0, %v10677
    %v10679 = vrcp.pop %v10493
    %v10680 = vmul.f32 1.0, %v10679
    %v10681 = vrcp.pop %v10494
    %v10682 = vmul.f32 1.0, %v10681
    %v10683 = vrcp.pop %v10495
    %v10684 = vmul.f32 1.0, %v10683
    %v10685 = vrcp.pop %v10496
    %v10686 = vmul.f32 1.0, %v10685
    %v10687 = vrcp.pop %v10497
    %v10688 = vmul.f32 1.0, %v10687
    %v10689 = vrcp.pop %v10498
    %v10690 = vmul.f32 1.0, %v10689
    %v10691 = vrcp.pop %v10499
    %v10692 = vmul.f32 1.0, %v10691
    %v10693 = vrcp.pop %v10500
    %v10694 = vmul.f32 1.0, %v10693
    %v10695 = vrcp.pop %v10501
    %v10696 = vmul.f32 1.0, %v10695
    %v10697 = vrcp.pop %v10502
    %v10698 = vmul.f32 1.0, %v10697
    %v10699 = vrcp.pop %v10503
    %v10700 = vmul.f32 1.0, %v10699
    %v10701 = vrcp.pop %v10504
    %v10702 = vmul.f32 1.0, %v10701
    %v10703 = vrcp.pop %v10505
    %v10704 = vmul.f32 1.0, %v10703
    %v10705 = vrcp.pop %v10506
    %v10706 = vmul.f32 1.0, %v10705
    %v10707 = vrcp.pop %v10507
    %v10708 = vmul.f32 1.0, %v10707
    %v10709 = vrcp.pop %v10508
    %v10710 = vmul.f32 1.0, %v10709
    %v10711 = vrcp.pop %v10509
    %v10712 = vmul.f32 1.0, %v10711
    %v10713 = vrcp.pop %v10510
    %v10714 = vmul.f32 1.0, %v10713
    %v10715 = vrcp.pop %v10511
    %v10716 = vmul.f32 1.0, %v10715
    %v10717 = vrcp.pop %v10512
    %v10718 = vmul.f32 1.0, %v10717
    %v10719 = vrcp.pop %v10513
    %v10720 = vmul.f32 1.0, %v10719
    %v10721 = vrcp.pop %v10514
    %v10722 = vmul.f32 1.0, %v10721
    %v10723 = vrcp.pop %v10515
    %v10724 = vmul.f32 1.0, %v10723
    %v10725 = vrcp.pop %v10516
    %v10726 = vmul.f32 1.0, %v10725
    %v10727 = vrcp.pop %v10517
    %v10728 = vmul.f32 1.0, %v10727
    %v10729 = vrcp.pop %v10518
    %v10730 = vmul.f32 1.0, %v10729
    %v10731 = vrcp.pop %v10519
    %v10732 = vmul.f32 1.0, %v10731
    %v10733 = vrcp.pop %v10520
    %v10734 = vmul.f32 1.0, %v10733
    %v10735 = vrcp.pop %v10521
    %v10736 = vmul.f32 1.0, %v10735
    %v10737 = vrcp.pop %v10522
    %v10738 = vmul.f32 1.0, %v10737
    %v10739 = vrcp.pop %v10523
    %v10740 = vmul.f32 1.0, %v10739
    %v10741 = vrcp.pop %v10524
    %v10742 = vmul.f32 1.0, %v10741
    %v10743 = vrcp.pop %v10525
    %v10744 = vmul.f32 1.0, %v10743
    %v10745 = vrcp.pop %v10526
    %v10746 = vmul.f32 1.0, %v10745
    %v10747 = vrcp.pop %v10527
    %v10748 = vmul.f32 1.0, %v10747
    %v10749 = vrcp.pop %v10528
    %v10750 = vmul.f32 1.0, %v10749
    %v10751 = vrcp.pop %v10529
    %v10752 = vmul.f32 1.0, %v10751
    %v10753 = vrcp.pop %v10530
    %v10754 = vmul.f32 1.0, %v10753
    %v10755 = vrcp.pop %v10531
    %v10756 = vmul.f32 1.0, %v10755
    %v10757 = vrcp.pop %v10532
    %v10758 = vmul.f32 1.0, %v10757
    %v10759 = vrcp.pop %v10533
    %v10760 = vmul.f32 1.0, %v10759
    %v10761 = vrcp.pop %v10534
    %v10762 = vmul.f32 1.0, %v10761
    %v10763 = vrcp.pop %v10535
    %v10764 = vmul.f32 1.0, %v10763
    %v10765 = vrcp.pop %v10536
    %v10766 = vmul.f32 1.0, %v10765
    %v10767 = vrcp.pop %v10537
    %v10768 = vmul.f32 1.0, %v10767
    %v10769 = vrcp.pop %v10538
    %v10770 = vmul.f32 1.0, %v10769
    %v10771 = vrcp.pop %v10539
    %v10772 = vmul.f32 1.0, %v10771
    %v10773 = vrcp.pop %v10540
    %v10774 = vmul.f32 1.0, %v10773
    %v10775 = vrcp.pop %v10541
    %v10776 = vmul.f32 1.0, %v10775
    %v10777 = vrcp.pop %v10542
    %v10778 = vmul.f32 1.0, %v10777
    %v10779 = vrcp.pop %v10543
    %v10780 = vmul.f32 1.0, %v10779
    %v10781 = vrcp.pop %v10544
    %v10782 = vmul.f32 1.0, %v10781
    %v10783 = vrcp.pop %v10545
    %v10784 = vmul.f32 1.0, %v10783
    %v10785 = vrcp.pop %v10546
    %v10786 = vmul.f32 1.0, %v10785
    %v10787 = vrcp.pop %v10547
    %v10788 = vmul.f32 1.0, %v10787
    %v10789 = vrcp.pop %v10548
    %v10790 = vmul.f32 1.0, %v10789
    %v10791 = vrcp.pop %v10549
    %v10792 = vmul.f32 1.0, %v10791
    %v10793 = vrcp.pop %v10550
    %v10794 = vmul.f32 1.0, %v10793
    %v10795 = vrcp.pop %v10551
    %v10796 = vmul.f32 1.0, %v10795
    %v10797 = vrcp.pop %v10552
    %v10798 = vmul.f32 1.0, %v10797
    %v10799 = vrcp.pop %v10553
    %v10800 = vmul.f32 1.0, %v10799
    %v10801 = vrcp.pop %v10554
    %v10802 = vmul.f32 1.0, %v10801
    %v10803 = vrcp.pop %v10555
    %v10804 = vmul.f32 1.0, %v10803
    %v10805 = vrcp.pop %v10556
    %v10806 = vmul.f32 1.0, %v10805
    %v10807 = vrcp.pop %v10557
    %v10808 = vmul.f32 1.0, %v10807
    %v10809 = vrcp.pop %v10558
    %v10810 = vmul.f32 1.0, %v10809
    %v10811 = vrcp.pop %v10559
    %v10812 = vmul.f32 1.0, %v10811
    %v10813 = vrcp.pop %v10560
    %v10814 = vmul.f32 1.0, %v10813
    %v10815 = vrcp.pop %v10561
    %v10816 = vmul.f32 1.0, %v10815
    %v10817 = vrcp.pop %v10562
    %v10818 = vmul.f32 1.0, %v10817
    %v10819 = vld [vmem:[%s8] sm:$0xff]
    %v10820 = vld [vmem:[%s8 + $0x8] sm:$0xff]
    %v10821 = vld [vmem:[%s8 + $0x10] sm:$0xff]
    %v10822 = vld [vmem:[%s8 + $0x18] sm:$0xff]
    %v10823 = vld [vmem:[%s8 + $0x20] sm:$0xff]
    %v10824 = vld [vmem:[%s8 + $0x28] sm:$0xff]
    %v10825 = vld [vmem:[%s8 + $0x30] sm:$0xff]
    %v10826 = vld [vmem:[%s8 + $0x38] sm:$0xff]
    %s10827 = sld [smem:[#allocation3]]
    %v10828 = vstv %s10827
    %10829 = vmatprep.subr.mxu0 0.0
    %10830 = vmatpush1.msra.mxu0 %v10564
    %10831 = vmatprep.subr.mxu0 0.0
    %10832 = vmatpush1.msra.mxu0 %v10566
    %10833 = vmatprep.subr.mxu0 0.0
    %10834 = vmatpush1.msra.mxu0 %v10568
    %10835 = vmatprep.subr.mxu0 0.0
    %10836 = vmatpush1.msra.mxu0 %v10570
    %10837 = vmatprep.subr.mxu0 0.0
    %10838 = vmatpush1.msra.mxu0 %v10572
    %10839 = vmatprep.subr.mxu0 0.0
    %10840 = vmatpush1.msra.mxu0 %v10574
    %10841 = vmatprep.subr.mxu0 0.0
    %10842 = vmatpush1.msra.mxu0 %v10576
    %10843 = vmatprep.subr.mxu0 0.0
    %10844 = vmatpush1.msra.mxu0 %v10578
    %10845 = vmatprep.subr.mxu0 0.0
    %10846 = vmatpush1.msra.mxu0 %v10580
    %10847 = vmatprep.subr.mxu0 0.0
    %10848 = vmatpush1.msra.mxu0 %v10582
    %10849 = vmatprep.subr.mxu0 0.0
    %10850 = vmatpush1.msra.mxu0 %v10584
    %10851 = vmatprep.subr.mxu0 0.0
    %10852 = vmatpush1.msra.mxu0 %v10586
    %10853 = vmatprep.subr.mxu0 0.0
    %10854 = vmatpush1.msra.mxu0 %v10588
    %10855 = vmatprep.subr.mxu0 0.0
    %10856 = vmatpush1.msra.mxu0 %v10590
    %10857 = vmatprep.subr.mxu0 0.0
    %10858 = vmatpush1.msra.mxu0 %v10592
    %10859 = vmatprep.subr.mxu0 0.0
    %10860 = vmatpush1.msra.mxu0 %v10594
    %10861 = vmatprep.subr.mxu0 0.0
    %10862 = vmatpush1.msra.mxu0 %v10596
    %10863 = vmatprep.subr.mxu0 0.0
    %10864 = vmatpush1.msra.mxu0 %v10598
    %10865 = vmatprep.subr.mxu0 0.0
    %10866 = vmatpush1.msra.mxu0 %v10600
    %10867 = vmatprep.subr.mxu0 0.0
    %10868 = vmatpush1.msra.mxu0 %v10602
    %10869 = vmatprep.subr.mxu0 0.0
    %10870 = vmatpush1.msra.mxu0 %v10604
    %10871 = vmatprep.subr.mxu0 0.0
    %10872 = vmatpush1.msra.mxu0 %v10606
    %10873 = vmatprep.subr.mxu0 0.0
    %10874 = vmatpush1.msra.mxu0 %v10608
    %10875 = vmatprep.subr.mxu0 0.0
    %10876 = vmatpush1.msra.mxu0 %v10610
    %10877 = vmatprep.subr.mxu0 0.0
    %10878 = vmatpush1.msra.mxu0 %v10612
    %10879 = vmatprep.subr.mxu0 0.0
    %10880 = vmatpush1.msra.mxu0 %v10614
    %10881 = vmatprep.subr.mxu0 0.0
    %10882 = vmatpush1.msra.mxu0 %v10616
    %10883 = vmatprep.subr.mxu0 0.0
    %10884 = vmatpush1.msra.mxu0 %v10618
    %10885 = vmatprep.subr.mxu0 0.0
    %10886 = vmatpush1.msra.mxu0 %v10620
    %10887 = vmatprep.subr.mxu0 0.0
    %10888 = vmatpush1.msra.mxu0 %v10622
    %10889 = vmatprep.subr.mxu0 0.0
    %10890 = vmatpush1.msra.mxu0 %v10624
    %10891 = vmatprep.subr.mxu0 0.0
    %10892 = vmatpush1.msra.mxu0 %v10626
    %10893 = vmatprep.mubr.f32.mxu0 %v10820
    %10894 = vmatmul.mubr.f32.gmra.mrb[0].mxu0 %v10819
    %v10895 = vpop.f32.mrb[0].mxu0
    %v10896 = vadd.f32 %v10828, %v10895
    %v10897 = vpop.f32.mrb[0].mxu0
    %10898 = vdwg.mxu0
    %10899 = vmatprep.subr.mxu0 0.0
    %10900 = vmatpush1.msra.mxu0 %v10628
    %10901 = vmatprep.subr.mxu0 0.0
    %10902 = vmatpush1.msra.mxu0 %v10630
    %10903 = vmatprep.subr.mxu0 0.0
    %10904 = vmatpush1.msra.mxu0 %v10632
    %10905 = vmatprep.subr.mxu0 0.0
    %10906 = vmatpush1.msra.mxu0 %v10634
    %10907 = vmatprep.subr.mxu0 0.0
    %10908 = vmatpush1.msra.mxu0 %v10636
    %10909 = vmatprep.subr.mxu0 0.0
    %10910 = vmatpush1.msra.mxu0 %v10638
    %10911 = vmatprep.subr.mxu0 0.0
    %10912 = vmatpush1.msra.mxu0 %v10640
    %10913 = vmatprep.subr.mxu0 0.0
    %10914 = vmatpush1.msra.mxu0 %v10642
    %10915 = vmatprep.subr.mxu0 0.0
    %10916 = vmatpush1.msra.mxu0 %v10644
    %10917 = vmatprep.subr.mxu0 0.0
    %10918 = vmatpush1.msra.mxu0 %v10646
    %10919 = vmatprep.subr.mxu0 0.0
    %10920 = vmatpush1.msra.mxu0 %v10648
    %10921 = vmatprep.subr.mxu0 0.0
    %10922 = vmatpush1.msra.mxu0 %v10650
    %10923 = vmatprep.subr.mxu0 0.0
    %10924 = vmatpush1.msra.mxu0 %v10652
    %10925 = vmatprep.subr.mxu0 0.0
    %10926 = vmatpush1.msra.mxu0 %v10654
    %10927 = vmatprep.subr.mxu0 0.0
    %10928 = vmatpush1.msra.mxu0 %v10656
    %10929 = vmatprep.subr.mxu0 0.0
    %10930 = vmatpush1.msra.mxu0 %v10658
    %10931 = vmatprep.subr.mxu0 0.0
    %10932 = vmatpush1.msra.mxu0 %v10660
    %10933 = vmatprep.subr.mxu0 0.0
    %10934 = vmatpush1.msra.mxu0 %v10662
    %10935 = vmatprep.subr.mxu0 0.0
    %10936 = vmatpush1.msra.mxu0 %v10664
    %10937 = vmatprep.subr.mxu0 0.0
    %10938 = vmatpush1.msra.mxu0 %v10666
    %10939 = vmatprep.subr.mxu0 0.0
    %10940 = vmatpush1.msra.mxu0 %v10668
    %10941 = vmatprep.subr.mxu0 0.0
    %10942 = vmatpush1.msra.mxu0 %v10670
    %10943 = vmatprep.subr.mxu0 0.0
    %10944 = vmatpush1.msra.mxu0 %v10672
    %10945 = vmatprep.subr.mxu0 0.0
    %10946 = vmatpush1.msra.mxu0 %v10674
    %10947 = vmatprep.subr.mxu0 0.0
    %10948 = vmatpush1.msra.mxu0 %v10676
    %10949 = vmatprep.subr.mxu0 0.0
    %10950 = vmatpush1.msra.mxu0 %v10678
    %10951 = vmatprep.subr.mxu0 0.0
    %10952 = vmatpush1.msra.mxu0 %v10680
    %10953 = vmatprep.subr.mxu0 0.0
    %10954 = vmatpush1.msra.mxu0 %v10682
    %10955 = vmatprep.subr.mxu0 0.0
    %10956 = vmatpush1.msra.mxu0 %v10684
    %10957 = vmatprep.subr.mxu0 0.0
    %10958 = vmatpush1.msra.mxu0 %v10686
    %10959 = vmatprep.subr.mxu0 0.0
    %10960 = vmatpush1.msra.mxu0 %v10688
    %10961 = vmatprep.subr.mxu0 0.0
    %10962 = vmatpush1.msra.mxu0 %v10690
    %10963 = vmatprep.mubr.f32.mxu0 %v10822
    %10964 = vmatmul.mubr.f32.gmra.mrb[0].mxu0 %v10821
    %v10965 = vpop.f32.mrb[0].mxu0
    %v10966 = vadd.f32 %v10896, %v10965
    %v10967 = vpop.f32.mrb[0].mxu0
    %10968 = vdwg.mxu0
    %10969 = vmatprep.subr.mxu0 0.0
    %10970 = vmatpush1.msra.mxu0 %v10692
    %10971 = vmatprep.subr.mxu0 0.0
    %10972 = vmatpush1.msra.mxu0 %v10694
    %10973 = vmatprep.subr.mxu0 0.0
    %10974 = vmatpush1.msra.mxu0 %v10696
    %10975 = vmatprep.subr.mxu0 0.0
    %10976 = vmatpush1.msra.mxu0 %v10698
    %10977 = vmatprep.subr.mxu0 0.0
    %10978 = vmatpush1.msra.mxu0 %v10700
    %10979 = vmatprep.subr.mxu0 0.0
    %10980 = vmatpush1.msra.mxu0 %v10702
    %10981 = vmatprep.subr.mxu0 0.0
    %10982 = vmatpush1.msra.mxu0 %v10704
    %10983 = vmatprep.subr.mxu0 0.0
    %10984 = vmatpush1.msra.mxu0 %v10706
    %10985 = vmatprep.subr.mxu0 0.0
    %10986 = vmatpush1.msra.mxu0 %v10708
    %10987 = vmatprep.subr.mxu0 0.0
    %10988 = vmatpush1.msra.mxu0 %v10710
    %10989 = vmatprep.subr.mxu0 0.0
    %10990 = vmatpush1.msra.mxu0 %v10712
    %10991 = vmatprep.subr.mxu0 0.0
    %10992 = vmatpush1.msra.mxu0 %v10714
    %10993 = vmatprep.subr.mxu0 0.0
    %10994 = vmatpush1.msra.mxu0 %v10716
    %10995 = vmatprep.subr.mxu0 0.0
    %10996 = vmatpush1.msra.mxu0 %v10718
    %10997 = vmatprep.subr.mxu0 0.0
    %10998 = vmatpush1.msra.mxu0 %v10720
    %10999 = vmatprep.subr.mxu0 0.0
    %11000 = vmatpush1.msra.mxu0 %v10722
    %11001 = vmatprep.subr.mxu0 0.0
    %11002 = vmatpush1.msra.mxu0 %v10724
    %11003 = vmatprep.subr.mxu0 0.0
    %11004 = vmatpush1.msra.mxu0 %v10726
    %11005 = vmatprep.subr.mxu0 0.0
    %11006 = vmatpush1.msra.mxu0 %v10728
    %11007 = vmatprep.subr.mxu0 0.0
    %11008 = vmatpush1.msra.mxu0 %v10730
    %11009 = vmatprep.subr.mxu0 0.0
    %11010 = vmatpush1.msra.mxu0 %v10732
    %11011 = vmatprep.subr.mxu0 0.0
    %11012 = vmatpush1.msra.mxu0 %v10734
    %11013 = vmatprep.subr.mxu0 0.0
    %11014 = vmatpush1.msra.mxu0 %v10736
    %11015 = vmatprep.subr.mxu0 0.0
    %11016 = vmatpush1.msra.mxu0 %v10738
    %11017 = vmatprep.subr.mxu0 0.0
    %11018 = vmatpush1.msra.mxu0 %v10740
    %11019 = vmatprep.subr.mxu0 0.0
    %11020 = vmatpush1.msra.mxu0 %v10742
    %11021 = vmatprep.subr.mxu0 0.0
    %11022 = vmatpush1.msra.mxu0 %v10744
    %11023 = vmatprep.subr.mxu0 0.0
    %11024 = vmatpush1.msra.mxu0 %v10746
    %11025 = vmatprep.subr.mxu0 0.0
    %11026 = vmatpush1.msra.mxu0 %v10748
    %11027 = vmatprep.subr.mxu0 0.0
    %11028 = vmatpush1.msra.mxu0 %v10750
    %11029 = vmatprep.subr.mxu0 0.0
    %11030 = vmatpush1.msra.mxu0 %v10752
    %11031 = vmatprep.subr.mxu0 0.0
    %11032 = vmatpush1.msra.mxu0 %v10754
    %11033 = vmatprep.mubr.f32.mxu0 %v10824
    %11034 = vmatmul.mubr.f32.gmra.mrb[0].mxu0 %v10823
    %v11035 = vpop.f32.mrb[0].mxu0
    %v11036 = vadd.f32 %v10966, %v11035
    %v11037 = vpop.f32.mrb[0].mxu0
    %11038 = vdwg.mxu0
    %11039 = vmatprep.subr.mxu0 0.0
    %11040 = vmatpush1.msra.mxu0 %v10756
    %11041 = vmatprep.subr.mxu0 0.0
    %11042 = vmatpush1.msra.mxu0 %v10758
    %11043 = vmatprep.subr.mxu0 0.0
    %11044 = vmatpush1.msra.mxu0 %v10760
    %11045 = vmatprep.subr.mxu0 0.0
    %11046 = vmatpush1.msra.mxu0 %v10762
    %11047 = vmatprep.subr.mxu0 0.0
    %11048 = vmatpush1.msra.mxu0 %v10764
    %11049 = vmatprep.subr.mxu0 0.0
    %11050 = vmatpush1.msra.mxu0 %v10766
    %11051 = vmatprep.subr.mxu0 0.0
    %11052 = vmatpush1.msra.mxu0 %v10768
    %11053 = vmatprep.subr.mxu0 0.0
    %11054 = vmatpush1.msra.mxu0 %v10770
    %11055 = vmatprep.subr.mxu0 0.0
    %11056 = vmatpush1.msra.mxu0 %v10772
    %11057 = vmatprep.subr.mxu0 0.0
    %11058 = vmatpush1.msra.mxu0 %v10774
    %11059 = vmatprep.subr.mxu0 0.0
    %11060 = vmatpush1.msra.mxu0 %v10776
    %11061 = vmatprep.subr.mxu0 0.0
    %11062 = vmatpush1.msra.mxu0 %v10778
    %11063 = vmatprep.subr.mxu0 0.0
    %11064 = vmatpush1.msra.mxu0 %v10780
    %11065 = vmatprep.subr.mxu0 0.0
    %11066 = vmatpush1.msra.mxu0 %v10782
    %11067 = vmatprep.subr.mxu0 0.0
    %11068 = vmatpush1.msra.mxu0 %v10784
    %11069 = vmatprep.subr.mxu0 0.0
    %11070 = vmatpush1.msra.mxu0 %v10786
    %11071 = vmatprep.subr.mxu0 0.0
    %11072 = vmatpush1.msra.mxu0 %v10788
    %11073 = vmatprep.subr.mxu0 0.0
    %11074 = vmatpush1.msra.mxu0 %v10790
    %11075 = vmatprep.subr.mxu0 0.0
    %11076 = vmatpush1.msra.mxu0 %v10792
    %11077 = vmatprep.subr.mxu0 0.0
    %11078 = vmatpush1.msra.mxu0 %v10794
    %11079 = vmatprep.subr.mxu0 0.0
    %11080 = vmatpush1.msra.mxu0 %v10796
    %11081 = vmatprep.subr.mxu0 0.0
    %11082 = vmatpush1.msra.mxu0 %v10798
    %11083 = vmatprep.subr.mxu0 0.0
    %11084 = vmatpush1.msra.mxu0 %v10800
    %11085 = vmatprep.subr.mxu0 0.0
    %11086 = vmatpush1.msra.mxu0 %v10802
    %11087 = vmatprep.subr.mxu0 0.0
    %11088 = vmatpush1.msra.mxu0 %v10804
    %11089 = vmatprep.subr.mxu0 0.0
    %11090 = vmatpush1.msra.mxu0 %v10806
    %11091 = vmatprep.subr.mxu0 0.0
    %11092 = vmatpush1.msra.mxu0 %v10808
    %11093 = vmatprep.subr.mxu0 0.0
    %11094 = vmatpush1.msra.mxu0 %v10810
    %11095 = vmatprep.subr.mxu0 0.0
    %11096 = vmatpush1.msra.mxu0 %v10812
    %11097 = vmatprep.subr.mxu0 0.0
    %11098 = vmatpush1.msra.mxu0 %v10814
    %11099 = vmatprep.subr.mxu0 0.0
    %11100 = vmatpush1.msra.mxu0 %v10816
    %11101 = vmatprep.subr.mxu0 0.0
    %11102 = vmatpush1.msra.mxu0 %v10818
    %11103 = vmatprep.mubr.f32.mxu0 %v10826
    %11104 = vmatmul.mubr.f32.gmra.mrb[0].mxu0 %v10825
    %v11105 = vpop.f32.mrb[0].mxu0
    %v11106 = vadd.f32 %v11036, %v11105
    %v11107 = vpop.f32.mrb[0].mxu0
    %11108 = vdwg.mxu0
    %v11109 = vxor.u32 %v11106, 2147483648
    %v11110 = vmul.f32 %v11109, 1.442695
    %v11111 = vpow.pop %v11110
    %v11112 = vadd.f32 %v11111, 1.0
    %v11113 = vrcp.pop %v11112
    %v11114 = vmul.f32 1.0, %v11113
    %11115 = vst [vmem:[#allocation4] sm:$0xff] %v11114
    // Predicated region
    $region42: #{tpu_custom_call.1} parent=1 // pred_check
      _
    $region43: #{tpu_custom_call.1} parent=1 // pred_check_branch
      %11117 = sbr.rel (0) target = $region45
    $region44: #{tpu_custom_call.1} parent=1 // pred_region
      %s11119 = ssub.s32 128, 128
      %11120 = vsyncadd [#allocation5], %s11119
      %s11122 = sshll.u32 [#allocation4], 4
      %s11123 = int_to_ptr.vmem [resolvable:$true] %s11122
      %11125 = dma.vmem_to_hbm [thread:$0]  %s11123, 128, %s10, [#allocation5]
    $region45: #{tpu_custom_call.1} parent=1 // pred_fallthru
      _
    // Predicated region
    $region46: #{tpu_custom_call.1} parent=1 // pred_check
      _
    $region47: #{tpu_custom_call.1} parent=1 // pred_check_branch
      %11127 = sbr.rel (0) target = $region49
    $region48: #{tpu_custom_call.1} parent=1 // pred_region
      %11128 = dma.done [#allocation5], 128
    $region49: #{tpu_custom_call.1} parent=1 // pred_fallthru
      _
    %11129 = vsyncpa [#allocation5], 1

</llo_original>
